<compile_context>
chip_gen: v7x
topology: tpu7x:2x2x1
jax: 0.10.0
libtpu: 0.0.40
codegen_flags: <defaults>
</compile_context>

<pallas_src>
import jax
import jax.numpy as jnp
import numpy as np
from jax.experimental import pallas as pl
from jax.experimental.pallas import tpu as pltpu

# Module-implied dimensions (N=1, SE channels=96, mid=2304, out=384, spatial 7x7)
N = 1
C_SE = 96
C_MID = 2304
C_OUT = 384
H = W = 7
HW = H * W
BN_EPS = 1e-3


def se_conv_bn_kernel(x660_ref, x657_ref, w1_ref, b1_ref, w2_ref,
                      gamma_ref, beta_ref, out_ref):
    # --- conv2d210 (1x1 conv on a 1x1 spatial input == matvec) ---------------
    # 2304x96 = 221 KFLOP: done on the idle VPU (broadcast-mul) + XLU lane-reduce
    # so the gate comes out directly as a column [C_MID, 1] — no relayout needed.
    w1f = w1_ref[...].astype(jnp.float32)                    # [C_MID, C_SE]
    x660_row = x660_ref[...]                                 # [1, C_SE] (f32)
    se = jnp.sum(w1f * x660_row, axis=1, keepdims=True) + b1_ref[...]  # [C_MID, 1]

    # --- sigmoid gate, broadcast over the spatial (lane) axis ----------------
    gate = jax.nn.sigmoid(se)                                # [C_MID, 1] (f32)
    scaled = (gate * x657_ref[...]).astype(jnp.bfloat16)     # [C_MID, HW] bf16

    # --- conv2d211 (1x1 conv, no bias) == channel matmul on the MXU ----------
    # Natural orientation: [C_OUT, C_MID] @ [C_MID, HW] -> [C_OUT, HW]
    y = jnp.dot(w2_ref[...], scaled,
                preferred_element_type=jnp.float32)          # [C_OUT, HW] f32

    # --- BatchNorm2d (training mode, batch stats over N*H*W with N=1) --------
    # Two-pass variance (biased) over the 49-wide lane axis.
    mean = jnp.mean(y, axis=1, keepdims=True)                # [C_OUT, 1]
    centered = y - mean
    var = jnp.mean(centered * centered, axis=1, keepdims=True)
    y_hat = centered * jax.lax.rsqrt(var + BN_EPS)
    out_ref[...] = gamma_ref[...] * y_hat + beta_ref[...]    # [C_OUT, HW]
    # TODO(synk): BatchNorm running_mean/running_var buffer updates (training-mode
    # module side effect, with the unbiased 49/48 correction) are not emitted.


def prepare_params(w1, b1, w2, gamma, beta):
    """One-time (load-time) parameter prep — hoisted out of the per-call hot path.

    Weights go to bf16 (halves their HBM read on the HBM-bound kernel) and into
    the natural channel-major layouts the kernel consumes directly.
    """
    return dict(
        w1=w1.reshape(C_MID, C_SE).astype(jnp.bfloat16),   # [2304, 96]
        b1=b1.reshape(C_MID, 1),                           # [2304, 1]  f32
        w2=w2.reshape(C_OUT, C_MID).astype(jnp.bfloat16),  # [384, 2304]
        gamma=gamma.reshape(C_OUT, 1),                     # [384, 1]   f32
        beta=beta.reshape(C_OUT, 1),                       # [384, 1]   f32
    )


def module_forward(x660, x657, params):
    """x660: [1, C_SE, 1, 1], x657: [1, C_MID, H, W] -> [1, C_OUT, H, W].

    Only free (contiguous) reshapes outside the kernel — no transposes, no casts.
    """
    x660_row = x660.reshape(1, C_SE)       # [1, 96]      (free reshape)
    x657_nat = x657.reshape(C_MID, HW)     # [2304, 49]   (free reshape, no .T)

    vmem = pl.BlockSpec(memory_space=pltpu.MemorySpace.VMEM)
    out = pl.pallas_call(
        se_conv_bn_kernel,
        out_shape=jax.ShapeDtypeStruct((C_OUT, HW), jnp.float32),
        in_specs=[vmem] * 7,
        out_specs=vmem,
    )(x660_row, x657_nat, params["w1"], params["b1"], params["w2"],
      params["gamma"], params["beta"])
    return out.reshape(N, C_OUT, H, W)     # free reshape, no transpose


def reference_forward(x660, x657, w1, b1, w2, gamma, beta):
    """Pure-JAX f32 reference matching the PyTorch module semantics."""
    se = (w1 @ x660.reshape(C_SE, 1)) + b1.reshape(C_MID, 1)          # [C_MID, 1]
    gate = jax.nn.sigmoid(se)
    scaled = gate * x657.reshape(C_MID, HW)
    y = w2 @ scaled                                                   # [C_OUT, HW]
    mean = y.mean(axis=-1, keepdims=True)
    var = ((y - mean) ** 2).mean(axis=-1, keepdims=True)              # biased variance
    out = gamma.reshape(C_OUT, 1) * (y - mean) / jnp.sqrt(var + BN_EPS) \
        + beta.reshape(C_OUT, 1)
    return out.reshape(N, C_OUT, H, W)


if __name__ == "__main__":
    key = jax.random.PRNGKey(0)
    ks = jax.random.split(key, 7)

    # Deterministic synthetic parameters (shapes from the module's __init__).
    w1 = jax.random.normal(ks[0], (C_MID, C_SE), jnp.float32) * 0.05   # conv2d210 weight [2304,96,1,1]
    b1 = jax.random.normal(ks[1], (C_MID,), jnp.float32) * 0.05        # conv2d210 bias
    w2 = jax.random.normal(ks[2], (C_OUT, C_MID), jnp.float32) * 0.02  # conv2d211 weight [384,2304,1,1]
    gamma = jax.random.normal(ks[3], (C_OUT,), jnp.float32) * 0.1 + 1.0
    beta = jax.random.normal(ks[4], (C_OUT,), jnp.float32) * 0.1

    # Inputs (same shapes as the PyTorch script).
    x660 = jax.random.normal(ks[5], (N, C_SE, 1, 1), jnp.float32)
    x657 = jax.random.normal(ks[6], (N, C_MID, H, W), jnp.float32)

    # One-time weight prep (off the hot path), then the fused kernel call.
    params = jax.tree_util.tree_map(jax.block_until_ready,
                                    prepare_params(w1, b1, w2, gamma, beta))
    out = module_forward(x660, x657, params)
    out = jax.block_until_ready(out)

    ref = reference_forward(x660, x657, w1, b1, w2, gamma, beta)
    # Tolerance relaxed vs f32 reference because weights feeding the MXU are
    # quantized to bf16 (accumulation stays f32, sigmoid/BN epilogue in f32).
    np.testing.assert_allclose(np.asarray(out), np.asarray(ref), rtol=3e-2, atol=3e-2)

    print("KERNEL_OK")
</pallas_src>

<mosaic_0001>
module attributes {stable_mosaic.version = 11 : i64} {
  func.func @se_conv_bn_kernel(%arg0: memref<1x96xf32, #tpu.memory_space<vmem>>, %arg1: memref<2304x49xf32, #tpu.memory_space<vmem>>, %arg2: memref<2304x96xbf16, #tpu.memory_space<vmem>>, %arg3: memref<2304x1xf32, #tpu.memory_space<vmem>>, %arg4: memref<384x2304xbf16, #tpu.memory_space<vmem>>, %arg5: memref<384x1xf32, #tpu.memory_space<vmem>>, %arg6: memref<384x1xf32, #tpu.memory_space<vmem>>, %arg7: memref<384x49xf32, #tpu.memory_space<vmem>>) attributes {dimension_semantics = [], scalar_prefetch = 0 : i64, scratch_operands = 0 : i64, tpu.core_type = #tpu.core_type<tc>} {
    %c0 = arith.constant 0 : index
    %c0_0 = arith.constant 0 : index
    %0 = vector.load %arg2[%c0, %c0_0] : memref<2304x96xbf16, #tpu.memory_space<vmem>>, vector<2304x96xbf16>
    %1 = arith.extf %0 : vector<2304x96xbf16> to vector<2304x96xf32>
    %c0_1 = arith.constant 0 : index
    %c0_2 = arith.constant 0 : index
    %2 = vector.load %arg0[%c0_1, %c0_2] : memref<1x96xf32, #tpu.memory_space<vmem>>, vector<1x96xf32>
    %3 = vector.broadcast %2 : vector<1x96xf32> to vector<2304x96xf32>
    %4 = arith.mulf %1, %3 : vector<2304x96xf32>
    %cst = arith.constant dense<0.000000e+00> : vector<2304xf32>
    %5 = vector.multi_reduction <add>, %4, %cst [1] : vector<2304x96xf32> to vector<2304xf32>
    %6 = vector.shape_cast %5 : vector<2304xf32> to vector<2304x1xf32>
    %c0_3 = arith.constant 0 : index
    %c0_4 = arith.constant 0 : index
    %7 = vector.load %arg3[%c0_3, %c0_4] : memref<2304x1xf32, #tpu.memory_space<vmem>>, vector<2304x1xf32>
    %8 = arith.addf %6, %7 : vector<2304x1xf32>
    %9 = arith.negf %8 : vector<2304x1xf32>
    %10 = math.exp %9 : vector<2304x1xf32>
    %cst_5 = arith.constant 1.000000e+00 : f32
    %11 = vector.broadcast %cst_5 : f32 to vector<2304x1xf32>
    %12 = arith.addf %11, %10 : vector<2304x1xf32>
    %13 = arith.divf %11, %12 : vector<2304x1xf32>
    %c0_6 = arith.constant 0 : index
    %c0_7 = arith.constant 0 : index
    %14 = vector.load %arg1[%c0_6, %c0_7] : memref<2304x49xf32, #tpu.memory_space<vmem>>, vector<2304x49xf32>
    %15 = vector.broadcast %13 : vector<2304x1xf32> to vector<2304x49xf32>
    %16 = arith.mulf %15, %14 : vector<2304x49xf32>
    %17 = arith.truncf %16 : vector<2304x49xf32> to vector<2304x49xbf16>
    %c0_8 = arith.constant 0 : index
    %c0_9 = arith.constant 0 : index
    %18 = vector.load %arg4[%c0_8, %c0_9] : memref<384x2304xbf16, #tpu.memory_space<vmem>>, vector<384x2304xbf16>
    %cst_10 = arith.constant dense<0.000000e+00> : vector<384x49xf32>
    %19 = tpu.matmul %18, %17, %cst_10 {dimension_numbers = #tpu.dot_dimension_numbers<[1], [0], [0], [1], [0, 0, 1, 1], [], []>} : vector<384x2304xbf16>, vector<2304x49xbf16>, vector<384x49xf32> -> vector<384x49xf32>
    %cst_11 = arith.constant dense<0.000000e+00> : vector<384xf32>
    %20 = vector.multi_reduction <add>, %19, %cst_11 [1] : vector<384x49xf32> to vector<384xf32>
    %21 = vector.shape_cast %20 : vector<384xf32> to vector<384x1xf32>
    %cst_12 = arith.constant 4.900000e+01 : f32
    %22 = vector.broadcast %cst_12 : f32 to vector<384x1xf32>
    %23 = arith.divf %21, %22 : vector<384x1xf32>
    %24 = vector.broadcast %23 : vector<384x1xf32> to vector<384x49xf32>
    %25 = arith.subf %19, %24 : vector<384x49xf32>
    %26 = arith.mulf %25, %25 : vector<384x49xf32>
    %cst_13 = arith.constant dense<0.000000e+00> : vector<384xf32>
    %27 = vector.multi_reduction <add>, %26, %cst_13 [1] : vector<384x49xf32> to vector<384xf32>
    %28 = vector.shape_cast %27 : vector<384xf32> to vector<384x1xf32>
    %cst_14 = arith.constant 4.900000e+01 : f32
    %29 = vector.broadcast %cst_14 : f32 to vector<384x1xf32>
    %30 = arith.divf %28, %29 : vector<384x1xf32>
    %cst_15 = arith.constant 1.000000e-03 : f32
    %31 = vector.broadcast %cst_15 : f32 to vector<384x1xf32>
    %32 = arith.addf %30, %31 : vector<384x1xf32>
    %33 = math.rsqrt %32 : vector<384x1xf32>
    %34 = vector.broadcast %33 : vector<384x1xf32> to vector<384x49xf32>
    %35 = arith.mulf %25, %34 : vector<384x49xf32>
    %c0_16 = arith.constant 0 : index
    %c0_17 = arith.constant 0 : index
    %36 = vector.load %arg5[%c0_16, %c0_17] : memref<384x1xf32, #tpu.memory_space<vmem>>, vector<384x1xf32>
    %37 = vector.broadcast %36 : vector<384x1xf32> to vector<384x49xf32>
    %38 = arith.mulf %37, %35 : vector<384x49xf32>
    %c0_18 = arith.constant 0 : index
    %c0_19 = arith.constant 0 : index
    %39 = vector.load %arg6[%c0_18, %c0_19] : memref<384x1xf32, #tpu.memory_space<vmem>>, vector<384x1xf32>
    %40 = vector.broadcast %39 : vector<384x1xf32> to vector<384x49xf32>
    %41 = arith.addf %38, %40 : vector<384x49xf32>
    %c0_20 = arith.constant 0 : index
    %c0_21 = arith.constant 0 : index
    %42 = vector.load %arg7[%c0_20, %c0_21] : memref<384x49xf32, #tpu.memory_space<vmem>>, vector<384x49xf32>
    tpu.vector_store %arg7[%c0_20, %c0_21], %41 {strides = array<i32>} : memref<384x49xf32, #tpu.memory_space<vmem>>, vector<384x49xf32>,
    return
  }
}

</mosaic_0001>

<llo_original>
// kernel: tpu_custom_call.1
$region0: #{tpu_custom_call.1}
  #allocation0 [shape = 'u32[]', space=smem, size = 0x4, offset = 0x4, fixed_abs, tag = 'smem constant byte address 0x4 - core index']
  #allocation1 [shape = 'u32[144,128]{1,0:T(1,128)}', space=vmem, size = 0x12000, scoped, tag = 'internal scratch']
  %s0 = inlined_call_operand.vmem [shape: f32[1,96], index: 0, kind: input, shape index: {}]
  %s1 = inlined_call_operand.vmem [shape: f32[2304,49], index: 1, kind: input, shape index: {}]
  %s2 = inlined_call_operand.vmem [shape: bf16[2304,96], index: 2, kind: input, shape index: {}]
  %s3 = inlined_call_operand.vmem [shape: f32[2304,1], index: 3, kind: input, shape index: {}]
  %s4 = inlined_call_operand.vmem [shape: bf16[384,2304], index: 4, kind: input, shape index: {}]
  %s5 = inlined_call_operand.vmem [shape: f32[384,1], index: 5, kind: input, shape index: {}]
  %s6 = inlined_call_operand.vmem [shape: f32[384,1], index: 6, kind: input, shape index: {}]
  %s7 = inlined_call_operand.vmem [shape: f32[384,49], index: 7, kind: output, shape index: {}]
  %s8 = sld [smem:[#allocation0]]
  $region38: #{tpu_custom_call.1} parent=0
    _
  %s10 = ssub.s32 1, %s8
  %s11 = scalar_select 0, %s10, %s8
  // Predicated region
  $region2: #{tpu_custom_call.1} parent=0 // pred_check
    _
  $region3: #{tpu_custom_call.1} parent=0 // pred_check_branch
    %13 = sbr.rel (0) target = $region5
  $region4: #{tpu_custom_call.1} parent=0 // pred_region
    _
  $region5: #{tpu_custom_call.1} parent=0 // pred_fallthru
    _
  // Predicated region
  $region6: #{tpu_custom_call.1} parent=0 // pred_check
    _
  $region7: #{tpu_custom_call.1} parent=0 // pred_check_branch
    %15 = sbr.rel (0) target = $region9
  $region8: #{tpu_custom_call.1} parent=0 // pred_region
    _
  $region9: #{tpu_custom_call.1} parent=0 // pred_fallthru
    _
  // Predicated region
  $region10: #{tpu_custom_call.1} parent=0 // pred_check
    _
  $region11: #{tpu_custom_call.1} parent=0 // pred_check_branch
    %17 = sbr.rel (0) target = $region13
  $region12: #{tpu_custom_call.1} parent=0 // pred_region
    _
  $region13: #{tpu_custom_call.1} parent=0 // pred_fallthru
    _
  // Predicated region
  $region14: #{tpu_custom_call.1} parent=0 // pred_check
    _
  $region15: #{tpu_custom_call.1} parent=0 // pred_check_branch
    %19 = sbr.rel (0) target = $region17
  $region16: #{tpu_custom_call.1} parent=0 // pred_region
    _
  $region17: #{tpu_custom_call.1} parent=0 // pred_fallthru
    _
  // Predicated region
  $region18: #{tpu_custom_call.1} parent=0 // pred_check
    _
  $region19: #{tpu_custom_call.1} parent=0 // pred_check_branch
    %21 = sbr.rel (0) target = $region21
  $region20: #{tpu_custom_call.1} parent=0 // pred_region
    _
  $region21: #{tpu_custom_call.1} parent=0 // pred_fallthru
    _
  // Predicated region
  $region22: #{tpu_custom_call.1} parent=0 // pred_check
    _
  $region23: #{tpu_custom_call.1} parent=0 // pred_check_branch
    %23 = sbr.rel (0) target = $region25
  $region24: #{tpu_custom_call.1} parent=0 // pred_region
    _
  $region25: #{tpu_custom_call.1} parent=0 // pred_fallthru
    _
  // Predicated region
  $region26: #{tpu_custom_call.1} parent=0 // pred_check
    _
  $region27: #{tpu_custom_call.1} parent=0 // pred_check_branch
    %25 = sbr.rel (0) target = $region29
  $region28: #{tpu_custom_call.1} parent=0 // pred_region
    _
  $region29: #{tpu_custom_call.1} parent=0 // pred_fallthru
    _
  %v27 = vld [vmem:[%s2] sm:$0xf]
  %v28 = vld [vmem:[%s2 + $0x4] sm:$0xf]
  %v29 = vld [vmem:[%s2 + $0x8] sm:$0xf]
  %v30 = vld [vmem:[%s2 + $0xc] sm:$0xf]
  %v31 = vld [vmem:[%s2 + $0x10] sm:$0xf]
  %v32 = vld [vmem:[%s2 + $0x14] sm:$0xf]
  %v33 = vld [vmem:[%s2 + $0x18] sm:$0xf]
  %v34 = vld [vmem:[%s2 + $0x1c] sm:$0xf]
  %v35 = vld [vmem:[%s2 + $0x20] sm:$0xf]
  %v36 = vld [vmem:[%s2 + $0x24] sm:$0xf]
  %v37 = vld [vmem:[%s2 + $0x28] sm:$0xf]
  %v38 = vld [vmem:[%s2 + $0x2c] sm:$0xf]
  %v39 = vld [vmem:[%s2 + $0x30] sm:$0xf]
  %v40 = vld [vmem:[%s2 + $0x34] sm:$0xf]
  %v41 = vld [vmem:[%s2 + $0x38] sm:$0xf]
  %v42 = vld [vmem:[%s2 + $0x3c] sm:$0xf]
  %v43 = vld [vmem:[%s2 + $0x40] sm:$0xf]
  %v44 = vld [vmem:[%s2 + $0x44] sm:$0xf]
  %v45 = vld [vmem:[%s2 + $0x48] sm:$0xf]
  %v46 = vld [vmem:[%s2 + $0x4c] sm:$0xf]
  %v47 = vld [vmem:[%s2 + $0x50] sm:$0xf]
  %v48 = vld [vmem:[%s2 + $0x54] sm:$0xf]
  %v49 = vld [vmem:[%s2 + $0x58] sm:$0xf]
  %v50 = vld [vmem:[%s2 + $0x5c] sm:$0xf]
  %v51 = vld [vmem:[%s2 + $0x60] sm:$0xf]
  %v52 = vld [vmem:[%s2 + $0x64] sm:$0xf]
  %v53 = vld [vmem:[%s2 + $0x68] sm:$0xf]
  %v54 = vld [vmem:[%s2 + $0x6c] sm:$0xf]
  %v55 = vld [vmem:[%s2 + $0x70] sm:$0xf]
  %v56 = vld [vmem:[%s2 + $0x74] sm:$0xf]
  %v57 = vld [vmem:[%s2 + $0x78] sm:$0xf]
  %v58 = vld [vmem:[%s2 + $0x7c] sm:$0xf]
  %v59 = vld [vmem:[%s2 + $0x80] sm:$0xf]
  %v60 = vld [vmem:[%s2 + $0x84] sm:$0xf]
  %v61 = vld [vmem:[%s2 + $0x88] sm:$0xf]
  %v62 = vld [vmem:[%s2 + $0x8c] sm:$0xf]
  %v63 = vld [vmem:[%s2 + $0x90] sm:$0xf]
  %v64 = vld [vmem:[%s2 + $0x94] sm:$0xf]
  %v65 = vld [vmem:[%s2 + $0x98] sm:$0xf]
  %v66 = vld [vmem:[%s2 + $0x9c] sm:$0xf]
  %v67 = vld [vmem:[%s2 + $0xa0] sm:$0xf]
  %v68 = vld [vmem:[%s2 + $0xa4] sm:$0xf]
  %v69 = vld [vmem:[%s2 + $0xa8] sm:$0xf]
  %v70 = vld [vmem:[%s2 + $0xac] sm:$0xf]
  %v71 = vld [vmem:[%s2 + $0xb0] sm:$0xf]
  %v72 = vld [vmem:[%s2 + $0xb4] sm:$0xf]
  %v73 = vld [vmem:[%s2 + $0xb8] sm:$0xf]
  %v74 = vld [vmem:[%s2 + $0xbc] sm:$0xf]
  %v75 = vld [vmem:[%s2 + $0xc0] sm:$0xf]
  %v76 = vld [vmem:[%s2 + $0xc4] sm:$0xf]
  %v77 = vld [vmem:[%s2 + $0xc8] sm:$0xf]
  %v78 = vld [vmem:[%s2 + $0xcc] sm:$0xf]
  %v79 = vld [vmem:[%s2 + $0xd0] sm:$0xf]
  %v80 = vld [vmem:[%s2 + $0xd4] sm:$0xf]
  %v81 = vld [vmem:[%s2 + $0xd8] sm:$0xf]
  %v82 = vld [vmem:[%s2 + $0xdc] sm:$0xf]
  %v83 = vld [vmem:[%s2 + $0xe0] sm:$0xf]
  %v84 = vld [vmem:[%s2 + $0xe4] sm:$0xf]
  %v85 = vld [vmem:[%s2 + $0xe8] sm:$0xf]
  %v86 = vld [vmem:[%s2 + $0xec] sm:$0xf]
  %v87 = vld [vmem:[%s2 + $0xf0] sm:$0xf]
  %v88 = vld [vmem:[%s2 + $0xf4] sm:$0xf]
  %v89 = vld [vmem:[%s2 + $0xf8] sm:$0xf]
  %v90 = vld [vmem:[%s2 + $0xfc] sm:$0xf]
  %v91 = vld [vmem:[%s2 + $0x100] sm:$0xf]
  %v92 = vld [vmem:[%s2 + $0x104] sm:$0xf]
  %v93 = vld [vmem:[%s2 + $0x108] sm:$0xf]
  %v94 = vld [vmem:[%s2 + $0x10c] sm:$0xf]
  %v95 = vld [vmem:[%s2 + $0x110] sm:$0xf]
  %v96 = vld [vmem:[%s2 + $0x114] sm:$0xf]
  %v97 = vld [vmem:[%s2 + $0x118] sm:$0xf]
  %v98 = vld [vmem:[%s2 + $0x11c] sm:$0xf]
  %v99 = vld [vmem:[%s2 + $0x120] sm:$0xf]
  %v100 = vld [vmem:[%s2 + $0x124] sm:$0xf]
  %v101 = vld [vmem:[%s2 + $0x128] sm:$0xf]
  %v102 = vld [vmem:[%s2 + $0x12c] sm:$0xf]
  %v103 = vld [vmem:[%s2 + $0x130] sm:$0xf]
  %v104 = vld [vmem:[%s2 + $0x134] sm:$0xf]
  %v105 = vld [vmem:[%s2 + $0x138] sm:$0xf]
  %v106 = vld [vmem:[%s2 + $0x13c] sm:$0xf]
  %v107 = vld [vmem:[%s2 + $0x140] sm:$0xf]
  %v108 = vld [vmem:[%s2 + $0x144] sm:$0xf]
  %v109 = vld [vmem:[%s2 + $0x148] sm:$0xf]
  %v110 = vld [vmem:[%s2 + $0x14c] sm:$0xf]
  %v111 = vld [vmem:[%s2 + $0x150] sm:$0xf]
  %v112 = vld [vmem:[%s2 + $0x154] sm:$0xf]
  %v113 = vld [vmem:[%s2 + $0x158] sm:$0xf]
  %v114 = vld [vmem:[%s2 + $0x15c] sm:$0xf]
  %v115 = vld [vmem:[%s2 + $0x160] sm:$0xf]
  %v116 = vld [vmem:[%s2 + $0x164] sm:$0xf]
  %v117 = vld [vmem:[%s2 + $0x168] sm:$0xf]
  %v118 = vld [vmem:[%s2 + $0x16c] sm:$0xf]
  %v119 = vld [vmem:[%s2 + $0x170] sm:$0xf]
  %v120 = vld [vmem:[%s2 + $0x174] sm:$0xf]
  %v121 = vld [vmem:[%s2 + $0x178] sm:$0xf]
  %v122 = vld [vmem:[%s2 + $0x17c] sm:$0xf]
  %v123 = vld [vmem:[%s2 + $0x180] sm:$0xf]
  %v124 = vld [vmem:[%s2 + $0x184] sm:$0xf]
  %v125 = vld [vmem:[%s2 + $0x188] sm:$0xf]
  %v126 = vld [vmem:[%s2 + $0x18c] sm:$0xf]
  %v127 = vld [vmem:[%s2 + $0x190] sm:$0xf]
  %v128 = vld [vmem:[%s2 + $0x194] sm:$0xf]
  %v129 = vld [vmem:[%s2 + $0x198] sm:$0xf]
  %v130 = vld [vmem:[%s2 + $0x19c] sm:$0xf]
  %v131 = vld [vmem:[%s2 + $0x1a0] sm:$0xf]
  %v132 = vld [vmem:[%s2 + $0x1a4] sm:$0xf]
  %v133 = vld [vmem:[%s2 + $0x1a8] sm:$0xf]
  %v134 = vld [vmem:[%s2 + $0x1ac] sm:$0xf]
  %v135 = vld [vmem:[%s2 + $0x1b0] sm:$0xf]
  %v136 = vld [vmem:[%s2 + $0x1b4] sm:$0xf]
  %v137 = vld [vmem:[%s2 + $0x1b8] sm:$0xf]
  %v138 = vld [vmem:[%s2 + $0x1bc] sm:$0xf]
  %v139 = vld [vmem:[%s2 + $0x1c0] sm:$0xf]
  %v140 = vld [vmem:[%s2 + $0x1c4] sm:$0xf]
  %v141 = vld [vmem:[%s2 + $0x1c8] sm:$0xf]
  %v142 = vld [vmem:[%s2 + $0x1cc] sm:$0xf]
  %v143 = vld [vmem:[%s2 + $0x1d0] sm:$0xf]
  %v144 = vld [vmem:[%s2 + $0x1d4] sm:$0xf]
  %v145 = vld [vmem:[%s2 + $0x1d8] sm:$0xf]
  %v146 = vld [vmem:[%s2 + $0x1dc] sm:$0xf]
  %v147 = vld [vmem:[%s2 + $0x1e0] sm:$0xf]
  %v148 = vld [vmem:[%s2 + $0x1e4] sm:$0xf]
  %v149 = vld [vmem:[%s2 + $0x1e8] sm:$0xf]
  %v150 = vld [vmem:[%s2 + $0x1ec] sm:$0xf]
  %v151 = vld [vmem:[%s2 + $0x1f0] sm:$0xf]
  %v152 = vld [vmem:[%s2 + $0x1f4] sm:$0xf]
  %v153 = vld [vmem:[%s2 + $0x1f8] sm:$0xf]
  %v154 = vld [vmem:[%s2 + $0x1fc] sm:$0xf]
  %v155 = vld [vmem:[%s2 + $0x200] sm:$0xf]
  %v156 = vld [vmem:[%s2 + $0x204] sm:$0xf]
  %v157 = vld [vmem:[%s2 + $0x208] sm:$0xf]
  %v158 = vld [vmem:[%s2 + $0x20c] sm:$0xf]
  %v159 = vld [vmem:[%s2 + $0x210] sm:$0xf]
  %v160 = vld [vmem:[%s2 + $0x214] sm:$0xf]
  %v161 = vld [vmem:[%s2 + $0x218] sm:$0xf]
  %v162 = vld [vmem:[%s2 + $0x21c] sm:$0xf]
  %v163 = vld [vmem:[%s2 + $0x220] sm:$0xf]
  %v164 = vld [vmem:[%s2 + $0x224] sm:$0xf]
  %v165 = vld [vmem:[%s2 + $0x228] sm:$0xf]
  %v166 = vld [vmem:[%s2 + $0x22c] sm:$0xf]
  %v167 = vld [vmem:[%s2 + $0x230] sm:$0xf]
  %v168 = vld [vmem:[%s2 + $0x234] sm:$0xf]
  %v169 = vld [vmem:[%s2 + $0x238] sm:$0xf]
  %v170 = vld [vmem:[%s2 + $0x23c] sm:$0xf]
  %v171 = vld [vmem:[%s2 + $0x240] sm:$0xf]
  %v172 = vld [vmem:[%s2 + $0x244] sm:$0xf]
  %v173 = vld [vmem:[%s2 + $0x248] sm:$0xf]
  %v174 = vld [vmem:[%s2 + $0x24c] sm:$0xf]
  %v175 = vld [vmem:[%s2 + $0x250] sm:$0xf]
  %v176 = vld [vmem:[%s2 + $0x254] sm:$0xf]
  %v177 = vld [vmem:[%s2 + $0x258] sm:$0xf]
  %v178 = vld [vmem:[%s2 + $0x25c] sm:$0xf]
  %v179 = vld [vmem:[%s2 + $0x260] sm:$0xf]
  %v180 = vld [vmem:[%s2 + $0x264] sm:$0xf]
  %v181 = vld [vmem:[%s2 + $0x268] sm:$0xf]
  %v182 = vld [vmem:[%s2 + $0x26c] sm:$0xf]
  %v183 = vld [vmem:[%s2 + $0x270] sm:$0xf]
  %v184 = vld [vmem:[%s2 + $0x274] sm:$0xf]
  %v185 = vld [vmem:[%s2 + $0x278] sm:$0xf]
  %v186 = vld [vmem:[%s2 + $0x27c] sm:$0xf]
  %v187 = vld [vmem:[%s2 + $0x280] sm:$0xf]
  %v188 = vld [vmem:[%s2 + $0x284] sm:$0xf]
  %v189 = vld [vmem:[%s2 + $0x288] sm:$0xf]
  %v190 = vld [vmem:[%s2 + $0x28c] sm:$0xf]
  %v191 = vld [vmem:[%s2 + $0x290] sm:$0xf]
  %v192 = vld [vmem:[%s2 + $0x294] sm:$0xf]
  %v193 = vld [vmem:[%s2 + $0x298] sm:$0xf]
  %v194 = vld [vmem:[%s2 + $0x29c] sm:$0xf]
  %v195 = vld [vmem:[%s2 + $0x2a0] sm:$0xf]
  %v196 = vld [vmem:[%s2 + $0x2a4] sm:$0xf]
  %v197 = vld [vmem:[%s2 + $0x2a8] sm:$0xf]
  %v198 = vld [vmem:[%s2 + $0x2ac] sm:$0xf]
  %v199 = vld [vmem:[%s2 + $0x2b0] sm:$0xf]
  %v200 = vld [vmem:[%s2 + $0x2b4] sm:$0xf]
  %v201 = vld [vmem:[%s2 + $0x2b8] sm:$0xf]
  %v202 = vld [vmem:[%s2 + $0x2bc] sm:$0xf]
  %v203 = vld [vmem:[%s2 + $0x2c0] sm:$0xf]
  %v204 = vld [vmem:[%s2 + $0x2c4] sm:$0xf]
  %v205 = vld [vmem:[%s2 + $0x2c8] sm:$0xf]
  %v206 = vld [vmem:[%s2 + $0x2cc] sm:$0xf]
  %v207 = vld [vmem:[%s2 + $0x2d0] sm:$0xf]
  %v208 = vld [vmem:[%s2 + $0x2d4] sm:$0xf]
  %v209 = vld [vmem:[%s2 + $0x2d8] sm:$0xf]
  %v210 = vld [vmem:[%s2 + $0x2dc] sm:$0xf]
  %v211 = vld [vmem:[%s2 + $0x2e0] sm:$0xf]
  %v212 = vld [vmem:[%s2 + $0x2e4] sm:$0xf]
  %v213 = vld [vmem:[%s2 + $0x2e8] sm:$0xf]
  %v214 = vld [vmem:[%s2 + $0x2ec] sm:$0xf]
  %v215 = vld [vmem:[%s2 + $0x2f0] sm:$0xf]
  %v216 = vld [vmem:[%s2 + $0x2f4] sm:$0xf]
  %v217 = vld [vmem:[%s2 + $0x2f8] sm:$0xf]
  %v218 = vld [vmem:[%s2 + $0x2fc] sm:$0xf]
  %v219 = vld [vmem:[%s2 + $0x300] sm:$0xf]
  %v220 = vld [vmem:[%s2 + $0x304] sm:$0xf]
  %v221 = vld [vmem:[%s2 + $0x308] sm:$0xf]
  %v222 = vld [vmem:[%s2 + $0x30c] sm:$0xf]
  %v223 = vld [vmem:[%s2 + $0x310] sm:$0xf]
  %v224 = vld [vmem:[%s2 + $0x314] sm:$0xf]
  %v225 = vld [vmem:[%s2 + $0x318] sm:$0xf]
  %v226 = vld [vmem:[%s2 + $0x31c] sm:$0xf]
  %v227 = vld [vmem:[%s2 + $0x320] sm:$0xf]
  %v228 = vld [vmem:[%s2 + $0x324] sm:$0xf]
  %v229 = vld [vmem:[%s2 + $0x328] sm:$0xf]
  %v230 = vld [vmem:[%s2 + $0x32c] sm:$0xf]
  %v231 = vld [vmem:[%s2 + $0x330] sm:$0xf]
  %v232 = vld [vmem:[%s2 + $0x334] sm:$0xf]
  %v233 = vld [vmem:[%s2 + $0x338] sm:$0xf]
  %v234 = vld [vmem:[%s2 + $0x33c] sm:$0xf]
  %v235 = vld [vmem:[%s2 + $0x340] sm:$0xf]
  %v236 = vld [vmem:[%s2 + $0x344] sm:$0xf]
  %v237 = vld [vmem:[%s2 + $0x348] sm:$0xf]
  %v238 = vld [vmem:[%s2 + $0x34c] sm:$0xf]
  %v239 = vld [vmem:[%s2 + $0x350] sm:$0xf]
  %v240 = vld [vmem:[%s2 + $0x354] sm:$0xf]
  %v241 = vld [vmem:[%s2 + $0x358] sm:$0xf]
  %v242 = vld [vmem:[%s2 + $0x35c] sm:$0xf]
  %v243 = vld [vmem:[%s2 + $0x360] sm:$0xf]
  %v244 = vld [vmem:[%s2 + $0x364] sm:$0xf]
  %v245 = vld [vmem:[%s2 + $0x368] sm:$0xf]
  %v246 = vld [vmem:[%s2 + $0x36c] sm:$0xf]
  %v247 = vld [vmem:[%s2 + $0x370] sm:$0xf]
  %v248 = vld [vmem:[%s2 + $0x374] sm:$0xf]
  %v249 = vld [vmem:[%s2 + $0x378] sm:$0xf]
  %v250 = vld [vmem:[%s2 + $0x37c] sm:$0xf]
  %v251 = vld [vmem:[%s2 + $0x380] sm:$0xf]
  %v252 = vld [vmem:[%s2 + $0x384] sm:$0xf]
  %v253 = vld [vmem:[%s2 + $0x388] sm:$0xf]
  %v254 = vld [vmem:[%s2 + $0x38c] sm:$0xf]
  %v255 = vld [vmem:[%s2 + $0x390] sm:$0xf]
  %v256 = vld [vmem:[%s2 + $0x394] sm:$0xf]
  %v257 = vld [vmem:[%s2 + $0x398] sm:$0xf]
  %v258 = vld [vmem:[%s2 + $0x39c] sm:$0xf]
  %v259 = vld [vmem:[%s2 + $0x3a0] sm:$0xf]
  %v260 = vld [vmem:[%s2 + $0x3a4] sm:$0xf]
  %v261 = vld [vmem:[%s2 + $0x3a8] sm:$0xf]
  %v262 = vld [vmem:[%s2 + $0x3ac] sm:$0xf]
  %v263 = vld [vmem:[%s2 + $0x3b0] sm:$0xf]
  %v264 = vld [vmem:[%s2 + $0x3b4] sm:$0xf]
  %v265 = vld [vmem:[%s2 + $0x3b8] sm:$0xf]
  %v266 = vld [vmem:[%s2 + $0x3bc] sm:$0xf]
  %v267 = vld [vmem:[%s2 + $0x3c0] sm:$0xf]
  %v268 = vld [vmem:[%s2 + $0x3c4] sm:$0xf]
  %v269 = vld [vmem:[%s2 + $0x3c8] sm:$0xf]
  %v270 = vld [vmem:[%s2 + $0x3cc] sm:$0xf]
  %v271 = vld [vmem:[%s2 + $0x3d0] sm:$0xf]
  %v272 = vld [vmem:[%s2 + $0x3d4] sm:$0xf]
  %v273 = vld [vmem:[%s2 + $0x3d8] sm:$0xf]
  %v274 = vld [vmem:[%s2 + $0x3dc] sm:$0xf]
  %v275 = vld [vmem:[%s2 + $0x3e0] sm:$0xf]
  %v276 = vld [vmem:[%s2 + $0x3e4] sm:$0xf]
  %v277 = vld [vmem:[%s2 + $0x3e8] sm:$0xf]
  %v278 = vld [vmem:[%s2 + $0x3ec] sm:$0xf]
  %v279 = vld [vmem:[%s2 + $0x3f0] sm:$0xf]
  %v280 = vld [vmem:[%s2 + $0x3f4] sm:$0xf]
  %v281 = vld [vmem:[%s2 + $0x3f8] sm:$0xf]
  %v282 = vld [vmem:[%s2 + $0x3fc] sm:$0xf]
  %v283 = vld [vmem:[%s2 + $0x400] sm:$0xf]
  %v284 = vld [vmem:[%s2 + $0x404] sm:$0xf]
  %v285 = vld [vmem:[%s2 + $0x408] sm:$0xf]
  %v286 = vld [vmem:[%s2 + $0x40c] sm:$0xf]
  %v287 = vld [vmem:[%s2 + $0x410] sm:$0xf]
  %v288 = vld [vmem:[%s2 + $0x414] sm:$0xf]
  %v289 = vld [vmem:[%s2 + $0x418] sm:$0xf]
  %v290 = vld [vmem:[%s2 + $0x41c] sm:$0xf]
  %v291 = vld [vmem:[%s2 + $0x420] sm:$0xf]
  %v292 = vld [vmem:[%s2 + $0x424] sm:$0xf]
  %v293 = vld [vmem:[%s2 + $0x428] sm:$0xf]
  %v294 = vld [vmem:[%s2 + $0x42c] sm:$0xf]
  %v295 = vld [vmem:[%s2 + $0x430] sm:$0xf]
  %v296 = vld [vmem:[%s2 + $0x434] sm:$0xf]
  %v297 = vld [vmem:[%s2 + $0x438] sm:$0xf]
  %v298 = vld [vmem:[%s2 + $0x43c] sm:$0xf]
  %v299 = vld [vmem:[%s2 + $0x440] sm:$0xf]
  %v300 = vld [vmem:[%s2 + $0x444] sm:$0xf]
  %v301 = vld [vmem:[%s2 + $0x448] sm:$0xf]
  %v302 = vld [vmem:[%s2 + $0x44c] sm:$0xf]
  %v303 = vld [vmem:[%s2 + $0x450] sm:$0xf]
  %v304 = vld [vmem:[%s2 + $0x454] sm:$0xf]
  %v305 = vld [vmem:[%s2 + $0x458] sm:$0xf]
  %v306 = vld [vmem:[%s2 + $0x45c] sm:$0xf]
  %v307 = vld [vmem:[%s2 + $0x460] sm:$0xf]
  %v308 = vld [vmem:[%s2 + $0x464] sm:$0xf]
  %v309 = vld [vmem:[%s2 + $0x468] sm:$0xf]
  %v310 = vld [vmem:[%s2 + $0x46c] sm:$0xf]
  %v311 = vld [vmem:[%s2 + $0x470] sm:$0xf]
  %v312 = vld [vmem:[%s2 + $0x474] sm:$0xf]
  %v313 = vld [vmem:[%s2 + $0x478] sm:$0xf]
  %v314 = vld [vmem:[%s2 + $0x47c] sm:$0xf]
  %v315 = vunpack.c.l.bf16 %v27
  %v316 = vunpack.c.l.bf16 %v28
  %v317 = vunpack.c.l.bf16 %v29
  %v318 = vunpack.c.l.bf16 %v30
  %v319 = vunpack.c.l.bf16 %v31
  %v320 = vunpack.c.l.bf16 %v32
  %v321 = vunpack.c.l.bf16 %v33
  %v322 = vunpack.c.l.bf16 %v34
  %v323 = vunpack.c.l.bf16 %v35
  %v324 = vunpack.c.l.bf16 %v36
  %v325 = vunpack.c.l.bf16 %v37
  %v326 = vunpack.c.l.bf16 %v38
  %v327 = vunpack.c.l.bf16 %v39
  %v328 = vunpack.c.l.bf16 %v40
  %v329 = vunpack.c.l.bf16 %v41
  %v330 = vunpack.c.l.bf16 %v42
  %v331 = vunpack.c.l.bf16 %v43
  %v332 = vunpack.c.l.bf16 %v44
  %v333 = vunpack.c.l.bf16 %v45
  %v334 = vunpack.c.l.bf16 %v46
  %v335 = vunpack.c.l.bf16 %v47
  %v336 = vunpack.c.l.bf16 %v48
  %v337 = vunpack.c.l.bf16 %v49
  %v338 = vunpack.c.l.bf16 %v50
  %v339 = vunpack.c.l.bf16 %v51
  %v340 = vunpack.c.l.bf16 %v52
  %v341 = vunpack.c.l.bf16 %v53
  %v342 = vunpack.c.l.bf16 %v54
  %v343 = vunpack.c.l.bf16 %v55
  %v344 = vunpack.c.l.bf16 %v56
  %v345 = vunpack.c.l.bf16 %v57
  %v346 = vunpack.c.l.bf16 %v58
  %v347 = vunpack.c.l.bf16 %v59
  %v348 = vunpack.c.l.bf16 %v60
  %v349 = vunpack.c.l.bf16 %v61
  %v350 = vunpack.c.l.bf16 %v62
  %v351 = vunpack.c.l.bf16 %v63
  %v352 = vunpack.c.l.bf16 %v64
  %v353 = vunpack.c.l.bf16 %v65
  %v354 = vunpack.c.l.bf16 %v66
  %v355 = vunpack.c.l.bf16 %v67
  %v356 = vunpack.c.l.bf16 %v68
  %v357 = vunpack.c.l.bf16 %v69
  %v358 = vunpack.c.l.bf16 %v70
  %v359 = vunpack.c.l.bf16 %v71
  %v360 = vunpack.c.l.bf16 %v72
  %v361 = vunpack.c.l.bf16 %v73
  %v362 = vunpack.c.l.bf16 %v74
  %v363 = vunpack.c.l.bf16 %v75
  %v364 = vunpack.c.l.bf16 %v76
  %v365 = vunpack.c.l.bf16 %v77
  %v366 = vunpack.c.l.bf16 %v78
  %v367 = vunpack.c.l.bf16 %v79
  %v368 = vunpack.c.l.bf16 %v80
  %v369 = vunpack.c.l.bf16 %v81
  %v370 = vunpack.c.l.bf16 %v82
  %v371 = vunpack.c.l.bf16 %v83
  %v372 = vunpack.c.l.bf16 %v84
  %v373 = vunpack.c.l.bf16 %v85
  %v374 = vunpack.c.l.bf16 %v86
  %v375 = vunpack.c.l.bf16 %v87
  %v376 = vunpack.c.l.bf16 %v88
  %v377 = vunpack.c.l.bf16 %v89
  %v378 = vunpack.c.l.bf16 %v90
  %v379 = vunpack.c.l.bf16 %v91
  %v380 = vunpack.c.l.bf16 %v92
  %v381 = vunpack.c.l.bf16 %v93
  %v382 = vunpack.c.l.bf16 %v94
  %v383 = vunpack.c.l.bf16 %v95
  %v384 = vunpack.c.l.bf16 %v96
  %v385 = vunpack.c.l.bf16 %v97
  %v386 = vunpack.c.l.bf16 %v98
  %v387 = vunpack.c.l.bf16 %v99
  %v388 = vunpack.c.l.bf16 %v100
  %v389 = vunpack.c.l.bf16 %v101
  %v390 = vunpack.c.l.bf16 %v102
  %v391 = vunpack.c.l.bf16 %v103
  %v392 = vunpack.c.l.bf16 %v104
  %v393 = vunpack.c.l.bf16 %v105
  %v394 = vunpack.c.l.bf16 %v106
  %v395 = vunpack.c.l.bf16 %v107
  %v396 = vunpack.c.l.bf16 %v108
  %v397 = vunpack.c.l.bf16 %v109
  %v398 = vunpack.c.l.bf16 %v110
  %v399 = vunpack.c.l.bf16 %v111
  %v400 = vunpack.c.l.bf16 %v112
  %v401 = vunpack.c.l.bf16 %v113
  %v402 = vunpack.c.l.bf16 %v114
  %v403 = vunpack.c.l.bf16 %v115
  %v404 = vunpack.c.l.bf16 %v116
  %v405 = vunpack.c.l.bf16 %v117
  %v406 = vunpack.c.l.bf16 %v118
  %v407 = vunpack.c.l.bf16 %v119
  %v408 = vunpack.c.l.bf16 %v120
  %v409 = vunpack.c.l.bf16 %v121
  %v410 = vunpack.c.l.bf16 %v122
  %v411 = vunpack.c.l.bf16 %v123
  %v412 = vunpack.c.l.bf16 %v124
  %v413 = vunpack.c.l.bf16 %v125
  %v414 = vunpack.c.l.bf16 %v126
  %v415 = vunpack.c.l.bf16 %v127
  %v416 = vunpack.c.l.bf16 %v128
  %v417 = vunpack.c.l.bf16 %v129
  %v418 = vunpack.c.l.bf16 %v130
  %v419 = vunpack.c.l.bf16 %v131
  %v420 = vunpack.c.l.bf16 %v132
  %v421 = vunpack.c.l.bf16 %v133
  %v422 = vunpack.c.l.bf16 %v134
  %v423 = vunpack.c.l.bf16 %v135
  %v424 = vunpack.c.l.bf16 %v136
  %v425 = vunpack.c.l.bf16 %v137
  %v426 = vunpack.c.l.bf16 %v138
  %v427 = vunpack.c.l.bf16 %v139
  %v428 = vunpack.c.l.bf16 %v140
  %v429 = vunpack.c.l.bf16 %v141
  %v430 = vunpack.c.l.bf16 %v142
  %v431 = vunpack.c.l.bf16 %v143
  %v432 = vunpack.c.l.bf16 %v144
  %v433 = vunpack.c.l.bf16 %v145
  %v434 = vunpack.c.l.bf16 %v146
  %v435 = vunpack.c.l.bf16 %v147
  %v436 = vunpack.c.l.bf16 %v148
  %v437 = vunpack.c.l.bf16 %v149
  %v438 = vunpack.c.l.bf16 %v150
  %v439 = vunpack.c.l.bf16 %v151
  %v440 = vunpack.c.l.bf16 %v152
  %v441 = vunpack.c.l.bf16 %v153
  %v442 = vunpack.c.l.bf16 %v154
  %v443 = vunpack.c.l.bf16 %v155
  %v444 = vunpack.c.l.bf16 %v156
  %v445 = vunpack.c.l.bf16 %v157
  %v446 = vunpack.c.l.bf16 %v158
  %v447 = vunpack.c.l.bf16 %v159
  %v448 = vunpack.c.l.bf16 %v160
  %v449 = vunpack.c.l.bf16 %v161
  %v450 = vunpack.c.l.bf16 %v162
  %v451 = vunpack.c.l.bf16 %v163
  %v452 = vunpack.c.l.bf16 %v164
  %v453 = vunpack.c.l.bf16 %v165
  %v454 = vunpack.c.l.bf16 %v166
  %v455 = vunpack.c.l.bf16 %v167
  %v456 = vunpack.c.l.bf16 %v168
  %v457 = vunpack.c.l.bf16 %v169
  %v458 = vunpack.c.l.bf16 %v170
  %v459 = vunpack.c.l.bf16 %v171
  %v460 = vunpack.c.l.bf16 %v172
  %v461 = vunpack.c.l.bf16 %v173
  %v462 = vunpack.c.l.bf16 %v174
  %v463 = vunpack.c.l.bf16 %v175
  %v464 = vunpack.c.l.bf16 %v176
  %v465 = vunpack.c.l.bf16 %v177
  %v466 = vunpack.c.l.bf16 %v178
  %v467 = vunpack.c.l.bf16 %v179
  %v468 = vunpack.c.l.bf16 %v180
  %v469 = vunpack.c.l.bf16 %v181
  %v470 = vunpack.c.l.bf16 %v182
  %v471 = vunpack.c.l.bf16 %v183
  %v472 = vunpack.c.l.bf16 %v184
  %v473 = vunpack.c.l.bf16 %v185
  %v474 = vunpack.c.l.bf16 %v186
  %v475 = vunpack.c.l.bf16 %v187
  %v476 = vunpack.c.l.bf16 %v188
  %v477 = vunpack.c.l.bf16 %v189
  %v478 = vunpack.c.l.bf16 %v190
  %v479 = vunpack.c.l.bf16 %v191
  %v480 = vunpack.c.l.bf16 %v192
  %v481 = vunpack.c.l.bf16 %v193
  %v482 = vunpack.c.l.bf16 %v194
  %v483 = vunpack.c.l.bf16 %v195
  %v484 = vunpack.c.l.bf16 %v196
  %v485 = vunpack.c.l.bf16 %v197
  %v486 = vunpack.c.l.bf16 %v198
  %v487 = vunpack.c.l.bf16 %v199
  %v488 = vunpack.c.l.bf16 %v200
  %v489 = vunpack.c.l.bf16 %v201
  %v490 = vunpack.c.l.bf16 %v202
  %v491 = vunpack.c.l.bf16 %v203
  %v492 = vunpack.c.l.bf16 %v204
  %v493 = vunpack.c.l.bf16 %v205
  %v494 = vunpack.c.l.bf16 %v206
  %v495 = vunpack.c.l.bf16 %v207
  %v496 = vunpack.c.l.bf16 %v208
  %v497 = vunpack.c.l.bf16 %v209
  %v498 = vunpack.c.l.bf16 %v210
  %v499 = vunpack.c.l.bf16 %v211
  %v500 = vunpack.c.l.bf16 %v212
  %v501 = vunpack.c.l.bf16 %v213
  %v502 = vunpack.c.l.bf16 %v214
  %v503 = vunpack.c.l.bf16 %v215
  %v504 = vunpack.c.l.bf16 %v216
  %v505 = vunpack.c.l.bf16 %v217
  %v506 = vunpack.c.l.bf16 %v218
  %v507 = vunpack.c.l.bf16 %v219
  %v508 = vunpack.c.l.bf16 %v220
  %v509 = vunpack.c.l.bf16 %v221
  %v510 = vunpack.c.l.bf16 %v222
  %v511 = vunpack.c.l.bf16 %v223
  %v512 = vunpack.c.l.bf16 %v224
  %v513 = vunpack.c.l.bf16 %v225
  %v514 = vunpack.c.l.bf16 %v226
  %v515 = vunpack.c.l.bf16 %v227
  %v516 = vunpack.c.l.bf16 %v228
  %v517 = vunpack.c.l.bf16 %v229
  %v518 = vunpack.c.l.bf16 %v230
  %v519 = vunpack.c.l.bf16 %v231
  %v520 = vunpack.c.l.bf16 %v232
  %v521 = vunpack.c.l.bf16 %v233
  %v522 = vunpack.c.l.bf16 %v234
  %v523 = vunpack.c.l.bf16 %v235
  %v524 = vunpack.c.l.bf16 %v236
  %v525 = vunpack.c.l.bf16 %v237
  %v526 = vunpack.c.l.bf16 %v238
  %v527 = vunpack.c.l.bf16 %v239
  %v528 = vunpack.c.l.bf16 %v240
  %v529 = vunpack.c.l.bf16 %v241
  %v530 = vunpack.c.l.bf16 %v242
  %v531 = vunpack.c.l.bf16 %v243
  %v532 = vunpack.c.l.bf16 %v244
  %v533 = vunpack.c.l.bf16 %v245
  %v534 = vunpack.c.l.bf16 %v246
  %v535 = vunpack.c.l.bf16 %v247
  %v536 = vunpack.c.l.bf16 %v248
  %v537 = vunpack.c.l.bf16 %v249
  %v538 = vunpack.c.l.bf16 %v250
  %v539 = vunpack.c.l.bf16 %v251
  %v540 = vunpack.c.l.bf16 %v252
  %v541 = vunpack.c.l.bf16 %v253
  %v542 = vunpack.c.l.bf16 %v254
  %v543 = vunpack.c.l.bf16 %v255
  %v544 = vunpack.c.l.bf16 %v256
  %v545 = vunpack.c.l.bf16 %v257
  %v546 = vunpack.c.l.bf16 %v258
  %v547 = vunpack.c.l.bf16 %v259
  %v548 = vunpack.c.l.bf16 %v260
  %v549 = vunpack.c.l.bf16 %v261
  %v550 = vunpack.c.l.bf16 %v262
  %v551 = vunpack.c.l.bf16 %v263
  %v552 = vunpack.c.l.bf16 %v264
  %v553 = vunpack.c.l.bf16 %v265
  %v554 = vunpack.c.l.bf16 %v266
  %v555 = vunpack.c.l.bf16 %v267
  %v556 = vunpack.c.l.bf16 %v268
  %v557 = vunpack.c.l.bf16 %v269
  %v558 = vunpack.c.l.bf16 %v270
  %v559 = vunpack.c.l.bf16 %v271
  %v560 = vunpack.c.l.bf16 %v272
  %v561 = vunpack.c.l.bf16 %v273
  %v562 = vunpack.c.l.bf16 %v274
  %v563 = vunpack.c.l.bf16 %v275
  %v564 = vunpack.c.l.bf16 %v276
  %v565 = vunpack.c.l.bf16 %v277
  %v566 = vunpack.c.l.bf16 %v278
  %v567 = vunpack.c.l.bf16 %v279
  %v568 = vunpack.c.l.bf16 %v280
  %v569 = vunpack.c.l.bf16 %v281
  %v570 = vunpack.c.l.bf16 %v282
  %v571 = vunpack.c.l.bf16 %v283
  %v572 = vunpack.c.l.bf16 %v284
  %v573 = vunpack.c.l.bf16 %v285
  %v574 = vunpack.c.l.bf16 %v286
  %v575 = vunpack.c.l.bf16 %v287
  %v576 = vunpack.c.l.bf16 %v288
  %v577 = vunpack.c.l.bf16 %v289
  %v578 = vunpack.c.l.bf16 %v290
  %v579 = vunpack.c.l.bf16 %v291
  %v580 = vunpack.c.l.bf16 %v292
  %v581 = vunpack.c.l.bf16 %v293
  %v582 = vunpack.c.l.bf16 %v294
  %v583 = vunpack.c.l.bf16 %v295
  %v584 = vunpack.c.l.bf16 %v296
  %v585 = vunpack.c.l.bf16 %v297
  %v586 = vunpack.c.l.bf16 %v298
  %v587 = vunpack.c.l.bf16 %v299
  %v588 = vunpack.c.l.bf16 %v300
  %v589 = vunpack.c.l.bf16 %v301
  %v590 = vunpack.c.l.bf16 %v302
  %v591 = vunpack.c.l.bf16 %v303
  %v592 = vunpack.c.l.bf16 %v304
  %v593 = vunpack.c.l.bf16 %v305
  %v594 = vunpack.c.l.bf16 %v306
  %v595 = vunpack.c.l.bf16 %v307
  %v596 = vunpack.c.l.bf16 %v308
  %v597 = vunpack.c.l.bf16 %v309
  %v598 = vunpack.c.l.bf16 %v310
  %v599 = vunpack.c.l.bf16 %v311
  %v600 = vunpack.c.l.bf16 %v312
  %v601 = vunpack.c.l.bf16 %v313
  %v602 = vunpack.c.l.bf16 %v314
  %v603 = vld [vmem:[%s0] sm:$0x1]
  %v605 = vlaneseq
  %v606 = vshrl.u32 %v605, 7
  %v607 = vsub.s32 0, %v606
  %v608 = vrot.slane %v603, %v607
  %v610 = vmul.f32 %v315, %v608
  %v611 = vmul.f32 %v316, %v608
  %v612 = vmul.f32 %v317, %v608
  %v613 = vmul.f32 %v318, %v608
  %v614 = vmul.f32 %v319, %v608
  %v615 = vmul.f32 %v320, %v608
  %v616 = vmul.f32 %v321, %v608
  %v617 = vmul.f32 %v322, %v608
  %v618 = vmul.f32 %v323, %v608
  %v619 = vmul.f32 %v324, %v608
  %v620 = vmul.f32 %v325, %v608
  %v621 = vmul.f32 %v326, %v608
  %v622 = vmul.f32 %v327, %v608
  %v623 = vmul.f32 %v328, %v608
  %v624 = vmul.f32 %v329, %v608
  %v625 = vmul.f32 %v330, %v608
  %v626 = vmul.f32 %v331, %v608
  %v627 = vmul.f32 %v332, %v608
  %v628 = vmul.f32 %v333, %v608
  %v629 = vmul.f32 %v334, %v608
  %v630 = vmul.f32 %v335, %v608
  %v631 = vmul.f32 %v336, %v608
  %v632 = vmul.f32 %v337, %v608
  %v633 = vmul.f32 %v338, %v608
  %v634 = vmul.f32 %v339, %v608
  %v635 = vmul.f32 %v340, %v608
  %v636 = vmul.f32 %v341, %v608
  %v637 = vmul.f32 %v342, %v608
  %v638 = vmul.f32 %v343, %v608
  %v639 = vmul.f32 %v344, %v608
  %v640 = vmul.f32 %v345, %v608
  %v641 = vmul.f32 %v346, %v608
  %v642 = vmul.f32 %v347, %v608
  %v643 = vmul.f32 %v348, %v608
  %v644 = vmul.f32 %v349, %v608
  %v645 = vmul.f32 %v350, %v608
  %v646 = vmul.f32 %v351, %v608
  %v647 = vmul.f32 %v352, %v608
  %v648 = vmul.f32 %v353, %v608
  %v649 = vmul.f32 %v354, %v608
  %v650 = vmul.f32 %v355, %v608
  %v651 = vmul.f32 %v356, %v608
  %v652 = vmul.f32 %v357, %v608
  %v653 = vmul.f32 %v358, %v608
  %v654 = vmul.f32 %v359, %v608
  %v655 = vmul.f32 %v360, %v608
  %v656 = vmul.f32 %v361, %v608
  %v657 = vmul.f32 %v362, %v608
  %v658 = vmul.f32 %v363, %v608
  %v659 = vmul.f32 %v364, %v608
  %v660 = vmul.f32 %v365, %v608
  %v661 = vmul.f32 %v366, %v608
  %v662 = vmul.f32 %v367, %v608
  %v663 = vmul.f32 %v368, %v608
  %v664 = vmul.f32 %v369, %v608
  %v665 = vmul.f32 %v370, %v608
  %v666 = vmul.f32 %v371, %v608
  %v667 = vmul.f32 %v372, %v608
  %v668 = vmul.f32 %v373, %v608
  %v669 = vmul.f32 %v374, %v608
  %v670 = vmul.f32 %v375, %v608
  %v671 = vmul.f32 %v376, %v608
  %v672 = vmul.f32 %v377, %v608
  %v673 = vmul.f32 %v378, %v608
  %v674 = vmul.f32 %v379, %v608
  %v675 = vmul.f32 %v380, %v608
  %v676 = vmul.f32 %v381, %v608
  %v677 = vmul.f32 %v382, %v608
  %v678 = vmul.f32 %v383, %v608
  %v679 = vmul.f32 %v384, %v608
  %v680 = vmul.f32 %v385, %v608
  %v681 = vmul.f32 %v386, %v608
  %v682 = vmul.f32 %v387, %v608
  %v683 = vmul.f32 %v388, %v608
  %v684 = vmul.f32 %v389, %v608
  %v685 = vmul.f32 %v390, %v608
  %v686 = vmul.f32 %v391, %v608
  %v687 = vmul.f32 %v392, %v608
  %v688 = vmul.f32 %v393, %v608
  %v689 = vmul.f32 %v394, %v608
  %v690 = vmul.f32 %v395, %v608
  %v691 = vmul.f32 %v396, %v608
  %v692 = vmul.f32 %v397, %v608
  %v693 = vmul.f32 %v398, %v608
  %v694 = vmul.f32 %v399, %v608
  %v695 = vmul.f32 %v400, %v608
  %v696 = vmul.f32 %v401, %v608
  %v697 = vmul.f32 %v402, %v608
  %v698 = vmul.f32 %v403, %v608
  %v699 = vmul.f32 %v404, %v608
  %v700 = vmul.f32 %v405, %v608
  %v701 = vmul.f32 %v406, %v608
  %v702 = vmul.f32 %v407, %v608
  %v703 = vmul.f32 %v408, %v608
  %v704 = vmul.f32 %v409, %v608
  %v705 = vmul.f32 %v410, %v608
  %v706 = vmul.f32 %v411, %v608
  %v707 = vmul.f32 %v412, %v608
  %v708 = vmul.f32 %v413, %v608
  %v709 = vmul.f32 %v414, %v608
  %v710 = vmul.f32 %v415, %v608
  %v711 = vmul.f32 %v416, %v608
  %v712 = vmul.f32 %v417, %v608
  %v713 = vmul.f32 %v418, %v608
  %v714 = vmul.f32 %v419, %v608
  %v715 = vmul.f32 %v420, %v608
  %v716 = vmul.f32 %v421, %v608
  %v717 = vmul.f32 %v422, %v608
  %v718 = vmul.f32 %v423, %v608
  %v719 = vmul.f32 %v424, %v608
  %v720 = vmul.f32 %v425, %v608
  %v721 = vmul.f32 %v426, %v608
  %v722 = vmul.f32 %v427, %v608
  %v723 = vmul.f32 %v428, %v608
  %v724 = vmul.f32 %v429, %v608
  %v725 = vmul.f32 %v430, %v608
  %v726 = vmul.f32 %v431, %v608
  %v727 = vmul.f32 %v432, %v608
  %v728 = vmul.f32 %v433, %v608
  %v729 = vmul.f32 %v434, %v608
  %v730 = vmul.f32 %v435, %v608
  %v731 = vmul.f32 %v436, %v608
  %v732 = vmul.f32 %v437, %v608
  %v733 = vmul.f32 %v438, %v608
  %v734 = vmul.f32 %v439, %v608
  %v735 = vmul.f32 %v440, %v608
  %v736 = vmul.f32 %v441, %v608
  %v737 = vmul.f32 %v442, %v608
  %v738 = vmul.f32 %v443, %v608
  %v739 = vmul.f32 %v444, %v608
  %v740 = vmul.f32 %v445, %v608
  %v741 = vmul.f32 %v446, %v608
  %v742 = vmul.f32 %v447, %v608
  %v743 = vmul.f32 %v448, %v608
  %v744 = vmul.f32 %v449, %v608
  %v745 = vmul.f32 %v450, %v608
  %v746 = vmul.f32 %v451, %v608
  %v747 = vmul.f32 %v452, %v608
  %v748 = vmul.f32 %v453, %v608
  %v749 = vmul.f32 %v454, %v608
  %v750 = vmul.f32 %v455, %v608
  %v751 = vmul.f32 %v456, %v608
  %v752 = vmul.f32 %v457, %v608
  %v753 = vmul.f32 %v458, %v608
  %v754 = vmul.f32 %v459, %v608
  %v755 = vmul.f32 %v460, %v608
  %v756 = vmul.f32 %v461, %v608
  %v757 = vmul.f32 %v462, %v608
  %v758 = vmul.f32 %v463, %v608
  %v759 = vmul.f32 %v464, %v608
  %v760 = vmul.f32 %v465, %v608
  %v761 = vmul.f32 %v466, %v608
  %v762 = vmul.f32 %v467, %v608
  %v763 = vmul.f32 %v468, %v608
  %v764 = vmul.f32 %v469, %v608
  %v765 = vmul.f32 %v470, %v608
  %v766 = vmul.f32 %v471, %v608
  %v767 = vmul.f32 %v472, %v608
  %v768 = vmul.f32 %v473, %v608
  %v769 = vmul.f32 %v474, %v608
  %v770 = vmul.f32 %v475, %v608
  %v771 = vmul.f32 %v476, %v608
  %v772 = vmul.f32 %v477, %v608
  %v773 = vmul.f32 %v478, %v608
  %v774 = vmul.f32 %v479, %v608
  %v775 = vmul.f32 %v480, %v608
  %v776 = vmul.f32 %v481, %v608
  %v777 = vmul.f32 %v482, %v608
  %v778 = vmul.f32 %v483, %v608
  %v779 = vmul.f32 %v484, %v608
  %v780 = vmul.f32 %v485, %v608
  %v781 = vmul.f32 %v486, %v608
  %v782 = vmul.f32 %v487, %v608
  %v783 = vmul.f32 %v488, %v608
  %v784 = vmul.f32 %v489, %v608
  %v785 = vmul.f32 %v490, %v608
  %v786 = vmul.f32 %v491, %v608
  %v787 = vmul.f32 %v492, %v608
  %v788 = vmul.f32 %v493, %v608
  %v789 = vmul.f32 %v494, %v608
  %v790 = vmul.f32 %v495, %v608
  %v791 = vmul.f32 %v496, %v608
  %v792 = vmul.f32 %v497, %v608
  %v793 = vmul.f32 %v498, %v608
  %v794 = vmul.f32 %v499, %v608
  %v795 = vmul.f32 %v500, %v608
  %v796 = vmul.f32 %v501, %v608
  %v797 = vmul.f32 %v502, %v608
  %v798 = vmul.f32 %v503, %v608
  %v799 = vmul.f32 %v504, %v608
  %v800 = vmul.f32 %v505, %v608
  %v801 = vmul.f32 %v506, %v608
  %v802 = vmul.f32 %v507, %v608
  %v803 = vmul.f32 %v508, %v608
  %v804 = vmul.f32 %v509, %v608
  %v805 = vmul.f32 %v510, %v608
  %v806 = vmul.f32 %v511, %v608
  %v807 = vmul.f32 %v512, %v608
  %v808 = vmul.f32 %v513, %v608
  %v809 = vmul.f32 %v514, %v608
  %v810 = vmul.f32 %v515, %v608
  %v811 = vmul.f32 %v516, %v608
  %v812 = vmul.f32 %v517, %v608
  %v813 = vmul.f32 %v518, %v608
  %v814 = vmul.f32 %v519, %v608
  %v815 = vmul.f32 %v520, %v608
  %v816 = vmul.f32 %v521, %v608
  %v817 = vmul.f32 %v522, %v608
  %v818 = vmul.f32 %v523, %v608
  %v819 = vmul.f32 %v524, %v608
  %v820 = vmul.f32 %v525, %v608
  %v821 = vmul.f32 %v526, %v608
  %v822 = vmul.f32 %v527, %v608
  %v823 = vmul.f32 %v528, %v608
  %v824 = vmul.f32 %v529, %v608
  %v825 = vmul.f32 %v530, %v608
  %v826 = vmul.f32 %v531, %v608
  %v827 = vmul.f32 %v532, %v608
  %v828 = vmul.f32 %v533, %v608
  %v829 = vmul.f32 %v534, %v608
  %v830 = vmul.f32 %v535, %v608
  %v831 = vmul.f32 %v536, %v608
  %v832 = vmul.f32 %v537, %v608
  %v833 = vmul.f32 %v538, %v608
  %v834 = vmul.f32 %v539, %v608
  %v835 = vmul.f32 %v540, %v608
  %v836 = vmul.f32 %v541, %v608
  %v837 = vmul.f32 %v542, %v608
  %v838 = vmul.f32 %v543, %v608
  %v839 = vmul.f32 %v544, %v608
  %v840 = vmul.f32 %v545, %v608
  %v841 = vmul.f32 %v546, %v608
  %v842 = vmul.f32 %v547, %v608
  %v843 = vmul.f32 %v548, %v608
  %v844 = vmul.f32 %v549, %v608
  %v845 = vmul.f32 %v550, %v608
  %v846 = vmul.f32 %v551, %v608
  %v847 = vmul.f32 %v552, %v608
  %v848 = vmul.f32 %v553, %v608
  %v849 = vmul.f32 %v554, %v608
  %v850 = vmul.f32 %v555, %v608
  %v851 = vmul.f32 %v556, %v608
  %v852 = vmul.f32 %v557, %v608
  %v853 = vmul.f32 %v558, %v608
  %v854 = vmul.f32 %v559, %v608
  %v855 = vmul.f32 %v560, %v608
  %v856 = vmul.f32 %v561, %v608
  %v857 = vmul.f32 %v562, %v608
  %v858 = vmul.f32 %v563, %v608
  %v859 = vmul.f32 %v564, %v608
  %v860 = vmul.f32 %v565, %v608
  %v861 = vmul.f32 %v566, %v608
  %v862 = vmul.f32 %v567, %v608
  %v863 = vmul.f32 %v568, %v608
  %v864 = vmul.f32 %v569, %v608
  %v865 = vmul.f32 %v570, %v608
  %v866 = vmul.f32 %v571, %v608
  %v867 = vmul.f32 %v572, %v608
  %v868 = vmul.f32 %v573, %v608
  %v869 = vmul.f32 %v574, %v608
  %v870 = vmul.f32 %v575, %v608
  %v871 = vmul.f32 %v576, %v608
  %v872 = vmul.f32 %v577, %v608
  %v873 = vmul.f32 %v578, %v608
  %v874 = vmul.f32 %v579, %v608
  %v875 = vmul.f32 %v580, %v608
  %v876 = vmul.f32 %v581, %v608
  %v877 = vmul.f32 %v582, %v608
  %v878 = vmul.f32 %v583, %v608
  %v879 = vmul.f32 %v584, %v608
  %v880 = vmul.f32 %v585, %v608
  %v881 = vmul.f32 %v586, %v608
  %v882 = vmul.f32 %v587, %v608
  %v883 = vmul.f32 %v588, %v608
  %v884 = vmul.f32 %v589, %v608
  %v885 = vmul.f32 %v590, %v608
  %v886 = vmul.f32 %v591, %v608
  %v887 = vmul.f32 %v592, %v608
  %v888 = vmul.f32 %v593, %v608
  %v889 = vmul.f32 %v594, %v608
  %v890 = vmul.f32 %v595, %v608
  %v891 = vmul.f32 %v596, %v608
  %v892 = vmul.f32 %v597, %v608
  %v893 = vmul.f32 %v598, %v608
  %v894 = vmul.f32 %v599, %v608
  %v895 = vmul.f32 %v600, %v608
  %v896 = vmul.f32 %v601, %v608
  %v897 = vmul.f32 %v602, %v608
  %vm898 = vcmask 785408
  %v899 = vsel %vm898, %v610, 0.0
  %900 = vadd.xlane.f32.xlu0 %v899
  %v901 = vpop.xlane.xlu0 %900
  %v902 = vsel %vm898, %v611, 0.0
  %903 = vadd.xlane.f32.xlu0 %v902
  %v904 = vpop.xlane.xlu0 %903
  %v905 = vsel %vm898, %v612, 0.0
  %906 = vadd.xlane.f32.xlu0 %v905
  %v907 = vpop.xlane.xlu0 %906
  %v908 = vsel %vm898, %v613, 0.0
  %909 = vadd.xlane.f32.xlu0 %v908
  %v910 = vpop.xlane.xlu0 %909
  %v911 = vsel %vm898, %v614, 0.0
  %912 = vadd.xlane.f32.xlu0 %v911
  %v913 = vpop.xlane.xlu0 %912
  %v914 = vsel %vm898, %v615, 0.0
  %915 = vadd.xlane.f32.xlu0 %v914
  %v916 = vpop.xlane.xlu0 %915
  %v917 = vsel %vm898, %v616, 0.0
  %918 = vadd.xlane.f32.xlu0 %v917
  %v919 = vpop.xlane.xlu0 %918
  %v920 = vsel %vm898, %v617, 0.0
  %921 = vadd.xlane.f32.xlu0 %v920
  %v922 = vpop.xlane.xlu0 %921
  %v923 = vsel %vm898, %v618, 0.0
  %924 = vadd.xlane.f32.xlu0 %v923
  %v925 = vpop.xlane.xlu0 %924
  %v926 = vsel %vm898, %v619, 0.0
  %927 = vadd.xlane.f32.xlu0 %v926
  %v928 = vpop.xlane.xlu0 %927
  %v929 = vsel %vm898, %v620, 0.0
  %930 = vadd.xlane.f32.xlu0 %v929
  %v931 = vpop.xlane.xlu0 %930
  %v932 = vsel %vm898, %v621, 0.0
  %933 = vadd.xlane.f32.xlu0 %v932
  %v934 = vpop.xlane.xlu0 %933
  %v935 = vsel %vm898, %v622, 0.0
  %936 = vadd.xlane.f32.xlu0 %v935
  %v937 = vpop.xlane.xlu0 %936
  %v938 = vsel %vm898, %v623, 0.0
  %939 = vadd.xlane.f32.xlu0 %v938
  %v940 = vpop.xlane.xlu0 %939
  %v941 = vsel %vm898, %v624, 0.0
  %942 = vadd.xlane.f32.xlu0 %v941
  %v943 = vpop.xlane.xlu0 %942
  %v944 = vsel %vm898, %v625, 0.0
  %945 = vadd.xlane.f32.xlu0 %v944
  %v946 = vpop.xlane.xlu0 %945
  %v947 = vsel %vm898, %v626, 0.0
  %948 = vadd.xlane.f32.xlu0 %v947
  %v949 = vpop.xlane.xlu0 %948
  %v950 = vsel %vm898, %v627, 0.0
  %951 = vadd.xlane.f32.xlu0 %v950
  %v952 = vpop.xlane.xlu0 %951
  %v953 = vsel %vm898, %v628, 0.0
  %954 = vadd.xlane.f32.xlu0 %v953
  %v955 = vpop.xlane.xlu0 %954
  %v956 = vsel %vm898, %v629, 0.0
  %957 = vadd.xlane.f32.xlu0 %v956
  %v958 = vpop.xlane.xlu0 %957
  %v959 = vsel %vm898, %v630, 0.0
  %960 = vadd.xlane.f32.xlu0 %v959
  %v961 = vpop.xlane.xlu0 %960
  %v962 = vsel %vm898, %v631, 0.0
  %963 = vadd.xlane.f32.xlu0 %v962
  %v964 = vpop.xlane.xlu0 %963
  %v965 = vsel %vm898, %v632, 0.0
  %966 = vadd.xlane.f32.xlu0 %v965
  %v967 = vpop.xlane.xlu0 %966
  %v968 = vsel %vm898, %v633, 0.0
  %969 = vadd.xlane.f32.xlu0 %v968
  %v970 = vpop.xlane.xlu0 %969
  %v971 = vsel %vm898, %v634, 0.0
  %972 = vadd.xlane.f32.xlu0 %v971
  %v973 = vpop.xlane.xlu0 %972
  %v974 = vsel %vm898, %v635, 0.0
  %975 = vadd.xlane.f32.xlu0 %v974
  %v976 = vpop.xlane.xlu0 %975
  %v977 = vsel %vm898, %v636, 0.0
  %978 = vadd.xlane.f32.xlu0 %v977
  %v979 = vpop.xlane.xlu0 %978
  %v980 = vsel %vm898, %v637, 0.0
  %981 = vadd.xlane.f32.xlu0 %v980
  %v982 = vpop.xlane.xlu0 %981
  %v983 = vsel %vm898, %v638, 0.0
  %984 = vadd.xlane.f32.xlu0 %v983
  %v985 = vpop.xlane.xlu0 %984
  %v986 = vsel %vm898, %v639, 0.0
  %987 = vadd.xlane.f32.xlu0 %v986
  %v988 = vpop.xlane.xlu0 %987
  %v989 = vsel %vm898, %v640, 0.0
  %990 = vadd.xlane.f32.xlu0 %v989
  %v991 = vpop.xlane.xlu0 %990
  %v992 = vsel %vm898, %v641, 0.0
  %993 = vadd.xlane.f32.xlu0 %v992
  %v994 = vpop.xlane.xlu0 %993
  %v995 = vsel %vm898, %v642, 0.0
  %996 = vadd.xlane.f32.xlu0 %v995
  %v997 = vpop.xlane.xlu0 %996
  %v998 = vsel %vm898, %v643, 0.0
  %999 = vadd.xlane.f32.xlu0 %v998
  %v1000 = vpop.xlane.xlu0 %999
  %v1001 = vsel %vm898, %v644, 0.0
  %1002 = vadd.xlane.f32.xlu0 %v1001
  %v1003 = vpop.xlane.xlu0 %1002
  %v1004 = vsel %vm898, %v645, 0.0
  %1005 = vadd.xlane.f32.xlu0 %v1004
  %v1006 = vpop.xlane.xlu0 %1005
  %v1007 = vsel %vm898, %v646, 0.0
  %1008 = vadd.xlane.f32.xlu0 %v1007
  %v1009 = vpop.xlane.xlu0 %1008
  %v1010 = vsel %vm898, %v647, 0.0
  %1011 = vadd.xlane.f32.xlu0 %v1010
  %v1012 = vpop.xlane.xlu0 %1011
  %v1013 = vsel %vm898, %v648, 0.0
  %1014 = vadd.xlane.f32.xlu0 %v1013
  %v1015 = vpop.xlane.xlu0 %1014
  %v1016 = vsel %vm898, %v649, 0.0
  %1017 = vadd.xlane.f32.xlu0 %v1016
  %v1018 = vpop.xlane.xlu0 %1017
  %v1019 = vsel %vm898, %v650, 0.0
  %1020 = vadd.xlane.f32.xlu0 %v1019
  %v1021 = vpop.xlane.xlu0 %1020
  %v1022 = vsel %vm898, %v651, 0.0
  %1023 = vadd.xlane.f32.xlu0 %v1022
  %v1024 = vpop.xlane.xlu0 %1023
  %v1025 = vsel %vm898, %v652, 0.0
  %1026 = vadd.xlane.f32.xlu0 %v1025
  %v1027 = vpop.xlane.xlu0 %1026
  %v1028 = vsel %vm898, %v653, 0.0
  %1029 = vadd.xlane.f32.xlu0 %v1028
  %v1030 = vpop.xlane.xlu0 %1029
  %v1031 = vsel %vm898, %v654, 0.0
  %1032 = vadd.xlane.f32.xlu0 %v1031
  %v1033 = vpop.xlane.xlu0 %1032
  %v1034 = vsel %vm898, %v655, 0.0
  %1035 = vadd.xlane.f32.xlu0 %v1034
  %v1036 = vpop.xlane.xlu0 %1035
  %v1037 = vsel %vm898, %v656, 0.0
  %1038 = vadd.xlane.f32.xlu0 %v1037
  %v1039 = vpop.xlane.xlu0 %1038
  %v1040 = vsel %vm898, %v657, 0.0
  %1041 = vadd.xlane.f32.xlu0 %v1040
  %v1042 = vpop.xlane.xlu0 %1041
  %v1043 = vsel %vm898, %v658, 0.0
  %1044 = vadd.xlane.f32.xlu0 %v1043
  %v1045 = vpop.xlane.xlu0 %1044
  %v1046 = vsel %vm898, %v659, 0.0
  %1047 = vadd.xlane.f32.xlu0 %v1046
  %v1048 = vpop.xlane.xlu0 %1047
  %v1049 = vsel %vm898, %v660, 0.0
  %1050 = vadd.xlane.f32.xlu0 %v1049
  %v1051 = vpop.xlane.xlu0 %1050
  %v1052 = vsel %vm898, %v661, 0.0
  %1053 = vadd.xlane.f32.xlu0 %v1052
  %v1054 = vpop.xlane.xlu0 %1053
  %v1055 = vsel %vm898, %v662, 0.0
  %1056 = vadd.xlane.f32.xlu0 %v1055
  %v1057 = vpop.xlane.xlu0 %1056
  %v1058 = vsel %vm898, %v663, 0.0
  %1059 = vadd.xlane.f32.xlu0 %v1058
  %v1060 = vpop.xlane.xlu0 %1059
  %v1061 = vsel %vm898, %v664, 0.0
  %1062 = vadd.xlane.f32.xlu0 %v1061
  %v1063 = vpop.xlane.xlu0 %1062
  %v1064 = vsel %vm898, %v665, 0.0
  %1065 = vadd.xlane.f32.xlu0 %v1064
  %v1066 = vpop.xlane.xlu0 %1065
  %v1067 = vsel %vm898, %v666, 0.0
  %1068 = vadd.xlane.f32.xlu0 %v1067
  %v1069 = vpop.xlane.xlu0 %1068
  %v1070 = vsel %vm898, %v667, 0.0
  %1071 = vadd.xlane.f32.xlu0 %v1070
  %v1072 = vpop.xlane.xlu0 %1071
  %v1073 = vsel %vm898, %v668, 0.0
  %1074 = vadd.xlane.f32.xlu0 %v1073
  %v1075 = vpop.xlane.xlu0 %1074
  %v1076 = vsel %vm898, %v669, 0.0
  %1077 = vadd.xlane.f32.xlu0 %v1076
  %v1078 = vpop.xlane.xlu0 %1077
  %v1079 = vsel %vm898, %v670, 0.0
  %1080 = vadd.xlane.f32.xlu0 %v1079
  %v1081 = vpop.xlane.xlu0 %1080
  %v1082 = vsel %vm898, %v671, 0.0
  %1083 = vadd.xlane.f32.xlu0 %v1082
  %v1084 = vpop.xlane.xlu0 %1083
  %v1085 = vsel %vm898, %v672, 0.0
  %1086 = vadd.xlane.f32.xlu0 %v1085
  %v1087 = vpop.xlane.xlu0 %1086
  %v1088 = vsel %vm898, %v673, 0.0
  %1089 = vadd.xlane.f32.xlu0 %v1088
  %v1090 = vpop.xlane.xlu0 %1089
  %v1091 = vsel %vm898, %v674, 0.0
  %1092 = vadd.xlane.f32.xlu0 %v1091
  %v1093 = vpop.xlane.xlu0 %1092
  %v1094 = vsel %vm898, %v675, 0.0
  %1095 = vadd.xlane.f32.xlu0 %v1094
  %v1096 = vpop.xlane.xlu0 %1095
  %v1097 = vsel %vm898, %v676, 0.0
  %1098 = vadd.xlane.f32.xlu0 %v1097
  %v1099 = vpop.xlane.xlu0 %1098
  %v1100 = vsel %vm898, %v677, 0.0
  %1101 = vadd.xlane.f32.xlu0 %v1100
  %v1102 = vpop.xlane.xlu0 %1101
  %v1103 = vsel %vm898, %v678, 0.0
  %1104 = vadd.xlane.f32.xlu0 %v1103
  %v1105 = vpop.xlane.xlu0 %1104
  %v1106 = vsel %vm898, %v679, 0.0
  %1107 = vadd.xlane.f32.xlu0 %v1106
  %v1108 = vpop.xlane.xlu0 %1107
  %v1109 = vsel %vm898, %v680, 0.0
  %1110 = vadd.xlane.f32.xlu0 %v1109
  %v1111 = vpop.xlane.xlu0 %1110
  %v1112 = vsel %vm898, %v681, 0.0
  %1113 = vadd.xlane.f32.xlu0 %v1112
  %v1114 = vpop.xlane.xlu0 %1113
  %v1115 = vsel %vm898, %v682, 0.0
  %1116 = vadd.xlane.f32.xlu0 %v1115
  %v1117 = vpop.xlane.xlu0 %1116
  %v1118 = vsel %vm898, %v683, 0.0
  %1119 = vadd.xlane.f32.xlu0 %v1118
  %v1120 = vpop.xlane.xlu0 %1119
  %v1121 = vsel %vm898, %v684, 0.0
  %1122 = vadd.xlane.f32.xlu0 %v1121
  %v1123 = vpop.xlane.xlu0 %1122
  %v1124 = vsel %vm898, %v685, 0.0
  %1125 = vadd.xlane.f32.xlu0 %v1124
  %v1126 = vpop.xlane.xlu0 %1125
  %v1127 = vsel %vm898, %v686, 0.0
  %1128 = vadd.xlane.f32.xlu0 %v1127
  %v1129 = vpop.xlane.xlu0 %1128
  %v1130 = vsel %vm898, %v687, 0.0
  %1131 = vadd.xlane.f32.xlu0 %v1130
  %v1132 = vpop.xlane.xlu0 %1131
  %v1133 = vsel %vm898, %v688, 0.0
  %1134 = vadd.xlane.f32.xlu0 %v1133
  %v1135 = vpop.xlane.xlu0 %1134
  %v1136 = vsel %vm898, %v689, 0.0
  %1137 = vadd.xlane.f32.xlu0 %v1136
  %v1138 = vpop.xlane.xlu0 %1137
  %v1139 = vsel %vm898, %v690, 0.0
  %1140 = vadd.xlane.f32.xlu0 %v1139
  %v1141 = vpop.xlane.xlu0 %1140
  %v1142 = vsel %vm898, %v691, 0.0
  %1143 = vadd.xlane.f32.xlu0 %v1142
  %v1144 = vpop.xlane.xlu0 %1143
  %v1145 = vsel %vm898, %v692, 0.0
  %1146 = vadd.xlane.f32.xlu0 %v1145
  %v1147 = vpop.xlane.xlu0 %1146
  %v1148 = vsel %vm898, %v693, 0.0
  %1149 = vadd.xlane.f32.xlu0 %v1148
  %v1150 = vpop.xlane.xlu0 %1149
  %v1151 = vsel %vm898, %v694, 0.0
  %1152 = vadd.xlane.f32.xlu0 %v1151
  %v1153 = vpop.xlane.xlu0 %1152
  %v1154 = vsel %vm898, %v695, 0.0
  %1155 = vadd.xlane.f32.xlu0 %v1154
  %v1156 = vpop.xlane.xlu0 %1155
  %v1157 = vsel %vm898, %v696, 0.0
  %1158 = vadd.xlane.f32.xlu0 %v1157
  %v1159 = vpop.xlane.xlu0 %1158
  %v1160 = vsel %vm898, %v697, 0.0
  %1161 = vadd.xlane.f32.xlu0 %v1160
  %v1162 = vpop.xlane.xlu0 %1161
  %v1163 = vsel %vm898, %v698, 0.0
  %1164 = vadd.xlane.f32.xlu0 %v1163
  %v1165 = vpop.xlane.xlu0 %1164
  %v1166 = vsel %vm898, %v699, 0.0
  %1167 = vadd.xlane.f32.xlu0 %v1166
  %v1168 = vpop.xlane.xlu0 %1167
  %v1169 = vsel %vm898, %v700, 0.0
  %1170 = vadd.xlane.f32.xlu0 %v1169
  %v1171 = vpop.xlane.xlu0 %1170
  %v1172 = vsel %vm898, %v701, 0.0
  %1173 = vadd.xlane.f32.xlu0 %v1172
  %v1174 = vpop.xlane.xlu0 %1173
  %v1175 = vsel %vm898, %v702, 0.0
  %1176 = vadd.xlane.f32.xlu0 %v1175
  %v1177 = vpop.xlane.xlu0 %1176
  %v1178 = vsel %vm898, %v703, 0.0
  %1179 = vadd.xlane.f32.xlu0 %v1178
  %v1180 = vpop.xlane.xlu0 %1179
  %v1181 = vsel %vm898, %v704, 0.0
  %1182 = vadd.xlane.f32.xlu0 %v1181
  %v1183 = vpop.xlane.xlu0 %1182
  %v1184 = vsel %vm898, %v705, 0.0
  %1185 = vadd.xlane.f32.xlu0 %v1184
  %v1186 = vpop.xlane.xlu0 %1185
  %v1187 = vsel %vm898, %v706, 0.0
  %1188 = vadd.xlane.f32.xlu0 %v1187
  %v1189 = vpop.xlane.xlu0 %1188
  %v1190 = vsel %vm898, %v707, 0.0
  %1191 = vadd.xlane.f32.xlu0 %v1190
  %v1192 = vpop.xlane.xlu0 %1191
  %v1193 = vsel %vm898, %v708, 0.0
  %1194 = vadd.xlane.f32.xlu0 %v1193
  %v1195 = vpop.xlane.xlu0 %1194
  %v1196 = vsel %vm898, %v709, 0.0
  %1197 = vadd.xlane.f32.xlu0 %v1196
  %v1198 = vpop.xlane.xlu0 %1197
  %v1199 = vsel %vm898, %v710, 0.0
  %1200 = vadd.xlane.f32.xlu0 %v1199
  %v1201 = vpop.xlane.xlu0 %1200
  %v1202 = vsel %vm898, %v711, 0.0
  %1203 = vadd.xlane.f32.xlu0 %v1202
  %v1204 = vpop.xlane.xlu0 %1203
  %v1205 = vsel %vm898, %v712, 0.0
  %1206 = vadd.xlane.f32.xlu0 %v1205
  %v1207 = vpop.xlane.xlu0 %1206
  %v1208 = vsel %vm898, %v713, 0.0
  %1209 = vadd.xlane.f32.xlu0 %v1208
  %v1210 = vpop.xlane.xlu0 %1209
  %v1211 = vsel %vm898, %v714, 0.0
  %1212 = vadd.xlane.f32.xlu0 %v1211
  %v1213 = vpop.xlane.xlu0 %1212
  %v1214 = vsel %vm898, %v715, 0.0
  %1215 = vadd.xlane.f32.xlu0 %v1214
  %v1216 = vpop.xlane.xlu0 %1215
  %v1217 = vsel %vm898, %v716, 0.0
  %1218 = vadd.xlane.f32.xlu0 %v1217
  %v1219 = vpop.xlane.xlu0 %1218
  %v1220 = vsel %vm898, %v717, 0.0
  %1221 = vadd.xlane.f32.xlu0 %v1220
  %v1222 = vpop.xlane.xlu0 %1221
  %v1223 = vsel %vm898, %v718, 0.0
  %1224 = vadd.xlane.f32.xlu0 %v1223
  %v1225 = vpop.xlane.xlu0 %1224
  %v1226 = vsel %vm898, %v719, 0.0
  %1227 = vadd.xlane.f32.xlu0 %v1226
  %v1228 = vpop.xlane.xlu0 %1227
  %v1229 = vsel %vm898, %v720, 0.0
  %1230 = vadd.xlane.f32.xlu0 %v1229
  %v1231 = vpop.xlane.xlu0 %1230
  %v1232 = vsel %vm898, %v721, 0.0
  %1233 = vadd.xlane.f32.xlu0 %v1232
  %v1234 = vpop.xlane.xlu0 %1233
  %v1235 = vsel %vm898, %v722, 0.0
  %1236 = vadd.xlane.f32.xlu0 %v1235
  %v1237 = vpop.xlane.xlu0 %1236
  %v1238 = vsel %vm898, %v723, 0.0
  %1239 = vadd.xlane.f32.xlu0 %v1238
  %v1240 = vpop.xlane.xlu0 %1239
  %v1241 = vsel %vm898, %v724, 0.0
  %1242 = vadd.xlane.f32.xlu0 %v1241
  %v1243 = vpop.xlane.xlu0 %1242
  %v1244 = vsel %vm898, %v725, 0.0
  %1245 = vadd.xlane.f32.xlu0 %v1244
  %v1246 = vpop.xlane.xlu0 %1245
  %v1247 = vsel %vm898, %v726, 0.0
  %1248 = vadd.xlane.f32.xlu0 %v1247
  %v1249 = vpop.xlane.xlu0 %1248
  %v1250 = vsel %vm898, %v727, 0.0
  %1251 = vadd.xlane.f32.xlu0 %v1250
  %v1252 = vpop.xlane.xlu0 %1251
  %v1253 = vsel %vm898, %v728, 0.0
  %1254 = vadd.xlane.f32.xlu0 %v1253
  %v1255 = vpop.xlane.xlu0 %1254
  %v1256 = vsel %vm898, %v729, 0.0
  %1257 = vadd.xlane.f32.xlu0 %v1256
  %v1258 = vpop.xlane.xlu0 %1257
  %v1259 = vsel %vm898, %v730, 0.0
  %1260 = vadd.xlane.f32.xlu0 %v1259
  %v1261 = vpop.xlane.xlu0 %1260
  %v1262 = vsel %vm898, %v731, 0.0
  %1263 = vadd.xlane.f32.xlu0 %v1262
  %v1264 = vpop.xlane.xlu0 %1263
  %v1265 = vsel %vm898, %v732, 0.0
  %1266 = vadd.xlane.f32.xlu0 %v1265
  %v1267 = vpop.xlane.xlu0 %1266
  %v1268 = vsel %vm898, %v733, 0.0
  %1269 = vadd.xlane.f32.xlu0 %v1268
  %v1270 = vpop.xlane.xlu0 %1269
  %v1271 = vsel %vm898, %v734, 0.0
  %1272 = vadd.xlane.f32.xlu0 %v1271
  %v1273 = vpop.xlane.xlu0 %1272
  %v1274 = vsel %vm898, %v735, 0.0
  %1275 = vadd.xlane.f32.xlu0 %v1274
  %v1276 = vpop.xlane.xlu0 %1275
  %v1277 = vsel %vm898, %v736, 0.0
  %1278 = vadd.xlane.f32.xlu0 %v1277
  %v1279 = vpop.xlane.xlu0 %1278
  %v1280 = vsel %vm898, %v737, 0.0
  %1281 = vadd.xlane.f32.xlu0 %v1280
  %v1282 = vpop.xlane.xlu0 %1281
  %v1283 = vsel %vm898, %v738, 0.0
  %1284 = vadd.xlane.f32.xlu0 %v1283
  %v1285 = vpop.xlane.xlu0 %1284
  %v1286 = vsel %vm898, %v739, 0.0
  %1287 = vadd.xlane.f32.xlu0 %v1286
  %v1288 = vpop.xlane.xlu0 %1287
  %v1289 = vsel %vm898, %v740, 0.0
  %1290 = vadd.xlane.f32.xlu0 %v1289
  %v1291 = vpop.xlane.xlu0 %1290
  %v1292 = vsel %vm898, %v741, 0.0
  %1293 = vadd.xlane.f32.xlu0 %v1292
  %v1294 = vpop.xlane.xlu0 %1293
  %v1295 = vsel %vm898, %v742, 0.0
  %1296 = vadd.xlane.f32.xlu0 %v1295
  %v1297 = vpop.xlane.xlu0 %1296
  %v1298 = vsel %vm898, %v743, 0.0
  %1299 = vadd.xlane.f32.xlu0 %v1298
  %v1300 = vpop.xlane.xlu0 %1299
  %v1301 = vsel %vm898, %v744, 0.0
  %1302 = vadd.xlane.f32.xlu0 %v1301
  %v1303 = vpop.xlane.xlu0 %1302
  %v1304 = vsel %vm898, %v745, 0.0
  %1305 = vadd.xlane.f32.xlu0 %v1304
  %v1306 = vpop.xlane.xlu0 %1305
  %v1307 = vsel %vm898, %v746, 0.0
  %1308 = vadd.xlane.f32.xlu0 %v1307
  %v1309 = vpop.xlane.xlu0 %1308
  %v1310 = vsel %vm898, %v747, 0.0
  %1311 = vadd.xlane.f32.xlu0 %v1310
  %v1312 = vpop.xlane.xlu0 %1311
  %v1313 = vsel %vm898, %v748, 0.0
  %1314 = vadd.xlane.f32.xlu0 %v1313
  %v1315 = vpop.xlane.xlu0 %1314
  %v1316 = vsel %vm898, %v749, 0.0
  %1317 = vadd.xlane.f32.xlu0 %v1316
  %v1318 = vpop.xlane.xlu0 %1317
  %v1319 = vsel %vm898, %v750, 0.0
  %1320 = vadd.xlane.f32.xlu0 %v1319
  %v1321 = vpop.xlane.xlu0 %1320
  %v1322 = vsel %vm898, %v751, 0.0
  %1323 = vadd.xlane.f32.xlu0 %v1322
  %v1324 = vpop.xlane.xlu0 %1323
  %v1325 = vsel %vm898, %v752, 0.0
  %1326 = vadd.xlane.f32.xlu0 %v1325
  %v1327 = vpop.xlane.xlu0 %1326
  %v1328 = vsel %vm898, %v753, 0.0
  %1329 = vadd.xlane.f32.xlu0 %v1328
  %v1330 = vpop.xlane.xlu0 %1329
  %v1331 = vsel %vm898, %v754, 0.0
  %1332 = vadd.xlane.f32.xlu0 %v1331
  %v1333 = vpop.xlane.xlu0 %1332
  %v1334 = vsel %vm898, %v755, 0.0
  %1335 = vadd.xlane.f32.xlu0 %v1334
  %v1336 = vpop.xlane.xlu0 %1335
  %v1337 = vsel %vm898, %v756, 0.0
  %1338 = vadd.xlane.f32.xlu0 %v1337
  %v1339 = vpop.xlane.xlu0 %1338
  %v1340 = vsel %vm898, %v757, 0.0
  %1341 = vadd.xlane.f32.xlu0 %v1340
  %v1342 = vpop.xlane.xlu0 %1341
  %v1343 = vsel %vm898, %v758, 0.0
  %1344 = vadd.xlane.f32.xlu0 %v1343
  %v1345 = vpop.xlane.xlu0 %1344
  %v1346 = vsel %vm898, %v759, 0.0
  %1347 = vadd.xlane.f32.xlu0 %v1346
  %v1348 = vpop.xlane.xlu0 %1347
  %v1349 = vsel %vm898, %v760, 0.0
  %1350 = vadd.xlane.f32.xlu0 %v1349
  %v1351 = vpop.xlane.xlu0 %1350
  %v1352 = vsel %vm898, %v761, 0.0
  %1353 = vadd.xlane.f32.xlu0 %v1352
  %v1354 = vpop.xlane.xlu0 %1353
  %v1355 = vsel %vm898, %v762, 0.0
  %1356 = vadd.xlane.f32.xlu0 %v1355
  %v1357 = vpop.xlane.xlu0 %1356
  %v1358 = vsel %vm898, %v763, 0.0
  %1359 = vadd.xlane.f32.xlu0 %v1358
  %v1360 = vpop.xlane.xlu0 %1359
  %v1361 = vsel %vm898, %v764, 0.0
  %1362 = vadd.xlane.f32.xlu0 %v1361
  %v1363 = vpop.xlane.xlu0 %1362
  %v1364 = vsel %vm898, %v765, 0.0
  %1365 = vadd.xlane.f32.xlu0 %v1364
  %v1366 = vpop.xlane.xlu0 %1365
  %v1367 = vsel %vm898, %v766, 0.0
  %1368 = vadd.xlane.f32.xlu0 %v1367
  %v1369 = vpop.xlane.xlu0 %1368
  %v1370 = vsel %vm898, %v767, 0.0
  %1371 = vadd.xlane.f32.xlu0 %v1370
  %v1372 = vpop.xlane.xlu0 %1371
  %v1373 = vsel %vm898, %v768, 0.0
  %1374 = vadd.xlane.f32.xlu0 %v1373
  %v1375 = vpop.xlane.xlu0 %1374
  %v1376 = vsel %vm898, %v769, 0.0
  %1377 = vadd.xlane.f32.xlu0 %v1376
  %v1378 = vpop.xlane.xlu0 %1377
  %v1379 = vsel %vm898, %v770, 0.0
  %1380 = vadd.xlane.f32.xlu0 %v1379
  %v1381 = vpop.xlane.xlu0 %1380
  %v1382 = vsel %vm898, %v771, 0.0
  %1383 = vadd.xlane.f32.xlu0 %v1382
  %v1384 = vpop.xlane.xlu0 %1383
  %v1385 = vsel %vm898, %v772, 0.0
  %1386 = vadd.xlane.f32.xlu0 %v1385
  %v1387 = vpop.xlane.xlu0 %1386
  %v1388 = vsel %vm898, %v773, 0.0
  %1389 = vadd.xlane.f32.xlu0 %v1388
  %v1390 = vpop.xlane.xlu0 %1389
  %v1391 = vsel %vm898, %v774, 0.0
  %1392 = vadd.xlane.f32.xlu0 %v1391
  %v1393 = vpop.xlane.xlu0 %1392
  %v1394 = vsel %vm898, %v775, 0.0
  %1395 = vadd.xlane.f32.xlu0 %v1394
  %v1396 = vpop.xlane.xlu0 %1395
  %v1397 = vsel %vm898, %v776, 0.0
  %1398 = vadd.xlane.f32.xlu0 %v1397
  %v1399 = vpop.xlane.xlu0 %1398
  %v1400 = vsel %vm898, %v777, 0.0
  %1401 = vadd.xlane.f32.xlu0 %v1400
  %v1402 = vpop.xlane.xlu0 %1401
  %v1403 = vsel %vm898, %v778, 0.0
  %1404 = vadd.xlane.f32.xlu0 %v1403
  %v1405 = vpop.xlane.xlu0 %1404
  %v1406 = vsel %vm898, %v779, 0.0
  %1407 = vadd.xlane.f32.xlu0 %v1406
  %v1408 = vpop.xlane.xlu0 %1407
  %v1409 = vsel %vm898, %v780, 0.0
  %1410 = vadd.xlane.f32.xlu0 %v1409
  %v1411 = vpop.xlane.xlu0 %1410
  %v1412 = vsel %vm898, %v781, 0.0
  %1413 = vadd.xlane.f32.xlu0 %v1412
  %v1414 = vpop.xlane.xlu0 %1413
  %v1415 = vsel %vm898, %v782, 0.0
  %1416 = vadd.xlane.f32.xlu0 %v1415
  %v1417 = vpop.xlane.xlu0 %1416
  %v1418 = vsel %vm898, %v783, 0.0
  %1419 = vadd.xlane.f32.xlu0 %v1418
  %v1420 = vpop.xlane.xlu0 %1419
  %v1421 = vsel %vm898, %v784, 0.0
  %1422 = vadd.xlane.f32.xlu0 %v1421
  %v1423 = vpop.xlane.xlu0 %1422
  %v1424 = vsel %vm898, %v785, 0.0
  %1425 = vadd.xlane.f32.xlu0 %v1424
  %v1426 = vpop.xlane.xlu0 %1425
  %v1427 = vsel %vm898, %v786, 0.0
  %1428 = vadd.xlane.f32.xlu0 %v1427
  %v1429 = vpop.xlane.xlu0 %1428
  %v1430 = vsel %vm898, %v787, 0.0
  %1431 = vadd.xlane.f32.xlu0 %v1430
  %v1432 = vpop.xlane.xlu0 %1431
  %v1433 = vsel %vm898, %v788, 0.0
  %1434 = vadd.xlane.f32.xlu0 %v1433
  %v1435 = vpop.xlane.xlu0 %1434
  %v1436 = vsel %vm898, %v789, 0.0
  %1437 = vadd.xlane.f32.xlu0 %v1436
  %v1438 = vpop.xlane.xlu0 %1437
  %v1439 = vsel %vm898, %v790, 0.0
  %1440 = vadd.xlane.f32.xlu0 %v1439
  %v1441 = vpop.xlane.xlu0 %1440
  %v1442 = vsel %vm898, %v791, 0.0
  %1443 = vadd.xlane.f32.xlu0 %v1442
  %v1444 = vpop.xlane.xlu0 %1443
  %v1445 = vsel %vm898, %v792, 0.0
  %1446 = vadd.xlane.f32.xlu0 %v1445
  %v1447 = vpop.xlane.xlu0 %1446
  %v1448 = vsel %vm898, %v793, 0.0
  %1449 = vadd.xlane.f32.xlu0 %v1448
  %v1450 = vpop.xlane.xlu0 %1449
  %v1451 = vsel %vm898, %v794, 0.0
  %1452 = vadd.xlane.f32.xlu0 %v1451
  %v1453 = vpop.xlane.xlu0 %1452
  %v1454 = vsel %vm898, %v795, 0.0
  %1455 = vadd.xlane.f32.xlu0 %v1454
  %v1456 = vpop.xlane.xlu0 %1455
  %v1457 = vsel %vm898, %v796, 0.0
  %1458 = vadd.xlane.f32.xlu0 %v1457
  %v1459 = vpop.xlane.xlu0 %1458
  %v1460 = vsel %vm898, %v797, 0.0
  %1461 = vadd.xlane.f32.xlu0 %v1460
  %v1462 = vpop.xlane.xlu0 %1461
  %v1463 = vsel %vm898, %v798, 0.0
  %1464 = vadd.xlane.f32.xlu0 %v1463
  %v1465 = vpop.xlane.xlu0 %1464
  %v1466 = vsel %vm898, %v799, 0.0
  %1467 = vadd.xlane.f32.xlu0 %v1466
  %v1468 = vpop.xlane.xlu0 %1467
  %v1469 = vsel %vm898, %v800, 0.0
  %1470 = vadd.xlane.f32.xlu0 %v1469
  %v1471 = vpop.xlane.xlu0 %1470
  %v1472 = vsel %vm898, %v801, 0.0
  %1473 = vadd.xlane.f32.xlu0 %v1472
  %v1474 = vpop.xlane.xlu0 %1473
  %v1475 = vsel %vm898, %v802, 0.0
  %1476 = vadd.xlane.f32.xlu0 %v1475
  %v1477 = vpop.xlane.xlu0 %1476
  %v1478 = vsel %vm898, %v803, 0.0
  %1479 = vadd.xlane.f32.xlu0 %v1478
  %v1480 = vpop.xlane.xlu0 %1479
  %v1481 = vsel %vm898, %v804, 0.0
  %1482 = vadd.xlane.f32.xlu0 %v1481
  %v1483 = vpop.xlane.xlu0 %1482
  %v1484 = vsel %vm898, %v805, 0.0
  %1485 = vadd.xlane.f32.xlu0 %v1484
  %v1486 = vpop.xlane.xlu0 %1485
  %v1487 = vsel %vm898, %v806, 0.0
  %1488 = vadd.xlane.f32.xlu0 %v1487
  %v1489 = vpop.xlane.xlu0 %1488
  %v1490 = vsel %vm898, %v807, 0.0
  %1491 = vadd.xlane.f32.xlu0 %v1490
  %v1492 = vpop.xlane.xlu0 %1491
  %v1493 = vsel %vm898, %v808, 0.0
  %1494 = vadd.xlane.f32.xlu0 %v1493
  %v1495 = vpop.xlane.xlu0 %1494
  %v1496 = vsel %vm898, %v809, 0.0
  %1497 = vadd.xlane.f32.xlu0 %v1496
  %v1498 = vpop.xlane.xlu0 %1497
  %v1499 = vsel %vm898, %v810, 0.0
  %1500 = vadd.xlane.f32.xlu0 %v1499
  %v1501 = vpop.xlane.xlu0 %1500
  %v1502 = vsel %vm898, %v811, 0.0
  %1503 = vadd.xlane.f32.xlu0 %v1502
  %v1504 = vpop.xlane.xlu0 %1503
  %v1505 = vsel %vm898, %v812, 0.0
  %1506 = vadd.xlane.f32.xlu0 %v1505
  %v1507 = vpop.xlane.xlu0 %1506
  %v1508 = vsel %vm898, %v813, 0.0
  %1509 = vadd.xlane.f32.xlu0 %v1508
  %v1510 = vpop.xlane.xlu0 %1509
  %v1511 = vsel %vm898, %v814, 0.0
  %1512 = vadd.xlane.f32.xlu0 %v1511
  %v1513 = vpop.xlane.xlu0 %1512
  %v1514 = vsel %vm898, %v815, 0.0
  %1515 = vadd.xlane.f32.xlu0 %v1514
  %v1516 = vpop.xlane.xlu0 %1515
  %v1517 = vsel %vm898, %v816, 0.0
  %1518 = vadd.xlane.f32.xlu0 %v1517
  %v1519 = vpop.xlane.xlu0 %1518
  %v1520 = vsel %vm898, %v817, 0.0
  %1521 = vadd.xlane.f32.xlu0 %v1520
  %v1522 = vpop.xlane.xlu0 %1521
  %v1523 = vsel %vm898, %v818, 0.0
  %1524 = vadd.xlane.f32.xlu0 %v1523
  %v1525 = vpop.xlane.xlu0 %1524
  %v1526 = vsel %vm898, %v819, 0.0
  %1527 = vadd.xlane.f32.xlu0 %v1526
  %v1528 = vpop.xlane.xlu0 %1527
  %v1529 = vsel %vm898, %v820, 0.0
  %1530 = vadd.xlane.f32.xlu0 %v1529
  %v1531 = vpop.xlane.xlu0 %1530
  %v1532 = vsel %vm898, %v821, 0.0
  %1533 = vadd.xlane.f32.xlu0 %v1532
  %v1534 = vpop.xlane.xlu0 %1533
  %v1535 = vsel %vm898, %v822, 0.0
  %1536 = vadd.xlane.f32.xlu0 %v1535
  %v1537 = vpop.xlane.xlu0 %1536
  %v1538 = vsel %vm898, %v823, 0.0
  %1539 = vadd.xlane.f32.xlu0 %v1538
  %v1540 = vpop.xlane.xlu0 %1539
  %v1541 = vsel %vm898, %v824, 0.0
  %1542 = vadd.xlane.f32.xlu0 %v1541
  %v1543 = vpop.xlane.xlu0 %1542
  %v1544 = vsel %vm898, %v825, 0.0
  %1545 = vadd.xlane.f32.xlu0 %v1544
  %v1546 = vpop.xlane.xlu0 %1545
  %v1547 = vsel %vm898, %v826, 0.0
  %1548 = vadd.xlane.f32.xlu0 %v1547
  %v1549 = vpop.xlane.xlu0 %1548
  %v1550 = vsel %vm898, %v827, 0.0
  %1551 = vadd.xlane.f32.xlu0 %v1550
  %v1552 = vpop.xlane.xlu0 %1551
  %v1553 = vsel %vm898, %v828, 0.0
  %1554 = vadd.xlane.f32.xlu0 %v1553
  %v1555 = vpop.xlane.xlu0 %1554
  %v1556 = vsel %vm898, %v829, 0.0
  %1557 = vadd.xlane.f32.xlu0 %v1556
  %v1558 = vpop.xlane.xlu0 %1557
  %v1559 = vsel %vm898, %v830, 0.0
  %1560 = vadd.xlane.f32.xlu0 %v1559
  %v1561 = vpop.xlane.xlu0 %1560
  %v1562 = vsel %vm898, %v831, 0.0
  %1563 = vadd.xlane.f32.xlu0 %v1562
  %v1564 = vpop.xlane.xlu0 %1563
  %v1565 = vsel %vm898, %v832, 0.0
  %1566 = vadd.xlane.f32.xlu0 %v1565
  %v1567 = vpop.xlane.xlu0 %1566
  %v1568 = vsel %vm898, %v833, 0.0
  %1569 = vadd.xlane.f32.xlu0 %v1568
  %v1570 = vpop.xlane.xlu0 %1569
  %v1571 = vsel %vm898, %v834, 0.0
  %1572 = vadd.xlane.f32.xlu0 %v1571
  %v1573 = vpop.xlane.xlu0 %1572
  %v1574 = vsel %vm898, %v835, 0.0
  %1575 = vadd.xlane.f32.xlu0 %v1574
  %v1576 = vpop.xlane.xlu0 %1575
  %v1577 = vsel %vm898, %v836, 0.0
  %1578 = vadd.xlane.f32.xlu0 %v1577
  %v1579 = vpop.xlane.xlu0 %1578
  %v1580 = vsel %vm898, %v837, 0.0
  %1581 = vadd.xlane.f32.xlu0 %v1580
  %v1582 = vpop.xlane.xlu0 %1581
  %v1583 = vsel %vm898, %v838, 0.0
  %1584 = vadd.xlane.f32.xlu0 %v1583
  %v1585 = vpop.xlane.xlu0 %1584
  %v1586 = vsel %vm898, %v839, 0.0
  %1587 = vadd.xlane.f32.xlu0 %v1586
  %v1588 = vpop.xlane.xlu0 %1587
  %v1589 = vsel %vm898, %v840, 0.0
  %1590 = vadd.xlane.f32.xlu0 %v1589
  %v1591 = vpop.xlane.xlu0 %1590
  %v1592 = vsel %vm898, %v841, 0.0
  %1593 = vadd.xlane.f32.xlu0 %v1592
  %v1594 = vpop.xlane.xlu0 %1593
  %v1595 = vsel %vm898, %v842, 0.0
  %1596 = vadd.xlane.f32.xlu0 %v1595
  %v1597 = vpop.xlane.xlu0 %1596
  %v1598 = vsel %vm898, %v843, 0.0
  %1599 = vadd.xlane.f32.xlu0 %v1598
  %v1600 = vpop.xlane.xlu0 %1599
  %v1601 = vsel %vm898, %v844, 0.0
  %1602 = vadd.xlane.f32.xlu0 %v1601
  %v1603 = vpop.xlane.xlu0 %1602
  %v1604 = vsel %vm898, %v845, 0.0
  %1605 = vadd.xlane.f32.xlu0 %v1604
  %v1606 = vpop.xlane.xlu0 %1605
  %v1607 = vsel %vm898, %v846, 0.0
  %1608 = vadd.xlane.f32.xlu0 %v1607
  %v1609 = vpop.xlane.xlu0 %1608
  %v1610 = vsel %vm898, %v847, 0.0
  %1611 = vadd.xlane.f32.xlu0 %v1610
  %v1612 = vpop.xlane.xlu0 %1611
  %v1613 = vsel %vm898, %v848, 0.0
  %1614 = vadd.xlane.f32.xlu0 %v1613
  %v1615 = vpop.xlane.xlu0 %1614
  %v1616 = vsel %vm898, %v849, 0.0
  %1617 = vadd.xlane.f32.xlu0 %v1616
  %v1618 = vpop.xlane.xlu0 %1617
  %v1619 = vsel %vm898, %v850, 0.0
  %1620 = vadd.xlane.f32.xlu0 %v1619
  %v1621 = vpop.xlane.xlu0 %1620
  %v1622 = vsel %vm898, %v851, 0.0
  %1623 = vadd.xlane.f32.xlu0 %v1622
  %v1624 = vpop.xlane.xlu0 %1623
  %v1625 = vsel %vm898, %v852, 0.0
  %1626 = vadd.xlane.f32.xlu0 %v1625
  %v1627 = vpop.xlane.xlu0 %1626
  %v1628 = vsel %vm898, %v853, 0.0
  %1629 = vadd.xlane.f32.xlu0 %v1628
  %v1630 = vpop.xlane.xlu0 %1629
  %v1631 = vsel %vm898, %v854, 0.0
  %1632 = vadd.xlane.f32.xlu0 %v1631
  %v1633 = vpop.xlane.xlu0 %1632
  %v1634 = vsel %vm898, %v855, 0.0
  %1635 = vadd.xlane.f32.xlu0 %v1634
  %v1636 = vpop.xlane.xlu0 %1635
  %v1637 = vsel %vm898, %v856, 0.0
  %1638 = vadd.xlane.f32.xlu0 %v1637
  %v1639 = vpop.xlane.xlu0 %1638
  %v1640 = vsel %vm898, %v857, 0.0
  %1641 = vadd.xlane.f32.xlu0 %v1640
  %v1642 = vpop.xlane.xlu0 %1641
  %v1643 = vsel %vm898, %v858, 0.0
  %1644 = vadd.xlane.f32.xlu0 %v1643
  %v1645 = vpop.xlane.xlu0 %1644
  %v1646 = vsel %vm898, %v859, 0.0
  %1647 = vadd.xlane.f32.xlu0 %v1646
  %v1648 = vpop.xlane.xlu0 %1647
  %v1649 = vsel %vm898, %v860, 0.0
  %1650 = vadd.xlane.f32.xlu0 %v1649
  %v1651 = vpop.xlane.xlu0 %1650
  %v1652 = vsel %vm898, %v861, 0.0
  %1653 = vadd.xlane.f32.xlu0 %v1652
  %v1654 = vpop.xlane.xlu0 %1653
  %v1655 = vsel %vm898, %v862, 0.0
  %1656 = vadd.xlane.f32.xlu0 %v1655
  %v1657 = vpop.xlane.xlu0 %1656
  %v1658 = vsel %vm898, %v863, 0.0
  %1659 = vadd.xlane.f32.xlu0 %v1658
  %v1660 = vpop.xlane.xlu0 %1659
  %v1661 = vsel %vm898, %v864, 0.0
  %1662 = vadd.xlane.f32.xlu0 %v1661
  %v1663 = vpop.xlane.xlu0 %1662
  %v1664 = vsel %vm898, %v865, 0.0
  %1665 = vadd.xlane.f32.xlu0 %v1664
  %v1666 = vpop.xlane.xlu0 %1665
  %v1667 = vsel %vm898, %v866, 0.0
  %1668 = vadd.xlane.f32.xlu0 %v1667
  %v1669 = vpop.xlane.xlu0 %1668
  %v1670 = vsel %vm898, %v867, 0.0
  %1671 = vadd.xlane.f32.xlu0 %v1670
  %v1672 = vpop.xlane.xlu0 %1671
  %v1673 = vsel %vm898, %v868, 0.0
  %1674 = vadd.xlane.f32.xlu0 %v1673
  %v1675 = vpop.xlane.xlu0 %1674
  %v1676 = vsel %vm898, %v869, 0.0
  %1677 = vadd.xlane.f32.xlu0 %v1676
  %v1678 = vpop.xlane.xlu0 %1677
  %v1679 = vsel %vm898, %v870, 0.0
  %1680 = vadd.xlane.f32.xlu0 %v1679
  %v1681 = vpop.xlane.xlu0 %1680
  %v1682 = vsel %vm898, %v871, 0.0
  %1683 = vadd.xlane.f32.xlu0 %v1682
  %v1684 = vpop.xlane.xlu0 %1683
  %v1685 = vsel %vm898, %v872, 0.0
  %1686 = vadd.xlane.f32.xlu0 %v1685
  %v1687 = vpop.xlane.xlu0 %1686
  %v1688 = vsel %vm898, %v873, 0.0
  %1689 = vadd.xlane.f32.xlu0 %v1688
  %v1690 = vpop.xlane.xlu0 %1689
  %v1691 = vsel %vm898, %v874, 0.0
  %1692 = vadd.xlane.f32.xlu0 %v1691
  %v1693 = vpop.xlane.xlu0 %1692
  %v1694 = vsel %vm898, %v875, 0.0
  %1695 = vadd.xlane.f32.xlu0 %v1694
  %v1696 = vpop.xlane.xlu0 %1695
  %v1697 = vsel %vm898, %v876, 0.0
  %1698 = vadd.xlane.f32.xlu0 %v1697
  %v1699 = vpop.xlane.xlu0 %1698
  %v1700 = vsel %vm898, %v877, 0.0
  %1701 = vadd.xlane.f32.xlu0 %v1700
  %v1702 = vpop.xlane.xlu0 %1701
  %v1703 = vsel %vm898, %v878, 0.0
  %1704 = vadd.xlane.f32.xlu0 %v1703
  %v1705 = vpop.xlane.xlu0 %1704
  %v1706 = vsel %vm898, %v879, 0.0
  %1707 = vadd.xlane.f32.xlu0 %v1706
  %v1708 = vpop.xlane.xlu0 %1707
  %v1709 = vsel %vm898, %v880, 0.0
  %1710 = vadd.xlane.f32.xlu0 %v1709
  %v1711 = vpop.xlane.xlu0 %1710
  %v1712 = vsel %vm898, %v881, 0.0
  %1713 = vadd.xlane.f32.xlu0 %v1712
  %v1714 = vpop.xlane.xlu0 %1713
  %v1715 = vsel %vm898, %v882, 0.0
  %1716 = vadd.xlane.f32.xlu0 %v1715
  %v1717 = vpop.xlane.xlu0 %1716
  %v1718 = vsel %vm898, %v883, 0.0
  %1719 = vadd.xlane.f32.xlu0 %v1718
  %v1720 = vpop.xlane.xlu0 %1719
  %v1721 = vsel %vm898, %v884, 0.0
  %1722 = vadd.xlane.f32.xlu0 %v1721
  %v1723 = vpop.xlane.xlu0 %1722
  %v1724 = vsel %vm898, %v885, 0.0
  %1725 = vadd.xlane.f32.xlu0 %v1724
  %v1726 = vpop.xlane.xlu0 %1725
  %v1727 = vsel %vm898, %v886, 0.0
  %1728 = vadd.xlane.f32.xlu0 %v1727
  %v1729 = vpop.xlane.xlu0 %1728
  %v1730 = vsel %vm898, %v887, 0.0
  %1731 = vadd.xlane.f32.xlu0 %v1730
  %v1732 = vpop.xlane.xlu0 %1731
  %v1733 = vsel %vm898, %v888, 0.0
  %1734 = vadd.xlane.f32.xlu0 %v1733
  %v1735 = vpop.xlane.xlu0 %1734
  %v1736 = vsel %vm898, %v889, 0.0
  %1737 = vadd.xlane.f32.xlu0 %v1736
  %v1738 = vpop.xlane.xlu0 %1737
  %v1739 = vsel %vm898, %v890, 0.0
  %1740 = vadd.xlane.f32.xlu0 %v1739
  %v1741 = vpop.xlane.xlu0 %1740
  %v1742 = vsel %vm898, %v891, 0.0
  %1743 = vadd.xlane.f32.xlu0 %v1742
  %v1744 = vpop.xlane.xlu0 %1743
  %v1745 = vsel %vm898, %v892, 0.0
  %1746 = vadd.xlane.f32.xlu0 %v1745
  %v1747 = vpop.xlane.xlu0 %1746
  %v1748 = vsel %vm898, %v893, 0.0
  %1749 = vadd.xlane.f32.xlu0 %v1748
  %v1750 = vpop.xlane.xlu0 %1749
  %v1751 = vsel %vm898, %v894, 0.0
  %1752 = vadd.xlane.f32.xlu0 %v1751
  %v1753 = vpop.xlane.xlu0 %1752
  %v1754 = vsel %vm898, %v895, 0.0
  %1755 = vadd.xlane.f32.xlu0 %v1754
  %v1756 = vpop.xlane.xlu0 %1755
  %v1757 = vsel %vm898, %v896, 0.0
  %1758 = vadd.xlane.f32.xlu0 %v1757
  %v1759 = vpop.xlane.xlu0 %1758
  %v1760 = vsel %vm898, %v897, 0.0
  %1761 = vadd.xlane.f32.xlu0 %v1760
  %v1762 = vpop.xlane.xlu0 %1761
  %v1763 = vld [vmem:[%s3] sm:$0xff]
  %v1764 = vld [vmem:[%s3 + $0x8] sm:$0xff]
  %v1765 = vld [vmem:[%s3 + $0x10] sm:$0xff]
  %v1766 = vld [vmem:[%s3 + $0x18] sm:$0xff]
  %v1767 = vld [vmem:[%s3 + $0x20] sm:$0xff]
  %v1768 = vld [vmem:[%s3 + $0x28] sm:$0xff]
  %v1769 = vld [vmem:[%s3 + $0x30] sm:$0xff]
  %v1770 = vld [vmem:[%s3 + $0x38] sm:$0xff]
  %v1771 = vld [vmem:[%s3 + $0x40] sm:$0xff]
  %v1772 = vld [vmem:[%s3 + $0x48] sm:$0xff]
  %v1773 = vld [vmem:[%s3 + $0x50] sm:$0xff]
  %v1774 = vld [vmem:[%s3 + $0x58] sm:$0xff]
  %v1775 = vld [vmem:[%s3 + $0x60] sm:$0xff]
  %v1776 = vld [vmem:[%s3 + $0x68] sm:$0xff]
  %v1777 = vld [vmem:[%s3 + $0x70] sm:$0xff]
  %v1778 = vld [vmem:[%s3 + $0x78] sm:$0xff]
  %v1779 = vld [vmem:[%s3 + $0x80] sm:$0xff]
  %v1780 = vld [vmem:[%s3 + $0x88] sm:$0xff]
  %v1781 = vld [vmem:[%s3 + $0x90] sm:$0xff]
  %v1782 = vld [vmem:[%s3 + $0x98] sm:$0xff]
  %v1783 = vld [vmem:[%s3 + $0xa0] sm:$0xff]
  %v1784 = vld [vmem:[%s3 + $0xa8] sm:$0xff]
  %v1785 = vld [vmem:[%s3 + $0xb0] sm:$0xff]
  %v1786 = vld [vmem:[%s3 + $0xb8] sm:$0xff]
  %v1787 = vld [vmem:[%s3 + $0xc0] sm:$0xff]
  %v1788 = vld [vmem:[%s3 + $0xc8] sm:$0xff]
  %v1789 = vld [vmem:[%s3 + $0xd0] sm:$0xff]
  %v1790 = vld [vmem:[%s3 + $0xd8] sm:$0xff]
  %v1791 = vld [vmem:[%s3 + $0xe0] sm:$0xff]
  %v1792 = vld [vmem:[%s3 + $0xe8] sm:$0xff]
  %v1793 = vld [vmem:[%s3 + $0xf0] sm:$0xff]
  %v1794 = vld [vmem:[%s3 + $0xf8] sm:$0xff]
  %v1795 = vld [vmem:[%s3 + $0x100] sm:$0xff]
  %v1796 = vld [vmem:[%s3 + $0x108] sm:$0xff]
  %v1797 = vld [vmem:[%s3 + $0x110] sm:$0xff]
  %v1798 = vld [vmem:[%s3 + $0x118] sm:$0xff]
  %v1799 = vld [vmem:[%s3 + $0x120] sm:$0xff]
  %v1800 = vld [vmem:[%s3 + $0x128] sm:$0xff]
  %v1801 = vld [vmem:[%s3 + $0x130] sm:$0xff]
  %v1802 = vld [vmem:[%s3 + $0x138] sm:$0xff]
  %v1803 = vld [vmem:[%s3 + $0x140] sm:$0xff]
  %v1804 = vld [vmem:[%s3 + $0x148] sm:$0xff]
  %v1805 = vld [vmem:[%s3 + $0x150] sm:$0xff]
  %v1806 = vld [vmem:[%s3 + $0x158] sm:$0xff]
  %v1807 = vld [vmem:[%s3 + $0x160] sm:$0xff]
  %v1808 = vld [vmem:[%s3 + $0x168] sm:$0xff]
  %v1809 = vld [vmem:[%s3 + $0x170] sm:$0xff]
  %v1810 = vld [vmem:[%s3 + $0x178] sm:$0xff]
  %v1811 = vld [vmem:[%s3 + $0x180] sm:$0xff]
  %v1812 = vld [vmem:[%s3 + $0x188] sm:$0xff]
  %v1813 = vld [vmem:[%s3 + $0x190] sm:$0xff]
  %v1814 = vld [vmem:[%s3 + $0x198] sm:$0xff]
  %v1815 = vld [vmem:[%s3 + $0x1a0] sm:$0xff]
  %v1816 = vld [vmem:[%s3 + $0x1a8] sm:$0xff]
  %v1817 = vld [vmem:[%s3 + $0x1b0] sm:$0xff]
  %v1818 = vld [vmem:[%s3 + $0x1b8] sm:$0xff]
  %v1819 = vld [vmem:[%s3 + $0x1c0] sm:$0xff]
  %v1820 = vld [vmem:[%s3 + $0x1c8] sm:$0xff]
  %v1821 = vld [vmem:[%s3 + $0x1d0] sm:$0xff]
  %v1822 = vld [vmem:[%s3 + $0x1d8] sm:$0xff]
  %v1823 = vld [vmem:[%s3 + $0x1e0] sm:$0xff]
  %v1824 = vld [vmem:[%s3 + $0x1e8] sm:$0xff]
  %v1825 = vld [vmem:[%s3 + $0x1f0] sm:$0xff]
  %v1826 = vld [vmem:[%s3 + $0x1f8] sm:$0xff]
  %v1827 = vld [vmem:[%s3 + $0x200] sm:$0xff]
  %v1828 = vld [vmem:[%s3 + $0x208] sm:$0xff]
  %v1829 = vld [vmem:[%s3 + $0x210] sm:$0xff]
  %v1830 = vld [vmem:[%s3 + $0x218] sm:$0xff]
  %v1831 = vld [vmem:[%s3 + $0x220] sm:$0xff]
  %v1832 = vld [vmem:[%s3 + $0x228] sm:$0xff]
  %v1833 = vld [vmem:[%s3 + $0x230] sm:$0xff]
  %v1834 = vld [vmem:[%s3 + $0x238] sm:$0xff]
  %v1835 = vld [vmem:[%s3 + $0x240] sm:$0xff]
  %v1836 = vld [vmem:[%s3 + $0x248] sm:$0xff]
  %v1837 = vld [vmem:[%s3 + $0x250] sm:$0xff]
  %v1838 = vld [vmem:[%s3 + $0x258] sm:$0xff]
  %v1839 = vld [vmem:[%s3 + $0x260] sm:$0xff]
  %v1840 = vld [vmem:[%s3 + $0x268] sm:$0xff]
  %v1841 = vld [vmem:[%s3 + $0x270] sm:$0xff]
  %v1842 = vld [vmem:[%s3 + $0x278] sm:$0xff]
  %v1843 = vld [vmem:[%s3 + $0x280] sm:$0xff]
  %v1844 = vld [vmem:[%s3 + $0x288] sm:$0xff]
  %v1845 = vld [vmem:[%s3 + $0x290] sm:$0xff]
  %v1846 = vld [vmem:[%s3 + $0x298] sm:$0xff]
  %v1847 = vld [vmem:[%s3 + $0x2a0] sm:$0xff]
  %v1848 = vld [vmem:[%s3 + $0x2a8] sm:$0xff]
  %v1849 = vld [vmem:[%s3 + $0x2b0] sm:$0xff]
  %v1850 = vld [vmem:[%s3 + $0x2b8] sm:$0xff]
  %v1851 = vld [vmem:[%s3 + $0x2c0] sm:$0xff]
  %v1852 = vld [vmem:[%s3 + $0x2c8] sm:$0xff]
  %v1853 = vld [vmem:[%s3 + $0x2d0] sm:$0xff]
  %v1854 = vld [vmem:[%s3 + $0x2d8] sm:$0xff]
  %v1855 = vld [vmem:[%s3 + $0x2e0] sm:$0xff]
  %v1856 = vld [vmem:[%s3 + $0x2e8] sm:$0xff]
  %v1857 = vld [vmem:[%s3 + $0x2f0] sm:$0xff]
  %v1858 = vld [vmem:[%s3 + $0x2f8] sm:$0xff]
  %v1859 = vld [vmem:[%s3 + $0x300] sm:$0xff]
  %v1860 = vld [vmem:[%s3 + $0x308] sm:$0xff]
  %v1861 = vld [vmem:[%s3 + $0x310] sm:$0xff]
  %v1862 = vld [vmem:[%s3 + $0x318] sm:$0xff]
  %v1863 = vld [vmem:[%s3 + $0x320] sm:$0xff]
  %v1864 = vld [vmem:[%s3 + $0x328] sm:$0xff]
  %v1865 = vld [vmem:[%s3 + $0x330] sm:$0xff]
  %v1866 = vld [vmem:[%s3 + $0x338] sm:$0xff]
  %v1867 = vld [vmem:[%s3 + $0x340] sm:$0xff]
  %v1868 = vld [vmem:[%s3 + $0x348] sm:$0xff]
  %v1869 = vld [vmem:[%s3 + $0x350] sm:$0xff]
  %v1870 = vld [vmem:[%s3 + $0x358] sm:$0xff]
  %v1871 = vld [vmem:[%s3 + $0x360] sm:$0xff]
  %v1872 = vld [vmem:[%s3 + $0x368] sm:$0xff]
  %v1873 = vld [vmem:[%s3 + $0x370] sm:$0xff]
  %v1874 = vld [vmem:[%s3 + $0x378] sm:$0xff]
  %v1875 = vld [vmem:[%s3 + $0x380] sm:$0xff]
  %v1876 = vld [vmem:[%s3 + $0x388] sm:$0xff]
  %v1877 = vld [vmem:[%s3 + $0x390] sm:$0xff]
  %v1878 = vld [vmem:[%s3 + $0x398] sm:$0xff]
  %v1879 = vld [vmem:[%s3 + $0x3a0] sm:$0xff]
  %v1880 = vld [vmem:[%s3 + $0x3a8] sm:$0xff]
  %v1881 = vld [vmem:[%s3 + $0x3b0] sm:$0xff]
  %v1882 = vld [vmem:[%s3 + $0x3b8] sm:$0xff]
  %v1883 = vld [vmem:[%s3 + $0x3c0] sm:$0xff]
  %v1884 = vld [vmem:[%s3 + $0x3c8] sm:$0xff]
  %v1885 = vld [vmem:[%s3 + $0x3d0] sm:$0xff]
  %v1886 = vld [vmem:[%s3 + $0x3d8] sm:$0xff]
  %v1887 = vld [vmem:[%s3 + $0x3e0] sm:$0xff]
  %v1888 = vld [vmem:[%s3 + $0x3e8] sm:$0xff]
  %v1889 = vld [vmem:[%s3 + $0x3f0] sm:$0xff]
  %v1890 = vld [vmem:[%s3 + $0x3f8] sm:$0xff]
  %v1891 = vld [vmem:[%s3 + $0x400] sm:$0xff]
  %v1892 = vld [vmem:[%s3 + $0x408] sm:$0xff]
  %v1893 = vld [vmem:[%s3 + $0x410] sm:$0xff]
  %v1894 = vld [vmem:[%s3 + $0x418] sm:$0xff]
  %v1895 = vld [vmem:[%s3 + $0x420] sm:$0xff]
  %v1896 = vld [vmem:[%s3 + $0x428] sm:$0xff]
  %v1897 = vld [vmem:[%s3 + $0x430] sm:$0xff]
  %v1898 = vld [vmem:[%s3 + $0x438] sm:$0xff]
  %v1899 = vld [vmem:[%s3 + $0x440] sm:$0xff]
  %v1900 = vld [vmem:[%s3 + $0x448] sm:$0xff]
  %v1901 = vld [vmem:[%s3 + $0x450] sm:$0xff]
  %v1902 = vld [vmem:[%s3 + $0x458] sm:$0xff]
  %v1903 = vld [vmem:[%s3 + $0x460] sm:$0xff]
  %v1904 = vld [vmem:[%s3 + $0x468] sm:$0xff]
  %v1905 = vld [vmem:[%s3 + $0x470] sm:$0xff]
  %v1906 = vld [vmem:[%s3 + $0x478] sm:$0xff]
  %v1907 = vld [vmem:[%s3 + $0x480] sm:$0xff]
  %v1908 = vld [vmem:[%s3 + $0x488] sm:$0xff]
  %v1909 = vld [vmem:[%s3 + $0x490] sm:$0xff]
  %v1910 = vld [vmem:[%s3 + $0x498] sm:$0xff]
  %v1911 = vld [vmem:[%s3 + $0x4a0] sm:$0xff]
  %v1912 = vld [vmem:[%s3 + $0x4a8] sm:$0xff]
  %v1913 = vld [vmem:[%s3 + $0x4b0] sm:$0xff]
  %v1914 = vld [vmem:[%s3 + $0x4b8] sm:$0xff]
  %v1915 = vld [vmem:[%s3 + $0x4c0] sm:$0xff]
  %v1916 = vld [vmem:[%s3 + $0x4c8] sm:$0xff]
  %v1917 = vld [vmem:[%s3 + $0x4d0] sm:$0xff]
  %v1918 = vld [vmem:[%s3 + $0x4d8] sm:$0xff]
  %v1919 = vld [vmem:[%s3 + $0x4e0] sm:$0xff]
  %v1920 = vld [vmem:[%s3 + $0x4e8] sm:$0xff]
  %v1921 = vld [vmem:[%s3 + $0x4f0] sm:$0xff]
  %v1922 = vld [vmem:[%s3 + $0x4f8] sm:$0xff]
  %v1923 = vld [vmem:[%s3 + $0x500] sm:$0xff]
  %v1924 = vld [vmem:[%s3 + $0x508] sm:$0xff]
  %v1925 = vld [vmem:[%s3 + $0x510] sm:$0xff]
  %v1926 = vld [vmem:[%s3 + $0x518] sm:$0xff]
  %v1927 = vld [vmem:[%s3 + $0x520] sm:$0xff]
  %v1928 = vld [vmem:[%s3 + $0x528] sm:$0xff]
  %v1929 = vld [vmem:[%s3 + $0x530] sm:$0xff]
  %v1930 = vld [vmem:[%s3 + $0x538] sm:$0xff]
  %v1931 = vld [vmem:[%s3 + $0x540] sm:$0xff]
  %v1932 = vld [vmem:[%s3 + $0x548] sm:$0xff]
  %v1933 = vld [vmem:[%s3 + $0x550] sm:$0xff]
  %v1934 = vld [vmem:[%s3 + $0x558] sm:$0xff]
  %v1935 = vld [vmem:[%s3 + $0x560] sm:$0xff]
  %v1936 = vld [vmem:[%s3 + $0x568] sm:$0xff]
  %v1937 = vld [vmem:[%s3 + $0x570] sm:$0xff]
  %v1938 = vld [vmem:[%s3 + $0x578] sm:$0xff]
  %v1939 = vld [vmem:[%s3 + $0x580] sm:$0xff]
  %v1940 = vld [vmem:[%s3 + $0x588] sm:$0xff]
  %v1941 = vld [vmem:[%s3 + $0x590] sm:$0xff]
  %v1942 = vld [vmem:[%s3 + $0x598] sm:$0xff]
  %v1943 = vld [vmem:[%s3 + $0x5a0] sm:$0xff]
  %v1944 = vld [vmem:[%s3 + $0x5a8] sm:$0xff]
  %v1945 = vld [vmem:[%s3 + $0x5b0] sm:$0xff]
  %v1946 = vld [vmem:[%s3 + $0x5b8] sm:$0xff]
  %v1947 = vld [vmem:[%s3 + $0x5c0] sm:$0xff]
  %v1948 = vld [vmem:[%s3 + $0x5c8] sm:$0xff]
  %v1949 = vld [vmem:[%s3 + $0x5d0] sm:$0xff]
  %v1950 = vld [vmem:[%s3 + $0x5d8] sm:$0xff]
  %v1951 = vld [vmem:[%s3 + $0x5e0] sm:$0xff]
  %v1952 = vld [vmem:[%s3 + $0x5e8] sm:$0xff]
  %v1953 = vld [vmem:[%s3 + $0x5f0] sm:$0xff]
  %v1954 = vld [vmem:[%s3 + $0x5f8] sm:$0xff]
  %v1955 = vld [vmem:[%s3 + $0x600] sm:$0xff]
  %v1956 = vld [vmem:[%s3 + $0x608] sm:$0xff]
  %v1957 = vld [vmem:[%s3 + $0x610] sm:$0xff]
  %v1958 = vld [vmem:[%s3 + $0x618] sm:$0xff]
  %v1959 = vld [vmem:[%s3 + $0x620] sm:$0xff]
  %v1960 = vld [vmem:[%s3 + $0x628] sm:$0xff]
  %v1961 = vld [vmem:[%s3 + $0x630] sm:$0xff]
  %v1962 = vld [vmem:[%s3 + $0x638] sm:$0xff]
  %v1963 = vld [vmem:[%s3 + $0x640] sm:$0xff]
  %v1964 = vld [vmem:[%s3 + $0x648] sm:$0xff]
  %v1965 = vld [vmem:[%s3 + $0x650] sm:$0xff]
  %v1966 = vld [vmem:[%s3 + $0x658] sm:$0xff]
  %v1967 = vld [vmem:[%s3 + $0x660] sm:$0xff]
  %v1968 = vld [vmem:[%s3 + $0x668] sm:$0xff]
  %v1969 = vld [vmem:[%s3 + $0x670] sm:$0xff]
  %v1970 = vld [vmem:[%s3 + $0x678] sm:$0xff]
  %v1971 = vld [vmem:[%s3 + $0x680] sm:$0xff]
  %v1972 = vld [vmem:[%s3 + $0x688] sm:$0xff]
  %v1973 = vld [vmem:[%s3 + $0x690] sm:$0xff]
  %v1974 = vld [vmem:[%s3 + $0x698] sm:$0xff]
  %v1975 = vld [vmem:[%s3 + $0x6a0] sm:$0xff]
  %v1976 = vld [vmem:[%s3 + $0x6a8] sm:$0xff]
  %v1977 = vld [vmem:[%s3 + $0x6b0] sm:$0xff]
  %v1978 = vld [vmem:[%s3 + $0x6b8] sm:$0xff]
  %v1979 = vld [vmem:[%s3 + $0x6c0] sm:$0xff]
  %v1980 = vld [vmem:[%s3 + $0x6c8] sm:$0xff]
  %v1981 = vld [vmem:[%s3 + $0x6d0] sm:$0xff]
  %v1982 = vld [vmem:[%s3 + $0x6d8] sm:$0xff]
  %v1983 = vld [vmem:[%s3 + $0x6e0] sm:$0xff]
  %v1984 = vld [vmem:[%s3 + $0x6e8] sm:$0xff]
  %v1985 = vld [vmem:[%s3 + $0x6f0] sm:$0xff]
  %v1986 = vld [vmem:[%s3 + $0x6f8] sm:$0xff]
  %v1987 = vld [vmem:[%s3 + $0x700] sm:$0xff]
  %v1988 = vld [vmem:[%s3 + $0x708] sm:$0xff]
  %v1989 = vld [vmem:[%s3 + $0x710] sm:$0xff]
  %v1990 = vld [vmem:[%s3 + $0x718] sm:$0xff]
  %v1991 = vld [vmem:[%s3 + $0x720] sm:$0xff]
  %v1992 = vld [vmem:[%s3 + $0x728] sm:$0xff]
  %v1993 = vld [vmem:[%s3 + $0x730] sm:$0xff]
  %v1994 = vld [vmem:[%s3 + $0x738] sm:$0xff]
  %v1995 = vld [vmem:[%s3 + $0x740] sm:$0xff]
  %v1996 = vld [vmem:[%s3 + $0x748] sm:$0xff]
  %v1997 = vld [vmem:[%s3 + $0x750] sm:$0xff]
  %v1998 = vld [vmem:[%s3 + $0x758] sm:$0xff]
  %v1999 = vld [vmem:[%s3 + $0x760] sm:$0xff]
  %v2000 = vld [vmem:[%s3 + $0x768] sm:$0xff]
  %v2001 = vld [vmem:[%s3 + $0x770] sm:$0xff]
  %v2002 = vld [vmem:[%s3 + $0x778] sm:$0xff]
  %v2003 = vld [vmem:[%s3 + $0x780] sm:$0xff]
  %v2004 = vld [vmem:[%s3 + $0x788] sm:$0xff]
  %v2005 = vld [vmem:[%s3 + $0x790] sm:$0xff]
  %v2006 = vld [vmem:[%s3 + $0x798] sm:$0xff]
  %v2007 = vld [vmem:[%s3 + $0x7a0] sm:$0xff]
  %v2008 = vld [vmem:[%s3 + $0x7a8] sm:$0xff]
  %v2009 = vld [vmem:[%s3 + $0x7b0] sm:$0xff]
  %v2010 = vld [vmem:[%s3 + $0x7b8] sm:$0xff]
  %v2011 = vld [vmem:[%s3 + $0x7c0] sm:$0xff]
  %v2012 = vld [vmem:[%s3 + $0x7c8] sm:$0xff]
  %v2013 = vld [vmem:[%s3 + $0x7d0] sm:$0xff]
  %v2014 = vld [vmem:[%s3 + $0x7d8] sm:$0xff]
  %v2015 = vld [vmem:[%s3 + $0x7e0] sm:$0xff]
  %v2016 = vld [vmem:[%s3 + $0x7e8] sm:$0xff]
  %v2017 = vld [vmem:[%s3 + $0x7f0] sm:$0xff]
  %v2018 = vld [vmem:[%s3 + $0x7f8] sm:$0xff]
  %v2019 = vld [vmem:[%s3 + $0x800] sm:$0xff]
  %v2020 = vld [vmem:[%s3 + $0x808] sm:$0xff]
  %v2021 = vld [vmem:[%s3 + $0x810] sm:$0xff]
  %v2022 = vld [vmem:[%s3 + $0x818] sm:$0xff]
  %v2023 = vld [vmem:[%s3 + $0x820] sm:$0xff]
  %v2024 = vld [vmem:[%s3 + $0x828] sm:$0xff]
  %v2025 = vld [vmem:[%s3 + $0x830] sm:$0xff]
  %v2026 = vld [vmem:[%s3 + $0x838] sm:$0xff]
  %v2027 = vld [vmem:[%s3 + $0x840] sm:$0xff]
  %v2028 = vld [vmem:[%s3 + $0x848] sm:$0xff]
  %v2029 = vld [vmem:[%s3 + $0x850] sm:$0xff]
  %v2030 = vld [vmem:[%s3 + $0x858] sm:$0xff]
  %v2031 = vld [vmem:[%s3 + $0x860] sm:$0xff]
  %v2032 = vld [vmem:[%s3 + $0x868] sm:$0xff]
  %v2033 = vld [vmem:[%s3 + $0x870] sm:$0xff]
  %v2034 = vld [vmem:[%s3 + $0x878] sm:$0xff]
  %v2035 = vld [vmem:[%s3 + $0x880] sm:$0xff]
  %v2036 = vld [vmem:[%s3 + $0x888] sm:$0xff]
  %v2037 = vld [vmem:[%s3 + $0x890] sm:$0xff]
  %v2038 = vld [vmem:[%s3 + $0x898] sm:$0xff]
  %v2039 = vld [vmem:[%s3 + $0x8a0] sm:$0xff]
  %v2040 = vld [vmem:[%s3 + $0x8a8] sm:$0xff]
  %v2041 = vld [vmem:[%s3 + $0x8b0] sm:$0xff]
  %v2042 = vld [vmem:[%s3 + $0x8b8] sm:$0xff]
  %v2043 = vld [vmem:[%s3 + $0x8c0] sm:$0xff]
  %v2044 = vld [vmem:[%s3 + $0x8c8] sm:$0xff]
  %v2045 = vld [vmem:[%s3 + $0x8d0] sm:$0xff]
  %v2046 = vld [vmem:[%s3 + $0x8d8] sm:$0xff]
  %v2047 = vld [vmem:[%s3 + $0x8e0] sm:$0xff]
  %v2048 = vld [vmem:[%s3 + $0x8e8] sm:$0xff]
  %v2049 = vld [vmem:[%s3 + $0x8f0] sm:$0xff]
  %v2050 = vld [vmem:[%s3 + $0x8f8] sm:$0xff]
  %v2051 = vadd.f32 %v901, %v1763
  %v2052 = vadd.f32 %v904, %v1764
  %v2053 = vadd.f32 %v907, %v1765
  %v2054 = vadd.f32 %v910, %v1766
  %v2055 = vadd.f32 %v913, %v1767
  %v2056 = vadd.f32 %v916, %v1768
  %v2057 = vadd.f32 %v919, %v1769
  %v2058 = vadd.f32 %v922, %v1770
  %v2059 = vadd.f32 %v925, %v1771
  %v2060 = vadd.f32 %v928, %v1772
  %v2061 = vadd.f32 %v931, %v1773
  %v2062 = vadd.f32 %v934, %v1774
  %v2063 = vadd.f32 %v937, %v1775
  %v2064 = vadd.f32 %v940, %v1776
  %v2065 = vadd.f32 %v943, %v1777
  %v2066 = vadd.f32 %v946, %v1778
  %v2067 = vadd.f32 %v949, %v1779
  %v2068 = vadd.f32 %v952, %v1780
  %v2069 = vadd.f32 %v955, %v1781
  %v2070 = vadd.f32 %v958, %v1782
  %v2071 = vadd.f32 %v961, %v1783
  %v2072 = vadd.f32 %v964, %v1784
  %v2073 = vadd.f32 %v967, %v1785
  %v2074 = vadd.f32 %v970, %v1786
  %v2075 = vadd.f32 %v973, %v1787
  %v2076 = vadd.f32 %v976, %v1788
  %v2077 = vadd.f32 %v979, %v1789
  %v2078 = vadd.f32 %v982, %v1790
  %v2079 = vadd.f32 %v985, %v1791
  %v2080 = vadd.f32 %v988, %v1792
  %v2081 = vadd.f32 %v991, %v1793
  %v2082 = vadd.f32 %v994, %v1794
  %v2083 = vadd.f32 %v997, %v1795
  %v2084 = vadd.f32 %v1000, %v1796
  %v2085 = vadd.f32 %v1003, %v1797
  %v2086 = vadd.f32 %v1006, %v1798
  %v2087 = vadd.f32 %v1009, %v1799
  %v2088 = vadd.f32 %v1012, %v1800
  %v2089 = vadd.f32 %v1015, %v1801
  %v2090 = vadd.f32 %v1018, %v1802
  %v2091 = vadd.f32 %v1021, %v1803
  %v2092 = vadd.f32 %v1024, %v1804
  %v2093 = vadd.f32 %v1027, %v1805
  %v2094 = vadd.f32 %v1030, %v1806
  %v2095 = vadd.f32 %v1033, %v1807
  %v2096 = vadd.f32 %v1036, %v1808
  %v2097 = vadd.f32 %v1039, %v1809
  %v2098 = vadd.f32 %v1042, %v1810
  %v2099 = vadd.f32 %v1045, %v1811
  %v2100 = vadd.f32 %v1048, %v1812
  %v2101 = vadd.f32 %v1051, %v1813
  %v2102 = vadd.f32 %v1054, %v1814
  %v2103 = vadd.f32 %v1057, %v1815
  %v2104 = vadd.f32 %v1060, %v1816
  %v2105 = vadd.f32 %v1063, %v1817
  %v2106 = vadd.f32 %v1066, %v1818
  %v2107 = vadd.f32 %v1069, %v1819
  %v2108 = vadd.f32 %v1072, %v1820
  %v2109 = vadd.f32 %v1075, %v1821
  %v2110 = vadd.f32 %v1078, %v1822
  %v2111 = vadd.f32 %v1081, %v1823
  %v2112 = vadd.f32 %v1084, %v1824
  %v2113 = vadd.f32 %v1087, %v1825
  %v2114 = vadd.f32 %v1090, %v1826
  %v2115 = vadd.f32 %v1093, %v1827
  %v2116 = vadd.f32 %v1096, %v1828
  %v2117 = vadd.f32 %v1099, %v1829
  %v2118 = vadd.f32 %v1102, %v1830
  %v2119 = vadd.f32 %v1105, %v1831
  %v2120 = vadd.f32 %v1108, %v1832
  %v2121 = vadd.f32 %v1111, %v1833
  %v2122 = vadd.f32 %v1114, %v1834
  %v2123 = vadd.f32 %v1117, %v1835
  %v2124 = vadd.f32 %v1120, %v1836
  %v2125 = vadd.f32 %v1123, %v1837
  %v2126 = vadd.f32 %v1126, %v1838
  %v2127 = vadd.f32 %v1129, %v1839
  %v2128 = vadd.f32 %v1132, %v1840
  %v2129 = vadd.f32 %v1135, %v1841
  %v2130 = vadd.f32 %v1138, %v1842
  %v2131 = vadd.f32 %v1141, %v1843
  %v2132 = vadd.f32 %v1144, %v1844
  %v2133 = vadd.f32 %v1147, %v1845
  %v2134 = vadd.f32 %v1150, %v1846
  %v2135 = vadd.f32 %v1153, %v1847
  %v2136 = vadd.f32 %v1156, %v1848
  %v2137 = vadd.f32 %v1159, %v1849
  %v2138 = vadd.f32 %v1162, %v1850
  %v2139 = vadd.f32 %v1165, %v1851
  %v2140 = vadd.f32 %v1168, %v1852
  %v2141 = vadd.f32 %v1171, %v1853
  %v2142 = vadd.f32 %v1174, %v1854
  %v2143 = vadd.f32 %v1177, %v1855
  %v2144 = vadd.f32 %v1180, %v1856
  %v2145 = vadd.f32 %v1183, %v1857
  %v2146 = vadd.f32 %v1186, %v1858
  %v2147 = vadd.f32 %v1189, %v1859
  %v2148 = vadd.f32 %v1192, %v1860
  %v2149 = vadd.f32 %v1195, %v1861
  %v2150 = vadd.f32 %v1198, %v1862
  %v2151 = vadd.f32 %v1201, %v1863
  %v2152 = vadd.f32 %v1204, %v1864
  %v2153 = vadd.f32 %v1207, %v1865
  %v2154 = vadd.f32 %v1210, %v1866
  %v2155 = vadd.f32 %v1213, %v1867
  %v2156 = vadd.f32 %v1216, %v1868
  %v2157 = vadd.f32 %v1219, %v1869
  %v2158 = vadd.f32 %v1222, %v1870
  %v2159 = vadd.f32 %v1225, %v1871
  %v2160 = vadd.f32 %v1228, %v1872
  %v2161 = vadd.f32 %v1231, %v1873
  %v2162 = vadd.f32 %v1234, %v1874
  %v2163 = vadd.f32 %v1237, %v1875
  %v2164 = vadd.f32 %v1240, %v1876
  %v2165 = vadd.f32 %v1243, %v1877
  %v2166 = vadd.f32 %v1246, %v1878
  %v2167 = vadd.f32 %v1249, %v1879
  %v2168 = vadd.f32 %v1252, %v1880
  %v2169 = vadd.f32 %v1255, %v1881
  %v2170 = vadd.f32 %v1258, %v1882
  %v2171 = vadd.f32 %v1261, %v1883
  %v2172 = vadd.f32 %v1264, %v1884
  %v2173 = vadd.f32 %v1267, %v1885
  %v2174 = vadd.f32 %v1270, %v1886
  %v2175 = vadd.f32 %v1273, %v1887
  %v2176 = vadd.f32 %v1276, %v1888
  %v2177 = vadd.f32 %v1279, %v1889
  %v2178 = vadd.f32 %v1282, %v1890
  %v2179 = vadd.f32 %v1285, %v1891
  %v2180 = vadd.f32 %v1288, %v1892
  %v2181 = vadd.f32 %v1291, %v1893
  %v2182 = vadd.f32 %v1294, %v1894
  %v2183 = vadd.f32 %v1297, %v1895
  %v2184 = vadd.f32 %v1300, %v1896
  %v2185 = vadd.f32 %v1303, %v1897
  %v2186 = vadd.f32 %v1306, %v1898
  %v2187 = vadd.f32 %v1309, %v1899
  %v2188 = vadd.f32 %v1312, %v1900
  %v2189 = vadd.f32 %v1315, %v1901
  %v2190 = vadd.f32 %v1318, %v1902
  %v2191 = vadd.f32 %v1321, %v1903
  %v2192 = vadd.f32 %v1324, %v1904
  %v2193 = vadd.f32 %v1327, %v1905
  %v2194 = vadd.f32 %v1330, %v1906
  %v2195 = vadd.f32 %v1333, %v1907
  %v2196 = vadd.f32 %v1336, %v1908
  %v2197 = vadd.f32 %v1339, %v1909
  %v2198 = vadd.f32 %v1342, %v1910
  %v2199 = vadd.f32 %v1345, %v1911
  %v2200 = vadd.f32 %v1348, %v1912
  %v2201 = vadd.f32 %v1351, %v1913
  %v2202 = vadd.f32 %v1354, %v1914
  %v2203 = vadd.f32 %v1357, %v1915
  %v2204 = vadd.f32 %v1360, %v1916
  %v2205 = vadd.f32 %v1363, %v1917
  %v2206 = vadd.f32 %v1366, %v1918
  %v2207 = vadd.f32 %v1369, %v1919
  %v2208 = vadd.f32 %v1372, %v1920
  %v2209 = vadd.f32 %v1375, %v1921
  %v2210 = vadd.f32 %v1378, %v1922
  %v2211 = vadd.f32 %v1381, %v1923
  %v2212 = vadd.f32 %v1384, %v1924
  %v2213 = vadd.f32 %v1387, %v1925
  %v2214 = vadd.f32 %v1390, %v1926
  %v2215 = vadd.f32 %v1393, %v1927
  %v2216 = vadd.f32 %v1396, %v1928
  %v2217 = vadd.f32 %v1399, %v1929
  %v2218 = vadd.f32 %v1402, %v1930
  %v2219 = vadd.f32 %v1405, %v1931
  %v2220 = vadd.f32 %v1408, %v1932
  %v2221 = vadd.f32 %v1411, %v1933
  %v2222 = vadd.f32 %v1414, %v1934
  %v2223 = vadd.f32 %v1417, %v1935
  %v2224 = vadd.f32 %v1420, %v1936
  %v2225 = vadd.f32 %v1423, %v1937
  %v2226 = vadd.f32 %v1426, %v1938
  %v2227 = vadd.f32 %v1429, %v1939
  %v2228 = vadd.f32 %v1432, %v1940
  %v2229 = vadd.f32 %v1435, %v1941
  %v2230 = vadd.f32 %v1438, %v1942
  %v2231 = vadd.f32 %v1441, %v1943
  %v2232 = vadd.f32 %v1444, %v1944
  %v2233 = vadd.f32 %v1447, %v1945
  %v2234 = vadd.f32 %v1450, %v1946
  %v2235 = vadd.f32 %v1453, %v1947
  %v2236 = vadd.f32 %v1456, %v1948
  %v2237 = vadd.f32 %v1459, %v1949
  %v2238 = vadd.f32 %v1462, %v1950
  %v2239 = vadd.f32 %v1465, %v1951
  %v2240 = vadd.f32 %v1468, %v1952
  %v2241 = vadd.f32 %v1471, %v1953
  %v2242 = vadd.f32 %v1474, %v1954
  %v2243 = vadd.f32 %v1477, %v1955
  %v2244 = vadd.f32 %v1480, %v1956
  %v2245 = vadd.f32 %v1483, %v1957
  %v2246 = vadd.f32 %v1486, %v1958
  %v2247 = vadd.f32 %v1489, %v1959
  %v2248 = vadd.f32 %v1492, %v1960
  %v2249 = vadd.f32 %v1495, %v1961
  %v2250 = vadd.f32 %v1498, %v1962
  %v2251 = vadd.f32 %v1501, %v1963
  %v2252 = vadd.f32 %v1504, %v1964
  %v2253 = vadd.f32 %v1507, %v1965
  %v2254 = vadd.f32 %v1510, %v1966
  %v2255 = vadd.f32 %v1513, %v1967
  %v2256 = vadd.f32 %v1516, %v1968
  %v2257 = vadd.f32 %v1519, %v1969
  %v2258 = vadd.f32 %v1522, %v1970
  %v2259 = vadd.f32 %v1525, %v1971
  %v2260 = vadd.f32 %v1528, %v1972
  %v2261 = vadd.f32 %v1531, %v1973
  %v2262 = vadd.f32 %v1534, %v1974
  %v2263 = vadd.f32 %v1537, %v1975
  %v2264 = vadd.f32 %v1540, %v1976
  %v2265 = vadd.f32 %v1543, %v1977
  %v2266 = vadd.f32 %v1546, %v1978
  %v2267 = vadd.f32 %v1549, %v1979
  %v2268 = vadd.f32 %v1552, %v1980
  %v2269 = vadd.f32 %v1555, %v1981
  %v2270 = vadd.f32 %v1558, %v1982
  %v2271 = vadd.f32 %v1561, %v1983
  %v2272 = vadd.f32 %v1564, %v1984
  %v2273 = vadd.f32 %v1567, %v1985
  %v2274 = vadd.f32 %v1570, %v1986
  %v2275 = vadd.f32 %v1573, %v1987
  %v2276 = vadd.f32 %v1576, %v1988
  %v2277 = vadd.f32 %v1579, %v1989
  %v2278 = vadd.f32 %v1582, %v1990
  %v2279 = vadd.f32 %v1585, %v1991
  %v2280 = vadd.f32 %v1588, %v1992
  %v2281 = vadd.f32 %v1591, %v1993
  %v2282 = vadd.f32 %v1594, %v1994
  %v2283 = vadd.f32 %v1597, %v1995
  %v2284 = vadd.f32 %v1600, %v1996
  %v2285 = vadd.f32 %v1603, %v1997
  %v2286 = vadd.f32 %v1606, %v1998
  %v2287 = vadd.f32 %v1609, %v1999
  %v2288 = vadd.f32 %v1612, %v2000
  %v2289 = vadd.f32 %v1615, %v2001
  %v2290 = vadd.f32 %v1618, %v2002
  %v2291 = vadd.f32 %v1621, %v2003
  %v2292 = vadd.f32 %v1624, %v2004
  %v2293 = vadd.f32 %v1627, %v2005
  %v2294 = vadd.f32 %v1630, %v2006
  %v2295 = vadd.f32 %v1633, %v2007
  %v2296 = vadd.f32 %v1636, %v2008
  %v2297 = vadd.f32 %v1639, %v2009
  %v2298 = vadd.f32 %v1642, %v2010
  %v2299 = vadd.f32 %v1645, %v2011
  %v2300 = vadd.f32 %v1648, %v2012
  %v2301 = vadd.f32 %v1651, %v2013
  %v2302 = vadd.f32 %v1654, %v2014
  %v2303 = vadd.f32 %v1657, %v2015
  %v2304 = vadd.f32 %v1660, %v2016
  %v2305 = vadd.f32 %v1663, %v2017
  %v2306 = vadd.f32 %v1666, %v2018
  %v2307 = vadd.f32 %v1669, %v2019
  %v2308 = vadd.f32 %v1672, %v2020
  %v2309 = vadd.f32 %v1675, %v2021
  %v2310 = vadd.f32 %v1678, %v2022
  %v2311 = vadd.f32 %v1681, %v2023
  %v2312 = vadd.f32 %v1684, %v2024
  %v2313 = vadd.f32 %v1687, %v2025
  %v2314 = vadd.f32 %v1690, %v2026
  %v2315 = vadd.f32 %v1693, %v2027
  %v2316 = vadd.f32 %v1696, %v2028
  %v2317 = vadd.f32 %v1699, %v2029
  %v2318 = vadd.f32 %v1702, %v2030
  %v2319 = vadd.f32 %v1705, %v2031
  %v2320 = vadd.f32 %v1708, %v2032
  %v2321 = vadd.f32 %v1711, %v2033
  %v2322 = vadd.f32 %v1714, %v2034
  %v2323 = vadd.f32 %v1717, %v2035
  %v2324 = vadd.f32 %v1720, %v2036
  %v2325 = vadd.f32 %v1723, %v2037
  %v2326 = vadd.f32 %v1726, %v2038
  %v2327 = vadd.f32 %v1729, %v2039
  %v2328 = vadd.f32 %v1732, %v2040
  %v2329 = vadd.f32 %v1735, %v2041
  %v2330 = vadd.f32 %v1738, %v2042
  %v2331 = vadd.f32 %v1741, %v2043
  %v2332 = vadd.f32 %v1744, %v2044
  %v2333 = vadd.f32 %v1747, %v2045
  %v2334 = vadd.f32 %v1750, %v2046
  %v2335 = vadd.f32 %v1753, %v2047
  %v2336 = vadd.f32 %v1756, %v2048
  %v2337 = vadd.f32 %v1759, %v2049
  %v2338 = vadd.f32 %v1762, %v2050
  %v2339 = vxor.u32 %v2051, 2147483648
  %v2340 = vxor.u32 %v2052, 2147483648
  %v2341 = vxor.u32 %v2053, 2147483648
  %v2342 = vxor.u32 %v2054, 2147483648
  %v2343 = vxor.u32 %v2055, 2147483648
  %v2344 = vxor.u32 %v2056, 2147483648
  %v2345 = vxor.u32 %v2057, 2147483648
  %v2346 = vxor.u32 %v2058, 2147483648
  %v2347 = vxor.u32 %v2059, 2147483648
  %v2348 = vxor.u32 %v2060, 2147483648
  %v2349 = vxor.u32 %v2061, 2147483648
  %v2350 = vxor.u32 %v2062, 2147483648
  %v2351 = vxor.u32 %v2063, 2147483648
  %v2352 = vxor.u32 %v2064, 2147483648
  %v2353 = vxor.u32 %v2065, 2147483648
  %v2354 = vxor.u32 %v2066, 2147483648
  %v2355 = vxor.u32 %v2067, 2147483648
  %v2356 = vxor.u32 %v2068, 2147483648
  %v2357 = vxor.u32 %v2069, 2147483648
  %v2358 = vxor.u32 %v2070, 2147483648
  %v2359 = vxor.u32 %v2071, 2147483648
  %v2360 = vxor.u32 %v2072, 2147483648
  %v2361 = vxor.u32 %v2073, 2147483648
  %v2362 = vxor.u32 %v2074, 2147483648
  %v2363 = vxor.u32 %v2075, 2147483648
  %v2364 = vxor.u32 %v2076, 2147483648
  %v2365 = vxor.u32 %v2077, 2147483648
  %v2366 = vxor.u32 %v2078, 2147483648
  %v2367 = vxor.u32 %v2079, 2147483648
  %v2368 = vxor.u32 %v2080, 2147483648
  %v2369 = vxor.u32 %v2081, 2147483648
  %v2370 = vxor.u32 %v2082, 2147483648
  %v2371 = vxor.u32 %v2083, 2147483648
  %v2372 = vxor.u32 %v2084, 2147483648
  %v2373 = vxor.u32 %v2085, 2147483648
  %v2374 = vxor.u32 %v2086, 2147483648
  %v2375 = vxor.u32 %v2087, 2147483648
  %v2376 = vxor.u32 %v2088, 2147483648
  %v2377 = vxor.u32 %v2089, 2147483648
  %v2378 = vxor.u32 %v2090, 2147483648
  %v2379 = vxor.u32 %v2091, 2147483648
  %v2380 = vxor.u32 %v2092, 2147483648
  %v2381 = vxor.u32 %v2093, 2147483648
  %v2382 = vxor.u32 %v2094, 2147483648
  %v2383 = vxor.u32 %v2095, 2147483648
  %v2384 = vxor.u32 %v2096, 2147483648
  %v2385 = vxor.u32 %v2097, 2147483648
  %v2386 = vxor.u32 %v2098, 2147483648
  %v2387 = vxor.u32 %v2099, 2147483648
  %v2388 = vxor.u32 %v2100, 2147483648
  %v2389 = vxor.u32 %v2101, 2147483648
  %v2390 = vxor.u32 %v2102, 2147483648
  %v2391 = vxor.u32 %v2103, 2147483648
  %v2392 = vxor.u32 %v2104, 2147483648
  %v2393 = vxor.u32 %v2105, 2147483648
  %v2394 = vxor.u32 %v2106, 2147483648
  %v2395 = vxor.u32 %v2107, 2147483648
  %v2396 = vxor.u32 %v2108, 2147483648
  %v2397 = vxor.u32 %v2109, 2147483648
  %v2398 = vxor.u32 %v2110, 2147483648
  %v2399 = vxor.u32 %v2111, 2147483648
  %v2400 = vxor.u32 %v2112, 2147483648
  %v2401 = vxor.u32 %v2113, 2147483648
  %v2402 = vxor.u32 %v2114, 2147483648
  %v2403 = vxor.u32 %v2115, 2147483648
  %v2404 = vxor.u32 %v2116, 2147483648
  %v2405 = vxor.u32 %v2117, 2147483648
  %v2406 = vxor.u32 %v2118, 2147483648
  %v2407 = vxor.u32 %v2119, 2147483648
  %v2408 = vxor.u32 %v2120, 2147483648
  %v2409 = vxor.u32 %v2121, 2147483648
  %v2410 = vxor.u32 %v2122, 2147483648
  %v2411 = vxor.u32 %v2123, 2147483648
  %v2412 = vxor.u32 %v2124, 2147483648
  %v2413 = vxor.u32 %v2125, 2147483648
  %v2414 = vxor.u32 %v2126, 2147483648
  %v2415 = vxor.u32 %v2127, 2147483648
  %v2416 = vxor.u32 %v2128, 2147483648
  %v2417 = vxor.u32 %v2129, 2147483648
  %v2418 = vxor.u32 %v2130, 2147483648
  %v2419 = vxor.u32 %v2131, 2147483648
  %v2420 = vxor.u32 %v2132, 2147483648
  %v2421 = vxor.u32 %v2133, 2147483648
  %v2422 = vxor.u32 %v2134, 2147483648
  %v2423 = vxor.u32 %v2135, 2147483648
  %v2424 = vxor.u32 %v2136, 2147483648
  %v2425 = vxor.u32 %v2137, 2147483648
  %v2426 = vxor.u32 %v2138, 2147483648
  %v2427 = vxor.u32 %v2139, 2147483648
  %v2428 = vxor.u32 %v2140, 2147483648
  %v2429 = vxor.u32 %v2141, 2147483648
  %v2430 = vxor.u32 %v2142, 2147483648
  %v2431 = vxor.u32 %v2143, 2147483648
  %v2432 = vxor.u32 %v2144, 2147483648
  %v2433 = vxor.u32 %v2145, 2147483648
  %v2434 = vxor.u32 %v2146, 2147483648
  %v2435 = vxor.u32 %v2147, 2147483648
  %v2436 = vxor.u32 %v2148, 2147483648
  %v2437 = vxor.u32 %v2149, 2147483648
  %v2438 = vxor.u32 %v2150, 2147483648
  %v2439 = vxor.u32 %v2151, 2147483648
  %v2440 = vxor.u32 %v2152, 2147483648
  %v2441 = vxor.u32 %v2153, 2147483648
  %v2442 = vxor.u32 %v2154, 2147483648
  %v2443 = vxor.u32 %v2155, 2147483648
  %v2444 = vxor.u32 %v2156, 2147483648
  %v2445 = vxor.u32 %v2157, 2147483648
  %v2446 = vxor.u32 %v2158, 2147483648
  %v2447 = vxor.u32 %v2159, 2147483648
  %v2448 = vxor.u32 %v2160, 2147483648
  %v2449 = vxor.u32 %v2161, 2147483648
  %v2450 = vxor.u32 %v2162, 2147483648
  %v2451 = vxor.u32 %v2163, 2147483648
  %v2452 = vxor.u32 %v2164, 2147483648
  %v2453 = vxor.u32 %v2165, 2147483648
  %v2454 = vxor.u32 %v2166, 2147483648
  %v2455 = vxor.u32 %v2167, 2147483648
  %v2456 = vxor.u32 %v2168, 2147483648
  %v2457 = vxor.u32 %v2169, 2147483648
  %v2458 = vxor.u32 %v2170, 2147483648
  %v2459 = vxor.u32 %v2171, 2147483648
  %v2460 = vxor.u32 %v2172, 2147483648
  %v2461 = vxor.u32 %v2173, 2147483648
  %v2462 = vxor.u32 %v2174, 2147483648
  %v2463 = vxor.u32 %v2175, 2147483648
  %v2464 = vxor.u32 %v2176, 2147483648
  %v2465 = vxor.u32 %v2177, 2147483648
  %v2466 = vxor.u32 %v2178, 2147483648
  %v2467 = vxor.u32 %v2179, 2147483648
  %v2468 = vxor.u32 %v2180, 2147483648
  %v2469 = vxor.u32 %v2181, 2147483648
  %v2470 = vxor.u32 %v2182, 2147483648
  %v2471 = vxor.u32 %v2183, 2147483648
  %v2472 = vxor.u32 %v2184, 2147483648
  %v2473 = vxor.u32 %v2185, 2147483648
  %v2474 = vxor.u32 %v2186, 2147483648
  %v2475 = vxor.u32 %v2187, 2147483648
  %v2476 = vxor.u32 %v2188, 2147483648
  %v2477 = vxor.u32 %v2189, 2147483648
  %v2478 = vxor.u32 %v2190, 2147483648
  %v2479 = vxor.u32 %v2191, 2147483648
  %v2480 = vxor.u32 %v2192, 2147483648
  %v2481 = vxor.u32 %v2193, 2147483648
  %v2482 = vxor.u32 %v2194, 2147483648
  %v2483 = vxor.u32 %v2195, 2147483648
  %v2484 = vxor.u32 %v2196, 2147483648
  %v2485 = vxor.u32 %v2197, 2147483648
  %v2486 = vxor.u32 %v2198, 2147483648
  %v2487 = vxor.u32 %v2199, 2147483648
  %v2488 = vxor.u32 %v2200, 2147483648
  %v2489 = vxor.u32 %v2201, 2147483648
  %v2490 = vxor.u32 %v2202, 2147483648
  %v2491 = vxor.u32 %v2203, 2147483648
  %v2492 = vxor.u32 %v2204, 2147483648
  %v2493 = vxor.u32 %v2205, 2147483648
  %v2494 = vxor.u32 %v2206, 2147483648
  %v2495 = vxor.u32 %v2207, 2147483648
  %v2496 = vxor.u32 %v2208, 2147483648
  %v2497 = vxor.u32 %v2209, 2147483648
  %v2498 = vxor.u32 %v2210, 2147483648
  %v2499 = vxor.u32 %v2211, 2147483648
  %v2500 = vxor.u32 %v2212, 2147483648
  %v2501 = vxor.u32 %v2213, 2147483648
  %v2502 = vxor.u32 %v2214, 2147483648
  %v2503 = vxor.u32 %v2215, 2147483648
  %v2504 = vxor.u32 %v2216, 2147483648
  %v2505 = vxor.u32 %v2217, 2147483648
  %v2506 = vxor.u32 %v2218, 2147483648
  %v2507 = vxor.u32 %v2219, 2147483648
  %v2508 = vxor.u32 %v2220, 2147483648
  %v2509 = vxor.u32 %v2221, 2147483648
  %v2510 = vxor.u32 %v2222, 2147483648
  %v2511 = vxor.u32 %v2223, 2147483648
  %v2512 = vxor.u32 %v2224, 2147483648
  %v2513 = vxor.u32 %v2225, 2147483648
  %v2514 = vxor.u32 %v2226, 2147483648
  %v2515 = vxor.u32 %v2227, 2147483648
  %v2516 = vxor.u32 %v2228, 2147483648
  %v2517 = vxor.u32 %v2229, 2147483648
  %v2518 = vxor.u32 %v2230, 2147483648
  %v2519 = vxor.u32 %v2231, 2147483648
  %v2520 = vxor.u32 %v2232, 2147483648
  %v2521 = vxor.u32 %v2233, 2147483648
  %v2522 = vxor.u32 %v2234, 2147483648
  %v2523 = vxor.u32 %v2235, 2147483648
  %v2524 = vxor.u32 %v2236, 2147483648
  %v2525 = vxor.u32 %v2237, 2147483648
  %v2526 = vxor.u32 %v2238, 2147483648
  %v2527 = vxor.u32 %v2239, 2147483648
  %v2528 = vxor.u32 %v2240, 2147483648
  %v2529 = vxor.u32 %v2241, 2147483648
  %v2530 = vxor.u32 %v2242, 2147483648
  %v2531 = vxor.u32 %v2243, 2147483648
  %v2532 = vxor.u32 %v2244, 2147483648
  %v2533 = vxor.u32 %v2245, 2147483648
  %v2534 = vxor.u32 %v2246, 2147483648
  %v2535 = vxor.u32 %v2247, 2147483648
  %v2536 = vxor.u32 %v2248, 2147483648
  %v2537 = vxor.u32 %v2249, 2147483648
  %v2538 = vxor.u32 %v2250, 2147483648
  %v2539 = vxor.u32 %v2251, 2147483648
  %v2540 = vxor.u32 %v2252, 2147483648
  %v2541 = vxor.u32 %v2253, 2147483648
  %v2542 = vxor.u32 %v2254, 2147483648
  %v2543 = vxor.u32 %v2255, 2147483648
  %v2544 = vxor.u32 %v2256, 2147483648
  %v2545 = vxor.u32 %v2257, 2147483648
  %v2546 = vxor.u32 %v2258, 2147483648
  %v2547 = vxor.u32 %v2259, 2147483648
  %v2548 = vxor.u32 %v2260, 2147483648
  %v2549 = vxor.u32 %v2261, 2147483648
  %v2550 = vxor.u32 %v2262, 2147483648
  %v2551 = vxor.u32 %v2263, 2147483648
  %v2552 = vxor.u32 %v2264, 2147483648
  %v2553 = vxor.u32 %v2265, 2147483648
  %v2554 = vxor.u32 %v2266, 2147483648
  %v2555 = vxor.u32 %v2267, 2147483648
  %v2556 = vxor.u32 %v2268, 2147483648
  %v2557 = vxor.u32 %v2269, 2147483648
  %v2558 = vxor.u32 %v2270, 2147483648
  %v2559 = vxor.u32 %v2271, 2147483648
  %v2560 = vxor.u32 %v2272, 2147483648
  %v2561 = vxor.u32 %v2273, 2147483648
  %v2562 = vxor.u32 %v2274, 2147483648
  %v2563 = vxor.u32 %v2275, 2147483648
  %v2564 = vxor.u32 %v2276, 2147483648
  %v2565 = vxor.u32 %v2277, 2147483648
  %v2566 = vxor.u32 %v2278, 2147483648
  %v2567 = vxor.u32 %v2279, 2147483648
  %v2568 = vxor.u32 %v2280, 2147483648
  %v2569 = vxor.u32 %v2281, 2147483648
  %v2570 = vxor.u32 %v2282, 2147483648
  %v2571 = vxor.u32 %v2283, 2147483648
  %v2572 = vxor.u32 %v2284, 2147483648
  %v2573 = vxor.u32 %v2285, 2147483648
  %v2574 = vxor.u32 %v2286, 2147483648
  %v2575 = vxor.u32 %v2287, 2147483648
  %v2576 = vxor.u32 %v2288, 2147483648
  %v2577 = vxor.u32 %v2289, 2147483648
  %v2578 = vxor.u32 %v2290, 2147483648
  %v2579 = vxor.u32 %v2291, 2147483648
  %v2580 = vxor.u32 %v2292, 2147483648
  %v2581 = vxor.u32 %v2293, 2147483648
  %v2582 = vxor.u32 %v2294, 2147483648
  %v2583 = vxor.u32 %v2295, 2147483648
  %v2584 = vxor.u32 %v2296, 2147483648
  %v2585 = vxor.u32 %v2297, 2147483648
  %v2586 = vxor.u32 %v2298, 2147483648
  %v2587 = vxor.u32 %v2299, 2147483648
  %v2588 = vxor.u32 %v2300, 2147483648
  %v2589 = vxor.u32 %v2301, 2147483648
  %v2590 = vxor.u32 %v2302, 2147483648
  %v2591 = vxor.u32 %v2303, 2147483648
  %v2592 = vxor.u32 %v2304, 2147483648
  %v2593 = vxor.u32 %v2305, 2147483648
  %v2594 = vxor.u32 %v2306, 2147483648
  %v2595 = vxor.u32 %v2307, 2147483648
  %v2596 = vxor.u32 %v2308, 2147483648
  %v2597 = vxor.u32 %v2309, 2147483648
  %v2598 = vxor.u32 %v2310, 2147483648
  %v2599 = vxor.u32 %v2311, 2147483648
  %v2600 = vxor.u32 %v2312, 2147483648
  %v2601 = vxor.u32 %v2313, 2147483648
  %v2602 = vxor.u32 %v2314, 2147483648
  %v2603 = vxor.u32 %v2315, 2147483648
  %v2604 = vxor.u32 %v2316, 2147483648
  %v2605 = vxor.u32 %v2317, 2147483648
  %v2606 = vxor.u32 %v2318, 2147483648
  %v2607 = vxor.u32 %v2319, 2147483648
  %v2608 = vxor.u32 %v2320, 2147483648
  %v2609 = vxor.u32 %v2321, 2147483648
  %v2610 = vxor.u32 %v2322, 2147483648
  %v2611 = vxor.u32 %v2323, 2147483648
  %v2612 = vxor.u32 %v2324, 2147483648
  %v2613 = vxor.u32 %v2325, 2147483648
  %v2614 = vxor.u32 %v2326, 2147483648
  %v2615 = vxor.u32 %v2327, 2147483648
  %v2616 = vxor.u32 %v2328, 2147483648
  %v2617 = vxor.u32 %v2329, 2147483648
  %v2618 = vxor.u32 %v2330, 2147483648
  %v2619 = vxor.u32 %v2331, 2147483648
  %v2620 = vxor.u32 %v2332, 2147483648
  %v2621 = vxor.u32 %v2333, 2147483648
  %v2622 = vxor.u32 %v2334, 2147483648
  %v2623 = vxor.u32 %v2335, 2147483648
  %v2624 = vxor.u32 %v2336, 2147483648
  %v2625 = vxor.u32 %v2337, 2147483648
  %v2626 = vxor.u32 %v2338, 2147483648
  %v2627 = vmul.f32 %v2339, 1.442695
  %v2628 = vpow.pop %v2627
  %v2629 = vmul.f32 %v2340, 1.442695
  %v2630 = vpow.pop %v2629
  %v2631 = vmul.f32 %v2341, 1.442695
  %v2632 = vpow.pop %v2631
  %v2633 = vmul.f32 %v2342, 1.442695
  %v2634 = vpow.pop %v2633
  %v2635 = vmul.f32 %v2343, 1.442695
  %v2636 = vpow.pop %v2635
  %v2637 = vmul.f32 %v2344, 1.442695
  %v2638 = vpow.pop %v2637
  %v2639 = vmul.f32 %v2345, 1.442695
  %v2640 = vpow.pop %v2639
  %v2641 = vmul.f32 %v2346, 1.442695
  %v2642 = vpow.pop %v2641
  %v2643 = vmul.f32 %v2347, 1.442695
  %v2644 = vpow.pop %v2643
  %v2645 = vmul.f32 %v2348, 1.442695
  %v2646 = vpow.pop %v2645
  %v2647 = vmul.f32 %v2349, 1.442695
  %v2648 = vpow.pop %v2647
  %v2649 = vmul.f32 %v2350, 1.442695
  %v2650 = vpow.pop %v2649
  %v2651 = vmul.f32 %v2351, 1.442695
  %v2652 = vpow.pop %v2651
  %v2653 = vmul.f32 %v2352, 1.442695
  %v2654 = vpow.pop %v2653
  %v2655 = vmul.f32 %v2353, 1.442695
  %v2656 = vpow.pop %v2655
  %v2657 = vmul.f32 %v2354, 1.442695
  %v2658 = vpow.pop %v2657
  %v2659 = vmul.f32 %v2355, 1.442695
  %v2660 = vpow.pop %v2659
  %v2661 = vmul.f32 %v2356, 1.442695
  %v2662 = vpow.pop %v2661
  %v2663 = vmul.f32 %v2357, 1.442695
  %v2664 = vpow.pop %v2663
  %v2665 = vmul.f32 %v2358, 1.442695
  %v2666 = vpow.pop %v2665
  %v2667 = vmul.f32 %v2359, 1.442695
  %v2668 = vpow.pop %v2667
  %v2669 = vmul.f32 %v2360, 1.442695
  %v2670 = vpow.pop %v2669
  %v2671 = vmul.f32 %v2361, 1.442695
  %v2672 = vpow.pop %v2671
  %v2673 = vmul.f32 %v2362, 1.442695
  %v2674 = vpow.pop %v2673
  %v2675 = vmul.f32 %v2363, 1.442695
  %v2676 = vpow.pop %v2675
  %v2677 = vmul.f32 %v2364, 1.442695
  %v2678 = vpow.pop %v2677
  %v2679 = vmul.f32 %v2365, 1.442695
  %v2680 = vpow.pop %v2679
  %v2681 = vmul.f32 %v2366, 1.442695
  %v2682 = vpow.pop %v2681
  %v2683 = vmul.f32 %v2367, 1.442695
  %v2684 = vpow.pop %v2683
  %v2685 = vmul.f32 %v2368, 1.442695
  %v2686 = vpow.pop %v2685
  %v2687 = vmul.f32 %v2369, 1.442695
  %v2688 = vpow.pop %v2687
  %v2689 = vmul.f32 %v2370, 1.442695
  %v2690 = vpow.pop %v2689
  %v2691 = vmul.f32 %v2371, 1.442695
  %v2692 = vpow.pop %v2691
  %v2693 = vmul.f32 %v2372, 1.442695
  %v2694 = vpow.pop %v2693
  %v2695 = vmul.f32 %v2373, 1.442695
  %v2696 = vpow.pop %v2695
  %v2697 = vmul.f32 %v2374, 1.442695
  %v2698 = vpow.pop %v2697
  %v2699 = vmul.f32 %v2375, 1.442695
  %v2700 = vpow.pop %v2699
  %v2701 = vmul.f32 %v2376, 1.442695
  %v2702 = vpow.pop %v2701
  %v2703 = vmul.f32 %v2377, 1.442695
  %v2704 = vpow.pop %v2703
  %v2705 = vmul.f32 %v2378, 1.442695
  %v2706 = vpow.pop %v2705
  %v2707 = vmul.f32 %v2379, 1.442695
  %v2708 = vpow.pop %v2707
  %v2709 = vmul.f32 %v2380, 1.442695
  %v2710 = vpow.pop %v2709
  %v2711 = vmul.f32 %v2381, 1.442695
  %v2712 = vpow.pop %v2711
  %v2713 = vmul.f32 %v2382, 1.442695
  %v2714 = vpow.pop %v2713
  %v2715 = vmul.f32 %v2383, 1.442695
  %v2716 = vpow.pop %v2715
  %v2717 = vmul.f32 %v2384, 1.442695
  %v2718 = vpow.pop %v2717
  %v2719 = vmul.f32 %v2385, 1.442695
  %v2720 = vpow.pop %v2719
  %v2721 = vmul.f32 %v2386, 1.442695
  %v2722 = vpow.pop %v2721
  %v2723 = vmul.f32 %v2387, 1.442695
  %v2724 = vpow.pop %v2723
  %v2725 = vmul.f32 %v2388, 1.442695
  %v2726 = vpow.pop %v2725
  %v2727 = vmul.f32 %v2389, 1.442695
  %v2728 = vpow.pop %v2727
  %v2729 = vmul.f32 %v2390, 1.442695
  %v2730 = vpow.pop %v2729
  %v2731 = vmul.f32 %v2391, 1.442695
  %v2732 = vpow.pop %v2731
  %v2733 = vmul.f32 %v2392, 1.442695
  %v2734 = vpow.pop %v2733
  %v2735 = vmul.f32 %v2393, 1.442695
  %v2736 = vpow.pop %v2735
  %v2737 = vmul.f32 %v2394, 1.442695
  %v2738 = vpow.pop %v2737
  %v2739 = vmul.f32 %v2395, 1.442695
  %v2740 = vpow.pop %v2739
  %v2741 = vmul.f32 %v2396, 1.442695
  %v2742 = vpow.pop %v2741
  %v2743 = vmul.f32 %v2397, 1.442695
  %v2744 = vpow.pop %v2743
  %v2745 = vmul.f32 %v2398, 1.442695
  %v2746 = vpow.pop %v2745
  %v2747 = vmul.f32 %v2399, 1.442695
  %v2748 = vpow.pop %v2747
  %v2749 = vmul.f32 %v2400, 1.442695
  %v2750 = vpow.pop %v2749
  %v2751 = vmul.f32 %v2401, 1.442695
  %v2752 = vpow.pop %v2751
  %v2753 = vmul.f32 %v2402, 1.442695
  %v2754 = vpow.pop %v2753
  %v2755 = vmul.f32 %v2403, 1.442695
  %v2756 = vpow.pop %v2755
  %v2757 = vmul.f32 %v2404, 1.442695
  %v2758 = vpow.pop %v2757
  %v2759 = vmul.f32 %v2405, 1.442695
  %v2760 = vpow.pop %v2759
  %v2761 = vmul.f32 %v2406, 1.442695
  %v2762 = vpow.pop %v2761
  %v2763 = vmul.f32 %v2407, 1.442695
  %v2764 = vpow.pop %v2763
  %v2765 = vmul.f32 %v2408, 1.442695
  %v2766 = vpow.pop %v2765
  %v2767 = vmul.f32 %v2409, 1.442695
  %v2768 = vpow.pop %v2767
  %v2769 = vmul.f32 %v2410, 1.442695
  %v2770 = vpow.pop %v2769
  %v2771 = vmul.f32 %v2411, 1.442695
  %v2772 = vpow.pop %v2771
  %v2773 = vmul.f32 %v2412, 1.442695
  %v2774 = vpow.pop %v2773
  %v2775 = vmul.f32 %v2413, 1.442695
  %v2776 = vpow.pop %v2775
  %v2777 = vmul.f32 %v2414, 1.442695
  %v2778 = vpow.pop %v2777
  %v2779 = vmul.f32 %v2415, 1.442695
  %v2780 = vpow.pop %v2779
  %v2781 = vmul.f32 %v2416, 1.442695
  %v2782 = vpow.pop %v2781
  %v2783 = vmul.f32 %v2417, 1.442695
  %v2784 = vpow.pop %v2783
  %v2785 = vmul.f32 %v2418, 1.442695
  %v2786 = vpow.pop %v2785
  %v2787 = vmul.f32 %v2419, 1.442695
  %v2788 = vpow.pop %v2787
  %v2789 = vmul.f32 %v2420, 1.442695
  %v2790 = vpow.pop %v2789
  %v2791 = vmul.f32 %v2421, 1.442695
  %v2792 = vpow.pop %v2791
  %v2793 = vmul.f32 %v2422, 1.442695
  %v2794 = vpow.pop %v2793
  %v2795 = vmul.f32 %v2423, 1.442695
  %v2796 = vpow.pop %v2795
  %v2797 = vmul.f32 %v2424, 1.442695
  %v2798 = vpow.pop %v2797
  %v2799 = vmul.f32 %v2425, 1.442695
  %v2800 = vpow.pop %v2799
  %v2801 = vmul.f32 %v2426, 1.442695
  %v2802 = vpow.pop %v2801
  %v2803 = vmul.f32 %v2427, 1.442695
  %v2804 = vpow.pop %v2803
  %v2805 = vmul.f32 %v2428, 1.442695
  %v2806 = vpow.pop %v2805
  %v2807 = vmul.f32 %v2429, 1.442695
  %v2808 = vpow.pop %v2807
  %v2809 = vmul.f32 %v2430, 1.442695
  %v2810 = vpow.pop %v2809
  %v2811 = vmul.f32 %v2431, 1.442695
  %v2812 = vpow.pop %v2811
  %v2813 = vmul.f32 %v2432, 1.442695
  %v2814 = vpow.pop %v2813
  %v2815 = vmul.f32 %v2433, 1.442695
  %v2816 = vpow.pop %v2815
  %v2817 = vmul.f32 %v2434, 1.442695
  %v2818 = vpow.pop %v2817
  %v2819 = vmul.f32 %v2435, 1.442695
  %v2820 = vpow.pop %v2819
  %v2821 = vmul.f32 %v2436, 1.442695
  %v2822 = vpow.pop %v2821
  %v2823 = vmul.f32 %v2437, 1.442695
  %v2824 = vpow.pop %v2823
  %v2825 = vmul.f32 %v2438, 1.442695
  %v2826 = vpow.pop %v2825
  %v2827 = vmul.f32 %v2439, 1.442695
  %v2828 = vpow.pop %v2827
  %v2829 = vmul.f32 %v2440, 1.442695
  %v2830 = vpow.pop %v2829
  %v2831 = vmul.f32 %v2441, 1.442695
  %v2832 = vpow.pop %v2831
  %v2833 = vmul.f32 %v2442, 1.442695
  %v2834 = vpow.pop %v2833
  %v2835 = vmul.f32 %v2443, 1.442695
  %v2836 = vpow.pop %v2835
  %v2837 = vmul.f32 %v2444, 1.442695
  %v2838 = vpow.pop %v2837
  %v2839 = vmul.f32 %v2445, 1.442695
  %v2840 = vpow.pop %v2839
  %v2841 = vmul.f32 %v2446, 1.442695
  %v2842 = vpow.pop %v2841
  %v2843 = vmul.f32 %v2447, 1.442695
  %v2844 = vpow.pop %v2843
  %v2845 = vmul.f32 %v2448, 1.442695
  %v2846 = vpow.pop %v2845
  %v2847 = vmul.f32 %v2449, 1.442695
  %v2848 = vpow.pop %v2847
  %v2849 = vmul.f32 %v2450, 1.442695
  %v2850 = vpow.pop %v2849
  %v2851 = vmul.f32 %v2451, 1.442695
  %v2852 = vpow.pop %v2851
  %v2853 = vmul.f32 %v2452, 1.442695
  %v2854 = vpow.pop %v2853
  %v2855 = vmul.f32 %v2453, 1.442695
  %v2856 = vpow.pop %v2855
  %v2857 = vmul.f32 %v2454, 1.442695
  %v2858 = vpow.pop %v2857
  %v2859 = vmul.f32 %v2455, 1.442695
  %v2860 = vpow.pop %v2859
  %v2861 = vmul.f32 %v2456, 1.442695
  %v2862 = vpow.pop %v2861
  %v2863 = vmul.f32 %v2457, 1.442695
  %v2864 = vpow.pop %v2863
  %v2865 = vmul.f32 %v2458, 1.442695
  %v2866 = vpow.pop %v2865
  %v2867 = vmul.f32 %v2459, 1.442695
  %v2868 = vpow.pop %v2867
  %v2869 = vmul.f32 %v2460, 1.442695
  %v2870 = vpow.pop %v2869
  %v2871 = vmul.f32 %v2461, 1.442695
  %v2872 = vpow.pop %v2871
  %v2873 = vmul.f32 %v2462, 1.442695
  %v2874 = vpow.pop %v2873
  %v2875 = vmul.f32 %v2463, 1.442695
  %v2876 = vpow.pop %v2875
  %v2877 = vmul.f32 %v2464, 1.442695
  %v2878 = vpow.pop %v2877
  %v2879 = vmul.f32 %v2465, 1.442695
  %v2880 = vpow.pop %v2879
  %v2881 = vmul.f32 %v2466, 1.442695
  %v2882 = vpow.pop %v2881
  %v2883 = vmul.f32 %v2467, 1.442695
  %v2884 = vpow.pop %v2883
  %v2885 = vmul.f32 %v2468, 1.442695
  %v2886 = vpow.pop %v2885
  %v2887 = vmul.f32 %v2469, 1.442695
  %v2888 = vpow.pop %v2887
  %v2889 = vmul.f32 %v2470, 1.442695
  %v2890 = vpow.pop %v2889
  %v2891 = vmul.f32 %v2471, 1.442695
  %v2892 = vpow.pop %v2891
  %v2893 = vmul.f32 %v2472, 1.442695
  %v2894 = vpow.pop %v2893
  %v2895 = vmul.f32 %v2473, 1.442695
  %v2896 = vpow.pop %v2895
  %v2897 = vmul.f32 %v2474, 1.442695
  %v2898 = vpow.pop %v2897
  %v2899 = vmul.f32 %v2475, 1.442695
  %v2900 = vpow.pop %v2899
  %v2901 = vmul.f32 %v2476, 1.442695
  %v2902 = vpow.pop %v2901
  %v2903 = vmul.f32 %v2477, 1.442695
  %v2904 = vpow.pop %v2903
  %v2905 = vmul.f32 %v2478, 1.442695
  %v2906 = vpow.pop %v2905
  %v2907 = vmul.f32 %v2479, 1.442695
  %v2908 = vpow.pop %v2907
  %v2909 = vmul.f32 %v2480, 1.442695
  %v2910 = vpow.pop %v2909
  %v2911 = vmul.f32 %v2481, 1.442695
  %v2912 = vpow.pop %v2911
  %v2913 = vmul.f32 %v2482, 1.442695
  %v2914 = vpow.pop %v2913
  %v2915 = vmul.f32 %v2483, 1.442695
  %v2916 = vpow.pop %v2915
  %v2917 = vmul.f32 %v2484, 1.442695
  %v2918 = vpow.pop %v2917
  %v2919 = vmul.f32 %v2485, 1.442695
  %v2920 = vpow.pop %v2919
  %v2921 = vmul.f32 %v2486, 1.442695
  %v2922 = vpow.pop %v2921
  %v2923 = vmul.f32 %v2487, 1.442695
  %v2924 = vpow.pop %v2923
  %v2925 = vmul.f32 %v2488, 1.442695
  %v2926 = vpow.pop %v2925
  %v2927 = vmul.f32 %v2489, 1.442695
  %v2928 = vpow.pop %v2927
  %v2929 = vmul.f32 %v2490, 1.442695
  %v2930 = vpow.pop %v2929
  %v2931 = vmul.f32 %v2491, 1.442695
  %v2932 = vpow.pop %v2931
  %v2933 = vmul.f32 %v2492, 1.442695
  %v2934 = vpow.pop %v2933
  %v2935 = vmul.f32 %v2493, 1.442695
  %v2936 = vpow.pop %v2935
  %v2937 = vmul.f32 %v2494, 1.442695
  %v2938 = vpow.pop %v2937
  %v2939 = vmul.f32 %v2495, 1.442695
  %v2940 = vpow.pop %v2939
  %v2941 = vmul.f32 %v2496, 1.442695
  %v2942 = vpow.pop %v2941
  %v2943 = vmul.f32 %v2497, 1.442695
  %v2944 = vpow.pop %v2943
  %v2945 = vmul.f32 %v2498, 1.442695
  %v2946 = vpow.pop %v2945
  %v2947 = vmul.f32 %v2499, 1.442695
  %v2948 = vpow.pop %v2947
  %v2949 = vmul.f32 %v2500, 1.442695
  %v2950 = vpow.pop %v2949
  %v2951 = vmul.f32 %v2501, 1.442695
  %v2952 = vpow.pop %v2951
  %v2953 = vmul.f32 %v2502, 1.442695
  %v2954 = vpow.pop %v2953
  %v2955 = vmul.f32 %v2503, 1.442695
  %v2956 = vpow.pop %v2955
  %v2957 = vmul.f32 %v2504, 1.442695
  %v2958 = vpow.pop %v2957
  %v2959 = vmul.f32 %v2505, 1.442695
  %v2960 = vpow.pop %v2959
  %v2961 = vmul.f32 %v2506, 1.442695
  %v2962 = vpow.pop %v2961
  %v2963 = vmul.f32 %v2507, 1.442695
  %v2964 = vpow.pop %v2963
  %v2965 = vmul.f32 %v2508, 1.442695
  %v2966 = vpow.pop %v2965
  %v2967 = vmul.f32 %v2509, 1.442695
  %v2968 = vpow.pop %v2967
  %v2969 = vmul.f32 %v2510, 1.442695
  %v2970 = vpow.pop %v2969
  %v2971 = vmul.f32 %v2511, 1.442695
  %v2972 = vpow.pop %v2971
  %v2973 = vmul.f32 %v2512, 1.442695
  %v2974 = vpow.pop %v2973
  %v2975 = vmul.f32 %v2513, 1.442695
  %v2976 = vpow.pop %v2975
  %v2977 = vmul.f32 %v2514, 1.442695
  %v2978 = vpow.pop %v2977
  %v2979 = vmul.f32 %v2515, 1.442695
  %v2980 = vpow.pop %v2979
  %v2981 = vmul.f32 %v2516, 1.442695
  %v2982 = vpow.pop %v2981
  %v2983 = vmul.f32 %v2517, 1.442695
  %v2984 = vpow.pop %v2983
  %v2985 = vmul.f32 %v2518, 1.442695
  %v2986 = vpow.pop %v2985
  %v2987 = vmul.f32 %v2519, 1.442695
  %v2988 = vpow.pop %v2987
  %v2989 = vmul.f32 %v2520, 1.442695
  %v2990 = vpow.pop %v2989
  %v2991 = vmul.f32 %v2521, 1.442695
  %v2992 = vpow.pop %v2991
  %v2993 = vmul.f32 %v2522, 1.442695
  %v2994 = vpow.pop %v2993
  %v2995 = vmul.f32 %v2523, 1.442695
  %v2996 = vpow.pop %v2995
  %v2997 = vmul.f32 %v2524, 1.442695
  %v2998 = vpow.pop %v2997
  %v2999 = vmul.f32 %v2525, 1.442695
  %v3000 = vpow.pop %v2999
  %v3001 = vmul.f32 %v2526, 1.442695
  %v3002 = vpow.pop %v3001
  %v3003 = vmul.f32 %v2527, 1.442695
  %v3004 = vpow.pop %v3003
  %v3005 = vmul.f32 %v2528, 1.442695
  %v3006 = vpow.pop %v3005
  %v3007 = vmul.f32 %v2529, 1.442695
  %v3008 = vpow.pop %v3007
  %v3009 = vmul.f32 %v2530, 1.442695
  %v3010 = vpow.pop %v3009
  %v3011 = vmul.f32 %v2531, 1.442695
  %v3012 = vpow.pop %v3011
  %v3013 = vmul.f32 %v2532, 1.442695
  %v3014 = vpow.pop %v3013
  %v3015 = vmul.f32 %v2533, 1.442695
  %v3016 = vpow.pop %v3015
  %v3017 = vmul.f32 %v2534, 1.442695
  %v3018 = vpow.pop %v3017
  %v3019 = vmul.f32 %v2535, 1.442695
  %v3020 = vpow.pop %v3019
  %v3021 = vmul.f32 %v2536, 1.442695
  %v3022 = vpow.pop %v3021
  %v3023 = vmul.f32 %v2537, 1.442695
  %v3024 = vpow.pop %v3023
  %v3025 = vmul.f32 %v2538, 1.442695
  %v3026 = vpow.pop %v3025
  %v3027 = vmul.f32 %v2539, 1.442695
  %v3028 = vpow.pop %v3027
  %v3029 = vmul.f32 %v2540, 1.442695
  %v3030 = vpow.pop %v3029
  %v3031 = vmul.f32 %v2541, 1.442695
  %v3032 = vpow.pop %v3031
  %v3033 = vmul.f32 %v2542, 1.442695
  %v3034 = vpow.pop %v3033
  %v3035 = vmul.f32 %v2543, 1.442695
  %v3036 = vpow.pop %v3035
  %v3037 = vmul.f32 %v2544, 1.442695
  %v3038 = vpow.pop %v3037
  %v3039 = vmul.f32 %v2545, 1.442695
  %v3040 = vpow.pop %v3039
  %v3041 = vmul.f32 %v2546, 1.442695
  %v3042 = vpow.pop %v3041
  %v3043 = vmul.f32 %v2547, 1.442695
  %v3044 = vpow.pop %v3043
  %v3045 = vmul.f32 %v2548, 1.442695
  %v3046 = vpow.pop %v3045
  %v3047 = vmul.f32 %v2549, 1.442695
  %v3048 = vpow.pop %v3047
  %v3049 = vmul.f32 %v2550, 1.442695
  %v3050 = vpow.pop %v3049
  %v3051 = vmul.f32 %v2551, 1.442695
  %v3052 = vpow.pop %v3051
  %v3053 = vmul.f32 %v2552, 1.442695
  %v3054 = vpow.pop %v3053
  %v3055 = vmul.f32 %v2553, 1.442695
  %v3056 = vpow.pop %v3055
  %v3057 = vmul.f32 %v2554, 1.442695
  %v3058 = vpow.pop %v3057
  %v3059 = vmul.f32 %v2555, 1.442695
  %v3060 = vpow.pop %v3059
  %v3061 = vmul.f32 %v2556, 1.442695
  %v3062 = vpow.pop %v3061
  %v3063 = vmul.f32 %v2557, 1.442695
  %v3064 = vpow.pop %v3063
  %v3065 = vmul.f32 %v2558, 1.442695
  %v3066 = vpow.pop %v3065
  %v3067 = vmul.f32 %v2559, 1.442695
  %v3068 = vpow.pop %v3067
  %v3069 = vmul.f32 %v2560, 1.442695
  %v3070 = vpow.pop %v3069
  %v3071 = vmul.f32 %v2561, 1.442695
  %v3072 = vpow.pop %v3071
  %v3073 = vmul.f32 %v2562, 1.442695
  %v3074 = vpow.pop %v3073
  %v3075 = vmul.f32 %v2563, 1.442695
  %v3076 = vpow.pop %v3075
  %v3077 = vmul.f32 %v2564, 1.442695
  %v3078 = vpow.pop %v3077
  %v3079 = vmul.f32 %v2565, 1.442695
  %v3080 = vpow.pop %v3079
  %v3081 = vmul.f32 %v2566, 1.442695
  %v3082 = vpow.pop %v3081
  %v3083 = vmul.f32 %v2567, 1.442695
  %v3084 = vpow.pop %v3083
  %v3085 = vmul.f32 %v2568, 1.442695
  %v3086 = vpow.pop %v3085
  %v3087 = vmul.f32 %v2569, 1.442695
  %v3088 = vpow.pop %v3087
  %v3089 = vmul.f32 %v2570, 1.442695
  %v3090 = vpow.pop %v3089
  %v3091 = vmul.f32 %v2571, 1.442695
  %v3092 = vpow.pop %v3091
  %v3093 = vmul.f32 %v2572, 1.442695
  %v3094 = vpow.pop %v3093
  %v3095 = vmul.f32 %v2573, 1.442695
  %v3096 = vpow.pop %v3095
  %v3097 = vmul.f32 %v2574, 1.442695
  %v3098 = vpow.pop %v3097
  %v3099 = vmul.f32 %v2575, 1.442695
  %v3100 = vpow.pop %v3099
  %v3101 = vmul.f32 %v2576, 1.442695
  %v3102 = vpow.pop %v3101
  %v3103 = vmul.f32 %v2577, 1.442695
  %v3104 = vpow.pop %v3103
  %v3105 = vmul.f32 %v2578, 1.442695
  %v3106 = vpow.pop %v3105
  %v3107 = vmul.f32 %v2579, 1.442695
  %v3108 = vpow.pop %v3107
  %v3109 = vmul.f32 %v2580, 1.442695
  %v3110 = vpow.pop %v3109
  %v3111 = vmul.f32 %v2581, 1.442695
  %v3112 = vpow.pop %v3111
  %v3113 = vmul.f32 %v2582, 1.442695
  %v3114 = vpow.pop %v3113
  %v3115 = vmul.f32 %v2583, 1.442695
  %v3116 = vpow.pop %v3115
  %v3117 = vmul.f32 %v2584, 1.442695
  %v3118 = vpow.pop %v3117
  %v3119 = vmul.f32 %v2585, 1.442695
  %v3120 = vpow.pop %v3119
  %v3121 = vmul.f32 %v2586, 1.442695
  %v3122 = vpow.pop %v3121
  %v3123 = vmul.f32 %v2587, 1.442695
  %v3124 = vpow.pop %v3123
  %v3125 = vmul.f32 %v2588, 1.442695
  %v3126 = vpow.pop %v3125
  %v3127 = vmul.f32 %v2589, 1.442695
  %v3128 = vpow.pop %v3127
  %v3129 = vmul.f32 %v2590, 1.442695
  %v3130 = vpow.pop %v3129
  %v3131 = vmul.f32 %v2591, 1.442695
  %v3132 = vpow.pop %v3131
  %v3133 = vmul.f32 %v2592, 1.442695
  %v3134 = vpow.pop %v3133
  %v3135 = vmul.f32 %v2593, 1.442695
  %v3136 = vpow.pop %v3135
  %v3137 = vmul.f32 %v2594, 1.442695
  %v3138 = vpow.pop %v3137
  %v3139 = vmul.f32 %v2595, 1.442695
  %v3140 = vpow.pop %v3139
  %v3141 = vmul.f32 %v2596, 1.442695
  %v3142 = vpow.pop %v3141
  %v3143 = vmul.f32 %v2597, 1.442695
  %v3144 = vpow.pop %v3143
  %v3145 = vmul.f32 %v2598, 1.442695
  %v3146 = vpow.pop %v3145
  %v3147 = vmul.f32 %v2599, 1.442695
  %v3148 = vpow.pop %v3147
  %v3149 = vmul.f32 %v2600, 1.442695
  %v3150 = vpow.pop %v3149
  %v3151 = vmul.f32 %v2601, 1.442695
  %v3152 = vpow.pop %v3151
  %v3153 = vmul.f32 %v2602, 1.442695
  %v3154 = vpow.pop %v3153
  %v3155 = vmul.f32 %v2603, 1.442695
  %v3156 = vpow.pop %v3155
  %v3157 = vmul.f32 %v2604, 1.442695
  %v3158 = vpow.pop %v3157
  %v3159 = vmul.f32 %v2605, 1.442695
  %v3160 = vpow.pop %v3159
  %v3161 = vmul.f32 %v2606, 1.442695
  %v3162 = vpow.pop %v3161
  %v3163 = vmul.f32 %v2607, 1.442695
  %v3164 = vpow.pop %v3163
  %v3165 = vmul.f32 %v2608, 1.442695
  %v3166 = vpow.pop %v3165
  %v3167 = vmul.f32 %v2609, 1.442695
  %v3168 = vpow.pop %v3167
  %v3169 = vmul.f32 %v2610, 1.442695
  %v3170 = vpow.pop %v3169
  %v3171 = vmul.f32 %v2611, 1.442695
  %v3172 = vpow.pop %v3171
  %v3173 = vmul.f32 %v2612, 1.442695
  %v3174 = vpow.pop %v3173
  %v3175 = vmul.f32 %v2613, 1.442695
  %v3176 = vpow.pop %v3175
  %v3177 = vmul.f32 %v2614, 1.442695
  %v3178 = vpow.pop %v3177
  %v3179 = vmul.f32 %v2615, 1.442695
  %v3180 = vpow.pop %v3179
  %v3181 = vmul.f32 %v2616, 1.442695
  %v3182 = vpow.pop %v3181
  %v3183 = vmul.f32 %v2617, 1.442695
  %v3184 = vpow.pop %v3183
  %v3185 = vmul.f32 %v2618, 1.442695
  %v3186 = vpow.pop %v3185
  %v3187 = vmul.f32 %v2619, 1.442695
  %v3188 = vpow.pop %v3187
  %v3189 = vmul.f32 %v2620, 1.442695
  %v3190 = vpow.pop %v3189
  %v3191 = vmul.f32 %v2621, 1.442695
  %v3192 = vpow.pop %v3191
  %v3193 = vmul.f32 %v2622, 1.442695
  %v3194 = vpow.pop %v3193
  %v3195 = vmul.f32 %v2623, 1.442695
  %v3196 = vpow.pop %v3195
  %v3197 = vmul.f32 %v2624, 1.442695
  %v3198 = vpow.pop %v3197
  %v3199 = vmul.f32 %v2625, 1.442695
  %v3200 = vpow.pop %v3199
  %v3201 = vmul.f32 %v2626, 1.442695
  %v3202 = vpow.pop %v3201
  %v3203 = vadd.f32 %v2628, 1.0
  %v3204 = vadd.f32 %v2630, 1.0
  %v3205 = vadd.f32 %v2632, 1.0
  %v3206 = vadd.f32 %v2634, 1.0
  %v3207 = vadd.f32 %v2636, 1.0
  %v3208 = vadd.f32 %v2638, 1.0
  %v3209 = vadd.f32 %v2640, 1.0
  %v3210 = vadd.f32 %v2642, 1.0
  %v3211 = vadd.f32 %v2644, 1.0
  %v3212 = vadd.f32 %v2646, 1.0
  %v3213 = vadd.f32 %v2648, 1.0
  %v3214 = vadd.f32 %v2650, 1.0
  %v3215 = vadd.f32 %v2652, 1.0
  %v3216 = vadd.f32 %v2654, 1.0
  %v3217 = vadd.f32 %v2656, 1.0
  %v3218 = vadd.f32 %v2658, 1.0
  %v3219 = vadd.f32 %v2660, 1.0
  %v3220 = vadd.f32 %v2662, 1.0
  %v3221 = vadd.f32 %v2664, 1.0
  %v3222 = vadd.f32 %v2666, 1.0
  %v3223 = vadd.f32 %v2668, 1.0
  %v3224 = vadd.f32 %v2670, 1.0
  %v3225 = vadd.f32 %v2672, 1.0
  %v3226 = vadd.f32 %v2674, 1.0
  %v3227 = vadd.f32 %v2676, 1.0
  %v3228 = vadd.f32 %v2678, 1.0
  %v3229 = vadd.f32 %v2680, 1.0
  %v3230 = vadd.f32 %v2682, 1.0
  %v3231 = vadd.f32 %v2684, 1.0
  %v3232 = vadd.f32 %v2686, 1.0
  %v3233 = vadd.f32 %v2688, 1.0
  %v3234 = vadd.f32 %v2690, 1.0
  %v3235 = vadd.f32 %v2692, 1.0
  %v3236 = vadd.f32 %v2694, 1.0
  %v3237 = vadd.f32 %v2696, 1.0
  %v3238 = vadd.f32 %v2698, 1.0
  %v3239 = vadd.f32 %v2700, 1.0
  %v3240 = vadd.f32 %v2702, 1.0
  %v3241 = vadd.f32 %v2704, 1.0
  %v3242 = vadd.f32 %v2706, 1.0
  %v3243 = vadd.f32 %v2708, 1.0
  %v3244 = vadd.f32 %v2710, 1.0
  %v3245 = vadd.f32 %v2712, 1.0
  %v3246 = vadd.f32 %v2714, 1.0
  %v3247 = vadd.f32 %v2716, 1.0
  %v3248 = vadd.f32 %v2718, 1.0
  %v3249 = vadd.f32 %v2720, 1.0
  %v3250 = vadd.f32 %v2722, 1.0
  %v3251 = vadd.f32 %v2724, 1.0
  %v3252 = vadd.f32 %v2726, 1.0
  %v3253 = vadd.f32 %v2728, 1.0
  %v3254 = vadd.f32 %v2730, 1.0
  %v3255 = vadd.f32 %v2732, 1.0
  %v3256 = vadd.f32 %v2734, 1.0
  %v3257 = vadd.f32 %v2736, 1.0
  %v3258 = vadd.f32 %v2738, 1.0
  %v3259 = vadd.f32 %v2740, 1.0
  %v3260 = vadd.f32 %v2742, 1.0
  %v3261 = vadd.f32 %v2744, 1.0
  %v3262 = vadd.f32 %v2746, 1.0
  %v3263 = vadd.f32 %v2748, 1.0
  %v3264 = vadd.f32 %v2750, 1.0
  %v3265 = vadd.f32 %v2752, 1.0
  %v3266 = vadd.f32 %v2754, 1.0
  %v3267 = vadd.f32 %v2756, 1.0
  %v3268 = vadd.f32 %v2758, 1.0
  %v3269 = vadd.f32 %v2760, 1.0
  %v3270 = vadd.f32 %v2762, 1.0
  %v3271 = vadd.f32 %v2764, 1.0
  %v3272 = vadd.f32 %v2766, 1.0
  %v3273 = vadd.f32 %v2768, 1.0
  %v3274 = vadd.f32 %v2770, 1.0
  %v3275 = vadd.f32 %v2772, 1.0
  %v3276 = vadd.f32 %v2774, 1.0
  %v3277 = vadd.f32 %v2776, 1.0
  %v3278 = vadd.f32 %v2778, 1.0
  %v3279 = vadd.f32 %v2780, 1.0
  %v3280 = vadd.f32 %v2782, 1.0
  %v3281 = vadd.f32 %v2784, 1.0
  %v3282 = vadd.f32 %v2786, 1.0
  %v3283 = vadd.f32 %v2788, 1.0
  %v3284 = vadd.f32 %v2790, 1.0
  %v3285 = vadd.f32 %v2792, 1.0
  %v3286 = vadd.f32 %v2794, 1.0
  %v3287 = vadd.f32 %v2796, 1.0
  %v3288 = vadd.f32 %v2798, 1.0
  %v3289 = vadd.f32 %v2800, 1.0
  %v3290 = vadd.f32 %v2802, 1.0
  %v3291 = vadd.f32 %v2804, 1.0
  %v3292 = vadd.f32 %v2806, 1.0
  %v3293 = vadd.f32 %v2808, 1.0
  %v3294 = vadd.f32 %v2810, 1.0
  %v3295 = vadd.f32 %v2812, 1.0
  %v3296 = vadd.f32 %v2814, 1.0
  %v3297 = vadd.f32 %v2816, 1.0
  %v3298 = vadd.f32 %v2818, 1.0
  %v3299 = vadd.f32 %v2820, 1.0
  %v3300 = vadd.f32 %v2822, 1.0
  %v3301 = vadd.f32 %v2824, 1.0
  %v3302 = vadd.f32 %v2826, 1.0
  %v3303 = vadd.f32 %v2828, 1.0
  %v3304 = vadd.f32 %v2830, 1.0
  %v3305 = vadd.f32 %v2832, 1.0
  %v3306 = vadd.f32 %v2834, 1.0
  %v3307 = vadd.f32 %v2836, 1.0
  %v3308 = vadd.f32 %v2838, 1.0
  %v3309 = vadd.f32 %v2840, 1.0
  %v3310 = vadd.f32 %v2842, 1.0
  %v3311 = vadd.f32 %v2844, 1.0
  %v3312 = vadd.f32 %v2846, 1.0
  %v3313 = vadd.f32 %v2848, 1.0
  %v3314 = vadd.f32 %v2850, 1.0
  %v3315 = vadd.f32 %v2852, 1.0
  %v3316 = vadd.f32 %v2854, 1.0
  %v3317 = vadd.f32 %v2856, 1.0
  %v3318 = vadd.f32 %v2858, 1.0
  %v3319 = vadd.f32 %v2860, 1.0
  %v3320 = vadd.f32 %v2862, 1.0
  %v3321 = vadd.f32 %v2864, 1.0
  %v3322 = vadd.f32 %v2866, 1.0
  %v3323 = vadd.f32 %v2868, 1.0
  %v3324 = vadd.f32 %v2870, 1.0
  %v3325 = vadd.f32 %v2872, 1.0
  %v3326 = vadd.f32 %v2874, 1.0
  %v3327 = vadd.f32 %v2876, 1.0
  %v3328 = vadd.f32 %v2878, 1.0
  %v3329 = vadd.f32 %v2880, 1.0
  %v3330 = vadd.f32 %v2882, 1.0
  %v3331 = vadd.f32 %v2884, 1.0
  %v3332 = vadd.f32 %v2886, 1.0
  %v3333 = vadd.f32 %v2888, 1.0
  %v3334 = vadd.f32 %v2890, 1.0
  %v3335 = vadd.f32 %v2892, 1.0
  %v3336 = vadd.f32 %v2894, 1.0
  %v3337 = vadd.f32 %v2896, 1.0
  %v3338 = vadd.f32 %v2898, 1.0
  %v3339 = vadd.f32 %v2900, 1.0
  %v3340 = vadd.f32 %v2902, 1.0
  %v3341 = vadd.f32 %v2904, 1.0
  %v3342 = vadd.f32 %v2906, 1.0
  %v3343 = vadd.f32 %v2908, 1.0
  %v3344 = vadd.f32 %v2910, 1.0
  %v3345 = vadd.f32 %v2912, 1.0
  %v3346 = vadd.f32 %v2914, 1.0
  %v3347 = vadd.f32 %v2916, 1.0
  %v3348 = vadd.f32 %v2918, 1.0
  %v3349 = vadd.f32 %v2920, 1.0
  %v3350 = vadd.f32 %v2922, 1.0
  %v3351 = vadd.f32 %v2924, 1.0
  %v3352 = vadd.f32 %v2926, 1.0
  %v3353 = vadd.f32 %v2928, 1.0
  %v3354 = vadd.f32 %v2930, 1.0
  %v3355 = vadd.f32 %v2932, 1.0
  %v3356 = vadd.f32 %v2934, 1.0
  %v3357 = vadd.f32 %v2936, 1.0
  %v3358 = vadd.f32 %v2938, 1.0
  %v3359 = vadd.f32 %v2940, 1.0
  %v3360 = vadd.f32 %v2942, 1.0
  %v3361 = vadd.f32 %v2944, 1.0
  %v3362 = vadd.f32 %v2946, 1.0
  %v3363 = vadd.f32 %v2948, 1.0
  %v3364 = vadd.f32 %v2950, 1.0
  %v3365 = vadd.f32 %v2952, 1.0
  %v3366 = vadd.f32 %v2954, 1.0
  %v3367 = vadd.f32 %v2956, 1.0
  %v3368 = vadd.f32 %v2958, 1.0
  %v3369 = vadd.f32 %v2960, 1.0
  %v3370 = vadd.f32 %v2962, 1.0
  %v3371 = vadd.f32 %v2964, 1.0
  %v3372 = vadd.f32 %v2966, 1.0
  %v3373 = vadd.f32 %v2968, 1.0
  %v3374 = vadd.f32 %v2970, 1.0
  %v3375 = vadd.f32 %v2972, 1.0
  %v3376 = vadd.f32 %v2974, 1.0
  %v3377 = vadd.f32 %v2976, 1.0
  %v3378 = vadd.f32 %v2978, 1.0
  %v3379 = vadd.f32 %v2980, 1.0
  %v3380 = vadd.f32 %v2982, 1.0
  %v3381 = vadd.f32 %v2984, 1.0
  %v3382 = vadd.f32 %v2986, 1.0
  %v3383 = vadd.f32 %v2988, 1.0
  %v3384 = vadd.f32 %v2990, 1.0
  %v3385 = vadd.f32 %v2992, 1.0
  %v3386 = vadd.f32 %v2994, 1.0
  %v3387 = vadd.f32 %v2996, 1.0
  %v3388 = vadd.f32 %v2998, 1.0
  %v3389 = vadd.f32 %v3000, 1.0
  %v3390 = vadd.f32 %v3002, 1.0
  %v3391 = vadd.f32 %v3004, 1.0
  %v3392 = vadd.f32 %v3006, 1.0
  %v3393 = vadd.f32 %v3008, 1.0
  %v3394 = vadd.f32 %v3010, 1.0
  %v3395 = vadd.f32 %v3012, 1.0
  %v3396 = vadd.f32 %v3014, 1.0
  %v3397 = vadd.f32 %v3016, 1.0
  %v3398 = vadd.f32 %v3018, 1.0
  %v3399 = vadd.f32 %v3020, 1.0
  %v3400 = vadd.f32 %v3022, 1.0
  %v3401 = vadd.f32 %v3024, 1.0
  %v3402 = vadd.f32 %v3026, 1.0
  %v3403 = vadd.f32 %v3028, 1.0
  %v3404 = vadd.f32 %v3030, 1.0
  %v3405 = vadd.f32 %v3032, 1.0
  %v3406 = vadd.f32 %v3034, 1.0
  %v3407 = vadd.f32 %v3036, 1.0
  %v3408 = vadd.f32 %v3038, 1.0
  %v3409 = vadd.f32 %v3040, 1.0
  %v3410 = vadd.f32 %v3042, 1.0
  %v3411 = vadd.f32 %v3044, 1.0
  %v3412 = vadd.f32 %v3046, 1.0
  %v3413 = vadd.f32 %v3048, 1.0
  %v3414 = vadd.f32 %v3050, 1.0
  %v3415 = vadd.f32 %v3052, 1.0
  %v3416 = vadd.f32 %v3054, 1.0
  %v3417 = vadd.f32 %v3056, 1.0
  %v3418 = vadd.f32 %v3058, 1.0
  %v3419 = vadd.f32 %v3060, 1.0
  %v3420 = vadd.f32 %v3062, 1.0
  %v3421 = vadd.f32 %v3064, 1.0
  %v3422 = vadd.f32 %v3066, 1.0
  %v3423 = vadd.f32 %v3068, 1.0
  %v3424 = vadd.f32 %v3070, 1.0
  %v3425 = vadd.f32 %v3072, 1.0
  %v3426 = vadd.f32 %v3074, 1.0
  %v3427 = vadd.f32 %v3076, 1.0
  %v3428 = vadd.f32 %v3078, 1.0
  %v3429 = vadd.f32 %v3080, 1.0
  %v3430 = vadd.f32 %v3082, 1.0
  %v3431 = vadd.f32 %v3084, 1.0
  %v3432 = vadd.f32 %v3086, 1.0
  %v3433 = vadd.f32 %v3088, 1.0
  %v3434 = vadd.f32 %v3090, 1.0
  %v3435 = vadd.f32 %v3092, 1.0
  %v3436 = vadd.f32 %v3094, 1.0
  %v3437 = vadd.f32 %v3096, 1.0
  %v3438 = vadd.f32 %v3098, 1.0
  %v3439 = vadd.f32 %v3100, 1.0
  %v3440 = vadd.f32 %v3102, 1.0
  %v3441 = vadd.f32 %v3104, 1.0
  %v3442 = vadd.f32 %v3106, 1.0
  %v3443 = vadd.f32 %v3108, 1.0
  %v3444 = vadd.f32 %v3110, 1.0
  %v3445 = vadd.f32 %v3112, 1.0
  %v3446 = vadd.f32 %v3114, 1.0
  %v3447 = vadd.f32 %v3116, 1.0
  %v3448 = vadd.f32 %v3118, 1.0
  %v3449 = vadd.f32 %v3120, 1.0
  %v3450 = vadd.f32 %v3122, 1.0
  %v3451 = vadd.f32 %v3124, 1.0
  %v3452 = vadd.f32 %v3126, 1.0
  %v3453 = vadd.f32 %v3128, 1.0
  %v3454 = vadd.f32 %v3130, 1.0
  %v3455 = vadd.f32 %v3132, 1.0
  %v3456 = vadd.f32 %v3134, 1.0
  %v3457 = vadd.f32 %v3136, 1.0
  %v3458 = vadd.f32 %v3138, 1.0
  %v3459 = vadd.f32 %v3140, 1.0
  %v3460 = vadd.f32 %v3142, 1.0
  %v3461 = vadd.f32 %v3144, 1.0
  %v3462 = vadd.f32 %v3146, 1.0
  %v3463 = vadd.f32 %v3148, 1.0
  %v3464 = vadd.f32 %v3150, 1.0
  %v3465 = vadd.f32 %v3152, 1.0
  %v3466 = vadd.f32 %v3154, 1.0
  %v3467 = vadd.f32 %v3156, 1.0
  %v3468 = vadd.f32 %v3158, 1.0
  %v3469 = vadd.f32 %v3160, 1.0
  %v3470 = vadd.f32 %v3162, 1.0
  %v3471 = vadd.f32 %v3164, 1.0
  %v3472 = vadd.f32 %v3166, 1.0
  %v3473 = vadd.f32 %v3168, 1.0
  %v3474 = vadd.f32 %v3170, 1.0
  %v3475 = vadd.f32 %v3172, 1.0
  %v3476 = vadd.f32 %v3174, 1.0
  %v3477 = vadd.f32 %v3176, 1.0
  %v3478 = vadd.f32 %v3178, 1.0
  %v3479 = vadd.f32 %v3180, 1.0
  %v3480 = vadd.f32 %v3182, 1.0
  %v3481 = vadd.f32 %v3184, 1.0
  %v3482 = vadd.f32 %v3186, 1.0
  %v3483 = vadd.f32 %v3188, 1.0
  %v3484 = vadd.f32 %v3190, 1.0
  %v3485 = vadd.f32 %v3192, 1.0
  %v3486 = vadd.f32 %v3194, 1.0
  %v3487 = vadd.f32 %v3196, 1.0
  %v3488 = vadd.f32 %v3198, 1.0
  %v3489 = vadd.f32 %v3200, 1.0
  %v3490 = vadd.f32 %v3202, 1.0
  %v3491 = vrcp.pop %v3203
  %v3492 = vmul.f32 1.0, %v3491
  %v3493 = vrcp.pop %v3204
  %v3494 = vmul.f32 1.0, %v3493
  %v3495 = vrcp.pop %v3205
  %v3496 = vmul.f32 1.0, %v3495
  %v3497 = vrcp.pop %v3206
  %v3498 = vmul.f32 1.0, %v3497
  %v3499 = vrcp.pop %v3207
  %v3500 = vmul.f32 1.0, %v3499
  %v3501 = vrcp.pop %v3208
  %v3502 = vmul.f32 1.0, %v3501
  %v3503 = vrcp.pop %v3209
  %v3504 = vmul.f32 1.0, %v3503
  %v3505 = vrcp.pop %v3210
  %v3506 = vmul.f32 1.0, %v3505
  %v3507 = vrcp.pop %v3211
  %v3508 = vmul.f32 1.0, %v3507
  %v3509 = vrcp.pop %v3212
  %v3510 = vmul.f32 1.0, %v3509
  %v3511 = vrcp.pop %v3213
  %v3512 = vmul.f32 1.0, %v3511
  %v3513 = vrcp.pop %v3214
  %v3514 = vmul.f32 1.0, %v3513
  %v3515 = vrcp.pop %v3215
  %v3516 = vmul.f32 1.0, %v3515
  %v3517 = vrcp.pop %v3216
  %v3518 = vmul.f32 1.0, %v3517
  %v3519 = vrcp.pop %v3217
  %v3520 = vmul.f32 1.0, %v3519
  %v3521 = vrcp.pop %v3218
  %v3522 = vmul.f32 1.0, %v3521
  %v3523 = vrcp.pop %v3219
  %v3524 = vmul.f32 1.0, %v3523
  %v3525 = vrcp.pop %v3220
  %v3526 = vmul.f32 1.0, %v3525
  %v3527 = vrcp.pop %v3221
  %v3528 = vmul.f32 1.0, %v3527
  %v3529 = vrcp.pop %v3222
  %v3530 = vmul.f32 1.0, %v3529
  %v3531 = vrcp.pop %v3223
  %v3532 = vmul.f32 1.0, %v3531
  %v3533 = vrcp.pop %v3224
  %v3534 = vmul.f32 1.0, %v3533
  %v3535 = vrcp.pop %v3225
  %v3536 = vmul.f32 1.0, %v3535
  %v3537 = vrcp.pop %v3226
  %v3538 = vmul.f32 1.0, %v3537
  %v3539 = vrcp.pop %v3227
  %v3540 = vmul.f32 1.0, %v3539
  %v3541 = vrcp.pop %v3228
  %v3542 = vmul.f32 1.0, %v3541
  %v3543 = vrcp.pop %v3229
  %v3544 = vmul.f32 1.0, %v3543
  %v3545 = vrcp.pop %v3230
  %v3546 = vmul.f32 1.0, %v3545
  %v3547 = vrcp.pop %v3231
  %v3548 = vmul.f32 1.0, %v3547
  %v3549 = vrcp.pop %v3232
  %v3550 = vmul.f32 1.0, %v3549
  %v3551 = vrcp.pop %v3233
  %v3552 = vmul.f32 1.0, %v3551
  %v3553 = vrcp.pop %v3234
  %v3554 = vmul.f32 1.0, %v3553
  %v3555 = vrcp.pop %v3235
  %v3556 = vmul.f32 1.0, %v3555
  %v3557 = vrcp.pop %v3236
  %v3558 = vmul.f32 1.0, %v3557
  %v3559 = vrcp.pop %v3237
  %v3560 = vmul.f32 1.0, %v3559
  %v3561 = vrcp.pop %v3238
  %v3562 = vmul.f32 1.0, %v3561
  %v3563 = vrcp.pop %v3239
  %v3564 = vmul.f32 1.0, %v3563
  %v3565 = vrcp.pop %v3240
  %v3566 = vmul.f32 1.0, %v3565
  %v3567 = vrcp.pop %v3241
  %v3568 = vmul.f32 1.0, %v3567
  %v3569 = vrcp.pop %v3242
  %v3570 = vmul.f32 1.0, %v3569
  %v3571 = vrcp.pop %v3243
  %v3572 = vmul.f32 1.0, %v3571
  %v3573 = vrcp.pop %v3244
  %v3574 = vmul.f32 1.0, %v3573
  %v3575 = vrcp.pop %v3245
  %v3576 = vmul.f32 1.0, %v3575
  %v3577 = vrcp.pop %v3246
  %v3578 = vmul.f32 1.0, %v3577
  %v3579 = vrcp.pop %v3247
  %v3580 = vmul.f32 1.0, %v3579
  %v3581 = vrcp.pop %v3248
  %v3582 = vmul.f32 1.0, %v3581
  %v3583 = vrcp.pop %v3249
  %v3584 = vmul.f32 1.0, %v3583
  %v3585 = vrcp.pop %v3250
  %v3586 = vmul.f32 1.0, %v3585
  %v3587 = vrcp.pop %v3251
  %v3588 = vmul.f32 1.0, %v3587
  %v3589 = vrcp.pop %v3252
  %v3590 = vmul.f32 1.0, %v3589
  %v3591 = vrcp.pop %v3253
  %v3592 = vmul.f32 1.0, %v3591
  %v3593 = vrcp.pop %v3254
  %v3594 = vmul.f32 1.0, %v3593
  %v3595 = vrcp.pop %v3255
  %v3596 = vmul.f32 1.0, %v3595
  %v3597 = vrcp.pop %v3256
  %v3598 = vmul.f32 1.0, %v3597
  %v3599 = vrcp.pop %v3257
  %v3600 = vmul.f32 1.0, %v3599
  %v3601 = vrcp.pop %v3258
  %v3602 = vmul.f32 1.0, %v3601
  %v3603 = vrcp.pop %v3259
  %v3604 = vmul.f32 1.0, %v3603
  %v3605 = vrcp.pop %v3260
  %v3606 = vmul.f32 1.0, %v3605
  %v3607 = vrcp.pop %v3261
  %v3608 = vmul.f32 1.0, %v3607
  %v3609 = vrcp.pop %v3262
  %v3610 = vmul.f32 1.0, %v3609
  %v3611 = vrcp.pop %v3263
  %v3612 = vmul.f32 1.0, %v3611
  %v3613 = vrcp.pop %v3264
  %v3614 = vmul.f32 1.0, %v3613
  %v3615 = vrcp.pop %v3265
  %v3616 = vmul.f32 1.0, %v3615
  %v3617 = vrcp.pop %v3266
  %v3618 = vmul.f32 1.0, %v3617
  %v3619 = vrcp.pop %v3267
  %v3620 = vmul.f32 1.0, %v3619
  %v3621 = vrcp.pop %v3268
  %v3622 = vmul.f32 1.0, %v3621
  %v3623 = vrcp.pop %v3269
  %v3624 = vmul.f32 1.0, %v3623
  %v3625 = vrcp.pop %v3270
  %v3626 = vmul.f32 1.0, %v3625
  %v3627 = vrcp.pop %v3271
  %v3628 = vmul.f32 1.0, %v3627
  %v3629 = vrcp.pop %v3272
  %v3630 = vmul.f32 1.0, %v3629
  %v3631 = vrcp.pop %v3273
  %v3632 = vmul.f32 1.0, %v3631
  %v3633 = vrcp.pop %v3274
  %v3634 = vmul.f32 1.0, %v3633
  %v3635 = vrcp.pop %v3275
  %v3636 = vmul.f32 1.0, %v3635
  %v3637 = vrcp.pop %v3276
  %v3638 = vmul.f32 1.0, %v3637
  %v3639 = vrcp.pop %v3277
  %v3640 = vmul.f32 1.0, %v3639
  %v3641 = vrcp.pop %v3278
  %v3642 = vmul.f32 1.0, %v3641
  %v3643 = vrcp.pop %v3279
  %v3644 = vmul.f32 1.0, %v3643
  %v3645 = vrcp.pop %v3280
  %v3646 = vmul.f32 1.0, %v3645
  %v3647 = vrcp.pop %v3281
  %v3648 = vmul.f32 1.0, %v3647
  %v3649 = vrcp.pop %v3282
  %v3650 = vmul.f32 1.0, %v3649
  %v3651 = vrcp.pop %v3283
  %v3652 = vmul.f32 1.0, %v3651
  %v3653 = vrcp.pop %v3284
  %v3654 = vmul.f32 1.0, %v3653
  %v3655 = vrcp.pop %v3285
  %v3656 = vmul.f32 1.0, %v3655
  %v3657 = vrcp.pop %v3286
  %v3658 = vmul.f32 1.0, %v3657
  %v3659 = vrcp.pop %v3287
  %v3660 = vmul.f32 1.0, %v3659
  %v3661 = vrcp.pop %v3288
  %v3662 = vmul.f32 1.0, %v3661
  %v3663 = vrcp.pop %v3289
  %v3664 = vmul.f32 1.0, %v3663
  %v3665 = vrcp.pop %v3290
  %v3666 = vmul.f32 1.0, %v3665
  %v3667 = vrcp.pop %v3291
  %v3668 = vmul.f32 1.0, %v3667
  %v3669 = vrcp.pop %v3292
  %v3670 = vmul.f32 1.0, %v3669
  %v3671 = vrcp.pop %v3293
  %v3672 = vmul.f32 1.0, %v3671
  %v3673 = vrcp.pop %v3294
  %v3674 = vmul.f32 1.0, %v3673
  %v3675 = vrcp.pop %v3295
  %v3676 = vmul.f32 1.0, %v3675
  %v3677 = vrcp.pop %v3296
  %v3678 = vmul.f32 1.0, %v3677
  %v3679 = vrcp.pop %v3297
  %v3680 = vmul.f32 1.0, %v3679
  %v3681 = vrcp.pop %v3298
  %v3682 = vmul.f32 1.0, %v3681
  %v3683 = vrcp.pop %v3299
  %v3684 = vmul.f32 1.0, %v3683
  %v3685 = vrcp.pop %v3300
  %v3686 = vmul.f32 1.0, %v3685
  %v3687 = vrcp.pop %v3301
  %v3688 = vmul.f32 1.0, %v3687
  %v3689 = vrcp.pop %v3302
  %v3690 = vmul.f32 1.0, %v3689
  %v3691 = vrcp.pop %v3303
  %v3692 = vmul.f32 1.0, %v3691
  %v3693 = vrcp.pop %v3304
  %v3694 = vmul.f32 1.0, %v3693
  %v3695 = vrcp.pop %v3305
  %v3696 = vmul.f32 1.0, %v3695
  %v3697 = vrcp.pop %v3306
  %v3698 = vmul.f32 1.0, %v3697
  %v3699 = vrcp.pop %v3307
  %v3700 = vmul.f32 1.0, %v3699
  %v3701 = vrcp.pop %v3308
  %v3702 = vmul.f32 1.0, %v3701
  %v3703 = vrcp.pop %v3309
  %v3704 = vmul.f32 1.0, %v3703
  %v3705 = vrcp.pop %v3310
  %v3706 = vmul.f32 1.0, %v3705
  %v3707 = vrcp.pop %v3311
  %v3708 = vmul.f32 1.0, %v3707
  %v3709 = vrcp.pop %v3312
  %v3710 = vmul.f32 1.0, %v3709
  %v3711 = vrcp.pop %v3313
  %v3712 = vmul.f32 1.0, %v3711
  %v3713 = vrcp.pop %v3314
  %v3714 = vmul.f32 1.0, %v3713
  %v3715 = vrcp.pop %v3315
  %v3716 = vmul.f32 1.0, %v3715
  %v3717 = vrcp.pop %v3316
  %v3718 = vmul.f32 1.0, %v3717
  %v3719 = vrcp.pop %v3317
  %v3720 = vmul.f32 1.0, %v3719
  %v3721 = vrcp.pop %v3318
  %v3722 = vmul.f32 1.0, %v3721
  %v3723 = vrcp.pop %v3319
  %v3724 = vmul.f32 1.0, %v3723
  %v3725 = vrcp.pop %v3320
  %v3726 = vmul.f32 1.0, %v3725
  %v3727 = vrcp.pop %v3321
  %v3728 = vmul.f32 1.0, %v3727
  %v3729 = vrcp.pop %v3322
  %v3730 = vmul.f32 1.0, %v3729
  %v3731 = vrcp.pop %v3323
  %v3732 = vmul.f32 1.0, %v3731
  %v3733 = vrcp.pop %v3324
  %v3734 = vmul.f32 1.0, %v3733
  %v3735 = vrcp.pop %v3325
  %v3736 = vmul.f32 1.0, %v3735
  %v3737 = vrcp.pop %v3326
  %v3738 = vmul.f32 1.0, %v3737
  %v3739 = vrcp.pop %v3327
  %v3740 = vmul.f32 1.0, %v3739
  %v3741 = vrcp.pop %v3328
  %v3742 = vmul.f32 1.0, %v3741
  %v3743 = vrcp.pop %v3329
  %v3744 = vmul.f32 1.0, %v3743
  %v3745 = vrcp.pop %v3330
  %v3746 = vmul.f32 1.0, %v3745
  %v3747 = vrcp.pop %v3331
  %v3748 = vmul.f32 1.0, %v3747
  %v3749 = vrcp.pop %v3332
  %v3750 = vmul.f32 1.0, %v3749
  %v3751 = vrcp.pop %v3333
  %v3752 = vmul.f32 1.0, %v3751
  %v3753 = vrcp.pop %v3334
  %v3754 = vmul.f32 1.0, %v3753
  %v3755 = vrcp.pop %v3335
  %v3756 = vmul.f32 1.0, %v3755
  %v3757 = vrcp.pop %v3336
  %v3758 = vmul.f32 1.0, %v3757
  %v3759 = vrcp.pop %v3337
  %v3760 = vmul.f32 1.0, %v3759
  %v3761 = vrcp.pop %v3338
  %v3762 = vmul.f32 1.0, %v3761
  %v3763 = vrcp.pop %v3339
  %v3764 = vmul.f32 1.0, %v3763
  %v3765 = vrcp.pop %v3340
  %v3766 = vmul.f32 1.0, %v3765
  %v3767 = vrcp.pop %v3341
  %v3768 = vmul.f32 1.0, %v3767
  %v3769 = vrcp.pop %v3342
  %v3770 = vmul.f32 1.0, %v3769
  %v3771 = vrcp.pop %v3343
  %v3772 = vmul.f32 1.0, %v3771
  %v3773 = vrcp.pop %v3344
  %v3774 = vmul.f32 1.0, %v3773
  %v3775 = vrcp.pop %v3345
  %v3776 = vmul.f32 1.0, %v3775
  %v3777 = vrcp.pop %v3346
  %v3778 = vmul.f32 1.0, %v3777
  %v3779 = vrcp.pop %v3347
  %v3780 = vmul.f32 1.0, %v3779
  %v3781 = vrcp.pop %v3348
  %v3782 = vmul.f32 1.0, %v3781
  %v3783 = vrcp.pop %v3349
  %v3784 = vmul.f32 1.0, %v3783
  %v3785 = vrcp.pop %v3350
  %v3786 = vmul.f32 1.0, %v3785
  %v3787 = vrcp.pop %v3351
  %v3788 = vmul.f32 1.0, %v3787
  %v3789 = vrcp.pop %v3352
  %v3790 = vmul.f32 1.0, %v3789
  %v3791 = vrcp.pop %v3353
  %v3792 = vmul.f32 1.0, %v3791
  %v3793 = vrcp.pop %v3354
  %v3794 = vmul.f32 1.0, %v3793
  %v3795 = vrcp.pop %v3355
  %v3796 = vmul.f32 1.0, %v3795
  %v3797 = vrcp.pop %v3356
  %v3798 = vmul.f32 1.0, %v3797
  %v3799 = vrcp.pop %v3357
  %v3800 = vmul.f32 1.0, %v3799
  %v3801 = vrcp.pop %v3358
  %v3802 = vmul.f32 1.0, %v3801
  %v3803 = vrcp.pop %v3359
  %v3804 = vmul.f32 1.0, %v3803
  %v3805 = vrcp.pop %v3360
  %v3806 = vmul.f32 1.0, %v3805
  %v3807 = vrcp.pop %v3361
  %v3808 = vmul.f32 1.0, %v3807
  %v3809 = vrcp.pop %v3362
  %v3810 = vmul.f32 1.0, %v3809
  %v3811 = vrcp.pop %v3363
  %v3812 = vmul.f32 1.0, %v3811
  %v3813 = vrcp.pop %v3364
  %v3814 = vmul.f32 1.0, %v3813
  %v3815 = vrcp.pop %v3365
  %v3816 = vmul.f32 1.0, %v3815
  %v3817 = vrcp.pop %v3366
  %v3818 = vmul.f32 1.0, %v3817
  %v3819 = vrcp.pop %v3367
  %v3820 = vmul.f32 1.0, %v3819
  %v3821 = vrcp.pop %v3368
  %v3822 = vmul.f32 1.0, %v3821
  %v3823 = vrcp.pop %v3369
  %v3824 = vmul.f32 1.0, %v3823
  %v3825 = vrcp.pop %v3370
  %v3826 = vmul.f32 1.0, %v3825
  %v3827 = vrcp.pop %v3371
  %v3828 = vmul.f32 1.0, %v3827
  %v3829 = vrcp.pop %v3372
  %v3830 = vmul.f32 1.0, %v3829
  %v3831 = vrcp.pop %v3373
  %v3832 = vmul.f32 1.0, %v3831
  %v3833 = vrcp.pop %v3374
  %v3834 = vmul.f32 1.0, %v3833
  %v3835 = vrcp.pop %v3375
  %v3836 = vmul.f32 1.0, %v3835
  %v3837 = vrcp.pop %v3376
  %v3838 = vmul.f32 1.0, %v3837
  %v3839 = vrcp.pop %v3377
  %v3840 = vmul.f32 1.0, %v3839
  %v3841 = vrcp.pop %v3378
  %v3842 = vmul.f32 1.0, %v3841
  %v3843 = vrcp.pop %v3379
  %v3844 = vmul.f32 1.0, %v3843
  %v3845 = vrcp.pop %v3380
  %v3846 = vmul.f32 1.0, %v3845
  %v3847 = vrcp.pop %v3381
  %v3848 = vmul.f32 1.0, %v3847
  %v3849 = vrcp.pop %v3382
  %v3850 = vmul.f32 1.0, %v3849
  %v3851 = vrcp.pop %v3383
  %v3852 = vmul.f32 1.0, %v3851
  %v3853 = vrcp.pop %v3384
  %v3854 = vmul.f32 1.0, %v3853
  %v3855 = vrcp.pop %v3385
  %v3856 = vmul.f32 1.0, %v3855
  %v3857 = vrcp.pop %v3386
  %v3858 = vmul.f32 1.0, %v3857
  %v3859 = vrcp.pop %v3387
  %v3860 = vmul.f32 1.0, %v3859
  %v3861 = vrcp.pop %v3388
  %v3862 = vmul.f32 1.0, %v3861
  %v3863 = vrcp.pop %v3389
  %v3864 = vmul.f32 1.0, %v3863
  %v3865 = vrcp.pop %v3390
  %v3866 = vmul.f32 1.0, %v3865
  %v3867 = vrcp.pop %v3391
  %v3868 = vmul.f32 1.0, %v3867
  %v3869 = vrcp.pop %v3392
  %v3870 = vmul.f32 1.0, %v3869
  %v3871 = vrcp.pop %v3393
  %v3872 = vmul.f32 1.0, %v3871
  %v3873 = vrcp.pop %v3394
  %v3874 = vmul.f32 1.0, %v3873
  %v3875 = vrcp.pop %v3395
  %v3876 = vmul.f32 1.0, %v3875
  %v3877 = vrcp.pop %v3396
  %v3878 = vmul.f32 1.0, %v3877
  %v3879 = vrcp.pop %v3397
  %v3880 = vmul.f32 1.0, %v3879
  %v3881 = vrcp.pop %v3398
  %v3882 = vmul.f32 1.0, %v3881
  %v3883 = vrcp.pop %v3399
  %v3884 = vmul.f32 1.0, %v3883
  %v3885 = vrcp.pop %v3400
  %v3886 = vmul.f32 1.0, %v3885
  %v3887 = vrcp.pop %v3401
  %v3888 = vmul.f32 1.0, %v3887
  %v3889 = vrcp.pop %v3402
  %v3890 = vmul.f32 1.0, %v3889
  %v3891 = vrcp.pop %v3403
  %v3892 = vmul.f32 1.0, %v3891
  %v3893 = vrcp.pop %v3404
  %v3894 = vmul.f32 1.0, %v3893
  %v3895 = vrcp.pop %v3405
  %v3896 = vmul.f32 1.0, %v3895
  %v3897 = vrcp.pop %v3406
  %v3898 = vmul.f32 1.0, %v3897
  %v3899 = vrcp.pop %v3407
  %v3900 = vmul.f32 1.0, %v3899
  %v3901 = vrcp.pop %v3408
  %v3902 = vmul.f32 1.0, %v3901
  %v3903 = vrcp.pop %v3409
  %v3904 = vmul.f32 1.0, %v3903
  %v3905 = vrcp.pop %v3410
  %v3906 = vmul.f32 1.0, %v3905
  %v3907 = vrcp.pop %v3411
  %v3908 = vmul.f32 1.0, %v3907
  %v3909 = vrcp.pop %v3412
  %v3910 = vmul.f32 1.0, %v3909
  %v3911 = vrcp.pop %v3413
  %v3912 = vmul.f32 1.0, %v3911
  %v3913 = vrcp.pop %v3414
  %v3914 = vmul.f32 1.0, %v3913
  %v3915 = vrcp.pop %v3415
  %v3916 = vmul.f32 1.0, %v3915
  %v3917 = vrcp.pop %v3416
  %v3918 = vmul.f32 1.0, %v3917
  %v3919 = vrcp.pop %v3417
  %v3920 = vmul.f32 1.0, %v3919
  %v3921 = vrcp.pop %v3418
  %v3922 = vmul.f32 1.0, %v3921
  %v3923 = vrcp.pop %v3419
  %v3924 = vmul.f32 1.0, %v3923
  %v3925 = vrcp.pop %v3420
  %v3926 = vmul.f32 1.0, %v3925
  %v3927 = vrcp.pop %v3421
  %v3928 = vmul.f32 1.0, %v3927
  %v3929 = vrcp.pop %v3422
  %v3930 = vmul.f32 1.0, %v3929
  %v3931 = vrcp.pop %v3423
  %v3932 = vmul.f32 1.0, %v3931
  %v3933 = vrcp.pop %v3424
  %v3934 = vmul.f32 1.0, %v3933
  %v3935 = vrcp.pop %v3425
  %v3936 = vmul.f32 1.0, %v3935
  %v3937 = vrcp.pop %v3426
  %v3938 = vmul.f32 1.0, %v3937
  %v3939 = vrcp.pop %v3427
  %v3940 = vmul.f32 1.0, %v3939
  %v3941 = vrcp.pop %v3428
  %v3942 = vmul.f32 1.0, %v3941
  %v3943 = vrcp.pop %v3429
  %v3944 = vmul.f32 1.0, %v3943
  %v3945 = vrcp.pop %v3430
  %v3946 = vmul.f32 1.0, %v3945
  %v3947 = vrcp.pop %v3431
  %v3948 = vmul.f32 1.0, %v3947
  %v3949 = vrcp.pop %v3432
  %v3950 = vmul.f32 1.0, %v3949
  %v3951 = vrcp.pop %v3433
  %v3952 = vmul.f32 1.0, %v3951
  %v3953 = vrcp.pop %v3434
  %v3954 = vmul.f32 1.0, %v3953
  %v3955 = vrcp.pop %v3435
  %v3956 = vmul.f32 1.0, %v3955
  %v3957 = vrcp.pop %v3436
  %v3958 = vmul.f32 1.0, %v3957
  %v3959 = vrcp.pop %v3437
  %v3960 = vmul.f32 1.0, %v3959
  %v3961 = vrcp.pop %v3438
  %v3962 = vmul.f32 1.0, %v3961
  %v3963 = vrcp.pop %v3439
  %v3964 = vmul.f32 1.0, %v3963
  %v3965 = vrcp.pop %v3440
  %v3966 = vmul.f32 1.0, %v3965
  %v3967 = vrcp.pop %v3441
  %v3968 = vmul.f32 1.0, %v3967
  %v3969 = vrcp.pop %v3442
  %v3970 = vmul.f32 1.0, %v3969
  %v3971 = vrcp.pop %v3443
  %v3972 = vmul.f32 1.0, %v3971
  %v3973 = vrcp.pop %v3444
  %v3974 = vmul.f32 1.0, %v3973
  %v3975 = vrcp.pop %v3445
  %v3976 = vmul.f32 1.0, %v3975
  %v3977 = vrcp.pop %v3446
  %v3978 = vmul.f32 1.0, %v3977
  %v3979 = vrcp.pop %v3447
  %v3980 = vmul.f32 1.0, %v3979
  %v3981 = vrcp.pop %v3448
  %v3982 = vmul.f32 1.0, %v3981
  %v3983 = vrcp.pop %v3449
  %v3984 = vmul.f32 1.0, %v3983
  %v3985 = vrcp.pop %v3450
  %v3986 = vmul.f32 1.0, %v3985
  %v3987 = vrcp.pop %v3451
  %v3988 = vmul.f32 1.0, %v3987
  %v3989 = vrcp.pop %v3452
  %v3990 = vmul.f32 1.0, %v3989
  %v3991 = vrcp.pop %v3453
  %v3992 = vmul.f32 1.0, %v3991
  %v3993 = vrcp.pop %v3454
  %v3994 = vmul.f32 1.0, %v3993
  %v3995 = vrcp.pop %v3455
  %v3996 = vmul.f32 1.0, %v3995
  %v3997 = vrcp.pop %v3456
  %v3998 = vmul.f32 1.0, %v3997
  %v3999 = vrcp.pop %v3457
  %v4000 = vmul.f32 1.0, %v3999
  %v4001 = vrcp.pop %v3458
  %v4002 = vmul.f32 1.0, %v4001
  %v4003 = vrcp.pop %v3459
  %v4004 = vmul.f32 1.0, %v4003
  %v4005 = vrcp.pop %v3460
  %v4006 = vmul.f32 1.0, %v4005
  %v4007 = vrcp.pop %v3461
  %v4008 = vmul.f32 1.0, %v4007
  %v4009 = vrcp.pop %v3462
  %v4010 = vmul.f32 1.0, %v4009
  %v4011 = vrcp.pop %v3463
  %v4012 = vmul.f32 1.0, %v4011
  %v4013 = vrcp.pop %v3464
  %v4014 = vmul.f32 1.0, %v4013
  %v4015 = vrcp.pop %v3465
  %v4016 = vmul.f32 1.0, %v4015
  %v4017 = vrcp.pop %v3466
  %v4018 = vmul.f32 1.0, %v4017
  %v4019 = vrcp.pop %v3467
  %v4020 = vmul.f32 1.0, %v4019
  %v4021 = vrcp.pop %v3468
  %v4022 = vmul.f32 1.0, %v4021
  %v4023 = vrcp.pop %v3469
  %v4024 = vmul.f32 1.0, %v4023
  %v4025 = vrcp.pop %v3470
  %v4026 = vmul.f32 1.0, %v4025
  %v4027 = vrcp.pop %v3471
  %v4028 = vmul.f32 1.0, %v4027
  %v4029 = vrcp.pop %v3472
  %v4030 = vmul.f32 1.0, %v4029
  %v4031 = vrcp.pop %v3473
  %v4032 = vmul.f32 1.0, %v4031
  %v4033 = vrcp.pop %v3474
  %v4034 = vmul.f32 1.0, %v4033
  %v4035 = vrcp.pop %v3475
  %v4036 = vmul.f32 1.0, %v4035
  %v4037 = vrcp.pop %v3476
  %v4038 = vmul.f32 1.0, %v4037
  %v4039 = vrcp.pop %v3477
  %v4040 = vmul.f32 1.0, %v4039
  %v4041 = vrcp.pop %v3478
  %v4042 = vmul.f32 1.0, %v4041
  %v4043 = vrcp.pop %v3479
  %v4044 = vmul.f32 1.0, %v4043
  %v4045 = vrcp.pop %v3480
  %v4046 = vmul.f32 1.0, %v4045
  %v4047 = vrcp.pop %v3481
  %v4048 = vmul.f32 1.0, %v4047
  %v4049 = vrcp.pop %v3482
  %v4050 = vmul.f32 1.0, %v4049
  %v4051 = vrcp.pop %v3483
  %v4052 = vmul.f32 1.0, %v4051
  %v4053 = vrcp.pop %v3484
  %v4054 = vmul.f32 1.0, %v4053
  %v4055 = vrcp.pop %v3485
  %v4056 = vmul.f32 1.0, %v4055
  %v4057 = vrcp.pop %v3486
  %v4058 = vmul.f32 1.0, %v4057
  %v4059 = vrcp.pop %v3487
  %v4060 = vmul.f32 1.0, %v4059
  %v4061 = vrcp.pop %v3488
  %v4062 = vmul.f32 1.0, %v4061
  %v4063 = vrcp.pop %v3489
  %v4064 = vmul.f32 1.0, %v4063
  %v4065 = vrcp.pop %v3490
  %v4066 = vmul.f32 1.0, %v4065
  %v4067 = vld [vmem:[%s1] sm:$0xff]
  %v4068 = vld [vmem:[%s1 + $0x8] sm:$0xff]
  %v4069 = vld [vmem:[%s1 + $0x10] sm:$0xff]
  %v4070 = vld [vmem:[%s1 + $0x18] sm:$0xff]
  %v4071 = vld [vmem:[%s1 + $0x20] sm:$0xff]
  %v4072 = vld [vmem:[%s1 + $0x28] sm:$0xff]
  %v4073 = vld [vmem:[%s1 + $0x30] sm:$0xff]
  %v4074 = vld [vmem:[%s1 + $0x38] sm:$0xff]
  %v4075 = vld [vmem:[%s1 + $0x40] sm:$0xff]
  %v4076 = vld [vmem:[%s1 + $0x48] sm:$0xff]
  %v4077 = vld [vmem:[%s1 + $0x50] sm:$0xff]
  %v4078 = vld [vmem:[%s1 + $0x58] sm:$0xff]
  %v4079 = vld [vmem:[%s1 + $0x60] sm:$0xff]
  %v4080 = vld [vmem:[%s1 + $0x68] sm:$0xff]
  %v4081 = vld [vmem:[%s1 + $0x70] sm:$0xff]
  %v4082 = vld [vmem:[%s1 + $0x78] sm:$0xff]
  %v4083 = vld [vmem:[%s1 + $0x80] sm:$0xff]
  %v4084 = vld [vmem:[%s1 + $0x88] sm:$0xff]
  %v4085 = vld [vmem:[%s1 + $0x90] sm:$0xff]
  %v4086 = vld [vmem:[%s1 + $0x98] sm:$0xff]
  %v4087 = vld [vmem:[%s1 + $0xa0] sm:$0xff]
  %v4088 = vld [vmem:[%s1 + $0xa8] sm:$0xff]
  %v4089 = vld [vmem:[%s1 + $0xb0] sm:$0xff]
  %v4090 = vld [vmem:[%s1 + $0xb8] sm:$0xff]
  %v4091 = vld [vmem:[%s1 + $0xc0] sm:$0xff]
  %v4092 = vld [vmem:[%s1 + $0xc8] sm:$0xff]
  %v4093 = vld [vmem:[%s1 + $0xd0] sm:$0xff]
  %v4094 = vld [vmem:[%s1 + $0xd8] sm:$0xff]
  %v4095 = vld [vmem:[%s1 + $0xe0] sm:$0xff]
  %v4096 = vld [vmem:[%s1 + $0xe8] sm:$0xff]
  %v4097 = vld [vmem:[%s1 + $0xf0] sm:$0xff]
  %v4098 = vld [vmem:[%s1 + $0xf8] sm:$0xff]
  %v4099 = vld [vmem:[%s1 + $0x100] sm:$0xff]
  %v4100 = vld [vmem:[%s1 + $0x108] sm:$0xff]
  %v4101 = vld [vmem:[%s1 + $0x110] sm:$0xff]
  %v4102 = vld [vmem:[%s1 + $0x118] sm:$0xff]
  %v4103 = vld [vmem:[%s1 + $0x120] sm:$0xff]
  %v4104 = vld [vmem:[%s1 + $0x128] sm:$0xff]
  %v4105 = vld [vmem:[%s1 + $0x130] sm:$0xff]
  %v4106 = vld [vmem:[%s1 + $0x138] sm:$0xff]
  %v4107 = vld [vmem:[%s1 + $0x140] sm:$0xff]
  %v4108 = vld [vmem:[%s1 + $0x148] sm:$0xff]
  %v4109 = vld [vmem:[%s1 + $0x150] sm:$0xff]
  %v4110 = vld [vmem:[%s1 + $0x158] sm:$0xff]
  %v4111 = vld [vmem:[%s1 + $0x160] sm:$0xff]
  %v4112 = vld [vmem:[%s1 + $0x168] sm:$0xff]
  %v4113 = vld [vmem:[%s1 + $0x170] sm:$0xff]
  %v4114 = vld [vmem:[%s1 + $0x178] sm:$0xff]
  %v4115 = vld [vmem:[%s1 + $0x180] sm:$0xff]
  %v4116 = vld [vmem:[%s1 + $0x188] sm:$0xff]
  %v4117 = vld [vmem:[%s1 + $0x190] sm:$0xff]
  %v4118 = vld [vmem:[%s1 + $0x198] sm:$0xff]
  %v4119 = vld [vmem:[%s1 + $0x1a0] sm:$0xff]
  %v4120 = vld [vmem:[%s1 + $0x1a8] sm:$0xff]
  %v4121 = vld [vmem:[%s1 + $0x1b0] sm:$0xff]
  %v4122 = vld [vmem:[%s1 + $0x1b8] sm:$0xff]
  %v4123 = vld [vmem:[%s1 + $0x1c0] sm:$0xff]
  %v4124 = vld [vmem:[%s1 + $0x1c8] sm:$0xff]
  %v4125 = vld [vmem:[%s1 + $0x1d0] sm:$0xff]
  %v4126 = vld [vmem:[%s1 + $0x1d8] sm:$0xff]
  %v4127 = vld [vmem:[%s1 + $0x1e0] sm:$0xff]
  %v4128 = vld [vmem:[%s1 + $0x1e8] sm:$0xff]
  %v4129 = vld [vmem:[%s1 + $0x1f0] sm:$0xff]
  %v4130 = vld [vmem:[%s1 + $0x1f8] sm:$0xff]
  %v4131 = vld [vmem:[%s1 + $0x200] sm:$0xff]
  %v4132 = vld [vmem:[%s1 + $0x208] sm:$0xff]
  %v4133 = vld [vmem:[%s1 + $0x210] sm:$0xff]
  %v4134 = vld [vmem:[%s1 + $0x218] sm:$0xff]
  %v4135 = vld [vmem:[%s1 + $0x220] sm:$0xff]
  %v4136 = vld [vmem:[%s1 + $0x228] sm:$0xff]
  %v4137 = vld [vmem:[%s1 + $0x230] sm:$0xff]
  %v4138 = vld [vmem:[%s1 + $0x238] sm:$0xff]
  %v4139 = vld [vmem:[%s1 + $0x240] sm:$0xff]
  %v4140 = vld [vmem:[%s1 + $0x248] sm:$0xff]
  %v4141 = vld [vmem:[%s1 + $0x250] sm:$0xff]
  %v4142 = vld [vmem:[%s1 + $0x258] sm:$0xff]
  %v4143 = vld [vmem:[%s1 + $0x260] sm:$0xff]
  %v4144 = vld [vmem:[%s1 + $0x268] sm:$0xff]
  %v4145 = vld [vmem:[%s1 + $0x270] sm:$0xff]
  %v4146 = vld [vmem:[%s1 + $0x278] sm:$0xff]
  %v4147 = vld [vmem:[%s1 + $0x280] sm:$0xff]
  %v4148 = vld [vmem:[%s1 + $0x288] sm:$0xff]
  %v4149 = vld [vmem:[%s1 + $0x290] sm:$0xff]
  %v4150 = vld [vmem:[%s1 + $0x298] sm:$0xff]
  %v4151 = vld [vmem:[%s1 + $0x2a0] sm:$0xff]
  %v4152 = vld [vmem:[%s1 + $0x2a8] sm:$0xff]
  %v4153 = vld [vmem:[%s1 + $0x2b0] sm:$0xff]
  %v4154 = vld [vmem:[%s1 + $0x2b8] sm:$0xff]
  %v4155 = vld [vmem:[%s1 + $0x2c0] sm:$0xff]
  %v4156 = vld [vmem:[%s1 + $0x2c8] sm:$0xff]
  %v4157 = vld [vmem:[%s1 + $0x2d0] sm:$0xff]
  %v4158 = vld [vmem:[%s1 + $0x2d8] sm:$0xff]
  %v4159 = vld [vmem:[%s1 + $0x2e0] sm:$0xff]
  %v4160 = vld [vmem:[%s1 + $0x2e8] sm:$0xff]
  %v4161 = vld [vmem:[%s1 + $0x2f0] sm:$0xff]
  %v4162 = vld [vmem:[%s1 + $0x2f8] sm:$0xff]
  %v4163 = vld [vmem:[%s1 + $0x300] sm:$0xff]
  %v4164 = vld [vmem:[%s1 + $0x308] sm:$0xff]
  %v4165 = vld [vmem:[%s1 + $0x310] sm:$0xff]
  %v4166 = vld [vmem:[%s1 + $0x318] sm:$0xff]
  %v4167 = vld [vmem:[%s1 + $0x320] sm:$0xff]
  %v4168 = vld [vmem:[%s1 + $0x328] sm:$0xff]
  %v4169 = vld [vmem:[%s1 + $0x330] sm:$0xff]
  %v4170 = vld [vmem:[%s1 + $0x338] sm:$0xff]
  %v4171 = vld [vmem:[%s1 + $0x340] sm:$0xff]
  %v4172 = vld [vmem:[%s1 + $0x348] sm:$0xff]
  %v4173 = vld [vmem:[%s1 + $0x350] sm:$0xff]
  %v4174 = vld [vmem:[%s1 + $0x358] sm:$0xff]
  %v4175 = vld [vmem:[%s1 + $0x360] sm:$0xff]
  %v4176 = vld [vmem:[%s1 + $0x368] sm:$0xff]
  %v4177 = vld [vmem:[%s1 + $0x370] sm:$0xff]
  %v4178 = vld [vmem:[%s1 + $0x378] sm:$0xff]
  %v4179 = vld [vmem:[%s1 + $0x380] sm:$0xff]
  %v4180 = vld [vmem:[%s1 + $0x388] sm:$0xff]
  %v4181 = vld [vmem:[%s1 + $0x390] sm:$0xff]
  %v4182 = vld [vmem:[%s1 + $0x398] sm:$0xff]
  %v4183 = vld [vmem:[%s1 + $0x3a0] sm:$0xff]
  %v4184 = vld [vmem:[%s1 + $0x3a8] sm:$0xff]
  %v4185 = vld [vmem:[%s1 + $0x3b0] sm:$0xff]
  %v4186 = vld [vmem:[%s1 + $0x3b8] sm:$0xff]
  %v4187 = vld [vmem:[%s1 + $0x3c0] sm:$0xff]
  %v4188 = vld [vmem:[%s1 + $0x3c8] sm:$0xff]
  %v4189 = vld [vmem:[%s1 + $0x3d0] sm:$0xff]
  %v4190 = vld [vmem:[%s1 + $0x3d8] sm:$0xff]
  %v4191 = vld [vmem:[%s1 + $0x3e0] sm:$0xff]
  %v4192 = vld [vmem:[%s1 + $0x3e8] sm:$0xff]
  %v4193 = vld [vmem:[%s1 + $0x3f0] sm:$0xff]
  %v4194 = vld [vmem:[%s1 + $0x3f8] sm:$0xff]
  %v4195 = vld [vmem:[%s1 + $0x400] sm:$0xff]
  %v4196 = vld [vmem:[%s1 + $0x408] sm:$0xff]
  %v4197 = vld [vmem:[%s1 + $0x410] sm:$0xff]
  %v4198 = vld [vmem:[%s1 + $0x418] sm:$0xff]
  %v4199 = vld [vmem:[%s1 + $0x420] sm:$0xff]
  %v4200 = vld [vmem:[%s1 + $0x428] sm:$0xff]
  %v4201 = vld [vmem:[%s1 + $0x430] sm:$0xff]
  %v4202 = vld [vmem:[%s1 + $0x438] sm:$0xff]
  %v4203 = vld [vmem:[%s1 + $0x440] sm:$0xff]
  %v4204 = vld [vmem:[%s1 + $0x448] sm:$0xff]
  %v4205 = vld [vmem:[%s1 + $0x450] sm:$0xff]
  %v4206 = vld [vmem:[%s1 + $0x458] sm:$0xff]
  %v4207 = vld [vmem:[%s1 + $0x460] sm:$0xff]
  %v4208 = vld [vmem:[%s1 + $0x468] sm:$0xff]
  %v4209 = vld [vmem:[%s1 + $0x470] sm:$0xff]
  %v4210 = vld [vmem:[%s1 + $0x478] sm:$0xff]
  %v4211 = vld [vmem:[%s1 + $0x480] sm:$0xff]
  %v4212 = vld [vmem:[%s1 + $0x488] sm:$0xff]
  %v4213 = vld [vmem:[%s1 + $0x490] sm:$0xff]
  %v4214 = vld [vmem:[%s1 + $0x498] sm:$0xff]
  %v4215 = vld [vmem:[%s1 + $0x4a0] sm:$0xff]
  %v4216 = vld [vmem:[%s1 + $0x4a8] sm:$0xff]
  %v4217 = vld [vmem:[%s1 + $0x4b0] sm:$0xff]
  %v4218 = vld [vmem:[%s1 + $0x4b8] sm:$0xff]
  %v4219 = vld [vmem:[%s1 + $0x4c0] sm:$0xff]
  %v4220 = vld [vmem:[%s1 + $0x4c8] sm:$0xff]
  %v4221 = vld [vmem:[%s1 + $0x4d0] sm:$0xff]
  %v4222 = vld [vmem:[%s1 + $0x4d8] sm:$0xff]
  %v4223 = vld [vmem:[%s1 + $0x4e0] sm:$0xff]
  %v4224 = vld [vmem:[%s1 + $0x4e8] sm:$0xff]
  %v4225 = vld [vmem:[%s1 + $0x4f0] sm:$0xff]
  %v4226 = vld [vmem:[%s1 + $0x4f8] sm:$0xff]
  %v4227 = vld [vmem:[%s1 + $0x500] sm:$0xff]
  %v4228 = vld [vmem:[%s1 + $0x508] sm:$0xff]
  %v4229 = vld [vmem:[%s1 + $0x510] sm:$0xff]
  %v4230 = vld [vmem:[%s1 + $0x518] sm:$0xff]
  %v4231 = vld [vmem:[%s1 + $0x520] sm:$0xff]
  %v4232 = vld [vmem:[%s1 + $0x528] sm:$0xff]
  %v4233 = vld [vmem:[%s1 + $0x530] sm:$0xff]
  %v4234 = vld [vmem:[%s1 + $0x538] sm:$0xff]
  %v4235 = vld [vmem:[%s1 + $0x540] sm:$0xff]
  %v4236 = vld [vmem:[%s1 + $0x548] sm:$0xff]
  %v4237 = vld [vmem:[%s1 + $0x550] sm:$0xff]
  %v4238 = vld [vmem:[%s1 + $0x558] sm:$0xff]
  %v4239 = vld [vmem:[%s1 + $0x560] sm:$0xff]
  %v4240 = vld [vmem:[%s1 + $0x568] sm:$0xff]
  %v4241 = vld [vmem:[%s1 + $0x570] sm:$0xff]
  %v4242 = vld [vmem:[%s1 + $0x578] sm:$0xff]
  %v4243 = vld [vmem:[%s1 + $0x580] sm:$0xff]
  %v4244 = vld [vmem:[%s1 + $0x588] sm:$0xff]
  %v4245 = vld [vmem:[%s1 + $0x590] sm:$0xff]
  %v4246 = vld [vmem:[%s1 + $0x598] sm:$0xff]
  %v4247 = vld [vmem:[%s1 + $0x5a0] sm:$0xff]
  %v4248 = vld [vmem:[%s1 + $0x5a8] sm:$0xff]
  %v4249 = vld [vmem:[%s1 + $0x5b0] sm:$0xff]
  %v4250 = vld [vmem:[%s1 + $0x5b8] sm:$0xff]
  %v4251 = vld [vmem:[%s1 + $0x5c0] sm:$0xff]
  %v4252 = vld [vmem:[%s1 + $0x5c8] sm:$0xff]
  %v4253 = vld [vmem:[%s1 + $0x5d0] sm:$0xff]
  %v4254 = vld [vmem:[%s1 + $0x5d8] sm:$0xff]
  %v4255 = vld [vmem:[%s1 + $0x5e0] sm:$0xff]
  %v4256 = vld [vmem:[%s1 + $0x5e8] sm:$0xff]
  %v4257 = vld [vmem:[%s1 + $0x5f0] sm:$0xff]
  %v4258 = vld [vmem:[%s1 + $0x5f8] sm:$0xff]
  %v4259 = vld [vmem:[%s1 + $0x600] sm:$0xff]
  %v4260 = vld [vmem:[%s1 + $0x608] sm:$0xff]
  %v4261 = vld [vmem:[%s1 + $0x610] sm:$0xff]
  %v4262 = vld [vmem:[%s1 + $0x618] sm:$0xff]
  %v4263 = vld [vmem:[%s1 + $0x620] sm:$0xff]
  %v4264 = vld [vmem:[%s1 + $0x628] sm:$0xff]
  %v4265 = vld [vmem:[%s1 + $0x630] sm:$0xff]
  %v4266 = vld [vmem:[%s1 + $0x638] sm:$0xff]
  %v4267 = vld [vmem:[%s1 + $0x640] sm:$0xff]
  %v4268 = vld [vmem:[%s1 + $0x648] sm:$0xff]
  %v4269 = vld [vmem:[%s1 + $0x650] sm:$0xff]
  %v4270 = vld [vmem:[%s1 + $0x658] sm:$0xff]
  %v4271 = vld [vmem:[%s1 + $0x660] sm:$0xff]
  %v4272 = vld [vmem:[%s1 + $0x668] sm:$0xff]
  %v4273 = vld [vmem:[%s1 + $0x670] sm:$0xff]
  %v4274 = vld [vmem:[%s1 + $0x678] sm:$0xff]
  %v4275 = vld [vmem:[%s1 + $0x680] sm:$0xff]
  %v4276 = vld [vmem:[%s1 + $0x688] sm:$0xff]
  %v4277 = vld [vmem:[%s1 + $0x690] sm:$0xff]
  %v4278 = vld [vmem:[%s1 + $0x698] sm:$0xff]
  %v4279 = vld [vmem:[%s1 + $0x6a0] sm:$0xff]
  %v4280 = vld [vmem:[%s1 + $0x6a8] sm:$0xff]
  %v4281 = vld [vmem:[%s1 + $0x6b0] sm:$0xff]
  %v4282 = vld [vmem:[%s1 + $0x6b8] sm:$0xff]
  %v4283 = vld [vmem:[%s1 + $0x6c0] sm:$0xff]
  %v4284 = vld [vmem:[%s1 + $0x6c8] sm:$0xff]
  %v4285 = vld [vmem:[%s1 + $0x6d0] sm:$0xff]
  %v4286 = vld [vmem:[%s1 + $0x6d8] sm:$0xff]
  %v4287 = vld [vmem:[%s1 + $0x6e0] sm:$0xff]
  %v4288 = vld [vmem:[%s1 + $0x6e8] sm:$0xff]
  %v4289 = vld [vmem:[%s1 + $0x6f0] sm:$0xff]
  %v4290 = vld [vmem:[%s1 + $0x6f8] sm:$0xff]
  %v4291 = vld [vmem:[%s1 + $0x700] sm:$0xff]
  %v4292 = vld [vmem:[%s1 + $0x708] sm:$0xff]
  %v4293 = vld [vmem:[%s1 + $0x710] sm:$0xff]
  %v4294 = vld [vmem:[%s1 + $0x718] sm:$0xff]
  %v4295 = vld [vmem:[%s1 + $0x720] sm:$0xff]
  %v4296 = vld [vmem:[%s1 + $0x728] sm:$0xff]
  %v4297 = vld [vmem:[%s1 + $0x730] sm:$0xff]
  %v4298 = vld [vmem:[%s1 + $0x738] sm:$0xff]
  %v4299 = vld [vmem:[%s1 + $0x740] sm:$0xff]
  %v4300 = vld [vmem:[%s1 + $0x748] sm:$0xff]
  %v4301 = vld [vmem:[%s1 + $0x750] sm:$0xff]
  %v4302 = vld [vmem:[%s1 + $0x758] sm:$0xff]
  %v4303 = vld [vmem:[%s1 + $0x760] sm:$0xff]
  %v4304 = vld [vmem:[%s1 + $0x768] sm:$0xff]
  %v4305 = vld [vmem:[%s1 + $0x770] sm:$0xff]
  %v4306 = vld [vmem:[%s1 + $0x778] sm:$0xff]
  %v4307 = vld [vmem:[%s1 + $0x780] sm:$0xff]
  %v4308 = vld [vmem:[%s1 + $0x788] sm:$0xff]
  %v4309 = vld [vmem:[%s1 + $0x790] sm:$0xff]
  %v4310 = vld [vmem:[%s1 + $0x798] sm:$0xff]
  %v4311 = vld [vmem:[%s1 + $0x7a0] sm:$0xff]
  %v4312 = vld [vmem:[%s1 + $0x7a8] sm:$0xff]
  %v4313 = vld [vmem:[%s1 + $0x7b0] sm:$0xff]
  %v4314 = vld [vmem:[%s1 + $0x7b8] sm:$0xff]
  %v4315 = vld [vmem:[%s1 + $0x7c0] sm:$0xff]
  %v4316 = vld [vmem:[%s1 + $0x7c8] sm:$0xff]
  %v4317 = vld [vmem:[%s1 + $0x7d0] sm:$0xff]
  %v4318 = vld [vmem:[%s1 + $0x7d8] sm:$0xff]
  %v4319 = vld [vmem:[%s1 + $0x7e0] sm:$0xff]
  %v4320 = vld [vmem:[%s1 + $0x7e8] sm:$0xff]
  %v4321 = vld [vmem:[%s1 + $0x7f0] sm:$0xff]
  %v4322 = vld [vmem:[%s1 + $0x7f8] sm:$0xff]
  %v4323 = vld [vmem:[%s1 + $0x800] sm:$0xff]
  %v4324 = vld [vmem:[%s1 + $0x808] sm:$0xff]
  %v4325 = vld [vmem:[%s1 + $0x810] sm:$0xff]
  %v4326 = vld [vmem:[%s1 + $0x818] sm:$0xff]
  %v4327 = vld [vmem:[%s1 + $0x820] sm:$0xff]
  %v4328 = vld [vmem:[%s1 + $0x828] sm:$0xff]
  %v4329 = vld [vmem:[%s1 + $0x830] sm:$0xff]
  %v4330 = vld [vmem:[%s1 + $0x838] sm:$0xff]
  %v4331 = vld [vmem:[%s1 + $0x840] sm:$0xff]
  %v4332 = vld [vmem:[%s1 + $0x848] sm:$0xff]
  %v4333 = vld [vmem:[%s1 + $0x850] sm:$0xff]
  %v4334 = vld [vmem:[%s1 + $0x858] sm:$0xff]
  %v4335 = vld [vmem:[%s1 + $0x860] sm:$0xff]
  %v4336 = vld [vmem:[%s1 + $0x868] sm:$0xff]
  %v4337 = vld [vmem:[%s1 + $0x870] sm:$0xff]
  %v4338 = vld [vmem:[%s1 + $0x878] sm:$0xff]
  %v4339 = vld [vmem:[%s1 + $0x880] sm:$0xff]
  %v4340 = vld [vmem:[%s1 + $0x888] sm:$0xff]
  %v4341 = vld [vmem:[%s1 + $0x890] sm:$0xff]
  %v4342 = vld [vmem:[%s1 + $0x898] sm:$0xff]
  %v4343 = vld [vmem:[%s1 + $0x8a0] sm:$0xff]
  %v4344 = vld [vmem:[%s1 + $0x8a8] sm:$0xff]
  %v4345 = vld [vmem:[%s1 + $0x8b0] sm:$0xff]
  %v4346 = vld [vmem:[%s1 + $0x8b8] sm:$0xff]
  %v4347 = vld [vmem:[%s1 + $0x8c0] sm:$0xff]
  %v4348 = vld [vmem:[%s1 + $0x8c8] sm:$0xff]
  %v4349 = vld [vmem:[%s1 + $0x8d0] sm:$0xff]
  %v4350 = vld [vmem:[%s1 + $0x8d8] sm:$0xff]
  %v4351 = vld [vmem:[%s1 + $0x8e0] sm:$0xff]
  %v4352 = vld [vmem:[%s1 + $0x8e8] sm:$0xff]
  %v4353 = vld [vmem:[%s1 + $0x8f0] sm:$0xff]
  %v4354 = vld [vmem:[%s1 + $0x8f8] sm:$0xff]
  %4356 = vset.pattern.permute.xlu0 0
  %4357 = vperm.xlu0 %4356, %v3492
  %v4358 = vpop.permute.xlu0 %4357
  %4361 = vset.pattern.permute.xlu0 0
  %4362 = vperm.xlu0 %4361, %v3494
  %v4363 = vpop.permute.xlu0 %4362
  %4366 = vset.pattern.permute.xlu0 0
  %4367 = vperm.xlu0 %4366, %v3496
  %v4368 = vpop.permute.xlu0 %4367
  %4371 = vset.pattern.permute.xlu0 0
  %4372 = vperm.xlu0 %4371, %v3498
  %v4373 = vpop.permute.xlu0 %4372
  %4376 = vset.pattern.permute.xlu0 0
  %4377 = vperm.xlu0 %4376, %v3500
  %v4378 = vpop.permute.xlu0 %4377
  %4381 = vset.pattern.permute.xlu0 0
  %4382 = vperm.xlu0 %4381, %v3502
  %v4383 = vpop.permute.xlu0 %4382
  %4386 = vset.pattern.permute.xlu0 0
  %4387 = vperm.xlu0 %4386, %v3504
  %v4388 = vpop.permute.xlu0 %4387
  %4391 = vset.pattern.permute.xlu0 0
  %4392 = vperm.xlu0 %4391, %v3506
  %v4393 = vpop.permute.xlu0 %4392
  %4396 = vset.pattern.permute.xlu0 0
  %4397 = vperm.xlu0 %4396, %v3508
  %v4398 = vpop.permute.xlu0 %4397
  %4401 = vset.pattern.permute.xlu0 0
  %4402 = vperm.xlu0 %4401, %v3510
  %v4403 = vpop.permute.xlu0 %4402
  %4406 = vset.pattern.permute.xlu0 0
  %4407 = vperm.xlu0 %4406, %v3512
  %v4408 = vpop.permute.xlu0 %4407
  %4411 = vset.pattern.permute.xlu0 0
  %4412 = vperm.xlu0 %4411, %v3514
  %v4413 = vpop.permute.xlu0 %4412
  %4416 = vset.pattern.permute.xlu0 0
  %4417 = vperm.xlu0 %4416, %v3516
  %v4418 = vpop.permute.xlu0 %4417
  %4421 = vset.pattern.permute.xlu0 0
  %4422 = vperm.xlu0 %4421, %v3518
  %v4423 = vpop.permute.xlu0 %4422
  %4426 = vset.pattern.permute.xlu0 0
  %4427 = vperm.xlu0 %4426, %v3520
  %v4428 = vpop.permute.xlu0 %4427
  %4431 = vset.pattern.permute.xlu0 0
  %4432 = vperm.xlu0 %4431, %v3522
  %v4433 = vpop.permute.xlu0 %4432
  %4436 = vset.pattern.permute.xlu0 0
  %4437 = vperm.xlu0 %4436, %v3524
  %v4438 = vpop.permute.xlu0 %4437
  %4441 = vset.pattern.permute.xlu0 0
  %4442 = vperm.xlu0 %4441, %v3526
  %v4443 = vpop.permute.xlu0 %4442
  %4446 = vset.pattern.permute.xlu0 0
  %4447 = vperm.xlu0 %4446, %v3528
  %v4448 = vpop.permute.xlu0 %4447
  %4451 = vset.pattern.permute.xlu0 0
  %4452 = vperm.xlu0 %4451, %v3530
  %v4453 = vpop.permute.xlu0 %4452
  %4456 = vset.pattern.permute.xlu0 0
  %4457 = vperm.xlu0 %4456, %v3532
  %v4458 = vpop.permute.xlu0 %4457
  %4461 = vset.pattern.permute.xlu0 0
  %4462 = vperm.xlu0 %4461, %v3534
  %v4463 = vpop.permute.xlu0 %4462
  %4466 = vset.pattern.permute.xlu0 0
  %4467 = vperm.xlu0 %4466, %v3536
  %v4468 = vpop.permute.xlu0 %4467
  %4471 = vset.pattern.permute.xlu0 0
  %4472 = vperm.xlu0 %4471, %v3538
  %v4473 = vpop.permute.xlu0 %4472
  %4476 = vset.pattern.permute.xlu0 0
  %4477 = vperm.xlu0 %4476, %v3540
  %v4478 = vpop.permute.xlu0 %4477
  %4481 = vset.pattern.permute.xlu0 0
  %4482 = vperm.xlu0 %4481, %v3542
  %v4483 = vpop.permute.xlu0 %4482
  %4486 = vset.pattern.permute.xlu0 0
  %4487 = vperm.xlu0 %4486, %v3544
  %v4488 = vpop.permute.xlu0 %4487
  %4491 = vset.pattern.permute.xlu0 0
  %4492 = vperm.xlu0 %4491, %v3546
  %v4493 = vpop.permute.xlu0 %4492
  %4496 = vset.pattern.permute.xlu0 0
  %4497 = vperm.xlu0 %4496, %v3548
  %v4498 = vpop.permute.xlu0 %4497
  %4501 = vset.pattern.permute.xlu0 0
  %4502 = vperm.xlu0 %4501, %v3550
  %v4503 = vpop.permute.xlu0 %4502
  %4506 = vset.pattern.permute.xlu0 0
  %4507 = vperm.xlu0 %4506, %v3552
  %v4508 = vpop.permute.xlu0 %4507
  %4511 = vset.pattern.permute.xlu0 0
  %4512 = vperm.xlu0 %4511, %v3554
  %v4513 = vpop.permute.xlu0 %4512
  %4516 = vset.pattern.permute.xlu0 0
  %4517 = vperm.xlu0 %4516, %v3556
  %v4518 = vpop.permute.xlu0 %4517
  %4521 = vset.pattern.permute.xlu0 0
  %4522 = vperm.xlu0 %4521, %v3558
  %v4523 = vpop.permute.xlu0 %4522
  %4526 = vset.pattern.permute.xlu0 0
  %4527 = vperm.xlu0 %4526, %v3560
  %v4528 = vpop.permute.xlu0 %4527
  %4531 = vset.pattern.permute.xlu0 0
  %4532 = vperm.xlu0 %4531, %v3562
  %v4533 = vpop.permute.xlu0 %4532
  %4536 = vset.pattern.permute.xlu0 0
  %4537 = vperm.xlu0 %4536, %v3564
  %v4538 = vpop.permute.xlu0 %4537
  %4541 = vset.pattern.permute.xlu0 0
  %4542 = vperm.xlu0 %4541, %v3566
  %v4543 = vpop.permute.xlu0 %4542
  %4546 = vset.pattern.permute.xlu0 0
  %4547 = vperm.xlu0 %4546, %v3568
  %v4548 = vpop.permute.xlu0 %4547
  %4551 = vset.pattern.permute.xlu0 0
  %4552 = vperm.xlu0 %4551, %v3570
  %v4553 = vpop.permute.xlu0 %4552
  %4556 = vset.pattern.permute.xlu0 0
  %4557 = vperm.xlu0 %4556, %v3572
  %v4558 = vpop.permute.xlu0 %4557
  %4561 = vset.pattern.permute.xlu0 0
  %4562 = vperm.xlu0 %4561, %v3574
  %v4563 = vpop.permute.xlu0 %4562
  %4566 = vset.pattern.permute.xlu0 0
  %4567 = vperm.xlu0 %4566, %v3576
  %v4568 = vpop.permute.xlu0 %4567
  %4571 = vset.pattern.permute.xlu0 0
  %4572 = vperm.xlu0 %4571, %v3578
  %v4573 = vpop.permute.xlu0 %4572
  %4576 = vset.pattern.permute.xlu0 0
  %4577 = vperm.xlu0 %4576, %v3580
  %v4578 = vpop.permute.xlu0 %4577
  %4581 = vset.pattern.permute.xlu0 0
  %4582 = vperm.xlu0 %4581, %v3582
  %v4583 = vpop.permute.xlu0 %4582
  %4586 = vset.pattern.permute.xlu0 0
  %4587 = vperm.xlu0 %4586, %v3584
  %v4588 = vpop.permute.xlu0 %4587
  %4591 = vset.pattern.permute.xlu0 0
  %4592 = vperm.xlu0 %4591, %v3586
  %v4593 = vpop.permute.xlu0 %4592
  %4596 = vset.pattern.permute.xlu0 0
  %4597 = vperm.xlu0 %4596, %v3588
  %v4598 = vpop.permute.xlu0 %4597
  %4601 = vset.pattern.permute.xlu0 0
  %4602 = vperm.xlu0 %4601, %v3590
  %v4603 = vpop.permute.xlu0 %4602
  %4606 = vset.pattern.permute.xlu0 0
  %4607 = vperm.xlu0 %4606, %v3592
  %v4608 = vpop.permute.xlu0 %4607
  %4611 = vset.pattern.permute.xlu0 0
  %4612 = vperm.xlu0 %4611, %v3594
  %v4613 = vpop.permute.xlu0 %4612
  %4616 = vset.pattern.permute.xlu0 0
  %4617 = vperm.xlu0 %4616, %v3596
  %v4618 = vpop.permute.xlu0 %4617
  %4621 = vset.pattern.permute.xlu0 0
  %4622 = vperm.xlu0 %4621, %v3598
  %v4623 = vpop.permute.xlu0 %4622
  %4626 = vset.pattern.permute.xlu0 0
  %4627 = vperm.xlu0 %4626, %v3600
  %v4628 = vpop.permute.xlu0 %4627
  %4631 = vset.pattern.permute.xlu0 0
  %4632 = vperm.xlu0 %4631, %v3602
  %v4633 = vpop.permute.xlu0 %4632
  %4636 = vset.pattern.permute.xlu0 0
  %4637 = vperm.xlu0 %4636, %v3604
  %v4638 = vpop.permute.xlu0 %4637
  %4641 = vset.pattern.permute.xlu0 0
  %4642 = vperm.xlu0 %4641, %v3606
  %v4643 = vpop.permute.xlu0 %4642
  %4646 = vset.pattern.permute.xlu0 0
  %4647 = vperm.xlu0 %4646, %v3608
  %v4648 = vpop.permute.xlu0 %4647
  %4651 = vset.pattern.permute.xlu0 0
  %4652 = vperm.xlu0 %4651, %v3610
  %v4653 = vpop.permute.xlu0 %4652
  %4656 = vset.pattern.permute.xlu0 0
  %4657 = vperm.xlu0 %4656, %v3612
  %v4658 = vpop.permute.xlu0 %4657
  %4661 = vset.pattern.permute.xlu0 0
  %4662 = vperm.xlu0 %4661, %v3614
  %v4663 = vpop.permute.xlu0 %4662
  %4666 = vset.pattern.permute.xlu0 0
  %4667 = vperm.xlu0 %4666, %v3616
  %v4668 = vpop.permute.xlu0 %4667
  %4671 = vset.pattern.permute.xlu0 0
  %4672 = vperm.xlu0 %4671, %v3618
  %v4673 = vpop.permute.xlu0 %4672
  %4676 = vset.pattern.permute.xlu0 0
  %4677 = vperm.xlu0 %4676, %v3620
  %v4678 = vpop.permute.xlu0 %4677
  %4681 = vset.pattern.permute.xlu0 0
  %4682 = vperm.xlu0 %4681, %v3622
  %v4683 = vpop.permute.xlu0 %4682
  %4686 = vset.pattern.permute.xlu0 0
  %4687 = vperm.xlu0 %4686, %v3624
  %v4688 = vpop.permute.xlu0 %4687
  %4691 = vset.pattern.permute.xlu0 0
  %4692 = vperm.xlu0 %4691, %v3626
  %v4693 = vpop.permute.xlu0 %4692
  %4696 = vset.pattern.permute.xlu0 0
  %4697 = vperm.xlu0 %4696, %v3628
  %v4698 = vpop.permute.xlu0 %4697
  %4701 = vset.pattern.permute.xlu0 0
  %4702 = vperm.xlu0 %4701, %v3630
  %v4703 = vpop.permute.xlu0 %4702
  %4706 = vset.pattern.permute.xlu0 0
  %4707 = vperm.xlu0 %4706, %v3632
  %v4708 = vpop.permute.xlu0 %4707
  %4711 = vset.pattern.permute.xlu0 0
  %4712 = vperm.xlu0 %4711, %v3634
  %v4713 = vpop.permute.xlu0 %4712
  %4716 = vset.pattern.permute.xlu0 0
  %4717 = vperm.xlu0 %4716, %v3636
  %v4718 = vpop.permute.xlu0 %4717
  %4721 = vset.pattern.permute.xlu0 0
  %4722 = vperm.xlu0 %4721, %v3638
  %v4723 = vpop.permute.xlu0 %4722
  %4726 = vset.pattern.permute.xlu0 0
  %4727 = vperm.xlu0 %4726, %v3640
  %v4728 = vpop.permute.xlu0 %4727
  %4731 = vset.pattern.permute.xlu0 0
  %4732 = vperm.xlu0 %4731, %v3642
  %v4733 = vpop.permute.xlu0 %4732
  %4736 = vset.pattern.permute.xlu0 0
  %4737 = vperm.xlu0 %4736, %v3644
  %v4738 = vpop.permute.xlu0 %4737
  %4741 = vset.pattern.permute.xlu0 0
  %4742 = vperm.xlu0 %4741, %v3646
  %v4743 = vpop.permute.xlu0 %4742
  %4746 = vset.pattern.permute.xlu0 0
  %4747 = vperm.xlu0 %4746, %v3648
  %v4748 = vpop.permute.xlu0 %4747
  %4751 = vset.pattern.permute.xlu0 0
  %4752 = vperm.xlu0 %4751, %v3650
  %v4753 = vpop.permute.xlu0 %4752
  %4756 = vset.pattern.permute.xlu0 0
  %4757 = vperm.xlu0 %4756, %v3652
  %v4758 = vpop.permute.xlu0 %4757
  %4761 = vset.pattern.permute.xlu0 0
  %4762 = vperm.xlu0 %4761, %v3654
  %v4763 = vpop.permute.xlu0 %4762
  %4766 = vset.pattern.permute.xlu0 0
  %4767 = vperm.xlu0 %4766, %v3656
  %v4768 = vpop.permute.xlu0 %4767
  %4771 = vset.pattern.permute.xlu0 0
  %4772 = vperm.xlu0 %4771, %v3658
  %v4773 = vpop.permute.xlu0 %4772
  %4776 = vset.pattern.permute.xlu0 0
  %4777 = vperm.xlu0 %4776, %v3660
  %v4778 = vpop.permute.xlu0 %4777
  %4781 = vset.pattern.permute.xlu0 0
  %4782 = vperm.xlu0 %4781, %v3662
  %v4783 = vpop.permute.xlu0 %4782
  %4786 = vset.pattern.permute.xlu0 0
  %4787 = vperm.xlu0 %4786, %v3664
  %v4788 = vpop.permute.xlu0 %4787
  %4791 = vset.pattern.permute.xlu0 0
  %4792 = vperm.xlu0 %4791, %v3666
  %v4793 = vpop.permute.xlu0 %4792
  %4796 = vset.pattern.permute.xlu0 0
  %4797 = vperm.xlu0 %4796, %v3668
  %v4798 = vpop.permute.xlu0 %4797
  %4801 = vset.pattern.permute.xlu0 0
  %4802 = vperm.xlu0 %4801, %v3670
  %v4803 = vpop.permute.xlu0 %4802
  %4806 = vset.pattern.permute.xlu0 0
  %4807 = vperm.xlu0 %4806, %v3672
  %v4808 = vpop.permute.xlu0 %4807
  %4811 = vset.pattern.permute.xlu0 0
  %4812 = vperm.xlu0 %4811, %v3674
  %v4813 = vpop.permute.xlu0 %4812
  %4816 = vset.pattern.permute.xlu0 0
  %4817 = vperm.xlu0 %4816, %v3676
  %v4818 = vpop.permute.xlu0 %4817
  %4821 = vset.pattern.permute.xlu0 0
  %4822 = vperm.xlu0 %4821, %v3678
  %v4823 = vpop.permute.xlu0 %4822
  %4826 = vset.pattern.permute.xlu0 0
  %4827 = vperm.xlu0 %4826, %v3680
  %v4828 = vpop.permute.xlu0 %4827
  %4831 = vset.pattern.permute.xlu0 0
  %4832 = vperm.xlu0 %4831, %v3682
  %v4833 = vpop.permute.xlu0 %4832
  %4836 = vset.pattern.permute.xlu0 0
  %4837 = vperm.xlu0 %4836, %v3684
  %v4838 = vpop.permute.xlu0 %4837
  %4841 = vset.pattern.permute.xlu0 0
  %4842 = vperm.xlu0 %4841, %v3686
  %v4843 = vpop.permute.xlu0 %4842
  %4846 = vset.pattern.permute.xlu0 0
  %4847 = vperm.xlu0 %4846, %v3688
  %v4848 = vpop.permute.xlu0 %4847
  %4851 = vset.pattern.permute.xlu0 0
  %4852 = vperm.xlu0 %4851, %v3690
  %v4853 = vpop.permute.xlu0 %4852
  %4856 = vset.pattern.permute.xlu0 0
  %4857 = vperm.xlu0 %4856, %v3692
  %v4858 = vpop.permute.xlu0 %4857
  %4861 = vset.pattern.permute.xlu0 0
  %4862 = vperm.xlu0 %4861, %v3694
  %v4863 = vpop.permute.xlu0 %4862
  %4866 = vset.pattern.permute.xlu0 0
  %4867 = vperm.xlu0 %4866, %v3696
  %v4868 = vpop.permute.xlu0 %4867
  %4871 = vset.pattern.permute.xlu0 0
  %4872 = vperm.xlu0 %4871, %v3698
  %v4873 = vpop.permute.xlu0 %4872
  %4876 = vset.pattern.permute.xlu0 0
  %4877 = vperm.xlu0 %4876, %v3700
  %v4878 = vpop.permute.xlu0 %4877
  %4881 = vset.pattern.permute.xlu0 0
  %4882 = vperm.xlu0 %4881, %v3702
  %v4883 = vpop.permute.xlu0 %4882
  %4886 = vset.pattern.permute.xlu0 0
  %4887 = vperm.xlu0 %4886, %v3704
  %v4888 = vpop.permute.xlu0 %4887
  %4891 = vset.pattern.permute.xlu0 0
  %4892 = vperm.xlu0 %4891, %v3706
  %v4893 = vpop.permute.xlu0 %4892
  %4896 = vset.pattern.permute.xlu0 0
  %4897 = vperm.xlu0 %4896, %v3708
  %v4898 = vpop.permute.xlu0 %4897
  %4901 = vset.pattern.permute.xlu0 0
  %4902 = vperm.xlu0 %4901, %v3710
  %v4903 = vpop.permute.xlu0 %4902
  %4906 = vset.pattern.permute.xlu0 0
  %4907 = vperm.xlu0 %4906, %v3712
  %v4908 = vpop.permute.xlu0 %4907
  %4911 = vset.pattern.permute.xlu0 0
  %4912 = vperm.xlu0 %4911, %v3714
  %v4913 = vpop.permute.xlu0 %4912
  %4916 = vset.pattern.permute.xlu0 0
  %4917 = vperm.xlu0 %4916, %v3716
  %v4918 = vpop.permute.xlu0 %4917
  %4921 = vset.pattern.permute.xlu0 0
  %4922 = vperm.xlu0 %4921, %v3718
  %v4923 = vpop.permute.xlu0 %4922
  %4926 = vset.pattern.permute.xlu0 0
  %4927 = vperm.xlu0 %4926, %v3720
  %v4928 = vpop.permute.xlu0 %4927
  %4931 = vset.pattern.permute.xlu0 0
  %4932 = vperm.xlu0 %4931, %v3722
  %v4933 = vpop.permute.xlu0 %4932
  %4936 = vset.pattern.permute.xlu0 0
  %4937 = vperm.xlu0 %4936, %v3724
  %v4938 = vpop.permute.xlu0 %4937
  %4941 = vset.pattern.permute.xlu0 0
  %4942 = vperm.xlu0 %4941, %v3726
  %v4943 = vpop.permute.xlu0 %4942
  %4946 = vset.pattern.permute.xlu0 0
  %4947 = vperm.xlu0 %4946, %v3728
  %v4948 = vpop.permute.xlu0 %4947
  %4951 = vset.pattern.permute.xlu0 0
  %4952 = vperm.xlu0 %4951, %v3730
  %v4953 = vpop.permute.xlu0 %4952
  %4956 = vset.pattern.permute.xlu0 0
  %4957 = vperm.xlu0 %4956, %v3732
  %v4958 = vpop.permute.xlu0 %4957
  %4961 = vset.pattern.permute.xlu0 0
  %4962 = vperm.xlu0 %4961, %v3734
  %v4963 = vpop.permute.xlu0 %4962
  %4966 = vset.pattern.permute.xlu0 0
  %4967 = vperm.xlu0 %4966, %v3736
  %v4968 = vpop.permute.xlu0 %4967
  %4971 = vset.pattern.permute.xlu0 0
  %4972 = vperm.xlu0 %4971, %v3738
  %v4973 = vpop.permute.xlu0 %4972
  %4976 = vset.pattern.permute.xlu0 0
  %4977 = vperm.xlu0 %4976, %v3740
  %v4978 = vpop.permute.xlu0 %4977
  %4981 = vset.pattern.permute.xlu0 0
  %4982 = vperm.xlu0 %4981, %v3742
  %v4983 = vpop.permute.xlu0 %4982
  %4986 = vset.pattern.permute.xlu0 0
  %4987 = vperm.xlu0 %4986, %v3744
  %v4988 = vpop.permute.xlu0 %4987
  %4991 = vset.pattern.permute.xlu0 0
  %4992 = vperm.xlu0 %4991, %v3746
  %v4993 = vpop.permute.xlu0 %4992
  %4996 = vset.pattern.permute.xlu0 0
  %4997 = vperm.xlu0 %4996, %v3748
  %v4998 = vpop.permute.xlu0 %4997
  %5001 = vset.pattern.permute.xlu0 0
  %5002 = vperm.xlu0 %5001, %v3750
  %v5003 = vpop.permute.xlu0 %5002
  %5006 = vset.pattern.permute.xlu0 0
  %5007 = vperm.xlu0 %5006, %v3752
  %v5008 = vpop.permute.xlu0 %5007
  %5011 = vset.pattern.permute.xlu0 0
  %5012 = vperm.xlu0 %5011, %v3754
  %v5013 = vpop.permute.xlu0 %5012
  %5016 = vset.pattern.permute.xlu0 0
  %5017 = vperm.xlu0 %5016, %v3756
  %v5018 = vpop.permute.xlu0 %5017
  %5021 = vset.pattern.permute.xlu0 0
  %5022 = vperm.xlu0 %5021, %v3758
  %v5023 = vpop.permute.xlu0 %5022
  %5026 = vset.pattern.permute.xlu0 0
  %5027 = vperm.xlu0 %5026, %v3760
  %v5028 = vpop.permute.xlu0 %5027
  %5031 = vset.pattern.permute.xlu0 0
  %5032 = vperm.xlu0 %5031, %v3762
  %v5033 = vpop.permute.xlu0 %5032
  %5036 = vset.pattern.permute.xlu0 0
  %5037 = vperm.xlu0 %5036, %v3764
  %v5038 = vpop.permute.xlu0 %5037
  %5041 = vset.pattern.permute.xlu0 0
  %5042 = vperm.xlu0 %5041, %v3766
  %v5043 = vpop.permute.xlu0 %5042
  %5046 = vset.pattern.permute.xlu0 0
  %5047 = vperm.xlu0 %5046, %v3768
  %v5048 = vpop.permute.xlu0 %5047
  %5051 = vset.pattern.permute.xlu0 0
  %5052 = vperm.xlu0 %5051, %v3770
  %v5053 = vpop.permute.xlu0 %5052
  %5056 = vset.pattern.permute.xlu0 0
  %5057 = vperm.xlu0 %5056, %v3772
  %v5058 = vpop.permute.xlu0 %5057
  %5061 = vset.pattern.permute.xlu0 0
  %5062 = vperm.xlu0 %5061, %v3774
  %v5063 = vpop.permute.xlu0 %5062
  %5066 = vset.pattern.permute.xlu0 0
  %5067 = vperm.xlu0 %5066, %v3776
  %v5068 = vpop.permute.xlu0 %5067
  %5071 = vset.pattern.permute.xlu0 0
  %5072 = vperm.xlu0 %5071, %v3778
  %v5073 = vpop.permute.xlu0 %5072
  %5076 = vset.pattern.permute.xlu0 0
  %5077 = vperm.xlu0 %5076, %v3780
  %v5078 = vpop.permute.xlu0 %5077
  %5081 = vset.pattern.permute.xlu0 0
  %5082 = vperm.xlu0 %5081, %v3782
  %v5083 = vpop.permute.xlu0 %5082
  %5086 = vset.pattern.permute.xlu0 0
  %5087 = vperm.xlu0 %5086, %v3784
  %v5088 = vpop.permute.xlu0 %5087
  %5091 = vset.pattern.permute.xlu0 0
  %5092 = vperm.xlu0 %5091, %v3786
  %v5093 = vpop.permute.xlu0 %5092
  %5096 = vset.pattern.permute.xlu0 0
  %5097 = vperm.xlu0 %5096, %v3788
  %v5098 = vpop.permute.xlu0 %5097
  %5101 = vset.pattern.permute.xlu0 0
  %5102 = vperm.xlu0 %5101, %v3790
  %v5103 = vpop.permute.xlu0 %5102
  %5106 = vset.pattern.permute.xlu0 0
  %5107 = vperm.xlu0 %5106, %v3792
  %v5108 = vpop.permute.xlu0 %5107
  %5111 = vset.pattern.permute.xlu0 0
  %5112 = vperm.xlu0 %5111, %v3794
  %v5113 = vpop.permute.xlu0 %5112
  %5116 = vset.pattern.permute.xlu0 0
  %5117 = vperm.xlu0 %5116, %v3796
  %v5118 = vpop.permute.xlu0 %5117
  %5121 = vset.pattern.permute.xlu0 0
  %5122 = vperm.xlu0 %5121, %v3798
  %v5123 = vpop.permute.xlu0 %5122
  %5126 = vset.pattern.permute.xlu0 0
  %5127 = vperm.xlu0 %5126, %v3800
  %v5128 = vpop.permute.xlu0 %5127
  %5131 = vset.pattern.permute.xlu0 0
  %5132 = vperm.xlu0 %5131, %v3802
  %v5133 = vpop.permute.xlu0 %5132
  %5136 = vset.pattern.permute.xlu0 0
  %5137 = vperm.xlu0 %5136, %v3804
  %v5138 = vpop.permute.xlu0 %5137
  %5141 = vset.pattern.permute.xlu0 0
  %5142 = vperm.xlu0 %5141, %v3806
  %v5143 = vpop.permute.xlu0 %5142
  %5146 = vset.pattern.permute.xlu0 0
  %5147 = vperm.xlu0 %5146, %v3808
  %v5148 = vpop.permute.xlu0 %5147
  %5151 = vset.pattern.permute.xlu0 0
  %5152 = vperm.xlu0 %5151, %v3810
  %v5153 = vpop.permute.xlu0 %5152
  %5156 = vset.pattern.permute.xlu0 0
  %5157 = vperm.xlu0 %5156, %v3812
  %v5158 = vpop.permute.xlu0 %5157
  %5161 = vset.pattern.permute.xlu0 0
  %5162 = vperm.xlu0 %5161, %v3814
  %v5163 = vpop.permute.xlu0 %5162
  %5166 = vset.pattern.permute.xlu0 0
  %5167 = vperm.xlu0 %5166, %v3816
  %v5168 = vpop.permute.xlu0 %5167
  %5171 = vset.pattern.permute.xlu0 0
  %5172 = vperm.xlu0 %5171, %v3818
  %v5173 = vpop.permute.xlu0 %5172
  %5176 = vset.pattern.permute.xlu0 0
  %5177 = vperm.xlu0 %5176, %v3820
  %v5178 = vpop.permute.xlu0 %5177
  %5181 = vset.pattern.permute.xlu0 0
  %5182 = vperm.xlu0 %5181, %v3822
  %v5183 = vpop.permute.xlu0 %5182
  %5186 = vset.pattern.permute.xlu0 0
  %5187 = vperm.xlu0 %5186, %v3824
  %v5188 = vpop.permute.xlu0 %5187
  %5191 = vset.pattern.permute.xlu0 0
  %5192 = vperm.xlu0 %5191, %v3826
  %v5193 = vpop.permute.xlu0 %5192
  %5196 = vset.pattern.permute.xlu0 0
  %5197 = vperm.xlu0 %5196, %v3828
  %v5198 = vpop.permute.xlu0 %5197
  %5201 = vset.pattern.permute.xlu0 0
  %5202 = vperm.xlu0 %5201, %v3830
  %v5203 = vpop.permute.xlu0 %5202
  %5206 = vset.pattern.permute.xlu0 0
  %5207 = vperm.xlu0 %5206, %v3832
  %v5208 = vpop.permute.xlu0 %5207
  %5211 = vset.pattern.permute.xlu0 0
  %5212 = vperm.xlu0 %5211, %v3834
  %v5213 = vpop.permute.xlu0 %5212
  %5216 = vset.pattern.permute.xlu0 0
  %5217 = vperm.xlu0 %5216, %v3836
  %v5218 = vpop.permute.xlu0 %5217
  %5221 = vset.pattern.permute.xlu0 0
  %5222 = vperm.xlu0 %5221, %v3838
  %v5223 = vpop.permute.xlu0 %5222
  %5226 = vset.pattern.permute.xlu0 0
  %5227 = vperm.xlu0 %5226, %v3840
  %v5228 = vpop.permute.xlu0 %5227
  %5231 = vset.pattern.permute.xlu0 0
  %5232 = vperm.xlu0 %5231, %v3842
  %v5233 = vpop.permute.xlu0 %5232
  %5236 = vset.pattern.permute.xlu0 0
  %5237 = vperm.xlu0 %5236, %v3844
  %v5238 = vpop.permute.xlu0 %5237
  %5241 = vset.pattern.permute.xlu0 0
  %5242 = vperm.xlu0 %5241, %v3846
  %v5243 = vpop.permute.xlu0 %5242
  %5246 = vset.pattern.permute.xlu0 0
  %5247 = vperm.xlu0 %5246, %v3848
  %v5248 = vpop.permute.xlu0 %5247
  %5251 = vset.pattern.permute.xlu0 0
  %5252 = vperm.xlu0 %5251, %v3850
  %v5253 = vpop.permute.xlu0 %5252
  %5256 = vset.pattern.permute.xlu0 0
  %5257 = vperm.xlu0 %5256, %v3852
  %v5258 = vpop.permute.xlu0 %5257
  %5261 = vset.pattern.permute.xlu0 0
  %5262 = vperm.xlu0 %5261, %v3854
  %v5263 = vpop.permute.xlu0 %5262
  %5266 = vset.pattern.permute.xlu0 0
  %5267 = vperm.xlu0 %5266, %v3856
  %v5268 = vpop.permute.xlu0 %5267
  %5271 = vset.pattern.permute.xlu0 0
  %5272 = vperm.xlu0 %5271, %v3858
  %v5273 = vpop.permute.xlu0 %5272
  %5276 = vset.pattern.permute.xlu0 0
  %5277 = vperm.xlu0 %5276, %v3860
  %v5278 = vpop.permute.xlu0 %5277
  %5281 = vset.pattern.permute.xlu0 0
  %5282 = vperm.xlu0 %5281, %v3862
  %v5283 = vpop.permute.xlu0 %5282
  %5286 = vset.pattern.permute.xlu0 0
  %5287 = vperm.xlu0 %5286, %v3864
  %v5288 = vpop.permute.xlu0 %5287
  %5291 = vset.pattern.permute.xlu0 0
  %5292 = vperm.xlu0 %5291, %v3866
  %v5293 = vpop.permute.xlu0 %5292
  %5296 = vset.pattern.permute.xlu0 0
  %5297 = vperm.xlu0 %5296, %v3868
  %v5298 = vpop.permute.xlu0 %5297
  %5301 = vset.pattern.permute.xlu0 0
  %5302 = vperm.xlu0 %5301, %v3870
  %v5303 = vpop.permute.xlu0 %5302
  %5306 = vset.pattern.permute.xlu0 0
  %5307 = vperm.xlu0 %5306, %v3872
  %v5308 = vpop.permute.xlu0 %5307
  %5311 = vset.pattern.permute.xlu0 0
  %5312 = vperm.xlu0 %5311, %v3874
  %v5313 = vpop.permute.xlu0 %5312
  %5316 = vset.pattern.permute.xlu0 0
  %5317 = vperm.xlu0 %5316, %v3876
  %v5318 = vpop.permute.xlu0 %5317
  %5321 = vset.pattern.permute.xlu0 0
  %5322 = vperm.xlu0 %5321, %v3878
  %v5323 = vpop.permute.xlu0 %5322
  %5326 = vset.pattern.permute.xlu0 0
  %5327 = vperm.xlu0 %5326, %v3880
  %v5328 = vpop.permute.xlu0 %5327
  %5331 = vset.pattern.permute.xlu0 0
  %5332 = vperm.xlu0 %5331, %v3882
  %v5333 = vpop.permute.xlu0 %5332
  %5336 = vset.pattern.permute.xlu0 0
  %5337 = vperm.xlu0 %5336, %v3884
  %v5338 = vpop.permute.xlu0 %5337
  %5341 = vset.pattern.permute.xlu0 0
  %5342 = vperm.xlu0 %5341, %v3886
  %v5343 = vpop.permute.xlu0 %5342
  %5346 = vset.pattern.permute.xlu0 0
  %5347 = vperm.xlu0 %5346, %v3888
  %v5348 = vpop.permute.xlu0 %5347
  %5351 = vset.pattern.permute.xlu0 0
  %5352 = vperm.xlu0 %5351, %v3890
  %v5353 = vpop.permute.xlu0 %5352
  %5356 = vset.pattern.permute.xlu0 0
  %5357 = vperm.xlu0 %5356, %v3892
  %v5358 = vpop.permute.xlu0 %5357
  %5361 = vset.pattern.permute.xlu0 0
  %5362 = vperm.xlu0 %5361, %v3894
  %v5363 = vpop.permute.xlu0 %5362
  %5366 = vset.pattern.permute.xlu0 0
  %5367 = vperm.xlu0 %5366, %v3896
  %v5368 = vpop.permute.xlu0 %5367
  %5371 = vset.pattern.permute.xlu0 0
  %5372 = vperm.xlu0 %5371, %v3898
  %v5373 = vpop.permute.xlu0 %5372
  %5376 = vset.pattern.permute.xlu0 0
  %5377 = vperm.xlu0 %5376, %v3900
  %v5378 = vpop.permute.xlu0 %5377
  %5381 = vset.pattern.permute.xlu0 0
  %5382 = vperm.xlu0 %5381, %v3902
  %v5383 = vpop.permute.xlu0 %5382
  %5386 = vset.pattern.permute.xlu0 0
  %5387 = vperm.xlu0 %5386, %v3904
  %v5388 = vpop.permute.xlu0 %5387
  %5391 = vset.pattern.permute.xlu0 0
  %5392 = vperm.xlu0 %5391, %v3906
  %v5393 = vpop.permute.xlu0 %5392
  %5396 = vset.pattern.permute.xlu0 0
  %5397 = vperm.xlu0 %5396, %v3908
  %v5398 = vpop.permute.xlu0 %5397
  %5401 = vset.pattern.permute.xlu0 0
  %5402 = vperm.xlu0 %5401, %v3910
  %v5403 = vpop.permute.xlu0 %5402
  %5406 = vset.pattern.permute.xlu0 0
  %5407 = vperm.xlu0 %5406, %v3912
  %v5408 = vpop.permute.xlu0 %5407
  %5411 = vset.pattern.permute.xlu0 0
  %5412 = vperm.xlu0 %5411, %v3914
  %v5413 = vpop.permute.xlu0 %5412
  %5416 = vset.pattern.permute.xlu0 0
  %5417 = vperm.xlu0 %5416, %v3916
  %v5418 = vpop.permute.xlu0 %5417
  %5421 = vset.pattern.permute.xlu0 0
  %5422 = vperm.xlu0 %5421, %v3918
  %v5423 = vpop.permute.xlu0 %5422
  %5426 = vset.pattern.permute.xlu0 0
  %5427 = vperm.xlu0 %5426, %v3920
  %v5428 = vpop.permute.xlu0 %5427
  %5431 = vset.pattern.permute.xlu0 0
  %5432 = vperm.xlu0 %5431, %v3922
  %v5433 = vpop.permute.xlu0 %5432
  %5436 = vset.pattern.permute.xlu0 0
  %5437 = vperm.xlu0 %5436, %v3924
  %v5438 = vpop.permute.xlu0 %5437
  %5441 = vset.pattern.permute.xlu0 0
  %5442 = vperm.xlu0 %5441, %v3926
  %v5443 = vpop.permute.xlu0 %5442
  %5446 = vset.pattern.permute.xlu0 0
  %5447 = vperm.xlu0 %5446, %v3928
  %v5448 = vpop.permute.xlu0 %5447
  %5451 = vset.pattern.permute.xlu0 0
  %5452 = vperm.xlu0 %5451, %v3930
  %v5453 = vpop.permute.xlu0 %5452
  %5456 = vset.pattern.permute.xlu0 0
  %5457 = vperm.xlu0 %5456, %v3932
  %v5458 = vpop.permute.xlu0 %5457
  %5461 = vset.pattern.permute.xlu0 0
  %5462 = vperm.xlu0 %5461, %v3934
  %v5463 = vpop.permute.xlu0 %5462
  %5466 = vset.pattern.permute.xlu0 0
  %5467 = vperm.xlu0 %5466, %v3936
  %v5468 = vpop.permute.xlu0 %5467
  %5471 = vset.pattern.permute.xlu0 0
  %5472 = vperm.xlu0 %5471, %v3938
  %v5473 = vpop.permute.xlu0 %5472
  %5476 = vset.pattern.permute.xlu0 0
  %5477 = vperm.xlu0 %5476, %v3940
  %v5478 = vpop.permute.xlu0 %5477
  %5481 = vset.pattern.permute.xlu0 0
  %5482 = vperm.xlu0 %5481, %v3942
  %v5483 = vpop.permute.xlu0 %5482
  %5486 = vset.pattern.permute.xlu0 0
  %5487 = vperm.xlu0 %5486, %v3944
  %v5488 = vpop.permute.xlu0 %5487
  %5491 = vset.pattern.permute.xlu0 0
  %5492 = vperm.xlu0 %5491, %v3946
  %v5493 = vpop.permute.xlu0 %5492
  %5496 = vset.pattern.permute.xlu0 0
  %5497 = vperm.xlu0 %5496, %v3948
  %v5498 = vpop.permute.xlu0 %5497
  %5501 = vset.pattern.permute.xlu0 0
  %5502 = vperm.xlu0 %5501, %v3950
  %v5503 = vpop.permute.xlu0 %5502
  %5506 = vset.pattern.permute.xlu0 0
  %5507 = vperm.xlu0 %5506, %v3952
  %v5508 = vpop.permute.xlu0 %5507
  %5511 = vset.pattern.permute.xlu0 0
  %5512 = vperm.xlu0 %5511, %v3954
  %v5513 = vpop.permute.xlu0 %5512
  %5516 = vset.pattern.permute.xlu0 0
  %5517 = vperm.xlu0 %5516, %v3956
  %v5518 = vpop.permute.xlu0 %5517
  %5521 = vset.pattern.permute.xlu0 0
  %5522 = vperm.xlu0 %5521, %v3958
  %v5523 = vpop.permute.xlu0 %5522
  %5526 = vset.pattern.permute.xlu0 0
  %5527 = vperm.xlu0 %5526, %v3960
  %v5528 = vpop.permute.xlu0 %5527
  %5531 = vset.pattern.permute.xlu0 0
  %5532 = vperm.xlu0 %5531, %v3962
  %v5533 = vpop.permute.xlu0 %5532
  %5536 = vset.pattern.permute.xlu0 0
  %5537 = vperm.xlu0 %5536, %v3964
  %v5538 = vpop.permute.xlu0 %5537
  %5541 = vset.pattern.permute.xlu0 0
  %5542 = vperm.xlu0 %5541, %v3966
  %v5543 = vpop.permute.xlu0 %5542
  %5546 = vset.pattern.permute.xlu0 0
  %5547 = vperm.xlu0 %5546, %v3968
  %v5548 = vpop.permute.xlu0 %5547
  %5551 = vset.pattern.permute.xlu0 0
  %5552 = vperm.xlu0 %5551, %v3970
  %v5553 = vpop.permute.xlu0 %5552
  %5556 = vset.pattern.permute.xlu0 0
  %5557 = vperm.xlu0 %5556, %v3972
  %v5558 = vpop.permute.xlu0 %5557
  %5561 = vset.pattern.permute.xlu0 0
  %5562 = vperm.xlu0 %5561, %v3974
  %v5563 = vpop.permute.xlu0 %5562
  %5566 = vset.pattern.permute.xlu0 0
  %5567 = vperm.xlu0 %5566, %v3976
  %v5568 = vpop.permute.xlu0 %5567
  %5571 = vset.pattern.permute.xlu0 0
  %5572 = vperm.xlu0 %5571, %v3978
  %v5573 = vpop.permute.xlu0 %5572
  %5576 = vset.pattern.permute.xlu0 0
  %5577 = vperm.xlu0 %5576, %v3980
  %v5578 = vpop.permute.xlu0 %5577
  %5581 = vset.pattern.permute.xlu0 0
  %5582 = vperm.xlu0 %5581, %v3982
  %v5583 = vpop.permute.xlu0 %5582
  %5586 = vset.pattern.permute.xlu0 0
  %5587 = vperm.xlu0 %5586, %v3984
  %v5588 = vpop.permute.xlu0 %5587
  %5591 = vset.pattern.permute.xlu0 0
  %5592 = vperm.xlu0 %5591, %v3986
  %v5593 = vpop.permute.xlu0 %5592
  %5596 = vset.pattern.permute.xlu0 0
  %5597 = vperm.xlu0 %5596, %v3988
  %v5598 = vpop.permute.xlu0 %5597
  %5601 = vset.pattern.permute.xlu0 0
  %5602 = vperm.xlu0 %5601, %v3990
  %v5603 = vpop.permute.xlu0 %5602
  %5606 = vset.pattern.permute.xlu0 0
  %5607 = vperm.xlu0 %5606, %v3992
  %v5608 = vpop.permute.xlu0 %5607
  %5611 = vset.pattern.permute.xlu0 0
  %5612 = vperm.xlu0 %5611, %v3994
  %v5613 = vpop.permute.xlu0 %5612
  %5616 = vset.pattern.permute.xlu0 0
  %5617 = vperm.xlu0 %5616, %v3996
  %v5618 = vpop.permute.xlu0 %5617
  %5621 = vset.pattern.permute.xlu0 0
  %5622 = vperm.xlu0 %5621, %v3998
  %v5623 = vpop.permute.xlu0 %5622
  %5626 = vset.pattern.permute.xlu0 0
  %5627 = vperm.xlu0 %5626, %v4000
  %v5628 = vpop.permute.xlu0 %5627
  %5631 = vset.pattern.permute.xlu0 0
  %5632 = vperm.xlu0 %5631, %v4002
  %v5633 = vpop.permute.xlu0 %5632
  %5636 = vset.pattern.permute.xlu0 0
  %5637 = vperm.xlu0 %5636, %v4004
  %v5638 = vpop.permute.xlu0 %5637
  %5641 = vset.pattern.permute.xlu0 0
  %5642 = vperm.xlu0 %5641, %v4006
  %v5643 = vpop.permute.xlu0 %5642
  %5646 = vset.pattern.permute.xlu0 0
  %5647 = vperm.xlu0 %5646, %v4008
  %v5648 = vpop.permute.xlu0 %5647
  %5651 = vset.pattern.permute.xlu0 0
  %5652 = vperm.xlu0 %5651, %v4010
  %v5653 = vpop.permute.xlu0 %5652
  %5656 = vset.pattern.permute.xlu0 0
  %5657 = vperm.xlu0 %5656, %v4012
  %v5658 = vpop.permute.xlu0 %5657
  %5661 = vset.pattern.permute.xlu0 0
  %5662 = vperm.xlu0 %5661, %v4014
  %v5663 = vpop.permute.xlu0 %5662
  %5666 = vset.pattern.permute.xlu0 0
  %5667 = vperm.xlu0 %5666, %v4016
  %v5668 = vpop.permute.xlu0 %5667
  %5671 = vset.pattern.permute.xlu0 0
  %5672 = vperm.xlu0 %5671, %v4018
  %v5673 = vpop.permute.xlu0 %5672
  %5676 = vset.pattern.permute.xlu0 0
  %5677 = vperm.xlu0 %5676, %v4020
  %v5678 = vpop.permute.xlu0 %5677
  %5681 = vset.pattern.permute.xlu0 0
  %5682 = vperm.xlu0 %5681, %v4022
  %v5683 = vpop.permute.xlu0 %5682
  %5686 = vset.pattern.permute.xlu0 0
  %5687 = vperm.xlu0 %5686, %v4024
  %v5688 = vpop.permute.xlu0 %5687
  %5691 = vset.pattern.permute.xlu0 0
  %5692 = vperm.xlu0 %5691, %v4026
  %v5693 = vpop.permute.xlu0 %5692
  %5696 = vset.pattern.permute.xlu0 0
  %5697 = vperm.xlu0 %5696, %v4028
  %v5698 = vpop.permute.xlu0 %5697
  %5701 = vset.pattern.permute.xlu0 0
  %5702 = vperm.xlu0 %5701, %v4030
  %v5703 = vpop.permute.xlu0 %5702
  %5706 = vset.pattern.permute.xlu0 0
  %5707 = vperm.xlu0 %5706, %v4032
  %v5708 = vpop.permute.xlu0 %5707
  %5711 = vset.pattern.permute.xlu0 0
  %5712 = vperm.xlu0 %5711, %v4034
  %v5713 = vpop.permute.xlu0 %5712
  %5716 = vset.pattern.permute.xlu0 0
  %5717 = vperm.xlu0 %5716, %v4036
  %v5718 = vpop.permute.xlu0 %5717
  %5721 = vset.pattern.permute.xlu0 0
  %5722 = vperm.xlu0 %5721, %v4038
  %v5723 = vpop.permute.xlu0 %5722
  %5726 = vset.pattern.permute.xlu0 0
  %5727 = vperm.xlu0 %5726, %v4040
  %v5728 = vpop.permute.xlu0 %5727
  %5731 = vset.pattern.permute.xlu0 0
  %5732 = vperm.xlu0 %5731, %v4042
  %v5733 = vpop.permute.xlu0 %5732
  %5736 = vset.pattern.permute.xlu0 0
  %5737 = vperm.xlu0 %5736, %v4044
  %v5738 = vpop.permute.xlu0 %5737
  %5741 = vset.pattern.permute.xlu0 0
  %5742 = vperm.xlu0 %5741, %v4046
  %v5743 = vpop.permute.xlu0 %5742
  %5746 = vset.pattern.permute.xlu0 0
  %5747 = vperm.xlu0 %5746, %v4048
  %v5748 = vpop.permute.xlu0 %5747
  %5751 = vset.pattern.permute.xlu0 0
  %5752 = vperm.xlu0 %5751, %v4050
  %v5753 = vpop.permute.xlu0 %5752
  %5756 = vset.pattern.permute.xlu0 0
  %5757 = vperm.xlu0 %5756, %v4052
  %v5758 = vpop.permute.xlu0 %5757
  %5761 = vset.pattern.permute.xlu0 0
  %5762 = vperm.xlu0 %5761, %v4054
  %v5763 = vpop.permute.xlu0 %5762
  %5766 = vset.pattern.permute.xlu0 0
  %5767 = vperm.xlu0 %5766, %v4056
  %v5768 = vpop.permute.xlu0 %5767
  %5771 = vset.pattern.permute.xlu0 0
  %5772 = vperm.xlu0 %5771, %v4058
  %v5773 = vpop.permute.xlu0 %5772
  %5776 = vset.pattern.permute.xlu0 0
  %5777 = vperm.xlu0 %5776, %v4060
  %v5778 = vpop.permute.xlu0 %5777
  %5781 = vset.pattern.permute.xlu0 0
  %5782 = vperm.xlu0 %5781, %v4062
  %v5783 = vpop.permute.xlu0 %5782
  %5786 = vset.pattern.permute.xlu0 0
  %5787 = vperm.xlu0 %5786, %v4064
  %v5788 = vpop.permute.xlu0 %5787
  %5791 = vset.pattern.permute.xlu0 0
  %5792 = vperm.xlu0 %5791, %v4066
  %v5793 = vpop.permute.xlu0 %5792
  %v5795 = vmul.f32 %v4358, %v4067
  %v5796 = vmul.f32 %v4363, %v4068
  %v5797 = vmul.f32 %v4368, %v4069
  %v5798 = vmul.f32 %v4373, %v4070
  %v5799 = vmul.f32 %v4378, %v4071
  %v5800 = vmul.f32 %v4383, %v4072
  %v5801 = vmul.f32 %v4388, %v4073
  %v5802 = vmul.f32 %v4393, %v4074
  %v5803 = vmul.f32 %v4398, %v4075
  %v5804 = vmul.f32 %v4403, %v4076
  %v5805 = vmul.f32 %v4408, %v4077
  %v5806 = vmul.f32 %v4413, %v4078
  %v5807 = vmul.f32 %v4418, %v4079
  %v5808 = vmul.f32 %v4423, %v4080
  %v5809 = vmul.f32 %v4428, %v4081
  %v5810 = vmul.f32 %v4433, %v4082
  %v5811 = vmul.f32 %v4438, %v4083
  %v5812 = vmul.f32 %v4443, %v4084
  %v5813 = vmul.f32 %v4448, %v4085
  %v5814 = vmul.f32 %v4453, %v4086
  %v5815 = vmul.f32 %v4458, %v4087
  %v5816 = vmul.f32 %v4463, %v4088
  %v5817 = vmul.f32 %v4468, %v4089
  %v5818 = vmul.f32 %v4473, %v4090
  %v5819 = vmul.f32 %v4478, %v4091
  %v5820 = vmul.f32 %v4483, %v4092
  %v5821 = vmul.f32 %v4488, %v4093
  %v5822 = vmul.f32 %v4493, %v4094
  %v5823 = vmul.f32 %v4498, %v4095
  %v5824 = vmul.f32 %v4503, %v4096
  %v5825 = vmul.f32 %v4508, %v4097
  %v5826 = vmul.f32 %v4513, %v4098
  %v5827 = vmul.f32 %v4518, %v4099
  %v5828 = vmul.f32 %v4523, %v4100
  %v5829 = vmul.f32 %v4528, %v4101
  %v5830 = vmul.f32 %v4533, %v4102
  %v5831 = vmul.f32 %v4538, %v4103
  %v5832 = vmul.f32 %v4543, %v4104
  %v5833 = vmul.f32 %v4548, %v4105
  %v5834 = vmul.f32 %v4553, %v4106
  %v5835 = vmul.f32 %v4558, %v4107
  %v5836 = vmul.f32 %v4563, %v4108
  %v5837 = vmul.f32 %v4568, %v4109
  %v5838 = vmul.f32 %v4573, %v4110
  %v5839 = vmul.f32 %v4578, %v4111
  %v5840 = vmul.f32 %v4583, %v4112
  %v5841 = vmul.f32 %v4588, %v4113
  %v5842 = vmul.f32 %v4593, %v4114
  %v5843 = vmul.f32 %v4598, %v4115
  %v5844 = vmul.f32 %v4603, %v4116
  %v5845 = vmul.f32 %v4608, %v4117
  %v5846 = vmul.f32 %v4613, %v4118
  %v5847 = vmul.f32 %v4618, %v4119
  %v5848 = vmul.f32 %v4623, %v4120
  %v5849 = vmul.f32 %v4628, %v4121
  %v5850 = vmul.f32 %v4633, %v4122
  %v5851 = vmul.f32 %v4638, %v4123
  %v5852 = vmul.f32 %v4643, %v4124
  %v5853 = vmul.f32 %v4648, %v4125
  %v5854 = vmul.f32 %v4653, %v4126
  %v5855 = vmul.f32 %v4658, %v4127
  %v5856 = vmul.f32 %v4663, %v4128
  %v5857 = vmul.f32 %v4668, %v4129
  %v5858 = vmul.f32 %v4673, %v4130
  %v5859 = vmul.f32 %v4678, %v4131
  %v5860 = vmul.f32 %v4683, %v4132
  %v5861 = vmul.f32 %v4688, %v4133
  %v5862 = vmul.f32 %v4693, %v4134
  %v5863 = vmul.f32 %v4698, %v4135
  %v5864 = vmul.f32 %v4703, %v4136
  %v5865 = vmul.f32 %v4708, %v4137
  %v5866 = vmul.f32 %v4713, %v4138
  %v5867 = vmul.f32 %v4718, %v4139
  %v5868 = vmul.f32 %v4723, %v4140
  %v5869 = vmul.f32 %v4728, %v4141
  %v5870 = vmul.f32 %v4733, %v4142
  %v5871 = vmul.f32 %v4738, %v4143
  %v5872 = vmul.f32 %v4743, %v4144
  %v5873 = vmul.f32 %v4748, %v4145
  %v5874 = vmul.f32 %v4753, %v4146
  %v5875 = vmul.f32 %v4758, %v4147
  %v5876 = vmul.f32 %v4763, %v4148
  %v5877 = vmul.f32 %v4768, %v4149
  %v5878 = vmul.f32 %v4773, %v4150
  %v5879 = vmul.f32 %v4778, %v4151
  %v5880 = vmul.f32 %v4783, %v4152
  %v5881 = vmul.f32 %v4788, %v4153
  %v5882 = vmul.f32 %v4793, %v4154
  %v5883 = vmul.f32 %v4798, %v4155
  %v5884 = vmul.f32 %v4803, %v4156
  %v5885 = vmul.f32 %v4808, %v4157
  %v5886 = vmul.f32 %v4813, %v4158
  %v5887 = vmul.f32 %v4818, %v4159
  %v5888 = vmul.f32 %v4823, %v4160
  %v5889 = vmul.f32 %v4828, %v4161
  %v5890 = vmul.f32 %v4833, %v4162
  %v5891 = vmul.f32 %v4838, %v4163
  %v5892 = vmul.f32 %v4843, %v4164
  %v5893 = vmul.f32 %v4848, %v4165
  %v5894 = vmul.f32 %v4853, %v4166
  %v5895 = vmul.f32 %v4858, %v4167
  %v5896 = vmul.f32 %v4863, %v4168
  %v5897 = vmul.f32 %v4868, %v4169
  %v5898 = vmul.f32 %v4873, %v4170
  %v5899 = vmul.f32 %v4878, %v4171
  %v5900 = vmul.f32 %v4883, %v4172
  %v5901 = vmul.f32 %v4888, %v4173
  %v5902 = vmul.f32 %v4893, %v4174
  %v5903 = vmul.f32 %v4898, %v4175
  %v5904 = vmul.f32 %v4903, %v4176
  %v5905 = vmul.f32 %v4908, %v4177
  %v5906 = vmul.f32 %v4913, %v4178
  %v5907 = vmul.f32 %v4918, %v4179
  %v5908 = vmul.f32 %v4923, %v4180
  %v5909 = vmul.f32 %v4928, %v4181
  %v5910 = vmul.f32 %v4933, %v4182
  %v5911 = vmul.f32 %v4938, %v4183
  %v5912 = vmul.f32 %v4943, %v4184
  %v5913 = vmul.f32 %v4948, %v4185
  %v5914 = vmul.f32 %v4953, %v4186
  %v5915 = vmul.f32 %v4958, %v4187
  %v5916 = vmul.f32 %v4963, %v4188
  %v5917 = vmul.f32 %v4968, %v4189
  %v5918 = vmul.f32 %v4973, %v4190
  %v5919 = vmul.f32 %v4978, %v4191
  %v5920 = vmul.f32 %v4983, %v4192
  %v5921 = vmul.f32 %v4988, %v4193
  %v5922 = vmul.f32 %v4993, %v4194
  %v5923 = vmul.f32 %v4998, %v4195
  %v5924 = vmul.f32 %v5003, %v4196
  %v5925 = vmul.f32 %v5008, %v4197
  %v5926 = vmul.f32 %v5013, %v4198
  %v5927 = vmul.f32 %v5018, %v4199
  %v5928 = vmul.f32 %v5023, %v4200
  %v5929 = vmul.f32 %v5028, %v4201
  %v5930 = vmul.f32 %v5033, %v4202
  %v5931 = vmul.f32 %v5038, %v4203
  %v5932 = vmul.f32 %v5043, %v4204
  %v5933 = vmul.f32 %v5048, %v4205
  %v5934 = vmul.f32 %v5053, %v4206
  %v5935 = vmul.f32 %v5058, %v4207
  %v5936 = vmul.f32 %v5063, %v4208
  %v5937 = vmul.f32 %v5068, %v4209
  %v5938 = vmul.f32 %v5073, %v4210
  %v5939 = vmul.f32 %v5078, %v4211
  %v5940 = vmul.f32 %v5083, %v4212
  %v5941 = vmul.f32 %v5088, %v4213
  %v5942 = vmul.f32 %v5093, %v4214
  %v5943 = vmul.f32 %v5098, %v4215
  %v5944 = vmul.f32 %v5103, %v4216
  %v5945 = vmul.f32 %v5108, %v4217
  %v5946 = vmul.f32 %v5113, %v4218
  %v5947 = vmul.f32 %v5118, %v4219
  %v5948 = vmul.f32 %v5123, %v4220
  %v5949 = vmul.f32 %v5128, %v4221
  %v5950 = vmul.f32 %v5133, %v4222
  %v5951 = vmul.f32 %v5138, %v4223
  %v5952 = vmul.f32 %v5143, %v4224
  %v5953 = vmul.f32 %v5148, %v4225
  %v5954 = vmul.f32 %v5153, %v4226
  %v5955 = vmul.f32 %v5158, %v4227
  %v5956 = vmul.f32 %v5163, %v4228
  %v5957 = vmul.f32 %v5168, %v4229
  %v5958 = vmul.f32 %v5173, %v4230
  %v5959 = vmul.f32 %v5178, %v4231
  %v5960 = vmul.f32 %v5183, %v4232
  %v5961 = vmul.f32 %v5188, %v4233
  %v5962 = vmul.f32 %v5193, %v4234
  %v5963 = vmul.f32 %v5198, %v4235
  %v5964 = vmul.f32 %v5203, %v4236
  %v5965 = vmul.f32 %v5208, %v4237
  %v5966 = vmul.f32 %v5213, %v4238
  %v5967 = vmul.f32 %v5218, %v4239
  %v5968 = vmul.f32 %v5223, %v4240
  %v5969 = vmul.f32 %v5228, %v4241
  %v5970 = vmul.f32 %v5233, %v4242
  %v5971 = vmul.f32 %v5238, %v4243
  %v5972 = vmul.f32 %v5243, %v4244
  %v5973 = vmul.f32 %v5248, %v4245
  %v5974 = vmul.f32 %v5253, %v4246
  %v5975 = vmul.f32 %v5258, %v4247
  %v5976 = vmul.f32 %v5263, %v4248
  %v5977 = vmul.f32 %v5268, %v4249
  %v5978 = vmul.f32 %v5273, %v4250
  %v5979 = vmul.f32 %v5278, %v4251
  %v5980 = vmul.f32 %v5283, %v4252
  %v5981 = vmul.f32 %v5288, %v4253
  %v5982 = vmul.f32 %v5293, %v4254
  %v5983 = vmul.f32 %v5298, %v4255
  %v5984 = vmul.f32 %v5303, %v4256
  %v5985 = vmul.f32 %v5308, %v4257
  %v5986 = vmul.f32 %v5313, %v4258
  %v5987 = vmul.f32 %v5318, %v4259
  %v5988 = vmul.f32 %v5323, %v4260
  %v5989 = vmul.f32 %v5328, %v4261
  %v5990 = vmul.f32 %v5333, %v4262
  %v5991 = vmul.f32 %v5338, %v4263
  %v5992 = vmul.f32 %v5343, %v4264
  %v5993 = vmul.f32 %v5348, %v4265
  %v5994 = vmul.f32 %v5353, %v4266
  %v5995 = vmul.f32 %v5358, %v4267
  %v5996 = vmul.f32 %v5363, %v4268
  %v5997 = vmul.f32 %v5368, %v4269
  %v5998 = vmul.f32 %v5373, %v4270
  %v5999 = vmul.f32 %v5378, %v4271
  %v6000 = vmul.f32 %v5383, %v4272
  %v6001 = vmul.f32 %v5388, %v4273
  %v6002 = vmul.f32 %v5393, %v4274
  %v6003 = vmul.f32 %v5398, %v4275
  %v6004 = vmul.f32 %v5403, %v4276
  %v6005 = vmul.f32 %v5408, %v4277
  %v6006 = vmul.f32 %v5413, %v4278
  %v6007 = vmul.f32 %v5418, %v4279
  %v6008 = vmul.f32 %v5423, %v4280
  %v6009 = vmul.f32 %v5428, %v4281
  %v6010 = vmul.f32 %v5433, %v4282
  %v6011 = vmul.f32 %v5438, %v4283
  %v6012 = vmul.f32 %v5443, %v4284
  %v6013 = vmul.f32 %v5448, %v4285
  %v6014 = vmul.f32 %v5453, %v4286
  %v6015 = vmul.f32 %v5458, %v4287
  %v6016 = vmul.f32 %v5463, %v4288
  %v6017 = vmul.f32 %v5468, %v4289
  %v6018 = vmul.f32 %v5473, %v4290
  %v6019 = vmul.f32 %v5478, %v4291
  %v6020 = vmul.f32 %v5483, %v4292
  %v6021 = vmul.f32 %v5488, %v4293
  %v6022 = vmul.f32 %v5493, %v4294
  %v6023 = vmul.f32 %v5498, %v4295
  %v6024 = vmul.f32 %v5503, %v4296
  %v6025 = vmul.f32 %v5508, %v4297
  %v6026 = vmul.f32 %v5513, %v4298
  %v6027 = vmul.f32 %v5518, %v4299
  %v6028 = vmul.f32 %v5523, %v4300
  %v6029 = vmul.f32 %v5528, %v4301
  %v6030 = vmul.f32 %v5533, %v4302
  %v6031 = vmul.f32 %v5538, %v4303
  %v6032 = vmul.f32 %v5543, %v4304
  %v6033 = vmul.f32 %v5548, %v4305
  %v6034 = vmul.f32 %v5553, %v4306
  %v6035 = vmul.f32 %v5558, %v4307
  %v6036 = vmul.f32 %v5563, %v4308
  %v6037 = vmul.f32 %v5568, %v4309
  %v6038 = vmul.f32 %v5573, %v4310
  %v6039 = vmul.f32 %v5578, %v4311
  %v6040 = vmul.f32 %v5583, %v4312
  %v6041 = vmul.f32 %v5588, %v4313
  %v6042 = vmul.f32 %v5593, %v4314
  %v6043 = vmul.f32 %v5598, %v4315
  %v6044 = vmul.f32 %v5603, %v4316
  %v6045 = vmul.f32 %v5608, %v4317
  %v6046 = vmul.f32 %v5613, %v4318
  %v6047 = vmul.f32 %v5618, %v4319
  %v6048 = vmul.f32 %v5623, %v4320
  %v6049 = vmul.f32 %v5628, %v4321
  %v6050 = vmul.f32 %v5633, %v4322
  %v6051 = vmul.f32 %v5638, %v4323
  %v6052 = vmul.f32 %v5643, %v4324
  %v6053 = vmul.f32 %v5648, %v4325
  %v6054 = vmul.f32 %v5653, %v4326
  %v6055 = vmul.f32 %v5658, %v4327
  %v6056 = vmul.f32 %v5663, %v4328
  %v6057 = vmul.f32 %v5668, %v4329
  %v6058 = vmul.f32 %v5673, %v4330
  %v6059 = vmul.f32 %v5678, %v4331
  %v6060 = vmul.f32 %v5683, %v4332
  %v6061 = vmul.f32 %v5688, %v4333
  %v6062 = vmul.f32 %v5693, %v4334
  %v6063 = vmul.f32 %v5698, %v4335
  %v6064 = vmul.f32 %v5703, %v4336
  %v6065 = vmul.f32 %v5708, %v4337
  %v6066 = vmul.f32 %v5713, %v4338
  %v6067 = vmul.f32 %v5718, %v4339
  %v6068 = vmul.f32 %v5723, %v4340
  %v6069 = vmul.f32 %v5728, %v4341
  %v6070 = vmul.f32 %v5733, %v4342
  %v6071 = vmul.f32 %v5738, %v4343
  %v6072 = vmul.f32 %v5743, %v4344
  %v6073 = vmul.f32 %v5748, %v4345
  %v6074 = vmul.f32 %v5753, %v4346
  %v6075 = vmul.f32 %v5758, %v4347
  %v6076 = vmul.f32 %v5763, %v4348
  %v6077 = vmul.f32 %v5768, %v4349
  %v6078 = vmul.f32 %v5773, %v4350
  %v6079 = vmul.f32 %v5778, %v4351
  %v6080 = vmul.f32 %v5783, %v4352
  %v6081 = vmul.f32 %v5788, %v4353
  %v6082 = vmul.f32 %v5793, %v4354
  %v6083 = vpack.c.bf16 %v5796, %v5795
  %v6084 = vpack.c.bf16 %v5798, %v5797
  %v6085 = vpack.c.bf16 %v5800, %v5799
  %v6086 = vpack.c.bf16 %v5802, %v5801
  %v6087 = vpack.c.bf16 %v5804, %v5803
  %v6088 = vpack.c.bf16 %v5806, %v5805
  %v6089 = vpack.c.bf16 %v5808, %v5807
  %v6090 = vpack.c.bf16 %v5810, %v5809
  %v6091 = vpack.c.bf16 %v5812, %v5811
  %v6092 = vpack.c.bf16 %v5814, %v5813
  %v6093 = vpack.c.bf16 %v5816, %v5815
  %v6094 = vpack.c.bf16 %v5818, %v5817
  %v6095 = vpack.c.bf16 %v5820, %v5819
  %v6096 = vpack.c.bf16 %v5822, %v5821
  %v6097 = vpack.c.bf16 %v5824, %v5823
  %v6098 = vpack.c.bf16 %v5826, %v5825
  %v6099 = vpack.c.bf16 %v5828, %v5827
  %v6100 = vpack.c.bf16 %v5830, %v5829
  %v6101 = vpack.c.bf16 %v5832, %v5831
  %v6102 = vpack.c.bf16 %v5834, %v5833
  %v6103 = vpack.c.bf16 %v5836, %v5835
  %v6104 = vpack.c.bf16 %v5838, %v5837
  %v6105 = vpack.c.bf16 %v5840, %v5839
  %v6106 = vpack.c.bf16 %v5842, %v5841
  %v6107 = vpack.c.bf16 %v5844, %v5843
  %v6108 = vpack.c.bf16 %v5846, %v5845
  %v6109 = vpack.c.bf16 %v5848, %v5847
  %v6110 = vpack.c.bf16 %v5850, %v5849
  %v6111 = vpack.c.bf16 %v5852, %v5851
  %v6112 = vpack.c.bf16 %v5854, %v5853
  %v6113 = vpack.c.bf16 %v5856, %v5855
  %v6114 = vpack.c.bf16 %v5858, %v5857
  %v6115 = vpack.c.bf16 %v5860, %v5859
  %v6116 = vpack.c.bf16 %v5862, %v5861
  %v6117 = vpack.c.bf16 %v5864, %v5863
  %v6118 = vpack.c.bf16 %v5866, %v5865
  %v6119 = vpack.c.bf16 %v5868, %v5867
  %v6120 = vpack.c.bf16 %v5870, %v5869
  %v6121 = vpack.c.bf16 %v5872, %v5871
  %v6122 = vpack.c.bf16 %v5874, %v5873
  %v6123 = vpack.c.bf16 %v5876, %v5875
  %v6124 = vpack.c.bf16 %v5878, %v5877
  %v6125 = vpack.c.bf16 %v5880, %v5879
  %v6126 = vpack.c.bf16 %v5882, %v5881
  %v6127 = vpack.c.bf16 %v5884, %v5883
  %v6128 = vpack.c.bf16 %v5886, %v5885
  %v6129 = vpack.c.bf16 %v5888, %v5887
  %v6130 = vpack.c.bf16 %v5890, %v5889
  %v6131 = vpack.c.bf16 %v5892, %v5891
  %v6132 = vpack.c.bf16 %v5894, %v5893
  %v6133 = vpack.c.bf16 %v5896, %v5895
  %v6134 = vpack.c.bf16 %v5898, %v5897
  %v6135 = vpack.c.bf16 %v5900, %v5899
  %v6136 = vpack.c.bf16 %v5902, %v5901
  %v6137 = vpack.c.bf16 %v5904, %v5903
  %v6138 = vpack.c.bf16 %v5906, %v5905
  %v6139 = vpack.c.bf16 %v5908, %v5907
  %v6140 = vpack.c.bf16 %v5910, %v5909
  %v6141 = vpack.c.bf16 %v5912, %v5911
  %v6142 = vpack.c.bf16 %v5914, %v5913
  %v6143 = vpack.c.bf16 %v5916, %v5915
  %v6144 = vpack.c.bf16 %v5918, %v5917
  %v6145 = vpack.c.bf16 %v5920, %v5919
  %v6146 = vpack.c.bf16 %v5922, %v5921
  %v6147 = vpack.c.bf16 %v5924, %v5923
  %v6148 = vpack.c.bf16 %v5926, %v5925
  %v6149 = vpack.c.bf16 %v5928, %v5927
  %v6150 = vpack.c.bf16 %v5930, %v5929
  %v6151 = vpack.c.bf16 %v5932, %v5931
  %v6152 = vpack.c.bf16 %v5934, %v5933
  %v6153 = vpack.c.bf16 %v5936, %v5935
  %v6154 = vpack.c.bf16 %v5938, %v5937
  %v6155 = vpack.c.bf16 %v5940, %v5939
  %v6156 = vpack.c.bf16 %v5942, %v5941
  %v6157 = vpack.c.bf16 %v5944, %v5943
  %v6158 = vpack.c.bf16 %v5946, %v5945
  %v6159 = vpack.c.bf16 %v5948, %v5947
  %v6160 = vpack.c.bf16 %v5950, %v5949
  %v6161 = vpack.c.bf16 %v5952, %v5951
  %v6162 = vpack.c.bf16 %v5954, %v5953
  %v6163 = vpack.c.bf16 %v5956, %v5955
  %v6164 = vpack.c.bf16 %v5958, %v5957
  %v6165 = vpack.c.bf16 %v5960, %v5959
  %v6166 = vpack.c.bf16 %v5962, %v5961
  %v6167 = vpack.c.bf16 %v5964, %v5963
  %v6168 = vpack.c.bf16 %v5966, %v5965
  %v6169 = vpack.c.bf16 %v5968, %v5967
  %v6170 = vpack.c.bf16 %v5970, %v5969
  %v6171 = vpack.c.bf16 %v5972, %v5971
  %v6172 = vpack.c.bf16 %v5974, %v5973
  %v6173 = vpack.c.bf16 %v5976, %v5975
  %v6174 = vpack.c.bf16 %v5978, %v5977
  %v6175 = vpack.c.bf16 %v5980, %v5979
  %v6176 = vpack.c.bf16 %v5982, %v5981
  %v6177 = vpack.c.bf16 %v5984, %v5983
  %v6178 = vpack.c.bf16 %v5986, %v5985
  %v6179 = vpack.c.bf16 %v5988, %v5987
  %v6180 = vpack.c.bf16 %v5990, %v5989
  %v6181 = vpack.c.bf16 %v5992, %v5991
  %v6182 = vpack.c.bf16 %v5994, %v5993
  %v6183 = vpack.c.bf16 %v5996, %v5995
  %v6184 = vpack.c.bf16 %v5998, %v5997
  %v6185 = vpack.c.bf16 %v6000, %v5999
  %v6186 = vpack.c.bf16 %v6002, %v6001
  %v6187 = vpack.c.bf16 %v6004, %v6003
  %v6188 = vpack.c.bf16 %v6006, %v6005
  %v6189 = vpack.c.bf16 %v6008, %v6007
  %v6190 = vpack.c.bf16 %v6010, %v6009
  %v6191 = vpack.c.bf16 %v6012, %v6011
  %v6192 = vpack.c.bf16 %v6014, %v6013
  %v6193 = vpack.c.bf16 %v6016, %v6015
  %v6194 = vpack.c.bf16 %v6018, %v6017
  %v6195 = vpack.c.bf16 %v6020, %v6019
  %v6196 = vpack.c.bf16 %v6022, %v6021
  %v6197 = vpack.c.bf16 %v6024, %v6023
  %v6198 = vpack.c.bf16 %v6026, %v6025
  %v6199 = vpack.c.bf16 %v6028, %v6027
  %v6200 = vpack.c.bf16 %v6030, %v6029
  %v6201 = vpack.c.bf16 %v6032, %v6031
  %v6202 = vpack.c.bf16 %v6034, %v6033
  %v6203 = vpack.c.bf16 %v6036, %v6035
  %v6204 = vpack.c.bf16 %v6038, %v6037
  %v6205 = vpack.c.bf16 %v6040, %v6039
  %v6206 = vpack.c.bf16 %v6042, %v6041
  %v6207 = vpack.c.bf16 %v6044, %v6043
  %v6208 = vpack.c.bf16 %v6046, %v6045
  %v6209 = vpack.c.bf16 %v6048, %v6047
  %v6210 = vpack.c.bf16 %v6050, %v6049
  %v6211 = vpack.c.bf16 %v6052, %v6051
  %v6212 = vpack.c.bf16 %v6054, %v6053
  %v6213 = vpack.c.bf16 %v6056, %v6055
  %v6214 = vpack.c.bf16 %v6058, %v6057
  %v6215 = vpack.c.bf16 %v6060, %v6059
  %v6216 = vpack.c.bf16 %v6062, %v6061
  %v6217 = vpack.c.bf16 %v6064, %v6063
  %v6218 = vpack.c.bf16 %v6066, %v6065
  %v6219 = vpack.c.bf16 %v6068, %v6067
  %v6220 = vpack.c.bf16 %v6070, %v6069
  %v6221 = vpack.c.bf16 %v6072, %v6071
  %v6222 = vpack.c.bf16 %v6074, %v6073
  %v6223 = vpack.c.bf16 %v6076, %v6075
  %v6224 = vpack.c.bf16 %v6078, %v6077
  %v6225 = vpack.c.bf16 %v6080, %v6079
  %v6226 = vpack.c.bf16 %v6082, %v6081
  %v6227 = vld [vmem:[%s4] sm:$0xff]
  %v6228 = vld [vmem:[%s4 + $0x8] sm:$0xff]
  %v6229 = vld [vmem:[%s4 + $0x10] sm:$0xff]
  %v6230 = vld [vmem:[%s4 + $0x18] sm:$0xff]
  %v6231 = vld [vmem:[%s4 + $0x20] sm:$0xff]
  %v6232 = vld [vmem:[%s4 + $0x28] sm:$0xff]
  %v6233 = vld [vmem:[%s4 + $0x30] sm:$0xff]
  %v6234 = vld [vmem:[%s4 + $0x38] sm:$0xff]
  %v6235 = vld [vmem:[%s4 + $0x40] sm:$0xff]
  %v6236 = vld [vmem:[%s4 + $0x48] sm:$0xff]
  %v6237 = vld [vmem:[%s4 + $0x50] sm:$0xff]
  %v6238 = vld [vmem:[%s4 + $0x58] sm:$0xff]
  %v6239 = vld [vmem:[%s4 + $0x60] sm:$0xff]
  %v6240 = vld [vmem:[%s4 + $0x68] sm:$0xff]
  %v6241 = vld [vmem:[%s4 + $0x70] sm:$0xff]
  %v6242 = vld [vmem:[%s4 + $0x78] sm:$0xff]
  %v6243 = vld [vmem:[%s4 + $0x80] sm:$0xff]
  %v6244 = vld [vmem:[%s4 + $0x88] sm:$0xff]
  %v6245 = vld [vmem:[%s4 + $0x90] sm:$0xff]
  %v6246 = vld [vmem:[%s4 + $0x98] sm:$0xff]
  %v6247 = vld [vmem:[%s4 + $0xa0] sm:$0xff]
  %v6248 = vld [vmem:[%s4 + $0xa8] sm:$0xff]
  %v6249 = vld [vmem:[%s4 + $0xb0] sm:$0xff]
  %v6250 = vld [vmem:[%s4 + $0xb8] sm:$0xff]
  %v6251 = vld [vmem:[%s4 + $0xc0] sm:$0xff]
  %v6252 = vld [vmem:[%s4 + $0xc8] sm:$0xff]
  %v6253 = vld [vmem:[%s4 + $0xd0] sm:$0xff]
  %v6254 = vld [vmem:[%s4 + $0xd8] sm:$0xff]
  %v6255 = vld [vmem:[%s4 + $0xe0] sm:$0xff]
  %v6256 = vld [vmem:[%s4 + $0xe8] sm:$0xff]
  %v6257 = vld [vmem:[%s4 + $0xf0] sm:$0xff]
  %v6258 = vld [vmem:[%s4 + $0xf8] sm:$0xff]
  %v6259 = vld [vmem:[%s4 + $0x100] sm:$0xff]
  %v6260 = vld [vmem:[%s4 + $0x108] sm:$0xff]
  %v6261 = vld [vmem:[%s4 + $0x110] sm:$0xff]
  %v6262 = vld [vmem:[%s4 + $0x118] sm:$0xff]
  %v6263 = vld [vmem:[%s4 + $0x120] sm:$0xff]
  %v6264 = vld [vmem:[%s4 + $0x128] sm:$0xff]
  %v6265 = vld [vmem:[%s4 + $0x130] sm:$0xff]
  %v6266 = vld [vmem:[%s4 + $0x138] sm:$0xff]
  %v6267 = vld [vmem:[%s4 + $0x140] sm:$0xff]
  %v6268 = vld [vmem:[%s4 + $0x148] sm:$0xff]
  %v6269 = vld [vmem:[%s4 + $0x150] sm:$0xff]
  %v6270 = vld [vmem:[%s4 + $0x158] sm:$0xff]
  %v6271 = vld [vmem:[%s4 + $0x160] sm:$0xff]
  %v6272 = vld [vmem:[%s4 + $0x168] sm:$0xff]
  %v6273 = vld [vmem:[%s4 + $0x170] sm:$0xff]
  %v6274 = vld [vmem:[%s4 + $0x178] sm:$0xff]
  %v6275 = vld [vmem:[%s4 + $0x180] sm:$0xff]
  %v6276 = vld [vmem:[%s4 + $0x188] sm:$0xff]
  %v6277 = vld [vmem:[%s4 + $0x190] sm:$0xff]
  %v6278 = vld [vmem:[%s4 + $0x198] sm:$0xff]
  %v6279 = vld [vmem:[%s4 + $0x1a0] sm:$0xff]
  %v6280 = vld [vmem:[%s4 + $0x1a8] sm:$0xff]
  %v6281 = vld [vmem:[%s4 + $0x1b0] sm:$0xff]
  %v6282 = vld [vmem:[%s4 + $0x1b8] sm:$0xff]
  %v6283 = vld [vmem:[%s4 + $0x1c0] sm:$0xff]
  %v6284 = vld [vmem:[%s4 + $0x1c8] sm:$0xff]
  %v6285 = vld [vmem:[%s4 + $0x1d0] sm:$0xff]
  %v6286 = vld [vmem:[%s4 + $0x1d8] sm:$0xff]
  %v6287 = vld [vmem:[%s4 + $0x1e0] sm:$0xff]
  %v6288 = vld [vmem:[%s4 + $0x1e8] sm:$0xff]
  %v6289 = vld [vmem:[%s4 + $0x1f0] sm:$0xff]
  %v6290 = vld [vmem:[%s4 + $0x1f8] sm:$0xff]
  %v6291 = vld [vmem:[%s4 + $0x200] sm:$0xff]
  %v6292 = vld [vmem:[%s4 + $0x208] sm:$0xff]
  %v6293 = vld [vmem:[%s4 + $0x210] sm:$0xff]
  %v6294 = vld [vmem:[%s4 + $0x218] sm:$0xff]
  %v6295 = vld [vmem:[%s4 + $0x220] sm:$0xff]
  %v6296 = vld [vmem:[%s4 + $0x228] sm:$0xff]
  %v6297 = vld [vmem:[%s4 + $0x230] sm:$0xff]
  %v6298 = vld [vmem:[%s4 + $0x238] sm:$0xff]
  %v6299 = vld [vmem:[%s4 + $0x240] sm:$0xff]
  %v6300 = vld [vmem:[%s4 + $0x248] sm:$0xff]
  %v6301 = vld [vmem:[%s4 + $0x250] sm:$0xff]
  %v6302 = vld [vmem:[%s4 + $0x258] sm:$0xff]
  %v6303 = vld [vmem:[%s4 + $0x260] sm:$0xff]
  %v6304 = vld [vmem:[%s4 + $0x268] sm:$0xff]
  %v6305 = vld [vmem:[%s4 + $0x270] sm:$0xff]
  %v6306 = vld [vmem:[%s4 + $0x278] sm:$0xff]
  %v6307 = vld [vmem:[%s4 + $0x280] sm:$0xff]
  %v6308 = vld [vmem:[%s4 + $0x288] sm:$0xff]
  %v6309 = vld [vmem:[%s4 + $0x290] sm:$0xff]
  %v6310 = vld [vmem:[%s4 + $0x298] sm:$0xff]
  %v6311 = vld [vmem:[%s4 + $0x2a0] sm:$0xff]
  %v6312 = vld [vmem:[%s4 + $0x2a8] sm:$0xff]
  %v6313 = vld [vmem:[%s4 + $0x2b0] sm:$0xff]
  %v6314 = vld [vmem:[%s4 + $0x2b8] sm:$0xff]
  %v6315 = vld [vmem:[%s4 + $0x2c0] sm:$0xff]
  %v6316 = vld [vmem:[%s4 + $0x2c8] sm:$0xff]
  %v6317 = vld [vmem:[%s4 + $0x2d0] sm:$0xff]
  %v6318 = vld [vmem:[%s4 + $0x2d8] sm:$0xff]
  %v6319 = vld [vmem:[%s4 + $0x2e0] sm:$0xff]
  %v6320 = vld [vmem:[%s4 + $0x2e8] sm:$0xff]
  %v6321 = vld [vmem:[%s4 + $0x2f0] sm:$0xff]
  %v6322 = vld [vmem:[%s4 + $0x2f8] sm:$0xff]
  %v6323 = vld [vmem:[%s4 + $0x300] sm:$0xff]
  %v6324 = vld [vmem:[%s4 + $0x308] sm:$0xff]
  %v6325 = vld [vmem:[%s4 + $0x310] sm:$0xff]
  %v6326 = vld [vmem:[%s4 + $0x318] sm:$0xff]
  %v6327 = vld [vmem:[%s4 + $0x320] sm:$0xff]
  %v6328 = vld [vmem:[%s4 + $0x328] sm:$0xff]
  %v6329 = vld [vmem:[%s4 + $0x330] sm:$0xff]
  %v6330 = vld [vmem:[%s4 + $0x338] sm:$0xff]
  %v6331 = vld [vmem:[%s4 + $0x340] sm:$0xff]
  %v6332 = vld [vmem:[%s4 + $0x348] sm:$0xff]
  %v6333 = vld [vmem:[%s4 + $0x350] sm:$0xff]
  %v6334 = vld [vmem:[%s4 + $0x358] sm:$0xff]
  %v6335 = vld [vmem:[%s4 + $0x360] sm:$0xff]
  %v6336 = vld [vmem:[%s4 + $0x368] sm:$0xff]
  %v6337 = vld [vmem:[%s4 + $0x370] sm:$0xff]
  %v6338 = vld [vmem:[%s4 + $0x378] sm:$0xff]
  %v6339 = vld [vmem:[%s4 + $0x380] sm:$0xff]
  %v6340 = vld [vmem:[%s4 + $0x388] sm:$0xff]
  %v6341 = vld [vmem:[%s4 + $0x390] sm:$0xff]
  %v6342 = vld [vmem:[%s4 + $0x398] sm:$0xff]
  %v6343 = vld [vmem:[%s4 + $0x3a0] sm:$0xff]
  %v6344 = vld [vmem:[%s4 + $0x3a8] sm:$0xff]
  %v6345 = vld [vmem:[%s4 + $0x3b0] sm:$0xff]
  %v6346 = vld [vmem:[%s4 + $0x3b8] sm:$0xff]
  %v6347 = vld [vmem:[%s4 + $0x3c0] sm:$0xff]
  %v6348 = vld [vmem:[%s4 + $0x3c8] sm:$0xff]
  %v6349 = vld [vmem:[%s4 + $0x3d0] sm:$0xff]
  %v6350 = vld [vmem:[%s4 + $0x3d8] sm:$0xff]
  %v6351 = vld [vmem:[%s4 + $0x3e0] sm:$0xff]
  %v6352 = vld [vmem:[%s4 + $0x3e8] sm:$0xff]
  %v6353 = vld [vmem:[%s4 + $0x3f0] sm:$0xff]
  %v6354 = vld [vmem:[%s4 + $0x3f8] sm:$0xff]
  %v6355 = vld [vmem:[%s4 + $0x400] sm:$0xff]
  %v6356 = vld [vmem:[%s4 + $0x408] sm:$0xff]
  %v6357 = vld [vmem:[%s4 + $0x410] sm:$0xff]
  %v6358 = vld [vmem:[%s4 + $0x418] sm:$0xff]
  %v6359 = vld [vmem:[%s4 + $0x420] sm:$0xff]
  %v6360 = vld [vmem:[%s4 + $0x428] sm:$0xff]
  %v6361 = vld [vmem:[%s4 + $0x430] sm:$0xff]
  %v6362 = vld [vmem:[%s4 + $0x438] sm:$0xff]
  %v6363 = vld [vmem:[%s4 + $0x440] sm:$0xff]
  %v6364 = vld [vmem:[%s4 + $0x448] sm:$0xff]
  %v6365 = vld [vmem:[%s4 + $0x450] sm:$0xff]
  %v6366 = vld [vmem:[%s4 + $0x458] sm:$0xff]
  %v6367 = vld [vmem:[%s4 + $0x460] sm:$0xff]
  %v6368 = vld [vmem:[%s4 + $0x468] sm:$0xff]
  %v6369 = vld [vmem:[%s4 + $0x470] sm:$0xff]
  %v6370 = vld [vmem:[%s4 + $0x478] sm:$0xff]
  %v6371 = vld [vmem:[%s4 + $0x480] sm:$0xff]
  %v6372 = vld [vmem:[%s4 + $0x488] sm:$0xff]
  %v6373 = vld [vmem:[%s4 + $0x490] sm:$0xff]
  %v6374 = vld [vmem:[%s4 + $0x498] sm:$0xff]
  %v6375 = vld [vmem:[%s4 + $0x4a0] sm:$0xff]
  %v6376 = vld [vmem:[%s4 + $0x4a8] sm:$0xff]
  %v6377 = vld [vmem:[%s4 + $0x4b0] sm:$0xff]
  %v6378 = vld [vmem:[%s4 + $0x4b8] sm:$0xff]
  %v6379 = vld [vmem:[%s4 + $0x4c0] sm:$0xff]
  %v6380 = vld [vmem:[%s4 + $0x4c8] sm:$0xff]
  %v6381 = vld [vmem:[%s4 + $0x4d0] sm:$0xff]
  %v6382 = vld [vmem:[%s4 + $0x4d8] sm:$0xff]
  %v6383 = vld [vmem:[%s4 + $0x4e0] sm:$0xff]
  %v6384 = vld [vmem:[%s4 + $0x4e8] sm:$0xff]
  %v6385 = vld [vmem:[%s4 + $0x4f0] sm:$0xff]
  %v6386 = vld [vmem:[%s4 + $0x4f8] sm:$0xff]
  %v6387 = vld [vmem:[%s4 + $0x500] sm:$0xff]
  %v6388 = vld [vmem:[%s4 + $0x508] sm:$0xff]
  %v6389 = vld [vmem:[%s4 + $0x510] sm:$0xff]
  %v6390 = vld [vmem:[%s4 + $0x518] sm:$0xff]
  %v6391 = vld [vmem:[%s4 + $0x520] sm:$0xff]
  %v6392 = vld [vmem:[%s4 + $0x528] sm:$0xff]
  %v6393 = vld [vmem:[%s4 + $0x530] sm:$0xff]
  %v6394 = vld [vmem:[%s4 + $0x538] sm:$0xff]
  %v6395 = vld [vmem:[%s4 + $0x540] sm:$0xff]
  %v6396 = vld [vmem:[%s4 + $0x548] sm:$0xff]
  %v6397 = vld [vmem:[%s4 + $0x550] sm:$0xff]
  %v6398 = vld [vmem:[%s4 + $0x558] sm:$0xff]
  %v6399 = vld [vmem:[%s4 + $0x560] sm:$0xff]
  %v6400 = vld [vmem:[%s4 + $0x568] sm:$0xff]
  %v6401 = vld [vmem:[%s4 + $0x570] sm:$0xff]
  %v6402 = vld [vmem:[%s4 + $0x578] sm:$0xff]
  %v6403 = vld [vmem:[%s4 + $0x580] sm:$0xff]
  %v6404 = vld [vmem:[%s4 + $0x588] sm:$0xff]
  %v6405 = vld [vmem:[%s4 + $0x590] sm:$0xff]
  %v6406 = vld [vmem:[%s4 + $0x598] sm:$0xff]
  %v6407 = vld [vmem:[%s4 + $0x5a0] sm:$0xff]
  %v6408 = vld [vmem:[%s4 + $0x5a8] sm:$0xff]
  %v6409 = vld [vmem:[%s4 + $0x5b0] sm:$0xff]
  %v6410 = vld [vmem:[%s4 + $0x5b8] sm:$0xff]
  %v6411 = vld [vmem:[%s4 + $0x5c0] sm:$0xff]
  %v6412 = vld [vmem:[%s4 + $0x5c8] sm:$0xff]
  %v6413 = vld [vmem:[%s4 + $0x5d0] sm:$0xff]
  %v6414 = vld [vmem:[%s4 + $0x5d8] sm:$0xff]
  %v6415 = vld [vmem:[%s4 + $0x5e0] sm:$0xff]
  %v6416 = vld [vmem:[%s4 + $0x5e8] sm:$0xff]
  %v6417 = vld [vmem:[%s4 + $0x5f0] sm:$0xff]
  %v6418 = vld [vmem:[%s4 + $0x5f8] sm:$0xff]
  %v6419 = vld [vmem:[%s4 + $0x600] sm:$0xff]
  %v6420 = vld [vmem:[%s4 + $0x608] sm:$0xff]
  %v6421 = vld [vmem:[%s4 + $0x610] sm:$0xff]
  %v6422 = vld [vmem:[%s4 + $0x618] sm:$0xff]
  %v6423 = vld [vmem:[%s4 + $0x620] sm:$0xff]
  %v6424 = vld [vmem:[%s4 + $0x628] sm:$0xff]
  %v6425 = vld [vmem:[%s4 + $0x630] sm:$0xff]
  %v6426 = vld [vmem:[%s4 + $0x638] sm:$0xff]
  %v6427 = vld [vmem:[%s4 + $0x640] sm:$0xff]
  %v6428 = vld [vmem:[%s4 + $0x648] sm:$0xff]
  %v6429 = vld [vmem:[%s4 + $0x650] sm:$0xff]
  %v6430 = vld [vmem:[%s4 + $0x658] sm:$0xff]
  %v6431 = vld [vmem:[%s4 + $0x660] sm:$0xff]
  %v6432 = vld [vmem:[%s4 + $0x668] sm:$0xff]
  %v6433 = vld [vmem:[%s4 + $0x670] sm:$0xff]
  %v6434 = vld [vmem:[%s4 + $0x678] sm:$0xff]
  %v6435 = vld [vmem:[%s4 + $0x680] sm:$0xff]
  %v6436 = vld [vmem:[%s4 + $0x688] sm:$0xff]
  %v6437 = vld [vmem:[%s4 + $0x690] sm:$0xff]
  %v6438 = vld [vmem:[%s4 + $0x698] sm:$0xff]
  %v6439 = vld [vmem:[%s4 + $0x6a0] sm:$0xff]
  %v6440 = vld [vmem:[%s4 + $0x6a8] sm:$0xff]
  %v6441 = vld [vmem:[%s4 + $0x6b0] sm:$0xff]
  %v6442 = vld [vmem:[%s4 + $0x6b8] sm:$0xff]
  %v6443 = vld [vmem:[%s4 + $0x6c0] sm:$0xff]
  %v6444 = vld [vmem:[%s4 + $0x6c8] sm:$0xff]
  %v6445 = vld [vmem:[%s4 + $0x6d0] sm:$0xff]
  %v6446 = vld [vmem:[%s4 + $0x6d8] sm:$0xff]
  %v6447 = vld [vmem:[%s4 + $0x6e0] sm:$0xff]
  %v6448 = vld [vmem:[%s4 + $0x6e8] sm:$0xff]
  %v6449 = vld [vmem:[%s4 + $0x6f0] sm:$0xff]
  %v6450 = vld [vmem:[%s4 + $0x6f8] sm:$0xff]
  %v6451 = vld [vmem:[%s4 + $0x700] sm:$0xff]
  %v6452 = vld [vmem:[%s4 + $0x708] sm:$0xff]
  %v6453 = vld [vmem:[%s4 + $0x710] sm:$0xff]
  %v6454 = vld [vmem:[%s4 + $0x718] sm:$0xff]
  %v6455 = vld [vmem:[%s4 + $0x720] sm:$0xff]
  %v6456 = vld [vmem:[%s4 + $0x728] sm:$0xff]
  %v6457 = vld [vmem:[%s4 + $0x730] sm:$0xff]
  %v6458 = vld [vmem:[%s4 + $0x738] sm:$0xff]
  %v6459 = vld [vmem:[%s4 + $0x740] sm:$0xff]
  %v6460 = vld [vmem:[%s4 + $0x748] sm:$0xff]
  %v6461 = vld [vmem:[%s4 + $0x750] sm:$0xff]
  %v6462 = vld [vmem:[%s4 + $0x758] sm:$0xff]
  %v6463 = vld [vmem:[%s4 + $0x760] sm:$0xff]
  %v6464 = vld [vmem:[%s4 + $0x768] sm:$0xff]
  %v6465 = vld [vmem:[%s4 + $0x770] sm:$0xff]
  %v6466 = vld [vmem:[%s4 + $0x778] sm:$0xff]
  %v6467 = vld [vmem:[%s4 + $0x780] sm:$0xff]
  %v6468 = vld [vmem:[%s4 + $0x788] sm:$0xff]
  %v6469 = vld [vmem:[%s4 + $0x790] sm:$0xff]
  %v6470 = vld [vmem:[%s4 + $0x798] sm:$0xff]
  %v6471 = vld [vmem:[%s4 + $0x7a0] sm:$0xff]
  %v6472 = vld [vmem:[%s4 + $0x7a8] sm:$0xff]
  %v6473 = vld [vmem:[%s4 + $0x7b0] sm:$0xff]
  %v6474 = vld [vmem:[%s4 + $0x7b8] sm:$0xff]
  %v6475 = vld [vmem:[%s4 + $0x7c0] sm:$0xff]
  %v6476 = vld [vmem:[%s4 + $0x7c8] sm:$0xff]
  %v6477 = vld [vmem:[%s4 + $0x7d0] sm:$0xff]
  %v6478 = vld [vmem:[%s4 + $0x7d8] sm:$0xff]
  %v6479 = vld [vmem:[%s4 + $0x7e0] sm:$0xff]
  %v6480 = vld [vmem:[%s4 + $0x7e8] sm:$0xff]
  %v6481 = vld [vmem:[%s4 + $0x7f0] sm:$0xff]
  %v6482 = vld [vmem:[%s4 + $0x7f8] sm:$0xff]
  %v6483 = vld [vmem:[%s4 + $0x800] sm:$0xff]
  %v6484 = vld [vmem:[%s4 + $0x808] sm:$0xff]
  %v6485 = vld [vmem:[%s4 + $0x810] sm:$0xff]
  %v6486 = vld [vmem:[%s4 + $0x818] sm:$0xff]
  %v6487 = vld [vmem:[%s4 + $0x820] sm:$0xff]
  %v6488 = vld [vmem:[%s4 + $0x828] sm:$0xff]
  %v6489 = vld [vmem:[%s4 + $0x830] sm:$0xff]
  %v6490 = vld [vmem:[%s4 + $0x838] sm:$0xff]
  %v6491 = vld [vmem:[%s4 + $0x840] sm:$0xff]
  %v6492 = vld [vmem:[%s4 + $0x848] sm:$0xff]
  %v6493 = vld [vmem:[%s4 + $0x850] sm:$0xff]
  %v6494 = vld [vmem:[%s4 + $0x858] sm:$0xff]
  %v6495 = vld [vmem:[%s4 + $0x860] sm:$0xff]
  %v6496 = vld [vmem:[%s4 + $0x868] sm:$0xff]
  %v6497 = vld [vmem:[%s4 + $0x870] sm:$0xff]
  %v6498 = vld [vmem:[%s4 + $0x878] sm:$0xff]
  %v6499 = vld [vmem:[%s4 + $0x880] sm:$0xff]
  %v6500 = vld [vmem:[%s4 + $0x888] sm:$0xff]
  %v6501 = vld [vmem:[%s4 + $0x890] sm:$0xff]
  %v6502 = vld [vmem:[%s4 + $0x898] sm:$0xff]
  %v6503 = vld [vmem:[%s4 + $0x8a0] sm:$0xff]
  %v6504 = vld [vmem:[%s4 + $0x8a8] sm:$0xff]
  %v6505 = vld [vmem:[%s4 + $0x8b0] sm:$0xff]
  %v6506 = vld [vmem:[%s4 + $0x8b8] sm:$0xff]
  %v6507 = vld [vmem:[%s4 + $0x8c0] sm:$0xff]
  %v6508 = vld [vmem:[%s4 + $0x8c8] sm:$0xff]
  %v6509 = vld [vmem:[%s4 + $0x8d0] sm:$0xff]
  %v6510 = vld [vmem:[%s4 + $0x8d8] sm:$0xff]
  %v6511 = vld [vmem:[%s4 + $0x8e0] sm:$0xff]
  %v6512 = vld [vmem:[%s4 + $0x8e8] sm:$0xff]
  %v6513 = vld [vmem:[%s4 + $0x8f0] sm:$0xff]
  %v6514 = vld [vmem:[%s4 + $0x8f8] sm:$0xff]
  %v6515 = vld [vmem:[%s4 + $0x900] sm:$0xff]
  %v6516 = vld [vmem:[%s4 + $0x908] sm:$0xff]
  %v6517 = vld [vmem:[%s4 + $0x910] sm:$0xff]
  %v6518 = vld [vmem:[%s4 + $0x918] sm:$0xff]
  %v6519 = vld [vmem:[%s4 + $0x920] sm:$0xff]
  %v6520 = vld [vmem:[%s4 + $0x928] sm:$0xff]
  %v6521 = vld [vmem:[%s4 + $0x930] sm:$0xff]
  %v6522 = vld [vmem:[%s4 + $0x938] sm:$0xff]
  %v6523 = vld [vmem:[%s4 + $0x940] sm:$0xff]
  %v6524 = vld [vmem:[%s4 + $0x948] sm:$0xff]
  %v6525 = vld [vmem:[%s4 + $0x950] sm:$0xff]
  %v6526 = vld [vmem:[%s4 + $0x958] sm:$0xff]
  %v6527 = vld [vmem:[%s4 + $0x960] sm:$0xff]
  %v6528 = vld [vmem:[%s4 + $0x968] sm:$0xff]
  %v6529 = vld [vmem:[%s4 + $0x970] sm:$0xff]
  %v6530 = vld [vmem:[%s4 + $0x978] sm:$0xff]
  %v6531 = vld [vmem:[%s4 + $0x980] sm:$0xff]
  %v6532 = vld [vmem:[%s4 + $0x988] sm:$0xff]
  %v6533 = vld [vmem:[%s4 + $0x990] sm:$0xff]
  %v6534 = vld [vmem:[%s4 + $0x998] sm:$0xff]
  %v6535 = vld [vmem:[%s4 + $0x9a0] sm:$0xff]
  %v6536 = vld [vmem:[%s4 + $0x9a8] sm:$0xff]
  %v6537 = vld [vmem:[%s4 + $0x9b0] sm:$0xff]
  %v6538 = vld [vmem:[%s4 + $0x9b8] sm:$0xff]
  %v6539 = vld [vmem:[%s4 + $0x9c0] sm:$0xff]
  %v6540 = vld [vmem:[%s4 + $0x9c8] sm:$0xff]
  %v6541 = vld [vmem:[%s4 + $0x9d0] sm:$0xff]
  %v6542 = vld [vmem:[%s4 + $0x9d8] sm:$0xff]
  %v6543 = vld [vmem:[%s4 + $0x9e0] sm:$0xff]
  %v6544 = vld [vmem:[%s4 + $0x9e8] sm:$0xff]
  %v6545 = vld [vmem:[%s4 + $0x9f0] sm:$0xff]
  %v6546 = vld [vmem:[%s4 + $0x9f8] sm:$0xff]
  %v6547 = vld [vmem:[%s4 + $0xa00] sm:$0xff]
  %v6548 = vld [vmem:[%s4 + $0xa08] sm:$0xff]
  %v6549 = vld [vmem:[%s4 + $0xa10] sm:$0xff]
  %v6550 = vld [vmem:[%s4 + $0xa18] sm:$0xff]
  %v6551 = vld [vmem:[%s4 + $0xa20] sm:$0xff]
  %v6552 = vld [vmem:[%s4 + $0xa28] sm:$0xff]
  %v6553 = vld [vmem:[%s4 + $0xa30] sm:$0xff]
  %v6554 = vld [vmem:[%s4 + $0xa38] sm:$0xff]
  %v6555 = vld [vmem:[%s4 + $0xa40] sm:$0xff]
  %v6556 = vld [vmem:[%s4 + $0xa48] sm:$0xff]
  %v6557 = vld [vmem:[%s4 + $0xa50] sm:$0xff]
  %v6558 = vld [vmem:[%s4 + $0xa58] sm:$0xff]
  %v6559 = vld [vmem:[%s4 + $0xa60] sm:$0xff]
  %v6560 = vld [vmem:[%s4 + $0xa68] sm:$0xff]
  %v6561 = vld [vmem:[%s4 + $0xa70] sm:$0xff]
  %v6562 = vld [vmem:[%s4 + $0xa78] sm:$0xff]
  %v6563 = vld [vmem:[%s4 + $0xa80] sm:$0xff]
  %v6564 = vld [vmem:[%s4 + $0xa88] sm:$0xff]
  %v6565 = vld [vmem:[%s4 + $0xa90] sm:$0xff]
  %v6566 = vld [vmem:[%s4 + $0xa98] sm:$0xff]
  %v6567 = vld [vmem:[%s4 + $0xaa0] sm:$0xff]
  %v6568 = vld [vmem:[%s4 + $0xaa8] sm:$0xff]
  %v6569 = vld [vmem:[%s4 + $0xab0] sm:$0xff]
  %v6570 = vld [vmem:[%s4 + $0xab8] sm:$0xff]
  %v6571 = vld [vmem:[%s4 + $0xac0] sm:$0xff]
  %v6572 = vld [vmem:[%s4 + $0xac8] sm:$0xff]
  %v6573 = vld [vmem:[%s4 + $0xad0] sm:$0xff]
  %v6574 = vld [vmem:[%s4 + $0xad8] sm:$0xff]
  %v6575 = vld [vmem:[%s4 + $0xae0] sm:$0xff]
  %v6576 = vld [vmem:[%s4 + $0xae8] sm:$0xff]
  %v6577 = vld [vmem:[%s4 + $0xaf0] sm:$0xff]
  %v6578 = vld [vmem:[%s4 + $0xaf8] sm:$0xff]
  %v6579 = vld [vmem:[%s4 + $0xb00] sm:$0xff]
  %v6580 = vld [vmem:[%s4 + $0xb08] sm:$0xff]
  %v6581 = vld [vmem:[%s4 + $0xb10] sm:$0xff]
  %v6582 = vld [vmem:[%s4 + $0xb18] sm:$0xff]
  %v6583 = vld [vmem:[%s4 + $0xb20] sm:$0xff]
  %v6584 = vld [vmem:[%s4 + $0xb28] sm:$0xff]
  %v6585 = vld [vmem:[%s4 + $0xb30] sm:$0xff]
  %v6586 = vld [vmem:[%s4 + $0xb38] sm:$0xff]
  %v6587 = vld [vmem:[%s4 + $0xb40] sm:$0xff]
  %v6588 = vld [vmem:[%s4 + $0xb48] sm:$0xff]
  %v6589 = vld [vmem:[%s4 + $0xb50] sm:$0xff]
  %v6590 = vld [vmem:[%s4 + $0xb58] sm:$0xff]
  %v6591 = vld [vmem:[%s4 + $0xb60] sm:$0xff]
  %v6592 = vld [vmem:[%s4 + $0xb68] sm:$0xff]
  %v6593 = vld [vmem:[%s4 + $0xb70] sm:$0xff]
  %v6594 = vld [vmem:[%s4 + $0xb78] sm:$0xff]
  %v6595 = vld [vmem:[%s4 + $0xb80] sm:$0xff]
  %v6596 = vld [vmem:[%s4 + $0xb88] sm:$0xff]
  %v6597 = vld [vmem:[%s4 + $0xb90] sm:$0xff]
  %v6598 = vld [vmem:[%s4 + $0xb98] sm:$0xff]
  %v6599 = vld [vmem:[%s4 + $0xba0] sm:$0xff]
  %v6600 = vld [vmem:[%s4 + $0xba8] sm:$0xff]
  %v6601 = vld [vmem:[%s4 + $0xbb0] sm:$0xff]
  %v6602 = vld [vmem:[%s4 + $0xbb8] sm:$0xff]
  %v6603 = vld [vmem:[%s4 + $0xbc0] sm:$0xff]
  %v6604 = vld [vmem:[%s4 + $0xbc8] sm:$0xff]
  %v6605 = vld [vmem:[%s4 + $0xbd0] sm:$0xff]
  %v6606 = vld [vmem:[%s4 + $0xbd8] sm:$0xff]
  %v6607 = vld [vmem:[%s4 + $0xbe0] sm:$0xff]
  %v6608 = vld [vmem:[%s4 + $0xbe8] sm:$0xff]
  %v6609 = vld [vmem:[%s4 + $0xbf0] sm:$0xff]
  %v6610 = vld [vmem:[%s4 + $0xbf8] sm:$0xff]
  %v6611 = vld [vmem:[%s4 + $0xc00] sm:$0xff]
  %v6612 = vld [vmem:[%s4 + $0xc08] sm:$0xff]
  %v6613 = vld [vmem:[%s4 + $0xc10] sm:$0xff]
  %v6614 = vld [vmem:[%s4 + $0xc18] sm:$0xff]
  %v6615 = vld [vmem:[%s4 + $0xc20] sm:$0xff]
  %v6616 = vld [vmem:[%s4 + $0xc28] sm:$0xff]
  %v6617 = vld [vmem:[%s4 + $0xc30] sm:$0xff]
  %v6618 = vld [vmem:[%s4 + $0xc38] sm:$0xff]
  %v6619 = vld [vmem:[%s4 + $0xc40] sm:$0xff]
  %v6620 = vld [vmem:[%s4 + $0xc48] sm:$0xff]
  %v6621 = vld [vmem:[%s4 + $0xc50] sm:$0xff]
  %v6622 = vld [vmem:[%s4 + $0xc58] sm:$0xff]
  %v6623 = vld [vmem:[%s4 + $0xc60] sm:$0xff]
  %v6624 = vld [vmem:[%s4 + $0xc68] sm:$0xff]
  %v6625 = vld [vmem:[%s4 + $0xc70] sm:$0xff]
  %v6626 = vld [vmem:[%s4 + $0xc78] sm:$0xff]
  %v6627 = vld [vmem:[%s4 + $0xc80] sm:$0xff]
  %v6628 = vld [vmem:[%s4 + $0xc88] sm:$0xff]
  %v6629 = vld [vmem:[%s4 + $0xc90] sm:$0xff]
  %v6630 = vld [vmem:[%s4 + $0xc98] sm:$0xff]
  %v6631 = vld [vmem:[%s4 + $0xca0] sm:$0xff]
  %v6632 = vld [vmem:[%s4 + $0xca8] sm:$0xff]
  %v6633 = vld [vmem:[%s4 + $0xcb0] sm:$0xff]
  %v6634 = vld [vmem:[%s4 + $0xcb8] sm:$0xff]
  %v6635 = vld [vmem:[%s4 + $0xcc0] sm:$0xff]
  %v6636 = vld [vmem:[%s4 + $0xcc8] sm:$0xff]
  %v6637 = vld [vmem:[%s4 + $0xcd0] sm:$0xff]
  %v6638 = vld [vmem:[%s4 + $0xcd8] sm:$0xff]
  %v6639 = vld [vmem:[%s4 + $0xce0] sm:$0xff]
  %v6640 = vld [vmem:[%s4 + $0xce8] sm:$0xff]
  %v6641 = vld [vmem:[%s4 + $0xcf0] sm:$0xff]
  %v6642 = vld [vmem:[%s4 + $0xcf8] sm:$0xff]
  %v6643 = vld [vmem:[%s4 + $0xd00] sm:$0xff]
  %v6644 = vld [vmem:[%s4 + $0xd08] sm:$0xff]
  %v6645 = vld [vmem:[%s4 + $0xd10] sm:$0xff]
  %v6646 = vld [vmem:[%s4 + $0xd18] sm:$0xff]
  %v6647 = vld [vmem:[%s4 + $0xd20] sm:$0xff]
  %v6648 = vld [vmem:[%s4 + $0xd28] sm:$0xff]
  %v6649 = vld [vmem:[%s4 + $0xd30] sm:$0xff]
  %v6650 = vld [vmem:[%s4 + $0xd38] sm:$0xff]
  %v6651 = vld [vmem:[%s4 + $0xd40] sm:$0xff]
  %v6652 = vld [vmem:[%s4 + $0xd48] sm:$0xff]
  %v6653 = vld [vmem:[%s4 + $0xd50] sm:$0xff]
  %v6654 = vld [vmem:[%s4 + $0xd58] sm:$0xff]
  %v6655 = vld [vmem:[%s4 + $0xd60] sm:$0xff]
  %v6656 = vld [vmem:[%s4 + $0xd68] sm:$0xff]
  %v6657 = vld [vmem:[%s4 + $0xd70] sm:$0xff]
  %v6658 = vld [vmem:[%s4 + $0xd78] sm:$0xff]
  %v7091 = vunpack.c.l.b16 %v6227
  %v7092 = vunpack.c.h.b16 %v6227
  %v7093 = vunpack.c.l.b16 %v6228
  %v7094 = vunpack.c.h.b16 %v6228
  %v7095 = vunpack.c.l.b16 %v6229
  %v7096 = vunpack.c.h.b16 %v6229
  %v7097 = vunpack.c.l.b16 %v6230
  %v7098 = vunpack.c.h.b16 %v6230
  %v7099 = vunpack.c.l.b16 %v6231
  %v7100 = vunpack.c.h.b16 %v6231
  %v7101 = vunpack.c.l.b16 %v6232
  %v7102 = vunpack.c.h.b16 %v6232
  %v7103 = vunpack.c.l.b16 %v6233
  %v7104 = vunpack.c.h.b16 %v6233
  %v7105 = vunpack.c.l.b16 %v6234
  %v7106 = vunpack.c.h.b16 %v6234
  %v7107 = vunpack.c.l.b16 %v6235
  %v7108 = vunpack.c.h.b16 %v6235
  %v7109 = vunpack.c.l.b16 %v6236
  %v7110 = vunpack.c.h.b16 %v6236
  %v7111 = vunpack.c.l.b16 %v6237
  %v7112 = vunpack.c.h.b16 %v6237
  %v7113 = vunpack.c.l.b16 %v6238
  %v7114 = vunpack.c.h.b16 %v6238
  %v7115 = vunpack.c.l.b16 %v6239
  %v7116 = vunpack.c.h.b16 %v6239
  %v7117 = vunpack.c.l.b16 %v6240
  %v7118 = vunpack.c.h.b16 %v6240
  %v7119 = vunpack.c.l.b16 %v6241
  %v7120 = vunpack.c.h.b16 %v6241
  %v7121 = vunpack.c.l.b16 %v6242
  %v7122 = vunpack.c.h.b16 %v6242
  %v7123 = vunpack.c.l.b16 %v6243
  %v7124 = vunpack.c.h.b16 %v6243
  %v7125 = vunpack.c.l.b16 %v6244
  %v7126 = vunpack.c.h.b16 %v6244
  %v7127 = vunpack.c.l.b16 %v6245
  %v7128 = vunpack.c.h.b16 %v6245
  %v7129 = vunpack.c.l.b16 %v6246
  %v7130 = vunpack.c.h.b16 %v6246
  %v7131 = vunpack.c.l.b16 %v6247
  %v7132 = vunpack.c.h.b16 %v6247
  %v7133 = vunpack.c.l.b16 %v6248
  %v7134 = vunpack.c.h.b16 %v6248
  %v7135 = vunpack.c.l.b16 %v6249
  %v7136 = vunpack.c.h.b16 %v6249
  %v7137 = vunpack.c.l.b16 %v6250
  %v7138 = vunpack.c.h.b16 %v6250
  %v7139 = vunpack.c.l.b16 %v6251
  %v7140 = vunpack.c.h.b16 %v6251
  %v7141 = vunpack.c.l.b16 %v6252
  %v7142 = vunpack.c.h.b16 %v6252
  %v7143 = vunpack.c.l.b16 %v6253
  %v7144 = vunpack.c.h.b16 %v6253
  %v7145 = vunpack.c.l.b16 %v6254
  %v7146 = vunpack.c.h.b16 %v6254
  %v7147 = vunpack.c.l.b16 %v6255
  %v7148 = vunpack.c.h.b16 %v6255
  %v7149 = vunpack.c.l.b16 %v6256
  %v7150 = vunpack.c.h.b16 %v6256
  %v7151 = vunpack.c.l.b16 %v6257
  %v7152 = vunpack.c.h.b16 %v6257
  %v7153 = vunpack.c.l.b16 %v6258
  %v7154 = vunpack.c.h.b16 %v6258
  %v7155 = vunpack.c.l.b16 %v6259
  %v7156 = vunpack.c.h.b16 %v6259
  %v7157 = vunpack.c.l.b16 %v6260
  %v7158 = vunpack.c.h.b16 %v6260
  %v7159 = vunpack.c.l.b16 %v6261
  %v7160 = vunpack.c.h.b16 %v6261
  %v7161 = vunpack.c.l.b16 %v6262
  %v7162 = vunpack.c.h.b16 %v6262
  %v7163 = vunpack.c.l.b16 %v6263
  %v7164 = vunpack.c.h.b16 %v6263
  %v7165 = vunpack.c.l.b16 %v6264
  %v7166 = vunpack.c.h.b16 %v6264
  %v7167 = vunpack.c.l.b16 %v6265
  %v7168 = vunpack.c.h.b16 %v6265
  %v7169 = vunpack.c.l.b16 %v6266
  %v7170 = vunpack.c.h.b16 %v6266
  %v7171 = vunpack.c.l.b16 %v6267
  %v7172 = vunpack.c.h.b16 %v6267
  %v7173 = vunpack.c.l.b16 %v6268
  %v7174 = vunpack.c.h.b16 %v6268
  %v7175 = vunpack.c.l.b16 %v6269
  %v7176 = vunpack.c.h.b16 %v6269
  %v7177 = vunpack.c.l.b16 %v6270
  %v7178 = vunpack.c.h.b16 %v6270
  %v7179 = vunpack.c.l.b16 %v6271
  %v7180 = vunpack.c.h.b16 %v6271
  %v7181 = vunpack.c.l.b16 %v6272
  %v7182 = vunpack.c.h.b16 %v6272
  %v7183 = vunpack.c.l.b16 %v6273
  %v7184 = vunpack.c.h.b16 %v6273
  %v7185 = vunpack.c.l.b16 %v6274
  %v7186 = vunpack.c.h.b16 %v6274
  %v7187 = vunpack.c.l.b16 %v6275
  %v7188 = vunpack.c.h.b16 %v6275
  %v7189 = vunpack.c.l.b16 %v6276
  %v7190 = vunpack.c.h.b16 %v6276
  %v7191 = vunpack.c.l.b16 %v6277
  %v7192 = vunpack.c.h.b16 %v6277
  %v7193 = vunpack.c.l.b16 %v6278
  %v7194 = vunpack.c.h.b16 %v6278
  %v7195 = vunpack.c.l.b16 %v6279
  %v7196 = vunpack.c.h.b16 %v6279
  %v7197 = vunpack.c.l.b16 %v6280
  %v7198 = vunpack.c.h.b16 %v6280
  %v7199 = vunpack.c.l.b16 %v6281
  %v7200 = vunpack.c.h.b16 %v6281
  %v7201 = vunpack.c.l.b16 %v6282
  %v7202 = vunpack.c.h.b16 %v6282
  %v7203 = vunpack.c.l.b16 %v6283
  %v7204 = vunpack.c.h.b16 %v6283
  %v7205 = vunpack.c.l.b16 %v6284
  %v7206 = vunpack.c.h.b16 %v6284
  %v7207 = vunpack.c.l.b16 %v6285
  %v7208 = vunpack.c.h.b16 %v6285
  %v7209 = vunpack.c.l.b16 %v6286
  %v7210 = vunpack.c.h.b16 %v6286
  %v7211 = vunpack.c.l.b16 %v6287
  %v7212 = vunpack.c.h.b16 %v6287
  %v7213 = vunpack.c.l.b16 %v6288
  %v7214 = vunpack.c.h.b16 %v6288
  %v7215 = vunpack.c.l.b16 %v6289
  %v7216 = vunpack.c.h.b16 %v6289
  %v7217 = vunpack.c.l.b16 %v6290
  %v7218 = vunpack.c.h.b16 %v6290
  %v7219 = vunpack.c.l.b16 %v6291
  %v7220 = vunpack.c.h.b16 %v6291
  %v7221 = vunpack.c.l.b16 %v6292
  %v7222 = vunpack.c.h.b16 %v6292
  %v7223 = vunpack.c.l.b16 %v6293
  %v7224 = vunpack.c.h.b16 %v6293
  %v7225 = vunpack.c.l.b16 %v6294
  %v7226 = vunpack.c.h.b16 %v6294
  %v7227 = vunpack.c.l.b16 %v6295
  %v7228 = vunpack.c.h.b16 %v6295
  %v7229 = vunpack.c.l.b16 %v6296
  %v7230 = vunpack.c.h.b16 %v6296
  %v7231 = vunpack.c.l.b16 %v6297
  %v7232 = vunpack.c.h.b16 %v6297
  %v7233 = vunpack.c.l.b16 %v6298
  %v7234 = vunpack.c.h.b16 %v6298
  %v7235 = vunpack.c.l.b16 %v6299
  %v7236 = vunpack.c.h.b16 %v6299
  %v7237 = vunpack.c.l.b16 %v6300
  %v7238 = vunpack.c.h.b16 %v6300
  %v7239 = vunpack.c.l.b16 %v6301
  %v7240 = vunpack.c.h.b16 %v6301
  %v7241 = vunpack.c.l.b16 %v6302
  %v7242 = vunpack.c.h.b16 %v6302
  %v7243 = vunpack.c.l.b16 %v6303
  %v7244 = vunpack.c.h.b16 %v6303
  %v7245 = vunpack.c.l.b16 %v6304
  %v7246 = vunpack.c.h.b16 %v6304
  %v7247 = vunpack.c.l.b16 %v6305
  %v7248 = vunpack.c.h.b16 %v6305
  %v7249 = vunpack.c.l.b16 %v6306
  %v7250 = vunpack.c.h.b16 %v6306
  %v7251 = vunpack.c.l.b16 %v6307
  %v7252 = vunpack.c.h.b16 %v6307
  %v7253 = vunpack.c.l.b16 %v6308
  %v7254 = vunpack.c.h.b16 %v6308
  %v7255 = vunpack.c.l.b16 %v6309
  %v7256 = vunpack.c.h.b16 %v6309
  %v7257 = vunpack.c.l.b16 %v6310
  %v7258 = vunpack.c.h.b16 %v6310
  %v7259 = vunpack.c.l.b16 %v6311
  %v7260 = vunpack.c.h.b16 %v6311
  %v7261 = vunpack.c.l.b16 %v6312
  %v7262 = vunpack.c.h.b16 %v6312
  %v7263 = vunpack.c.l.b16 %v6313
  %v7264 = vunpack.c.h.b16 %v6313
  %v7265 = vunpack.c.l.b16 %v6314
  %v7266 = vunpack.c.h.b16 %v6314
  %v7267 = vunpack.c.l.b16 %v6315
  %v7268 = vunpack.c.h.b16 %v6315
  %v7269 = vunpack.c.l.b16 %v6316
  %v7270 = vunpack.c.h.b16 %v6316
  %v7271 = vunpack.c.l.b16 %v6317
  %v7272 = vunpack.c.h.b16 %v6317
  %v7273 = vunpack.c.l.b16 %v6318
  %v7274 = vunpack.c.h.b16 %v6318
  %v7275 = vunpack.c.l.b16 %v6319
  %v7276 = vunpack.c.h.b16 %v6319
  %v7277 = vunpack.c.l.b16 %v6320
  %v7278 = vunpack.c.h.b16 %v6320
  %v7279 = vunpack.c.l.b16 %v6321
  %v7280 = vunpack.c.h.b16 %v6321
  %v7281 = vunpack.c.l.b16 %v6322
  %v7282 = vunpack.c.h.b16 %v6322
  %v7283 = vunpack.c.l.b16 %v6323
  %v7284 = vunpack.c.h.b16 %v6323
  %v7285 = vunpack.c.l.b16 %v6324
  %v7286 = vunpack.c.h.b16 %v6324
  %v7287 = vunpack.c.l.b16 %v6325
  %v7288 = vunpack.c.h.b16 %v6325
  %v7289 = vunpack.c.l.b16 %v6326
  %v7290 = vunpack.c.h.b16 %v6326
  %v7291 = vunpack.c.l.b16 %v6327
  %v7292 = vunpack.c.h.b16 %v6327
  %v7293 = vunpack.c.l.b16 %v6328
  %v7294 = vunpack.c.h.b16 %v6328
  %v7295 = vunpack.c.l.b16 %v6329
  %v7296 = vunpack.c.h.b16 %v6329
  %v7297 = vunpack.c.l.b16 %v6330
  %v7298 = vunpack.c.h.b16 %v6330
  %v7299 = vunpack.c.l.b16 %v6331
  %v7300 = vunpack.c.h.b16 %v6331
  %v7301 = vunpack.c.l.b16 %v6332
  %v7302 = vunpack.c.h.b16 %v6332
  %v7303 = vunpack.c.l.b16 %v6333
  %v7304 = vunpack.c.h.b16 %v6333
  %v7305 = vunpack.c.l.b16 %v6334
  %v7306 = vunpack.c.h.b16 %v6334
  %v7307 = vunpack.c.l.b16 %v6335
  %v7308 = vunpack.c.h.b16 %v6335
  %v7309 = vunpack.c.l.b16 %v6336
  %v7310 = vunpack.c.h.b16 %v6336
  %v7311 = vunpack.c.l.b16 %v6337
  %v7312 = vunpack.c.h.b16 %v6337
  %v7313 = vunpack.c.l.b16 %v6338
  %v7314 = vunpack.c.h.b16 %v6338
  %v7315 = vunpack.c.l.b16 %v6339
  %v7316 = vunpack.c.h.b16 %v6339
  %v7317 = vunpack.c.l.b16 %v6340
  %v7318 = vunpack.c.h.b16 %v6340
  %v7319 = vunpack.c.l.b16 %v6341
  %v7320 = vunpack.c.h.b16 %v6341
  %v7321 = vunpack.c.l.b16 %v6342
  %v7322 = vunpack.c.h.b16 %v6342
  %v7323 = vunpack.c.l.b16 %v6343
  %v7324 = vunpack.c.h.b16 %v6343
  %v7325 = vunpack.c.l.b16 %v6344
  %v7326 = vunpack.c.h.b16 %v6344
  %v7327 = vunpack.c.l.b16 %v6345
  %v7328 = vunpack.c.h.b16 %v6345
  %v7329 = vunpack.c.l.b16 %v6346
  %v7330 = vunpack.c.h.b16 %v6346
  %v7331 = vunpack.c.l.b16 %v6347
  %v7332 = vunpack.c.h.b16 %v6347
  %v7333 = vunpack.c.l.b16 %v6348
  %v7334 = vunpack.c.h.b16 %v6348
  %v7335 = vunpack.c.l.b16 %v6349
  %v7336 = vunpack.c.h.b16 %v6349
  %v7337 = vunpack.c.l.b16 %v6350
  %v7338 = vunpack.c.h.b16 %v6350
  %v7339 = vunpack.c.l.b16 %v6351
  %v7340 = vunpack.c.h.b16 %v6351
  %v7341 = vunpack.c.l.b16 %v6352
  %v7342 = vunpack.c.h.b16 %v6352
  %v7343 = vunpack.c.l.b16 %v6353
  %v7344 = vunpack.c.h.b16 %v6353
  %v7345 = vunpack.c.l.b16 %v6354
  %v7346 = vunpack.c.h.b16 %v6354
  %v7347 = vunpack.c.l.b16 %v6355
  %v7348 = vunpack.c.h.b16 %v6355
  %v7349 = vunpack.c.l.b16 %v6356
  %v7350 = vunpack.c.h.b16 %v6356
  %v7351 = vunpack.c.l.b16 %v6357
  %v7352 = vunpack.c.h.b16 %v6357
  %v7353 = vunpack.c.l.b16 %v6358
  %v7354 = vunpack.c.h.b16 %v6358
  %v7355 = vunpack.c.l.b16 %v6359
  %v7356 = vunpack.c.h.b16 %v6359
  %v7357 = vunpack.c.l.b16 %v6360
  %v7358 = vunpack.c.h.b16 %v6360
  %v7359 = vunpack.c.l.b16 %v6361
  %v7360 = vunpack.c.h.b16 %v6361
  %v7361 = vunpack.c.l.b16 %v6362
  %v7362 = vunpack.c.h.b16 %v6362
  %v7363 = vunpack.c.l.b16 %v6363
  %v7364 = vunpack.c.h.b16 %v6363
  %v7365 = vunpack.c.l.b16 %v6364
  %v7366 = vunpack.c.h.b16 %v6364
  %v7367 = vunpack.c.l.b16 %v6365
  %v7368 = vunpack.c.h.b16 %v6365
  %v7369 = vunpack.c.l.b16 %v6366
  %v7370 = vunpack.c.h.b16 %v6366
  %v7371 = vunpack.c.l.b16 %v6367
  %v7372 = vunpack.c.h.b16 %v6367
  %v7373 = vunpack.c.l.b16 %v6368
  %v7374 = vunpack.c.h.b16 %v6368
  %v7375 = vunpack.c.l.b16 %v6369
  %v7376 = vunpack.c.h.b16 %v6369
  %v7377 = vunpack.c.l.b16 %v6370
  %v7378 = vunpack.c.h.b16 %v6370
  %v7379 = vunpack.c.l.b16 %v6371
  %v7380 = vunpack.c.h.b16 %v6371
  %v7381 = vunpack.c.l.b16 %v6372
  %v7382 = vunpack.c.h.b16 %v6372
  %v7383 = vunpack.c.l.b16 %v6373
  %v7384 = vunpack.c.h.b16 %v6373
  %v7385 = vunpack.c.l.b16 %v6374
  %v7386 = vunpack.c.h.b16 %v6374
  %v7387 = vunpack.c.l.b16 %v6375
  %v7388 = vunpack.c.h.b16 %v6375
  %v7389 = vunpack.c.l.b16 %v6376
  %v7390 = vunpack.c.h.b16 %v6376
  %v7391 = vunpack.c.l.b16 %v6377
  %v7392 = vunpack.c.h.b16 %v6377
  %v7393 = vunpack.c.l.b16 %v6378
  %v7394 = vunpack.c.h.b16 %v6378
  %v7395 = vunpack.c.l.b16 %v6379
  %v7396 = vunpack.c.h.b16 %v6379
  %v7397 = vunpack.c.l.b16 %v6380
  %v7398 = vunpack.c.h.b16 %v6380
  %v7399 = vunpack.c.l.b16 %v6381
  %v7400 = vunpack.c.h.b16 %v6381
  %v7401 = vunpack.c.l.b16 %v6382
  %v7402 = vunpack.c.h.b16 %v6382
  %v7403 = vunpack.c.l.b16 %v6383
  %v7404 = vunpack.c.h.b16 %v6383
  %v7405 = vunpack.c.l.b16 %v6384
  %v7406 = vunpack.c.h.b16 %v6384
  %v7407 = vunpack.c.l.b16 %v6385
  %v7408 = vunpack.c.h.b16 %v6385
  %v7409 = vunpack.c.l.b16 %v6386
  %v7410 = vunpack.c.h.b16 %v6386
  %v7411 = vunpack.c.l.b16 %v6387
  %v7412 = vunpack.c.h.b16 %v6387
  %v7413 = vunpack.c.l.b16 %v6388
  %v7414 = vunpack.c.h.b16 %v6388
  %v7415 = vunpack.c.l.b16 %v6389
  %v7416 = vunpack.c.h.b16 %v6389
  %v7417 = vunpack.c.l.b16 %v6390
  %v7418 = vunpack.c.h.b16 %v6390
  %v7419 = vunpack.c.l.b16 %v6391
  %v7420 = vunpack.c.h.b16 %v6391
  %v7421 = vunpack.c.l.b16 %v6392
  %v7422 = vunpack.c.h.b16 %v6392
  %v7423 = vunpack.c.l.b16 %v6393
  %v7424 = vunpack.c.h.b16 %v6393
  %v7425 = vunpack.c.l.b16 %v6394
  %v7426 = vunpack.c.h.b16 %v6394
  %v7427 = vunpack.c.l.b16 %v6395
  %v7428 = vunpack.c.h.b16 %v6395
  %v7429 = vunpack.c.l.b16 %v6396
  %v7430 = vunpack.c.h.b16 %v6396
  %v7431 = vunpack.c.l.b16 %v6397
  %v7432 = vunpack.c.h.b16 %v6397
  %v7433 = vunpack.c.l.b16 %v6398
  %v7434 = vunpack.c.h.b16 %v6398
  %v7435 = vunpack.c.l.b16 %v6399
  %v7436 = vunpack.c.h.b16 %v6399
  %v7437 = vunpack.c.l.b16 %v6400
  %v7438 = vunpack.c.h.b16 %v6400
  %v7439 = vunpack.c.l.b16 %v6401
  %v7440 = vunpack.c.h.b16 %v6401
  %v7441 = vunpack.c.l.b16 %v6402
  %v7442 = vunpack.c.h.b16 %v6402
  %v7443 = vunpack.c.l.b16 %v6403
  %v7444 = vunpack.c.h.b16 %v6403
  %v7445 = vunpack.c.l.b16 %v6404
  %v7446 = vunpack.c.h.b16 %v6404
  %v7447 = vunpack.c.l.b16 %v6405
  %v7448 = vunpack.c.h.b16 %v6405
  %v7449 = vunpack.c.l.b16 %v6406
  %v7450 = vunpack.c.h.b16 %v6406
  %v7451 = vunpack.c.l.b16 %v6407
  %v7452 = vunpack.c.h.b16 %v6407
  %v7453 = vunpack.c.l.b16 %v6408
  %v7454 = vunpack.c.h.b16 %v6408
  %v7455 = vunpack.c.l.b16 %v6409
  %v7456 = vunpack.c.h.b16 %v6409
  %v7457 = vunpack.c.l.b16 %v6410
  %v7458 = vunpack.c.h.b16 %v6410
  %v7459 = vunpack.c.l.b16 %v6411
  %v7460 = vunpack.c.h.b16 %v6411
  %v7461 = vunpack.c.l.b16 %v6412
  %v7462 = vunpack.c.h.b16 %v6412
  %v7463 = vunpack.c.l.b16 %v6413
  %v7464 = vunpack.c.h.b16 %v6413
  %v7465 = vunpack.c.l.b16 %v6414
  %v7466 = vunpack.c.h.b16 %v6414
  %v7467 = vunpack.c.l.b16 %v6415
  %v7468 = vunpack.c.h.b16 %v6415
  %v7469 = vunpack.c.l.b16 %v6416
  %v7470 = vunpack.c.h.b16 %v6416
  %v7471 = vunpack.c.l.b16 %v6417
  %v7472 = vunpack.c.h.b16 %v6417
  %v7473 = vunpack.c.l.b16 %v6418
  %v7474 = vunpack.c.h.b16 %v6418
  %v7475 = vunpack.c.l.b16 %v6419
  %v7476 = vunpack.c.h.b16 %v6419
  %v7477 = vunpack.c.l.b16 %v6420
  %v7478 = vunpack.c.h.b16 %v6420
  %v7479 = vunpack.c.l.b16 %v6421
  %v7480 = vunpack.c.h.b16 %v6421
  %v7481 = vunpack.c.l.b16 %v6422
  %v7482 = vunpack.c.h.b16 %v6422
  %v7483 = vunpack.c.l.b16 %v6423
  %v7484 = vunpack.c.h.b16 %v6423
  %v7485 = vunpack.c.l.b16 %v6424
  %v7486 = vunpack.c.h.b16 %v6424
  %v7487 = vunpack.c.l.b16 %v6425
  %v7488 = vunpack.c.h.b16 %v6425
  %v7489 = vunpack.c.l.b16 %v6426
  %v7490 = vunpack.c.h.b16 %v6426
  %v7491 = vunpack.c.l.b16 %v6427
  %v7492 = vunpack.c.h.b16 %v6427
  %v7493 = vunpack.c.l.b16 %v6428
  %v7494 = vunpack.c.h.b16 %v6428
  %v7495 = vunpack.c.l.b16 %v6429
  %v7496 = vunpack.c.h.b16 %v6429
  %v7497 = vunpack.c.l.b16 %v6430
  %v7498 = vunpack.c.h.b16 %v6430
  %v7499 = vunpack.c.l.b16 %v6431
  %v7500 = vunpack.c.h.b16 %v6431
  %v7501 = vunpack.c.l.b16 %v6432
  %v7502 = vunpack.c.h.b16 %v6432
  %v7503 = vunpack.c.l.b16 %v6433
  %v7504 = vunpack.c.h.b16 %v6433
  %v7505 = vunpack.c.l.b16 %v6434
  %v7506 = vunpack.c.h.b16 %v6434
  %v7507 = vunpack.c.l.b16 %v6435
  %v7508 = vunpack.c.h.b16 %v6435
  %v7509 = vunpack.c.l.b16 %v6436
  %v7510 = vunpack.c.h.b16 %v6436
  %v7511 = vunpack.c.l.b16 %v6437
  %v7512 = vunpack.c.h.b16 %v6437
  %v7513 = vunpack.c.l.b16 %v6438
  %v7514 = vunpack.c.h.b16 %v6438
  %v7515 = vunpack.c.l.b16 %v6439
  %v7516 = vunpack.c.h.b16 %v6439
  %v7517 = vunpack.c.l.b16 %v6440
  %v7518 = vunpack.c.h.b16 %v6440
  %v7519 = vunpack.c.l.b16 %v6441
  %v7520 = vunpack.c.h.b16 %v6441
  %v7521 = vunpack.c.l.b16 %v6442
  %v7522 = vunpack.c.h.b16 %v6442
  %v7523 = vunpack.c.l.b16 %v6443
  %v7524 = vunpack.c.h.b16 %v6443
  %v7525 = vunpack.c.l.b16 %v6444
  %v7526 = vunpack.c.h.b16 %v6444
  %v7527 = vunpack.c.l.b16 %v6445
  %v7528 = vunpack.c.h.b16 %v6445
  %v7529 = vunpack.c.l.b16 %v6446
  %v7530 = vunpack.c.h.b16 %v6446
  %v7531 = vunpack.c.l.b16 %v6447
  %v7532 = vunpack.c.h.b16 %v6447
  %v7533 = vunpack.c.l.b16 %v6448
  %v7534 = vunpack.c.h.b16 %v6448
  %v7535 = vunpack.c.l.b16 %v6449
  %v7536 = vunpack.c.h.b16 %v6449
  %v7537 = vunpack.c.l.b16 %v6450
  %v7538 = vunpack.c.h.b16 %v6450
  %v7539 = vunpack.c.l.b16 %v6451
  %v7540 = vunpack.c.h.b16 %v6451
  %v7541 = vunpack.c.l.b16 %v6452
  %v7542 = vunpack.c.h.b16 %v6452
  %v7543 = vunpack.c.l.b16 %v6453
  %v7544 = vunpack.c.h.b16 %v6453
  %v7545 = vunpack.c.l.b16 %v6454
  %v7546 = vunpack.c.h.b16 %v6454
  %v7547 = vunpack.c.l.b16 %v6455
  %v7548 = vunpack.c.h.b16 %v6455
  %v7549 = vunpack.c.l.b16 %v6456
  %v7550 = vunpack.c.h.b16 %v6456
  %v7551 = vunpack.c.l.b16 %v6457
  %v7552 = vunpack.c.h.b16 %v6457
  %v7553 = vunpack.c.l.b16 %v6458
  %v7554 = vunpack.c.h.b16 %v6458
  %v7555 = vunpack.c.l.b16 %v6459
  %v7556 = vunpack.c.h.b16 %v6459
  %v7557 = vunpack.c.l.b16 %v6460
  %v7558 = vunpack.c.h.b16 %v6460
  %v7559 = vunpack.c.l.b16 %v6461
  %v7560 = vunpack.c.h.b16 %v6461
  %v7561 = vunpack.c.l.b16 %v6462
  %v7562 = vunpack.c.h.b16 %v6462
  %v7563 = vunpack.c.l.b16 %v6463
  %v7564 = vunpack.c.h.b16 %v6463
  %v7565 = vunpack.c.l.b16 %v6464
  %v7566 = vunpack.c.h.b16 %v6464
  %v7567 = vunpack.c.l.b16 %v6465
  %v7568 = vunpack.c.h.b16 %v6465
  %v7569 = vunpack.c.l.b16 %v6466
  %v7570 = vunpack.c.h.b16 %v6466
  %v7571 = vunpack.c.l.b16 %v6467
  %v7572 = vunpack.c.h.b16 %v6467
  %v7573 = vunpack.c.l.b16 %v6468
  %v7574 = vunpack.c.h.b16 %v6468
  %v7575 = vunpack.c.l.b16 %v6469
  %v7576 = vunpack.c.h.b16 %v6469
  %v7577 = vunpack.c.l.b16 %v6470
  %v7578 = vunpack.c.h.b16 %v6470
  %v7579 = vunpack.c.l.b16 %v6471
  %v7580 = vunpack.c.h.b16 %v6471
  %v7581 = vunpack.c.l.b16 %v6472
  %v7582 = vunpack.c.h.b16 %v6472
  %v7583 = vunpack.c.l.b16 %v6473
  %v7584 = vunpack.c.h.b16 %v6473
  %v7585 = vunpack.c.l.b16 %v6474
  %v7586 = vunpack.c.h.b16 %v6474
  %v7587 = vunpack.c.l.b16 %v6475
  %v7588 = vunpack.c.h.b16 %v6475
  %v7589 = vunpack.c.l.b16 %v6476
  %v7590 = vunpack.c.h.b16 %v6476
  %v7591 = vunpack.c.l.b16 %v6477
  %v7592 = vunpack.c.h.b16 %v6477
  %v7593 = vunpack.c.l.b16 %v6478
  %v7594 = vunpack.c.h.b16 %v6478
  %v7595 = vunpack.c.l.b16 %v6479
  %v7596 = vunpack.c.h.b16 %v6479
  %v7597 = vunpack.c.l.b16 %v6480
  %v7598 = vunpack.c.h.b16 %v6480
  %v7599 = vunpack.c.l.b16 %v6481
  %v7600 = vunpack.c.h.b16 %v6481
  %v7601 = vunpack.c.l.b16 %v6482
  %v7602 = vunpack.c.h.b16 %v6482
  %v7603 = vunpack.c.l.b16 %v6483
  %v7604 = vunpack.c.h.b16 %v6483
  %v7605 = vunpack.c.l.b16 %v6484
  %v7606 = vunpack.c.h.b16 %v6484
  %v7607 = vunpack.c.l.b16 %v6485
  %v7608 = vunpack.c.h.b16 %v6485
  %v7609 = vunpack.c.l.b16 %v6486
  %v7610 = vunpack.c.h.b16 %v6486
  %v7611 = vunpack.c.l.b16 %v6487
  %v7612 = vunpack.c.h.b16 %v6487
  %v7613 = vunpack.c.l.b16 %v6488
  %v7614 = vunpack.c.h.b16 %v6488
  %v7615 = vunpack.c.l.b16 %v6489
  %v7616 = vunpack.c.h.b16 %v6489
  %v7617 = vunpack.c.l.b16 %v6490
  %v7618 = vunpack.c.h.b16 %v6490
  %v7619 = vunpack.c.l.b16 %v6491
  %v7620 = vunpack.c.h.b16 %v6491
  %v7621 = vunpack.c.l.b16 %v6492
  %v7622 = vunpack.c.h.b16 %v6492
  %v7623 = vunpack.c.l.b16 %v6493
  %v7624 = vunpack.c.h.b16 %v6493
  %v7625 = vunpack.c.l.b16 %v6494
  %v7626 = vunpack.c.h.b16 %v6494
  %v7627 = vunpack.c.l.b16 %v6495
  %v7628 = vunpack.c.h.b16 %v6495
  %v7629 = vunpack.c.l.b16 %v6496
  %v7630 = vunpack.c.h.b16 %v6496
  %v7631 = vunpack.c.l.b16 %v6497
  %v7632 = vunpack.c.h.b16 %v6497
  %v7633 = vunpack.c.l.b16 %v6498
  %v7634 = vunpack.c.h.b16 %v6498
  %v7635 = vunpack.c.l.b16 %v6499
  %v7636 = vunpack.c.h.b16 %v6499
  %v7637 = vunpack.c.l.b16 %v6500
  %v7638 = vunpack.c.h.b16 %v6500
  %v7639 = vunpack.c.l.b16 %v6501
  %v7640 = vunpack.c.h.b16 %v6501
  %v7641 = vunpack.c.l.b16 %v6502
  %v7642 = vunpack.c.h.b16 %v6502
  %v7643 = vunpack.c.l.b16 %v6503
  %v7644 = vunpack.c.h.b16 %v6503
  %v7645 = vunpack.c.l.b16 %v6504
  %v7646 = vunpack.c.h.b16 %v6504
  %v7647 = vunpack.c.l.b16 %v6505
  %v7648 = vunpack.c.h.b16 %v6505
  %v7649 = vunpack.c.l.b16 %v6506
  %v7650 = vunpack.c.h.b16 %v6506
  %v7651 = vunpack.c.l.b16 %v6507
  %v7652 = vunpack.c.h.b16 %v6507
  %v7653 = vunpack.c.l.b16 %v6508
  %v7654 = vunpack.c.h.b16 %v6508
  %v7655 = vunpack.c.l.b16 %v6509
  %v7656 = vunpack.c.h.b16 %v6509
  %v7657 = vunpack.c.l.b16 %v6510
  %v7658 = vunpack.c.h.b16 %v6510
  %v7659 = vunpack.c.l.b16 %v6511
  %v7660 = vunpack.c.h.b16 %v6511
  %v7661 = vunpack.c.l.b16 %v6512
  %v7662 = vunpack.c.h.b16 %v6512
  %v7663 = vunpack.c.l.b16 %v6513
  %v7664 = vunpack.c.h.b16 %v6513
  %v7665 = vunpack.c.l.b16 %v6514
  %v7666 = vunpack.c.h.b16 %v6514
  %v7667 = vunpack.c.l.b16 %v6515
  %v7668 = vunpack.c.h.b16 %v6515
  %v7669 = vunpack.c.l.b16 %v6516
  %v7670 = vunpack.c.h.b16 %v6516
  %v7671 = vunpack.c.l.b16 %v6517
  %v7672 = vunpack.c.h.b16 %v6517
  %v7673 = vunpack.c.l.b16 %v6518
  %v7674 = vunpack.c.h.b16 %v6518
  %v7675 = vunpack.c.l.b16 %v6519
  %v7676 = vunpack.c.h.b16 %v6519
  %v7677 = vunpack.c.l.b16 %v6520
  %v7678 = vunpack.c.h.b16 %v6520
  %v7679 = vunpack.c.l.b16 %v6521
  %v7680 = vunpack.c.h.b16 %v6521
  %v7681 = vunpack.c.l.b16 %v6522
  %v7682 = vunpack.c.h.b16 %v6522
  %v7683 = vunpack.c.l.b16 %v6523
  %v7684 = vunpack.c.h.b16 %v6523
  %v7685 = vunpack.c.l.b16 %v6524
  %v7686 = vunpack.c.h.b16 %v6524
  %v7687 = vunpack.c.l.b16 %v6525
  %v7688 = vunpack.c.h.b16 %v6525
  %v7689 = vunpack.c.l.b16 %v6526
  %v7690 = vunpack.c.h.b16 %v6526
  %v7691 = vunpack.c.l.b16 %v6527
  %v7692 = vunpack.c.h.b16 %v6527
  %v7693 = vunpack.c.l.b16 %v6528
  %v7694 = vunpack.c.h.b16 %v6528
  %v7695 = vunpack.c.l.b16 %v6529
  %v7696 = vunpack.c.h.b16 %v6529
  %v7697 = vunpack.c.l.b16 %v6530
  %v7698 = vunpack.c.h.b16 %v6530
  %v7699 = vunpack.c.l.b16 %v6531
  %v7700 = vunpack.c.h.b16 %v6531
  %v7701 = vunpack.c.l.b16 %v6532
  %v7702 = vunpack.c.h.b16 %v6532
  %v7703 = vunpack.c.l.b16 %v6533
  %v7704 = vunpack.c.h.b16 %v6533
  %v7705 = vunpack.c.l.b16 %v6534
  %v7706 = vunpack.c.h.b16 %v6534
  %v7707 = vunpack.c.l.b16 %v6535
  %v7708 = vunpack.c.h.b16 %v6535
  %v7709 = vunpack.c.l.b16 %v6536
  %v7710 = vunpack.c.h.b16 %v6536
  %v7711 = vunpack.c.l.b16 %v6537
  %v7712 = vunpack.c.h.b16 %v6537
  %v7713 = vunpack.c.l.b16 %v6538
  %v7714 = vunpack.c.h.b16 %v6538
  %v7715 = vunpack.c.l.b16 %v6539
  %v7716 = vunpack.c.h.b16 %v6539
  %v7717 = vunpack.c.l.b16 %v6540
  %v7718 = vunpack.c.h.b16 %v6540
  %v7719 = vunpack.c.l.b16 %v6541
  %v7720 = vunpack.c.h.b16 %v6541
  %v7721 = vunpack.c.l.b16 %v6542
  %v7722 = vunpack.c.h.b16 %v6542
  %v7723 = vunpack.c.l.b16 %v6543
  %v7724 = vunpack.c.h.b16 %v6543
  %v7725 = vunpack.c.l.b16 %v6544
  %v7726 = vunpack.c.h.b16 %v6544
  %v7727 = vunpack.c.l.b16 %v6545
  %v7728 = vunpack.c.h.b16 %v6545
  %v7729 = vunpack.c.l.b16 %v6546
  %v7730 = vunpack.c.h.b16 %v6546
  %v7731 = vunpack.c.l.b16 %v6547
  %v7732 = vunpack.c.h.b16 %v6547
  %v7733 = vunpack.c.l.b16 %v6548
  %v7734 = vunpack.c.h.b16 %v6548
  %v7735 = vunpack.c.l.b16 %v6549
  %v7736 = vunpack.c.h.b16 %v6549
  %v7737 = vunpack.c.l.b16 %v6550
  %v7738 = vunpack.c.h.b16 %v6550
  %v7739 = vunpack.c.l.b16 %v6551
  %v7740 = vunpack.c.h.b16 %v6551
  %v7741 = vunpack.c.l.b16 %v6552
  %v7742 = vunpack.c.h.b16 %v6552
  %v7743 = vunpack.c.l.b16 %v6553
  %v7744 = vunpack.c.h.b16 %v6553
  %v7745 = vunpack.c.l.b16 %v6554
  %v7746 = vunpack.c.h.b16 %v6554
  %v7747 = vunpack.c.l.b16 %v6555
  %v7748 = vunpack.c.h.b16 %v6555
  %v7749 = vunpack.c.l.b16 %v6556
  %v7750 = vunpack.c.h.b16 %v6556
  %v7751 = vunpack.c.l.b16 %v6557
  %v7752 = vunpack.c.h.b16 %v6557
  %v7753 = vunpack.c.l.b16 %v6558
  %v7754 = vunpack.c.h.b16 %v6558
  %v7755 = vunpack.c.l.b16 %v6559
  %v7756 = vunpack.c.h.b16 %v6559
  %v7757 = vunpack.c.l.b16 %v6560
  %v7758 = vunpack.c.h.b16 %v6560
  %v7759 = vunpack.c.l.b16 %v6561
  %v7760 = vunpack.c.h.b16 %v6561
  %v7761 = vunpack.c.l.b16 %v6562
  %v7762 = vunpack.c.h.b16 %v6562
  %v7763 = vunpack.c.l.b16 %v6563
  %v7764 = vunpack.c.h.b16 %v6563
  %v7765 = vunpack.c.l.b16 %v6564
  %v7766 = vunpack.c.h.b16 %v6564
  %v7767 = vunpack.c.l.b16 %v6565
  %v7768 = vunpack.c.h.b16 %v6565
  %v7769 = vunpack.c.l.b16 %v6566
  %v7770 = vunpack.c.h.b16 %v6566
  %v7771 = vunpack.c.l.b16 %v6567
  %v7772 = vunpack.c.h.b16 %v6567
  %v7773 = vunpack.c.l.b16 %v6568
  %v7774 = vunpack.c.h.b16 %v6568
  %v7775 = vunpack.c.l.b16 %v6569
  %v7776 = vunpack.c.h.b16 %v6569
  %v7777 = vunpack.c.l.b16 %v6570
  %v7778 = vunpack.c.h.b16 %v6570
  %v7779 = vunpack.c.l.b16 %v6571
  %v7780 = vunpack.c.h.b16 %v6571
  %v7781 = vunpack.c.l.b16 %v6572
  %v7782 = vunpack.c.h.b16 %v6572
  %v7783 = vunpack.c.l.b16 %v6573
  %v7784 = vunpack.c.h.b16 %v6573
  %v7785 = vunpack.c.l.b16 %v6574
  %v7786 = vunpack.c.h.b16 %v6574
  %v7787 = vunpack.c.l.b16 %v6575
  %v7788 = vunpack.c.h.b16 %v6575
  %v7789 = vunpack.c.l.b16 %v6576
  %v7790 = vunpack.c.h.b16 %v6576
  %v7791 = vunpack.c.l.b16 %v6577
  %v7792 = vunpack.c.h.b16 %v6577
  %v7793 = vunpack.c.l.b16 %v6578
  %v7794 = vunpack.c.h.b16 %v6578
  %v7795 = vunpack.c.l.b16 %v6579
  %v7796 = vunpack.c.h.b16 %v6579
  %v7797 = vunpack.c.l.b16 %v6580
  %v7798 = vunpack.c.h.b16 %v6580
  %v7799 = vunpack.c.l.b16 %v6581
  %v7800 = vunpack.c.h.b16 %v6581
  %v7801 = vunpack.c.l.b16 %v6582
  %v7802 = vunpack.c.h.b16 %v6582
  %v7803 = vunpack.c.l.b16 %v6583
  %v7804 = vunpack.c.h.b16 %v6583
  %v7805 = vunpack.c.l.b16 %v6584
  %v7806 = vunpack.c.h.b16 %v6584
  %v7807 = vunpack.c.l.b16 %v6585
  %v7808 = vunpack.c.h.b16 %v6585
  %v7809 = vunpack.c.l.b16 %v6586
  %v7810 = vunpack.c.h.b16 %v6586
  %v7811 = vunpack.c.l.b16 %v6587
  %v7812 = vunpack.c.h.b16 %v6587
  %v7813 = vunpack.c.l.b16 %v6588
  %v7814 = vunpack.c.h.b16 %v6588
  %v7815 = vunpack.c.l.b16 %v6589
  %v7816 = vunpack.c.h.b16 %v6589
  %v7817 = vunpack.c.l.b16 %v6590
  %v7818 = vunpack.c.h.b16 %v6590
  %v7819 = vunpack.c.l.b16 %v6591
  %v7820 = vunpack.c.h.b16 %v6591
  %v7821 = vunpack.c.l.b16 %v6592
  %v7822 = vunpack.c.h.b16 %v6592
  %v7823 = vunpack.c.l.b16 %v6593
  %v7824 = vunpack.c.h.b16 %v6593
  %v7825 = vunpack.c.l.b16 %v6594
  %v7826 = vunpack.c.h.b16 %v6594
  %v7827 = vunpack.c.l.b16 %v6595
  %v7828 = vunpack.c.h.b16 %v6595
  %v7829 = vunpack.c.l.b16 %v6596
  %v7830 = vunpack.c.h.b16 %v6596
  %v7831 = vunpack.c.l.b16 %v6597
  %v7832 = vunpack.c.h.b16 %v6597
  %v7833 = vunpack.c.l.b16 %v6598
  %v7834 = vunpack.c.h.b16 %v6598
  %v7835 = vunpack.c.l.b16 %v6599
  %v7836 = vunpack.c.h.b16 %v6599
  %v7837 = vunpack.c.l.b16 %v6600
  %v7838 = vunpack.c.h.b16 %v6600
  %v7839 = vunpack.c.l.b16 %v6601
  %v7840 = vunpack.c.h.b16 %v6601
  %v7841 = vunpack.c.l.b16 %v6602
  %v7842 = vunpack.c.h.b16 %v6602
  %v7843 = vunpack.c.l.b16 %v6603
  %v7844 = vunpack.c.h.b16 %v6603
  %v7845 = vunpack.c.l.b16 %v6604
  %v7846 = vunpack.c.h.b16 %v6604
  %v7847 = vunpack.c.l.b16 %v6605
  %v7848 = vunpack.c.h.b16 %v6605
  %v7849 = vunpack.c.l.b16 %v6606
  %v7850 = vunpack.c.h.b16 %v6606
  %v7851 = vunpack.c.l.b16 %v6607
  %v7852 = vunpack.c.h.b16 %v6607
  %v7853 = vunpack.c.l.b16 %v6608
  %v7854 = vunpack.c.h.b16 %v6608
  %v7855 = vunpack.c.l.b16 %v6609
  %v7856 = vunpack.c.h.b16 %v6609
  %v7857 = vunpack.c.l.b16 %v6610
  %v7858 = vunpack.c.h.b16 %v6610
  %v7859 = vunpack.c.l.b16 %v6611
  %v7860 = vunpack.c.h.b16 %v6611
  %v7861 = vunpack.c.l.b16 %v6612
  %v7862 = vunpack.c.h.b16 %v6612
  %v7863 = vunpack.c.l.b16 %v6613
  %v7864 = vunpack.c.h.b16 %v6613
  %v7865 = vunpack.c.l.b16 %v6614
  %v7866 = vunpack.c.h.b16 %v6614
  %v7867 = vunpack.c.l.b16 %v6615
  %v7868 = vunpack.c.h.b16 %v6615
  %v7869 = vunpack.c.l.b16 %v6616
  %v7870 = vunpack.c.h.b16 %v6616
  %v7871 = vunpack.c.l.b16 %v6617
  %v7872 = vunpack.c.h.b16 %v6617
  %v7873 = vunpack.c.l.b16 %v6618
  %v7874 = vunpack.c.h.b16 %v6618
  %v7875 = vunpack.c.l.b16 %v6619
  %v7876 = vunpack.c.h.b16 %v6619
  %v7877 = vunpack.c.l.b16 %v6620
  %v7878 = vunpack.c.h.b16 %v6620
  %v7879 = vunpack.c.l.b16 %v6621
  %v7880 = vunpack.c.h.b16 %v6621
  %v7881 = vunpack.c.l.b16 %v6622
  %v7882 = vunpack.c.h.b16 %v6622
  %v7883 = vunpack.c.l.b16 %v6623
  %v7884 = vunpack.c.h.b16 %v6623
  %v7885 = vunpack.c.l.b16 %v6624
  %v7886 = vunpack.c.h.b16 %v6624
  %v7887 = vunpack.c.l.b16 %v6625
  %v7888 = vunpack.c.h.b16 %v6625
  %v7889 = vunpack.c.l.b16 %v6626
  %v7890 = vunpack.c.h.b16 %v6626
  %v7891 = vunpack.c.l.b16 %v6627
  %v7892 = vunpack.c.h.b16 %v6627
  %v7893 = vunpack.c.l.b16 %v6628
  %v7894 = vunpack.c.h.b16 %v6628
  %v7895 = vunpack.c.l.b16 %v6629
  %v7896 = vunpack.c.h.b16 %v6629
  %v7897 = vunpack.c.l.b16 %v6630
  %v7898 = vunpack.c.h.b16 %v6630
  %v7899 = vunpack.c.l.b16 %v6631
  %v7900 = vunpack.c.h.b16 %v6631
  %v7901 = vunpack.c.l.b16 %v6632
  %v7902 = vunpack.c.h.b16 %v6632
  %v7903 = vunpack.c.l.b16 %v6633
  %v7904 = vunpack.c.h.b16 %v6633
  %v7905 = vunpack.c.l.b16 %v6634
  %v7906 = vunpack.c.h.b16 %v6634
  %v7907 = vunpack.c.l.b16 %v6635
  %v7908 = vunpack.c.h.b16 %v6635
  %v7909 = vunpack.c.l.b16 %v6636
  %v7910 = vunpack.c.h.b16 %v6636
  %v7911 = vunpack.c.l.b16 %v6637
  %v7912 = vunpack.c.h.b16 %v6637
  %v7913 = vunpack.c.l.b16 %v6638
  %v7914 = vunpack.c.h.b16 %v6638
  %v7915 = vunpack.c.l.b16 %v6639
  %v7916 = vunpack.c.h.b16 %v6639
  %v7917 = vunpack.c.l.b16 %v6640
  %v7918 = vunpack.c.h.b16 %v6640
  %v7919 = vunpack.c.l.b16 %v6641
  %v7920 = vunpack.c.h.b16 %v6641
  %v7921 = vunpack.c.l.b16 %v6642
  %v7922 = vunpack.c.h.b16 %v6642
  %v7923 = vunpack.c.l.b16 %v6643
  %v7924 = vunpack.c.h.b16 %v6643
  %v7925 = vunpack.c.l.b16 %v6644
  %v7926 = vunpack.c.h.b16 %v6644
  %v7927 = vunpack.c.l.b16 %v6645
  %v7928 = vunpack.c.h.b16 %v6645
  %v7929 = vunpack.c.l.b16 %v6646
  %v7930 = vunpack.c.h.b16 %v6646
  %v7931 = vunpack.c.l.b16 %v6647
  %v7932 = vunpack.c.h.b16 %v6647
  %v7933 = vunpack.c.l.b16 %v6648
  %v7934 = vunpack.c.h.b16 %v6648
  %v7935 = vunpack.c.l.b16 %v6649
  %v7936 = vunpack.c.h.b16 %v6649
  %v7937 = vunpack.c.l.b16 %v6650
  %v7938 = vunpack.c.h.b16 %v6650
  %v7939 = vunpack.c.l.b16 %v6651
  %v7940 = vunpack.c.h.b16 %v6651
  %v7941 = vunpack.c.l.b16 %v6652
  %v7942 = vunpack.c.h.b16 %v6652
  %v7943 = vunpack.c.l.b16 %v6653
  %v7944 = vunpack.c.h.b16 %v6653
  %v7945 = vunpack.c.l.b16 %v6654
  %v7946 = vunpack.c.h.b16 %v6654
  %v7947 = vunpack.c.l.b16 %v6655
  %v7948 = vunpack.c.h.b16 %v6655
  %v7949 = vunpack.c.l.b16 %v6656
  %v7950 = vunpack.c.h.b16 %v6656
  %v7951 = vunpack.c.l.b16 %v6657
  %v7952 = vunpack.c.h.b16 %v6657
  %v7953 = vunpack.c.l.b16 %v6658
  %v7954 = vunpack.c.h.b16 %v6658
  %v7955 = vpack.c.b16 %v7109, %v7091
  %v7956 = vpack.c.b16 %v7110, %v7092
  %v7957 = vpack.c.b16 %v7111, %v7093
  %v7958 = vpack.c.b16 %v7112, %v7094
  %v7959 = vpack.c.b16 %v7113, %v7095
  %v7960 = vpack.c.b16 %v7114, %v7096
  %v7961 = vpack.c.b16 %v7115, %v7097
  %v7962 = vpack.c.b16 %v7116, %v7098
  %v7963 = vpack.c.b16 %v7117, %v7099
  %v7964 = vpack.c.b16 %v7118, %v7100
  %v7965 = vpack.c.b16 %v7119, %v7101
  %v7966 = vpack.c.b16 %v7120, %v7102
  %v7967 = vpack.c.b16 %v7121, %v7103
  %v7968 = vpack.c.b16 %v7122, %v7104
  %v7969 = vpack.c.b16 %v7123, %v7105
  %v7970 = vpack.c.b16 %v7124, %v7106
  %v7971 = vpack.c.b16 %v7125, %v7107
  %v7972 = vpack.c.b16 %v7126, %v7108
  %v7973 = vpack.c.b16 %v7145, %v7127
  %v7974 = vpack.c.b16 %v7146, %v7128
  %v7975 = vpack.c.b16 %v7147, %v7129
  %v7976 = vpack.c.b16 %v7148, %v7130
  %v7977 = vpack.c.b16 %v7149, %v7131
  %v7978 = vpack.c.b16 %v7150, %v7132
  %v7979 = vpack.c.b16 %v7151, %v7133
  %v7980 = vpack.c.b16 %v7152, %v7134
  %v7981 = vpack.c.b16 %v7153, %v7135
  %v7982 = vpack.c.b16 %v7154, %v7136
  %v7983 = vpack.c.b16 %v7155, %v7137
  %v7984 = vpack.c.b16 %v7156, %v7138
  %v7985 = vpack.c.b16 %v7157, %v7139
  %v7986 = vpack.c.b16 %v7158, %v7140
  %v7987 = vpack.c.b16 %v7159, %v7141
  %v7988 = vpack.c.b16 %v7160, %v7142
  %v7989 = vpack.c.b16 %v7161, %v7143
  %v7990 = vpack.c.b16 %v7162, %v7144
  %v7991 = vpack.c.b16 %v7181, %v7163
  %v7992 = vpack.c.b16 %v7182, %v7164
  %v7993 = vpack.c.b16 %v7183, %v7165
  %v7994 = vpack.c.b16 %v7184, %v7166
  %v7995 = vpack.c.b16 %v7185, %v7167
  %v7996 = vpack.c.b16 %v7186, %v7168
  %v7997 = vpack.c.b16 %v7187, %v7169
  %v7998 = vpack.c.b16 %v7188, %v7170
  %v7999 = vpack.c.b16 %v7189, %v7171
  %v8000 = vpack.c.b16 %v7190, %v7172
  %v8001 = vpack.c.b16 %v7191, %v7173
  %v8002 = vpack.c.b16 %v7192, %v7174
  %v8003 = vpack.c.b16 %v7193, %v7175
  %v8004 = vpack.c.b16 %v7194, %v7176
  %v8005 = vpack.c.b16 %v7195, %v7177
  %v8006 = vpack.c.b16 %v7196, %v7178
  %v8007 = vpack.c.b16 %v7197, %v7179
  %v8008 = vpack.c.b16 %v7198, %v7180
  %v8009 = vpack.c.b16 %v7217, %v7199
  %v8010 = vpack.c.b16 %v7218, %v7200
  %v8011 = vpack.c.b16 %v7219, %v7201
  %v8012 = vpack.c.b16 %v7220, %v7202
  %v8013 = vpack.c.b16 %v7221, %v7203
  %v8014 = vpack.c.b16 %v7222, %v7204
  %v8015 = vpack.c.b16 %v7223, %v7205
  %v8016 = vpack.c.b16 %v7224, %v7206
  %v8017 = vpack.c.b16 %v7225, %v7207
  %v8018 = vpack.c.b16 %v7226, %v7208
  %v8019 = vpack.c.b16 %v7227, %v7209
  %v8020 = vpack.c.b16 %v7228, %v7210
  %v8021 = vpack.c.b16 %v7229, %v7211
  %v8022 = vpack.c.b16 %v7230, %v7212
  %v8023 = vpack.c.b16 %v7231, %v7213
  %v8024 = vpack.c.b16 %v7232, %v7214
  %v8025 = vpack.c.b16 %v7233, %v7215
  %v8026 = vpack.c.b16 %v7234, %v7216
  %v8027 = vpack.c.b16 %v7253, %v7235
  %v8028 = vpack.c.b16 %v7254, %v7236
  %v8029 = vpack.c.b16 %v7255, %v7237
  %v8030 = vpack.c.b16 %v7256, %v7238
  %v8031 = vpack.c.b16 %v7257, %v7239
  %v8032 = vpack.c.b16 %v7258, %v7240
  %v8033 = vpack.c.b16 %v7259, %v7241
  %v8034 = vpack.c.b16 %v7260, %v7242
  %v8035 = vpack.c.b16 %v7261, %v7243
  %v8036 = vpack.c.b16 %v7262, %v7244
  %v8037 = vpack.c.b16 %v7263, %v7245
  %v8038 = vpack.c.b16 %v7264, %v7246
  %v8039 = vpack.c.b16 %v7265, %v7247
  %v8040 = vpack.c.b16 %v7266, %v7248
  %v8041 = vpack.c.b16 %v7267, %v7249
  %v8042 = vpack.c.b16 %v7268, %v7250
  %v8043 = vpack.c.b16 %v7269, %v7251
  %v8044 = vpack.c.b16 %v7270, %v7252
  %v8045 = vpack.c.b16 %v7289, %v7271
  %v8046 = vpack.c.b16 %v7290, %v7272
  %v8047 = vpack.c.b16 %v7291, %v7273
  %v8048 = vpack.c.b16 %v7292, %v7274
  %v8049 = vpack.c.b16 %v7293, %v7275
  %v8050 = vpack.c.b16 %v7294, %v7276
  %v8051 = vpack.c.b16 %v7295, %v7277
  %v8052 = vpack.c.b16 %v7296, %v7278
  %v8053 = vpack.c.b16 %v7297, %v7279
  %v8054 = vpack.c.b16 %v7298, %v7280
  %v8055 = vpack.c.b16 %v7299, %v7281
  %v8056 = vpack.c.b16 %v7300, %v7282
  %v8057 = vpack.c.b16 %v7301, %v7283
  %v8058 = vpack.c.b16 %v7302, %v7284
  %v8059 = vpack.c.b16 %v7303, %v7285
  %v8060 = vpack.c.b16 %v7304, %v7286
  %v8061 = vpack.c.b16 %v7305, %v7287
  %v8062 = vpack.c.b16 %v7306, %v7288
  %v8063 = vpack.c.b16 %v7325, %v7307
  %v8064 = vpack.c.b16 %v7326, %v7308
  %v8065 = vpack.c.b16 %v7327, %v7309
  %v8066 = vpack.c.b16 %v7328, %v7310
  %v8067 = vpack.c.b16 %v7329, %v7311
  %v8068 = vpack.c.b16 %v7330, %v7312
  %v8069 = vpack.c.b16 %v7331, %v7313
  %v8070 = vpack.c.b16 %v7332, %v7314
  %v8071 = vpack.c.b16 %v7333, %v7315
  %v8072 = vpack.c.b16 %v7334, %v7316
  %v8073 = vpack.c.b16 %v7335, %v7317
  %v8074 = vpack.c.b16 %v7336, %v7318
  %v8075 = vpack.c.b16 %v7337, %v7319
  %v8076 = vpack.c.b16 %v7338, %v7320
  %v8077 = vpack.c.b16 %v7339, %v7321
  %v8078 = vpack.c.b16 %v7340, %v7322
  %v8079 = vpack.c.b16 %v7341, %v7323
  %v8080 = vpack.c.b16 %v7342, %v7324
  %v8081 = vpack.c.b16 %v7361, %v7343
  %v8082 = vpack.c.b16 %v7362, %v7344
  %v8083 = vpack.c.b16 %v7363, %v7345
  %v8084 = vpack.c.b16 %v7364, %v7346
  %v8085 = vpack.c.b16 %v7365, %v7347
  %v8086 = vpack.c.b16 %v7366, %v7348
  %v8087 = vpack.c.b16 %v7367, %v7349
  %v8088 = vpack.c.b16 %v7368, %v7350
  %v8089 = vpack.c.b16 %v7369, %v7351
  %v8090 = vpack.c.b16 %v7370, %v7352
  %v8091 = vpack.c.b16 %v7371, %v7353
  %v8092 = vpack.c.b16 %v7372, %v7354
  %v8093 = vpack.c.b16 %v7373, %v7355
  %v8094 = vpack.c.b16 %v7374, %v7356
  %v8095 = vpack.c.b16 %v7375, %v7357
  %v8096 = vpack.c.b16 %v7376, %v7358
  %v8097 = vpack.c.b16 %v7377, %v7359
  %v8098 = vpack.c.b16 %v7378, %v7360
  %v8099 = vpack.c.b16 %v7397, %v7379
  %v8100 = vpack.c.b16 %v7398, %v7380
  %v8101 = vpack.c.b16 %v7399, %v7381
  %v8102 = vpack.c.b16 %v7400, %v7382
  %v8103 = vpack.c.b16 %v7401, %v7383
  %v8104 = vpack.c.b16 %v7402, %v7384
  %v8105 = vpack.c.b16 %v7403, %v7385
  %v8106 = vpack.c.b16 %v7404, %v7386
  %v8107 = vpack.c.b16 %v7405, %v7387
  %v8108 = vpack.c.b16 %v7406, %v7388
  %v8109 = vpack.c.b16 %v7407, %v7389
  %v8110 = vpack.c.b16 %v7408, %v7390
  %v8111 = vpack.c.b16 %v7409, %v7391
  %v8112 = vpack.c.b16 %v7410, %v7392
  %v8113 = vpack.c.b16 %v7411, %v7393
  %v8114 = vpack.c.b16 %v7412, %v7394
  %v8115 = vpack.c.b16 %v7413, %v7395
  %v8116 = vpack.c.b16 %v7414, %v7396
  %v8117 = vpack.c.b16 %v7433, %v7415
  %v8118 = vpack.c.b16 %v7434, %v7416
  %v8119 = vpack.c.b16 %v7435, %v7417
  %v8120 = vpack.c.b16 %v7436, %v7418
  %v8121 = vpack.c.b16 %v7437, %v7419
  %v8122 = vpack.c.b16 %v7438, %v7420
  %v8123 = vpack.c.b16 %v7439, %v7421
  %v8124 = vpack.c.b16 %v7440, %v7422
  %v8125 = vpack.c.b16 %v7441, %v7423
  %v8126 = vpack.c.b16 %v7442, %v7424
  %v8127 = vpack.c.b16 %v7443, %v7425
  %v8128 = vpack.c.b16 %v7444, %v7426
  %v8129 = vpack.c.b16 %v7445, %v7427
  %v8130 = vpack.c.b16 %v7446, %v7428
  %v8131 = vpack.c.b16 %v7447, %v7429
  %v8132 = vpack.c.b16 %v7448, %v7430
  %v8133 = vpack.c.b16 %v7449, %v7431
  %v8134 = vpack.c.b16 %v7450, %v7432
  %v8135 = vpack.c.b16 %v7469, %v7451
  %v8136 = vpack.c.b16 %v7470, %v7452
  %v8137 = vpack.c.b16 %v7471, %v7453
  %v8138 = vpack.c.b16 %v7472, %v7454
  %v8139 = vpack.c.b16 %v7473, %v7455
  %v8140 = vpack.c.b16 %v7474, %v7456
  %v8141 = vpack.c.b16 %v7475, %v7457
  %v8142 = vpack.c.b16 %v7476, %v7458
  %v8143 = vpack.c.b16 %v7477, %v7459
  %v8144 = vpack.c.b16 %v7478, %v7460
  %v8145 = vpack.c.b16 %v7479, %v7461
  %v8146 = vpack.c.b16 %v7480, %v7462
  %v8147 = vpack.c.b16 %v7481, %v7463
  %v8148 = vpack.c.b16 %v7482, %v7464
  %v8149 = vpack.c.b16 %v7483, %v7465
  %v8150 = vpack.c.b16 %v7484, %v7466
  %v8151 = vpack.c.b16 %v7485, %v7467
  %v8152 = vpack.c.b16 %v7486, %v7468
  %v8153 = vpack.c.b16 %v7505, %v7487
  %v8154 = vpack.c.b16 %v7506, %v7488
  %v8155 = vpack.c.b16 %v7507, %v7489
  %v8156 = vpack.c.b16 %v7508, %v7490
  %v8157 = vpack.c.b16 %v7509, %v7491
  %v8158 = vpack.c.b16 %v7510, %v7492
  %v8159 = vpack.c.b16 %v7511, %v7493
  %v8160 = vpack.c.b16 %v7512, %v7494
  %v8161 = vpack.c.b16 %v7513, %v7495
  %v8162 = vpack.c.b16 %v7514, %v7496
  %v8163 = vpack.c.b16 %v7515, %v7497
  %v8164 = vpack.c.b16 %v7516, %v7498
  %v8165 = vpack.c.b16 %v7517, %v7499
  %v8166 = vpack.c.b16 %v7518, %v7500
  %v8167 = vpack.c.b16 %v7519, %v7501
  %v8168 = vpack.c.b16 %v7520, %v7502
  %v8169 = vpack.c.b16 %v7521, %v7503
  %v8170 = vpack.c.b16 %v7522, %v7504
  %v8171 = vpack.c.b16 %v7541, %v7523
  %v8172 = vpack.c.b16 %v7542, %v7524
  %v8173 = vpack.c.b16 %v7543, %v7525
  %v8174 = vpack.c.b16 %v7544, %v7526
  %v8175 = vpack.c.b16 %v7545, %v7527
  %v8176 = vpack.c.b16 %v7546, %v7528
  %v8177 = vpack.c.b16 %v7547, %v7529
  %v8178 = vpack.c.b16 %v7548, %v7530
  %v8179 = vpack.c.b16 %v7549, %v7531
  %v8180 = vpack.c.b16 %v7550, %v7532
  %v8181 = vpack.c.b16 %v7551, %v7533
  %v8182 = vpack.c.b16 %v7552, %v7534
  %v8183 = vpack.c.b16 %v7553, %v7535
  %v8184 = vpack.c.b16 %v7554, %v7536
  %v8185 = vpack.c.b16 %v7555, %v7537
  %v8186 = vpack.c.b16 %v7556, %v7538
  %v8187 = vpack.c.b16 %v7557, %v7539
  %v8188 = vpack.c.b16 %v7558, %v7540
  %v8189 = vpack.c.b16 %v7577, %v7559
  %v8190 = vpack.c.b16 %v7578, %v7560
  %v8191 = vpack.c.b16 %v7579, %v7561
  %v8192 = vpack.c.b16 %v7580, %v7562
  %v8193 = vpack.c.b16 %v7581, %v7563
  %v8194 = vpack.c.b16 %v7582, %v7564
  %v8195 = vpack.c.b16 %v7583, %v7565
  %v8196 = vpack.c.b16 %v7584, %v7566
  %v8197 = vpack.c.b16 %v7585, %v7567
  %v8198 = vpack.c.b16 %v7586, %v7568
  %v8199 = vpack.c.b16 %v7587, %v7569
  %v8200 = vpack.c.b16 %v7588, %v7570
  %v8201 = vpack.c.b16 %v7589, %v7571
  %v8202 = vpack.c.b16 %v7590, %v7572
  %v8203 = vpack.c.b16 %v7591, %v7573
  %v8204 = vpack.c.b16 %v7592, %v7574
  %v8205 = vpack.c.b16 %v7593, %v7575
  %v8206 = vpack.c.b16 %v7594, %v7576
  %v8207 = vpack.c.b16 %v7613, %v7595
  %v8208 = vpack.c.b16 %v7614, %v7596
  %v8209 = vpack.c.b16 %v7615, %v7597
  %v8210 = vpack.c.b16 %v7616, %v7598
  %v8211 = vpack.c.b16 %v7617, %v7599
  %v8212 = vpack.c.b16 %v7618, %v7600
  %v8213 = vpack.c.b16 %v7619, %v7601
  %v8214 = vpack.c.b16 %v7620, %v7602
  %v8215 = vpack.c.b16 %v7621, %v7603
  %v8216 = vpack.c.b16 %v7622, %v7604
  %v8217 = vpack.c.b16 %v7623, %v7605
  %v8218 = vpack.c.b16 %v7624, %v7606
  %v8219 = vpack.c.b16 %v7625, %v7607
  %v8220 = vpack.c.b16 %v7626, %v7608
  %v8221 = vpack.c.b16 %v7627, %v7609
  %v8222 = vpack.c.b16 %v7628, %v7610
  %v8223 = vpack.c.b16 %v7629, %v7611
  %v8224 = vpack.c.b16 %v7630, %v7612
  %v8225 = vpack.c.b16 %v7649, %v7631
  %v8226 = vpack.c.b16 %v7650, %v7632
  %v8227 = vpack.c.b16 %v7651, %v7633
  %v8228 = vpack.c.b16 %v7652, %v7634
  %v8229 = vpack.c.b16 %v7653, %v7635
  %v8230 = vpack.c.b16 %v7654, %v7636
  %v8231 = vpack.c.b16 %v7655, %v7637
  %v8232 = vpack.c.b16 %v7656, %v7638
  %v8233 = vpack.c.b16 %v7657, %v7639
  %v8234 = vpack.c.b16 %v7658, %v7640
  %v8235 = vpack.c.b16 %v7659, %v7641
  %v8236 = vpack.c.b16 %v7660, %v7642
  %v8237 = vpack.c.b16 %v7661, %v7643
  %v8238 = vpack.c.b16 %v7662, %v7644
  %v8239 = vpack.c.b16 %v7663, %v7645
  %v8240 = vpack.c.b16 %v7664, %v7646
  %v8241 = vpack.c.b16 %v7665, %v7647
  %v8242 = vpack.c.b16 %v7666, %v7648
  %v8243 = vpack.c.b16 %v7685, %v7667
  %v8244 = vpack.c.b16 %v7686, %v7668
  %v8245 = vpack.c.b16 %v7687, %v7669
  %v8246 = vpack.c.b16 %v7688, %v7670
  %v8247 = vpack.c.b16 %v7689, %v7671
  %v8248 = vpack.c.b16 %v7690, %v7672
  %v8249 = vpack.c.b16 %v7691, %v7673
  %v8250 = vpack.c.b16 %v7692, %v7674
  %v8251 = vpack.c.b16 %v7693, %v7675
  %v8252 = vpack.c.b16 %v7694, %v7676
  %v8253 = vpack.c.b16 %v7695, %v7677
  %v8254 = vpack.c.b16 %v7696, %v7678
  %v8255 = vpack.c.b16 %v7697, %v7679
  %v8256 = vpack.c.b16 %v7698, %v7680
  %v8257 = vpack.c.b16 %v7699, %v7681
  %v8258 = vpack.c.b16 %v7700, %v7682
  %v8259 = vpack.c.b16 %v7701, %v7683
  %v8260 = vpack.c.b16 %v7702, %v7684
  %v8261 = vpack.c.b16 %v7721, %v7703
  %v8262 = vpack.c.b16 %v7722, %v7704
  %v8263 = vpack.c.b16 %v7723, %v7705
  %v8264 = vpack.c.b16 %v7724, %v7706
  %v8265 = vpack.c.b16 %v7725, %v7707
  %v8266 = vpack.c.b16 %v7726, %v7708
  %v8267 = vpack.c.b16 %v7727, %v7709
  %v8268 = vpack.c.b16 %v7728, %v7710
  %v8269 = vpack.c.b16 %v7729, %v7711
  %v8270 = vpack.c.b16 %v7730, %v7712
  %v8271 = vpack.c.b16 %v7731, %v7713
  %v8272 = vpack.c.b16 %v7732, %v7714
  %v8273 = vpack.c.b16 %v7733, %v7715
  %v8274 = vpack.c.b16 %v7734, %v7716
  %v8275 = vpack.c.b16 %v7735, %v7717
  %v8276 = vpack.c.b16 %v7736, %v7718
  %v8277 = vpack.c.b16 %v7737, %v7719
  %v8278 = vpack.c.b16 %v7738, %v7720
  %v8279 = vpack.c.b16 %v7757, %v7739
  %v8280 = vpack.c.b16 %v7758, %v7740
  %v8281 = vpack.c.b16 %v7759, %v7741
  %v8282 = vpack.c.b16 %v7760, %v7742
  %v8283 = vpack.c.b16 %v7761, %v7743
  %v8284 = vpack.c.b16 %v7762, %v7744
  %v8285 = vpack.c.b16 %v7763, %v7745
  %v8286 = vpack.c.b16 %v7764, %v7746
  %v8287 = vpack.c.b16 %v7765, %v7747
  %v8288 = vpack.c.b16 %v7766, %v7748
  %v8289 = vpack.c.b16 %v7767, %v7749
  %v8290 = vpack.c.b16 %v7768, %v7750
  %v8291 = vpack.c.b16 %v7769, %v7751
  %v8292 = vpack.c.b16 %v7770, %v7752
  %v8293 = vpack.c.b16 %v7771, %v7753
  %v8294 = vpack.c.b16 %v7772, %v7754
  %v8295 = vpack.c.b16 %v7773, %v7755
  %v8296 = vpack.c.b16 %v7774, %v7756
  %v8297 = vpack.c.b16 %v7793, %v7775
  %v8298 = vpack.c.b16 %v7794, %v7776
  %v8299 = vpack.c.b16 %v7795, %v7777
  %v8300 = vpack.c.b16 %v7796, %v7778
  %v8301 = vpack.c.b16 %v7797, %v7779
  %v8302 = vpack.c.b16 %v7798, %v7780
  %v8303 = vpack.c.b16 %v7799, %v7781
  %v8304 = vpack.c.b16 %v7800, %v7782
  %v8305 = vpack.c.b16 %v7801, %v7783
  %v8306 = vpack.c.b16 %v7802, %v7784
  %v8307 = vpack.c.b16 %v7803, %v7785
  %v8308 = vpack.c.b16 %v7804, %v7786
  %v8309 = vpack.c.b16 %v7805, %v7787
  %v8310 = vpack.c.b16 %v7806, %v7788
  %v8311 = vpack.c.b16 %v7807, %v7789
  %v8312 = vpack.c.b16 %v7808, %v7790
  %v8313 = vpack.c.b16 %v7809, %v7791
  %v8314 = vpack.c.b16 %v7810, %v7792
  %v8315 = vpack.c.b16 %v7829, %v7811
  %v8316 = vpack.c.b16 %v7830, %v7812
  %v8317 = vpack.c.b16 %v7831, %v7813
  %v8318 = vpack.c.b16 %v7832, %v7814
  %v8319 = vpack.c.b16 %v7833, %v7815
  %v8320 = vpack.c.b16 %v7834, %v7816
  %v8321 = vpack.c.b16 %v7835, %v7817
  %v8322 = vpack.c.b16 %v7836, %v7818
  %v8323 = vpack.c.b16 %v7837, %v7819
  %v8324 = vpack.c.b16 %v7838, %v7820
  %v8325 = vpack.c.b16 %v7839, %v7821
  %v8326 = vpack.c.b16 %v7840, %v7822
  %v8327 = vpack.c.b16 %v7841, %v7823
  %v8328 = vpack.c.b16 %v7842, %v7824
  %v8329 = vpack.c.b16 %v7843, %v7825
  %v8330 = vpack.c.b16 %v7844, %v7826
  %v8331 = vpack.c.b16 %v7845, %v7827
  %v8332 = vpack.c.b16 %v7846, %v7828
  %v8333 = vpack.c.b16 %v7865, %v7847
  %v8334 = vpack.c.b16 %v7866, %v7848
  %v8335 = vpack.c.b16 %v7867, %v7849
  %v8336 = vpack.c.b16 %v7868, %v7850
  %v8337 = vpack.c.b16 %v7869, %v7851
  %v8338 = vpack.c.b16 %v7870, %v7852
  %v8339 = vpack.c.b16 %v7871, %v7853
  %v8340 = vpack.c.b16 %v7872, %v7854
  %v8341 = vpack.c.b16 %v7873, %v7855
  %v8342 = vpack.c.b16 %v7874, %v7856
  %v8343 = vpack.c.b16 %v7875, %v7857
  %v8344 = vpack.c.b16 %v7876, %v7858
  %v8345 = vpack.c.b16 %v7877, %v7859
  %v8346 = vpack.c.b16 %v7878, %v7860
  %v8347 = vpack.c.b16 %v7879, %v7861
  %v8348 = vpack.c.b16 %v7880, %v7862
  %v8349 = vpack.c.b16 %v7881, %v7863
  %v8350 = vpack.c.b16 %v7882, %v7864
  %v8351 = vpack.c.b16 %v7901, %v7883
  %v8352 = vpack.c.b16 %v7902, %v7884
  %v8353 = vpack.c.b16 %v7903, %v7885
  %v8354 = vpack.c.b16 %v7904, %v7886
  %v8355 = vpack.c.b16 %v7905, %v7887
  %v8356 = vpack.c.b16 %v7906, %v7888
  %v8357 = vpack.c.b16 %v7907, %v7889
  %v8358 = vpack.c.b16 %v7908, %v7890
  %v8359 = vpack.c.b16 %v7909, %v7891
  %v8360 = vpack.c.b16 %v7910, %v7892
  %v8361 = vpack.c.b16 %v7911, %v7893
  %v8362 = vpack.c.b16 %v7912, %v7894
  %v8363 = vpack.c.b16 %v7913, %v7895
  %v8364 = vpack.c.b16 %v7914, %v7896
  %v8365 = vpack.c.b16 %v7915, %v7897
  %v8366 = vpack.c.b16 %v7916, %v7898
  %v8367 = vpack.c.b16 %v7917, %v7899
  %v8368 = vpack.c.b16 %v7918, %v7900
  %v8369 = vpack.c.b16 %v7937, %v7919
  %v8370 = vpack.c.b16 %v7938, %v7920
  %v8371 = vpack.c.b16 %v7939, %v7921
  %v8372 = vpack.c.b16 %v7940, %v7922
  %v8373 = vpack.c.b16 %v7941, %v7923
  %v8374 = vpack.c.b16 %v7942, %v7924
  %v8375 = vpack.c.b16 %v7943, %v7925
  %v8376 = vpack.c.b16 %v7944, %v7926
  %v8377 = vpack.c.b16 %v7945, %v7927
  %v8378 = vpack.c.b16 %v7946, %v7928
  %v8379 = vpack.c.b16 %v7947, %v7929
  %v8380 = vpack.c.b16 %v7948, %v7930
  %v8381 = vpack.c.b16 %v7949, %v7931
  %v8382 = vpack.c.b16 %v7950, %v7932
  %v8383 = vpack.c.b16 %v7951, %v7933
  %v8384 = vpack.c.b16 %v7952, %v7934
  %v8385 = vpack.c.b16 %v7953, %v7935
  %v8386 = vpack.c.b16 %v7954, %v7936
  %8819 = vmatprep.subr.bf16.mxu0 0
  %8820 = vmatpush1.bf16.msra.mxu0 %v6083
  %8821 = vmatprep.subr.bf16.mxu0 0
  %8822 = vmatpush1.bf16.msra.mxu0 %v6084
  %8823 = vmatprep.subr.bf16.mxu0 0
  %8824 = vmatpush1.bf16.msra.mxu0 %v6085
  %8825 = vmatprep.subr.bf16.mxu0 0
  %8826 = vmatpush1.bf16.msra.mxu0 %v6086
  %8827 = vmatprep.subr.bf16.mxu0 0
  %8828 = vmatpush1.bf16.msra.mxu0 %v6087
  %8829 = vmatprep.subr.bf16.mxu0 0
  %8830 = vmatpush1.bf16.msra.mxu0 %v6088
  %8831 = vmatprep.subr.bf16.mxu0 0
  %8832 = vmatpush1.bf16.msra.mxu0 %v6089
  %8833 = vmatprep.subr.bf16.mxu0 0
  %8834 = vmatpush1.bf16.msra.mxu0 %v6090
  %8835 = vmatprep.subr.bf16.mxu0 0
  %8836 = vmatpush1.bf16.msra.mxu0 %v6091
  %8837 = vmatprep.subr.bf16.mxu0 0
  %8838 = vmatpush1.bf16.msra.mxu0 %v6092
  %8839 = vmatprep.subr.bf16.mxu0 0
  %8840 = vmatpush1.bf16.msra.mxu0 %v6093
  %8841 = vmatprep.subr.bf16.mxu0 0
  %8842 = vmatpush1.bf16.msra.mxu0 %v6094
  %8843 = vmatprep.subr.bf16.mxu0 0
  %8844 = vmatpush1.bf16.msra.mxu0 %v6095
  %8845 = vmatprep.subr.bf16.mxu0 0
  %8846 = vmatpush1.bf16.msra.mxu0 %v6096
  %8847 = vmatprep.subr.bf16.mxu0 0
  %8848 = vmatpush1.bf16.msra.mxu0 %v6097
  %8849 = vmatprep.subr.bf16.mxu0 0
  %8850 = vmatpush1.bf16.msra.mxu0 %v6098
  %8851 = vmatprep.mubr.bf16.mxu0 %v7956
  %8852 = vmatmul.mubr.bf16.gmra.mrb[0].mxu0 %v7955
  %v8853 = vpop.f32.mrb[0].mxu0
  %v8854 = vadd.f32 0.0, %v8853
  %v8855 = vpop.f32.mrb[0].mxu0
  %v8856 = vpop.f32.mrb[0].mxu0
  %v8857 = vadd.f32 0.0, %v8856
  %v8858 = vpop.f32.mrb[0].mxu0
  %8859 = vmatprep.mubr.bf16.mxu0 %v7974
  %8860 = vmatmul.mubr.bf16.gmra.mrb[0].mxu0 %v7973
  %v8861 = vpop.f32.mrb[0].mxu0
  %v8862 = vadd.f32 0.0, %v8861
  %v8863 = vpop.f32.mrb[0].mxu0
  %v8864 = vpop.f32.mrb[0].mxu0
  %v8865 = vadd.f32 0.0, %v8864
  %v8866 = vpop.f32.mrb[0].mxu0
  %8867 = vmatprep.mubr.bf16.mxu0 %v7992
  %8868 = vmatmul.mubr.bf16.gmra.mrb[0].mxu0 %v7991
  %v8869 = vpop.f32.mrb[0].mxu0
  %v8870 = vadd.f32 0.0, %v8869
  %v8871 = vpop.f32.mrb[0].mxu0
  %v8872 = vpop.f32.mrb[0].mxu0
  %v8873 = vadd.f32 0.0, %v8872
  %v8874 = vpop.f32.mrb[0].mxu0
  %8875 = vmatprep.mubr.bf16.mxu0 %v8010
  %8876 = vmatmul.mubr.bf16.gmra.mrb[0].mxu0 %v8009
  %v8877 = vpop.f32.mrb[0].mxu0
  %v8878 = vadd.f32 0.0, %v8877
  %v8879 = vpop.f32.mrb[0].mxu0
  %v8880 = vpop.f32.mrb[0].mxu0
  %v8881 = vadd.f32 0.0, %v8880
  %v8882 = vpop.f32.mrb[0].mxu0
  %8883 = vmatprep.mubr.bf16.mxu0 %v8028
  %8884 = vmatmul.mubr.bf16.gmra.mrb[0].mxu0 %v8027
  %v8885 = vpop.f32.mrb[0].mxu0
  %v8886 = vadd.f32 0.0, %v8885
  %v8887 = vpop.f32.mrb[0].mxu0
  %v8888 = vpop.f32.mrb[0].mxu0
  %v8889 = vadd.f32 0.0, %v8888
  %v8890 = vpop.f32.mrb[0].mxu0
  %8891 = vmatprep.mubr.bf16.mxu0 %v8046
  %8892 = vmatmul.mubr.bf16.gmra.mrb[0].mxu0 %v8045
  %v8893 = vpop.f32.mrb[0].mxu0
  %v8894 = vadd.f32 0.0, %v8893
  %v8895 = vpop.f32.mrb[0].mxu0
  %v8896 = vpop.f32.mrb[0].mxu0
  %v8897 = vadd.f32 0.0, %v8896
  %v8898 = vpop.f32.mrb[0].mxu0
  %8899 = vmatprep.mubr.bf16.mxu0 %v8064
  %8900 = vmatmul.mubr.bf16.gmra.mrb[0].mxu0 %v8063
  %v8901 = vpop.f32.mrb[0].mxu0
  %v8902 = vadd.f32 0.0, %v8901
  %v8903 = vpop.f32.mrb[0].mxu0
  %v8904 = vpop.f32.mrb[0].mxu0
  %v8905 = vadd.f32 0.0, %v8904
  %v8906 = vpop.f32.mrb[0].mxu0
  %8907 = vmatprep.mubr.bf16.mxu0 %v8082
  %8908 = vmatmul.mubr.bf16.gmra.mrb[0].mxu0 %v8081
  %v8909 = vpop.f32.mrb[0].mxu0
  %v8910 = vadd.f32 0.0, %v8909
  %v8911 = vpop.f32.mrb[0].mxu0
  %v8912 = vpop.f32.mrb[0].mxu0
  %v8913 = vadd.f32 0.0, %v8912
  %v8914 = vpop.f32.mrb[0].mxu0
  %8915 = vmatprep.mubr.bf16.mxu0 %v8100
  %8916 = vmatmul.mubr.bf16.gmra.mrb[0].mxu0 %v8099
  %v8917 = vpop.f32.mrb[0].mxu0
  %v8918 = vadd.f32 0.0, %v8917
  %v8919 = vpop.f32.mrb[0].mxu0
  %v8920 = vpop.f32.mrb[0].mxu0
  %v8921 = vadd.f32 0.0, %v8920
  %v8922 = vpop.f32.mrb[0].mxu0
  %8923 = vmatprep.mubr.bf16.mxu0 %v8118
  %8924 = vmatmul.mubr.bf16.gmra.mrb[0].mxu0 %v8117
  %v8925 = vpop.f32.mrb[0].mxu0
  %v8926 = vadd.f32 0.0, %v8925
  %v8927 = vpop.f32.mrb[0].mxu0
  %v8928 = vpop.f32.mrb[0].mxu0
  %v8929 = vadd.f32 0.0, %v8928
  %v8930 = vpop.f32.mrb[0].mxu0
  %8931 = vmatprep.mubr.bf16.mxu0 %v8136
  %8932 = vmatmul.mubr.bf16.gmra.mrb[0].mxu0 %v8135
  %v8933 = vpop.f32.mrb[0].mxu0
  %v8934 = vadd.f32 0.0, %v8933
  %v8935 = vpop.f32.mrb[0].mxu0
  %v8936 = vpop.f32.mrb[0].mxu0
  %v8937 = vadd.f32 0.0, %v8936
  %v8938 = vpop.f32.mrb[0].mxu0
  %8939 = vmatprep.mubr.bf16.mxu0 %v8154
  %8940 = vmatmul.mubr.bf16.gmra.mrb[0].mxu0 %v8153
  %v8941 = vpop.f32.mrb[0].mxu0
  %v8942 = vadd.f32 0.0, %v8941
  %v8943 = vpop.f32.mrb[0].mxu0
  %v8944 = vpop.f32.mrb[0].mxu0
  %v8945 = vadd.f32 0.0, %v8944
  %v8946 = vpop.f32.mrb[0].mxu0
  %8947 = vmatprep.mubr.bf16.mxu0 %v8172
  %8948 = vmatmul.mubr.bf16.gmra.mrb[0].mxu0 %v8171
  %v8949 = vpop.f32.mrb[0].mxu0
  %v8950 = vadd.f32 0.0, %v8949
  %v8951 = vpop.f32.mrb[0].mxu0
  %v8952 = vpop.f32.mrb[0].mxu0
  %v8953 = vadd.f32 0.0, %v8952
  %v8954 = vpop.f32.mrb[0].mxu0
  %8955 = vmatprep.mubr.bf16.mxu0 %v8190
  %8956 = vmatmul.mubr.bf16.gmra.mrb[0].mxu0 %v8189
  %v8957 = vpop.f32.mrb[0].mxu0
  %v8958 = vadd.f32 0.0, %v8957
  %v8959 = vpop.f32.mrb[0].mxu0
  %v8960 = vpop.f32.mrb[0].mxu0
  %v8961 = vadd.f32 0.0, %v8960
  %v8962 = vpop.f32.mrb[0].mxu0
  %8963 = vmatprep.mubr.bf16.mxu0 %v8208
  %8964 = vmatmul.mubr.bf16.gmra.mrb[0].mxu0 %v8207
  %v8965 = vpop.f32.mrb[0].mxu0
  %v8966 = vadd.f32 0.0, %v8965
  %v8967 = vpop.f32.mrb[0].mxu0
  %v8968 = vpop.f32.mrb[0].mxu0
  %v8969 = vadd.f32 0.0, %v8968
  %v8970 = vpop.f32.mrb[0].mxu0
  %8971 = vmatprep.mubr.bf16.mxu0 %v8226
  %8972 = vmatmul.mubr.bf16.gmra.mrb[0].mxu0 %v8225
  %v8973 = vpop.f32.mrb[0].mxu0
  %v8974 = vadd.f32 0.0, %v8973
  %v8975 = vpop.f32.mrb[0].mxu0
  %v8976 = vpop.f32.mrb[0].mxu0
  %v8977 = vadd.f32 0.0, %v8976
  %v8978 = vpop.f32.mrb[0].mxu0
  %8979 = vmatprep.mubr.bf16.mxu0 %v8244
  %8980 = vmatmul.mubr.bf16.gmra.mrb[0].mxu0 %v8243
  %v8981 = vpop.f32.mrb[0].mxu0
  %v8982 = vadd.f32 0.0, %v8981
  %v8983 = vpop.f32.mrb[0].mxu0
  %v8984 = vpop.f32.mrb[0].mxu0
  %v8985 = vadd.f32 0.0, %v8984
  %v8986 = vpop.f32.mrb[0].mxu0
  %8987 = vmatprep.mubr.bf16.mxu0 %v8262
  %8988 = vmatmul.mubr.bf16.gmra.mrb[0].mxu0 %v8261
  %v8989 = vpop.f32.mrb[0].mxu0
  %v8990 = vadd.f32 0.0, %v8989
  %v8991 = vpop.f32.mrb[0].mxu0
  %v8992 = vpop.f32.mrb[0].mxu0
  %v8993 = vadd.f32 0.0, %v8992
  %v8994 = vpop.f32.mrb[0].mxu0
  %8995 = vmatprep.mubr.bf16.mxu0 %v8280
  %8996 = vmatmul.mubr.bf16.gmra.mrb[0].mxu0 %v8279
  %v8997 = vpop.f32.mrb[0].mxu0
  %v8998 = vadd.f32 0.0, %v8997
  %v8999 = vpop.f32.mrb[0].mxu0
  %v9000 = vpop.f32.mrb[0].mxu0
  %v9001 = vadd.f32 0.0, %v9000
  %v9002 = vpop.f32.mrb[0].mxu0
  %9003 = vmatprep.mubr.bf16.mxu0 %v8298
  %9004 = vmatmul.mubr.bf16.gmra.mrb[0].mxu0 %v8297
  %v9005 = vpop.f32.mrb[0].mxu0
  %v9006 = vadd.f32 0.0, %v9005
  %v9007 = vpop.f32.mrb[0].mxu0
  %v9008 = vpop.f32.mrb[0].mxu0
  %v9009 = vadd.f32 0.0, %v9008
  %v9010 = vpop.f32.mrb[0].mxu0
  %9011 = vmatprep.mubr.bf16.mxu0 %v8316
  %9012 = vmatmul.mubr.bf16.gmra.mrb[0].mxu0 %v8315
  %v9013 = vpop.f32.mrb[0].mxu0
  %v9014 = vadd.f32 0.0, %v9013
  %v9015 = vpop.f32.mrb[0].mxu0
  %v9016 = vpop.f32.mrb[0].mxu0
  %v9017 = vadd.f32 0.0, %v9016
  %v9018 = vpop.f32.mrb[0].mxu0
  %9019 = vmatprep.mubr.bf16.mxu0 %v8334
  %9020 = vmatmul.mubr.bf16.gmra.mrb[0].mxu0 %v8333
  %v9021 = vpop.f32.mrb[0].mxu0
  %v9022 = vadd.f32 0.0, %v9021
  %v9023 = vpop.f32.mrb[0].mxu0
  %v9024 = vpop.f32.mrb[0].mxu0
  %v9025 = vadd.f32 0.0, %v9024
  %v9026 = vpop.f32.mrb[0].mxu0
  %9027 = vmatprep.mubr.bf16.mxu0 %v8352
  %9028 = vmatmul.mubr.bf16.gmra.mrb[0].mxu0 %v8351
  %v9029 = vpop.f32.mrb[0].mxu0
  %v9030 = vadd.f32 0.0, %v9029
  %v9031 = vpop.f32.mrb[0].mxu0
  %v9032 = vpop.f32.mrb[0].mxu0
  %v9033 = vadd.f32 0.0, %v9032
  %v9034 = vpop.f32.mrb[0].mxu0
  %9035 = vmatprep.mubr.bf16.mxu0 %v8370
  %9036 = vmatmul.mubr.bf16.gmra.mrb[0].mxu0 %v8369
  %v9037 = vpop.f32.mrb[0].mxu0
  %v9038 = vadd.f32 0.0, %v9037
  %v9039 = vpop.f32.mrb[0].mxu0
  %v9040 = vpop.f32.mrb[0].mxu0
  %v9041 = vadd.f32 0.0, %v9040
  %v9042 = vpop.f32.mrb[0].mxu0
  %9043 = vdwg.mxu0
  %9044 = vmatprep.subr.bf16.mxu0 0
  %9045 = vmatpush1.bf16.msra.mxu0 %v6099
  %9046 = vmatprep.subr.bf16.mxu0 0
  %9047 = vmatpush1.bf16.msra.mxu0 %v6100
  %9048 = vmatprep.subr.bf16.mxu0 0
  %9049 = vmatpush1.bf16.msra.mxu0 %v6101
  %9050 = vmatprep.subr.bf16.mxu0 0
  %9051 = vmatpush1.bf16.msra.mxu0 %v6102
  %9052 = vmatprep.subr.bf16.mxu0 0
  %9053 = vmatpush1.bf16.msra.mxu0 %v6103
  %9054 = vmatprep.subr.bf16.mxu0 0
  %9055 = vmatpush1.bf16.msra.mxu0 %v6104
  %9056 = vmatprep.subr.bf16.mxu0 0
  %9057 = vmatpush1.bf16.msra.mxu0 %v6105
  %9058 = vmatprep.subr.bf16.mxu0 0
  %9059 = vmatpush1.bf16.msra.mxu0 %v6106
  %9060 = vmatprep.subr.bf16.mxu0 0
  %9061 = vmatpush1.bf16.msra.mxu0 %v6107
  %9062 = vmatprep.subr.bf16.mxu0 0
  %9063 = vmatpush1.bf16.msra.mxu0 %v6108
  %9064 = vmatprep.subr.bf16.mxu0 0
  %9065 = vmatpush1.bf16.msra.mxu0 %v6109
  %9066 = vmatprep.subr.bf16.mxu0 0
  %9067 = vmatpush1.bf16.msra.mxu0 %v6110
  %9068 = vmatprep.subr.bf16.mxu0 0
  %9069 = vmatpush1.bf16.msra.mxu0 %v6111
  %9070 = vmatprep.subr.bf16.mxu0 0
  %9071 = vmatpush1.bf16.msra.mxu0 %v6112
  %9072 = vmatprep.subr.bf16.mxu0 0
  %9073 = vmatpush1.bf16.msra.mxu0 %v6113
  %9074 = vmatprep.subr.bf16.mxu0 0
  %9075 = vmatpush1.bf16.msra.mxu0 %v6114
  %9076 = vmatprep.mubr.bf16.mxu0 %v7958
  %9077 = vmatmul.mubr.bf16.gmra.mrb[0].mxu0 %v7957
  %v9078 = vpop.f32.mrb[0].mxu0
  %v9079 = vadd.f32 %v8854, %v9078
  %v9080 = vpop.f32.mrb[0].mxu0
  %v9081 = vpop.f32.mrb[0].mxu0
  %v9082 = vadd.f32 %v8857, %v9081
  %v9083 = vpop.f32.mrb[0].mxu0
  %9084 = vmatprep.mubr.bf16.mxu0 %v7976
  %9085 = vmatmul.mubr.bf16.gmra.mrb[0].mxu0 %v7975
  %v9086 = vpop.f32.mrb[0].mxu0
  %v9087 = vadd.f32 %v8862, %v9086
  %v9088 = vpop.f32.mrb[0].mxu0
  %v9089 = vpop.f32.mrb[0].mxu0
  %v9090 = vadd.f32 %v8865, %v9089
  %v9091 = vpop.f32.mrb[0].mxu0
  %9092 = vmatprep.mubr.bf16.mxu0 %v7994
  %9093 = vmatmul.mubr.bf16.gmra.mrb[0].mxu0 %v7993
  %v9094 = vpop.f32.mrb[0].mxu0
  %v9095 = vadd.f32 %v8870, %v9094
  %v9096 = vpop.f32.mrb[0].mxu0
  %v9097 = vpop.f32.mrb[0].mxu0
  %v9098 = vadd.f32 %v8873, %v9097
  %v9099 = vpop.f32.mrb[0].mxu0
  %9100 = vmatprep.mubr.bf16.mxu0 %v8012
  %9101 = vmatmul.mubr.bf16.gmra.mrb[0].mxu0 %v8011
  %v9102 = vpop.f32.mrb[0].mxu0
  %v9103 = vadd.f32 %v8878, %v9102
  %v9104 = vpop.f32.mrb[0].mxu0
  %v9105 = vpop.f32.mrb[0].mxu0
  %v9106 = vadd.f32 %v8881, %v9105
  %v9107 = vpop.f32.mrb[0].mxu0
  %9108 = vmatprep.mubr.bf16.mxu0 %v8030
  %9109 = vmatmul.mubr.bf16.gmra.mrb[0].mxu0 %v8029
  %v9110 = vpop.f32.mrb[0].mxu0
  %v9111 = vadd.f32 %v8886, %v9110
  %v9112 = vpop.f32.mrb[0].mxu0
  %v9113 = vpop.f32.mrb[0].mxu0
  %v9114 = vadd.f32 %v8889, %v9113
  %v9115 = vpop.f32.mrb[0].mxu0
  %9116 = vmatprep.mubr.bf16.mxu0 %v8048
  %9117 = vmatmul.mubr.bf16.gmra.mrb[0].mxu0 %v8047
  %v9118 = vpop.f32.mrb[0].mxu0
  %v9119 = vadd.f32 %v8894, %v9118
  %v9120 = vpop.f32.mrb[0].mxu0
  %v9121 = vpop.f32.mrb[0].mxu0
  %v9122 = vadd.f32 %v8897, %v9121
  %v9123 = vpop.f32.mrb[0].mxu0
  %9124 = vmatprep.mubr.bf16.mxu0 %v8066
  %9125 = vmatmul.mubr.bf16.gmra.mrb[0].mxu0 %v8065
  %v9126 = vpop.f32.mrb[0].mxu0
  %v9127 = vadd.f32 %v8902, %v9126
  %v9128 = vpop.f32.mrb[0].mxu0
  %v9129 = vpop.f32.mrb[0].mxu0
  %v9130 = vadd.f32 %v8905, %v9129
  %v9131 = vpop.f32.mrb[0].mxu0
  %9132 = vmatprep.mubr.bf16.mxu0 %v8084
  %9133 = vmatmul.mubr.bf16.gmra.mrb[0].mxu0 %v8083
  %v9134 = vpop.f32.mrb[0].mxu0
  %v9135 = vadd.f32 %v8910, %v9134
  %v9136 = vpop.f32.mrb[0].mxu0
  %v9137 = vpop.f32.mrb[0].mxu0
  %v9138 = vadd.f32 %v8913, %v9137
  %v9139 = vpop.f32.mrb[0].mxu0
  %9140 = vmatprep.mubr.bf16.mxu0 %v8102
  %9141 = vmatmul.mubr.bf16.gmra.mrb[0].mxu0 %v8101
  %v9142 = vpop.f32.mrb[0].mxu0
  %v9143 = vadd.f32 %v8918, %v9142
  %v9144 = vpop.f32.mrb[0].mxu0
  %v9145 = vpop.f32.mrb[0].mxu0
  %v9146 = vadd.f32 %v8921, %v9145
  %v9147 = vpop.f32.mrb[0].mxu0
  %9148 = vmatprep.mubr.bf16.mxu0 %v8120
  %9149 = vmatmul.mubr.bf16.gmra.mrb[0].mxu0 %v8119
  %v9150 = vpop.f32.mrb[0].mxu0
  %v9151 = vadd.f32 %v8926, %v9150
  %v9152 = vpop.f32.mrb[0].mxu0
  %v9153 = vpop.f32.mrb[0].mxu0
  %v9154 = vadd.f32 %v8929, %v9153
  %v9155 = vpop.f32.mrb[0].mxu0
  %9156 = vmatprep.mubr.bf16.mxu0 %v8138
  %9157 = vmatmul.mubr.bf16.gmra.mrb[0].mxu0 %v8137
  %v9158 = vpop.f32.mrb[0].mxu0
  %v9159 = vadd.f32 %v8934, %v9158
  %v9160 = vpop.f32.mrb[0].mxu0
  %v9161 = vpop.f32.mrb[0].mxu0
  %v9162 = vadd.f32 %v8937, %v9161
  %v9163 = vpop.f32.mrb[0].mxu0
  %9164 = vmatprep.mubr.bf16.mxu0 %v8156
  %9165 = vmatmul.mubr.bf16.gmra.mrb[0].mxu0 %v8155
  %v9166 = vpop.f32.mrb[0].mxu0
  %v9167 = vadd.f32 %v8942, %v9166
  %v9168 = vpop.f32.mrb[0].mxu0
  %v9169 = vpop.f32.mrb[0].mxu0
  %v9170 = vadd.f32 %v8945, %v9169
  %v9171 = vpop.f32.mrb[0].mxu0
  %9172 = vmatprep.mubr.bf16.mxu0 %v8174
  %9173 = vmatmul.mubr.bf16.gmra.mrb[0].mxu0 %v8173
  %v9174 = vpop.f32.mrb[0].mxu0
  %v9175 = vadd.f32 %v8950, %v9174
  %v9176 = vpop.f32.mrb[0].mxu0
  %v9177 = vpop.f32.mrb[0].mxu0
  %v9178 = vadd.f32 %v8953, %v9177
  %v9179 = vpop.f32.mrb[0].mxu0
  %9180 = vmatprep.mubr.bf16.mxu0 %v8192
  %9181 = vmatmul.mubr.bf16.gmra.mrb[0].mxu0 %v8191
  %v9182 = vpop.f32.mrb[0].mxu0
  %v9183 = vadd.f32 %v8958, %v9182
  %v9184 = vpop.f32.mrb[0].mxu0
  %v9185 = vpop.f32.mrb[0].mxu0
  %v9186 = vadd.f32 %v8961, %v9185
  %v9187 = vpop.f32.mrb[0].mxu0
  %9188 = vmatprep.mubr.bf16.mxu0 %v8210
  %9189 = vmatmul.mubr.bf16.gmra.mrb[0].mxu0 %v8209
  %v9190 = vpop.f32.mrb[0].mxu0
  %v9191 = vadd.f32 %v8966, %v9190
  %v9192 = vpop.f32.mrb[0].mxu0
  %v9193 = vpop.f32.mrb[0].mxu0
  %v9194 = vadd.f32 %v8969, %v9193
  %v9195 = vpop.f32.mrb[0].mxu0
  %9196 = vmatprep.mubr.bf16.mxu0 %v8228
  %9197 = vmatmul.mubr.bf16.gmra.mrb[0].mxu0 %v8227
  %v9198 = vpop.f32.mrb[0].mxu0
  %v9199 = vadd.f32 %v8974, %v9198
  %v9200 = vpop.f32.mrb[0].mxu0
  %v9201 = vpop.f32.mrb[0].mxu0
  %v9202 = vadd.f32 %v8977, %v9201
  %v9203 = vpop.f32.mrb[0].mxu0
  %9204 = vmatprep.mubr.bf16.mxu0 %v8246
  %9205 = vmatmul.mubr.bf16.gmra.mrb[0].mxu0 %v8245
  %v9206 = vpop.f32.mrb[0].mxu0
  %v9207 = vadd.f32 %v8982, %v9206
  %v9208 = vpop.f32.mrb[0].mxu0
  %v9209 = vpop.f32.mrb[0].mxu0
  %v9210 = vadd.f32 %v8985, %v9209
  %v9211 = vpop.f32.mrb[0].mxu0
  %9212 = vmatprep.mubr.bf16.mxu0 %v8264
  %9213 = vmatmul.mubr.bf16.gmra.mrb[0].mxu0 %v8263
  %v9214 = vpop.f32.mrb[0].mxu0
  %v9215 = vadd.f32 %v8990, %v9214
  %v9216 = vpop.f32.mrb[0].mxu0
  %v9217 = vpop.f32.mrb[0].mxu0
  %v9218 = vadd.f32 %v8993, %v9217
  %v9219 = vpop.f32.mrb[0].mxu0
  %9220 = vmatprep.mubr.bf16.mxu0 %v8282
  %9221 = vmatmul.mubr.bf16.gmra.mrb[0].mxu0 %v8281
  %v9222 = vpop.f32.mrb[0].mxu0
  %v9223 = vadd.f32 %v8998, %v9222
  %v9224 = vpop.f32.mrb[0].mxu0
  %v9225 = vpop.f32.mrb[0].mxu0
  %v9226 = vadd.f32 %v9001, %v9225
  %v9227 = vpop.f32.mrb[0].mxu0
  %9228 = vmatprep.mubr.bf16.mxu0 %v8300
  %9229 = vmatmul.mubr.bf16.gmra.mrb[0].mxu0 %v8299
  %v9230 = vpop.f32.mrb[0].mxu0
  %v9231 = vadd.f32 %v9006, %v9230
  %v9232 = vpop.f32.mrb[0].mxu0
  %v9233 = vpop.f32.mrb[0].mxu0
  %v9234 = vadd.f32 %v9009, %v9233
  %v9235 = vpop.f32.mrb[0].mxu0
  %9236 = vmatprep.mubr.bf16.mxu0 %v8318
  %9237 = vmatmul.mubr.bf16.gmra.mrb[0].mxu0 %v8317
  %v9238 = vpop.f32.mrb[0].mxu0
  %v9239 = vadd.f32 %v9014, %v9238
  %v9240 = vpop.f32.mrb[0].mxu0
  %v9241 = vpop.f32.mrb[0].mxu0
  %v9242 = vadd.f32 %v9017, %v9241
  %v9243 = vpop.f32.mrb[0].mxu0
  %9244 = vmatprep.mubr.bf16.mxu0 %v8336
  %9245 = vmatmul.mubr.bf16.gmra.mrb[0].mxu0 %v8335
  %v9246 = vpop.f32.mrb[0].mxu0
  %v9247 = vadd.f32 %v9022, %v9246
  %v9248 = vpop.f32.mrb[0].mxu0
  %v9249 = vpop.f32.mrb[0].mxu0
  %v9250 = vadd.f32 %v9025, %v9249
  %v9251 = vpop.f32.mrb[0].mxu0
  %9252 = vmatprep.mubr.bf16.mxu0 %v8354
  %9253 = vmatmul.mubr.bf16.gmra.mrb[0].mxu0 %v8353
  %v9254 = vpop.f32.mrb[0].mxu0
  %v9255 = vadd.f32 %v9030, %v9254
  %v9256 = vpop.f32.mrb[0].mxu0
  %v9257 = vpop.f32.mrb[0].mxu0
  %v9258 = vadd.f32 %v9033, %v9257
  %v9259 = vpop.f32.mrb[0].mxu0
  %9260 = vmatprep.mubr.bf16.mxu0 %v8372
  %9261 = vmatmul.mubr.bf16.gmra.mrb[0].mxu0 %v8371
  %v9262 = vpop.f32.mrb[0].mxu0
  %v9263 = vadd.f32 %v9038, %v9262
  %v9264 = vpop.f32.mrb[0].mxu0
  %v9265 = vpop.f32.mrb[0].mxu0
  %v9266 = vadd.f32 %v9041, %v9265
  %v9267 = vpop.f32.mrb[0].mxu0
  %9268 = vdwg.mxu0
  %9269 = vmatprep.subr.bf16.mxu0 0
  %9270 = vmatpush1.bf16.msra.mxu0 %v6115
  %9271 = vmatprep.subr.bf16.mxu0 0
  %9272 = vmatpush1.bf16.msra.mxu0 %v6116
  %9273 = vmatprep.subr.bf16.mxu0 0
  %9274 = vmatpush1.bf16.msra.mxu0 %v6117
  %9275 = vmatprep.subr.bf16.mxu0 0
  %9276 = vmatpush1.bf16.msra.mxu0 %v6118
  %9277 = vmatprep.subr.bf16.mxu0 0
  %9278 = vmatpush1.bf16.msra.mxu0 %v6119
  %9279 = vmatprep.subr.bf16.mxu0 0
  %9280 = vmatpush1.bf16.msra.mxu0 %v6120
  %9281 = vmatprep.subr.bf16.mxu0 0
  %9282 = vmatpush1.bf16.msra.mxu0 %v6121
  %9283 = vmatprep.subr.bf16.mxu0 0
  %9284 = vmatpush1.bf16.msra.mxu0 %v6122
  %9285 = vmatprep.subr.bf16.mxu0 0
  %9286 = vmatpush1.bf16.msra.mxu0 %v6123
  %9287 = vmatprep.subr.bf16.mxu0 0
  %9288 = vmatpush1.bf16.msra.mxu0 %v6124
  %9289 = vmatprep.subr.bf16.mxu0 0
  %9290 = vmatpush1.bf16.msra.mxu0 %v6125
  %9291 = vmatprep.subr.bf16.mxu0 0
  %9292 = vmatpush1.bf16.msra.mxu0 %v6126
  %9293 = vmatprep.subr.bf16.mxu0 0
  %9294 = vmatpush1.bf16.msra.mxu0 %v6127
  %9295 = vmatprep.subr.bf16.mxu0 0
  %9296 = vmatpush1.bf16.msra.mxu0 %v6128
  %9297 = vmatprep.subr.bf16.mxu0 0
  %9298 = vmatpush1.bf16.msra.mxu0 %v6129
  %9299 = vmatprep.subr.bf16.mxu0 0
  %9300 = vmatpush1.bf16.msra.mxu0 %v6130
  %9301 = vmatprep.mubr.bf16.mxu0 %v7960
  %9302 = vmatmul.mubr.bf16.gmra.mrb[0].mxu0 %v7959
  %v9303 = vpop.f32.mrb[0].mxu0
  %v9304 = vadd.f32 %v9079, %v9303
  %v9305 = vpop.f32.mrb[0].mxu0
  %v9306 = vpop.f32.mrb[0].mxu0
  %v9307 = vadd.f32 %v9082, %v9306
  %v9308 = vpop.f32.mrb[0].mxu0
  %9309 = vmatprep.mubr.bf16.mxu0 %v7978
  %9310 = vmatmul.mubr.bf16.gmra.mrb[0].mxu0 %v7977
  %v9311 = vpop.f32.mrb[0].mxu0
  %v9312 = vadd.f32 %v9087, %v9311
  %v9313 = vpop.f32.mrb[0].mxu0
  %v9314 = vpop.f32.mrb[0].mxu0
  %v9315 = vadd.f32 %v9090, %v9314
  %v9316 = vpop.f32.mrb[0].mxu0
  %9317 = vmatprep.mubr.bf16.mxu0 %v7996
  %9318 = vmatmul.mubr.bf16.gmra.mrb[0].mxu0 %v7995
  %v9319 = vpop.f32.mrb[0].mxu0
  %v9320 = vadd.f32 %v9095, %v9319
  %v9321 = vpop.f32.mrb[0].mxu0
  %v9322 = vpop.f32.mrb[0].mxu0
  %v9323 = vadd.f32 %v9098, %v9322
  %v9324 = vpop.f32.mrb[0].mxu0
  %9325 = vmatprep.mubr.bf16.mxu0 %v8014
  %9326 = vmatmul.mubr.bf16.gmra.mrb[0].mxu0 %v8013
  %v9327 = vpop.f32.mrb[0].mxu0
  %v9328 = vadd.f32 %v9103, %v9327
  %v9329 = vpop.f32.mrb[0].mxu0
  %v9330 = vpop.f32.mrb[0].mxu0
  %v9331 = vadd.f32 %v9106, %v9330
  %v9332 = vpop.f32.mrb[0].mxu0
  %9333 = vmatprep.mubr.bf16.mxu0 %v8032
  %9334 = vmatmul.mubr.bf16.gmra.mrb[0].mxu0 %v8031
  %v9335 = vpop.f32.mrb[0].mxu0
  %v9336 = vadd.f32 %v9111, %v9335
  %v9337 = vpop.f32.mrb[0].mxu0
  %v9338 = vpop.f32.mrb[0].mxu0
  %v9339 = vadd.f32 %v9114, %v9338
  %v9340 = vpop.f32.mrb[0].mxu0
  %9341 = vmatprep.mubr.bf16.mxu0 %v8050
  %9342 = vmatmul.mubr.bf16.gmra.mrb[0].mxu0 %v8049
  %v9343 = vpop.f32.mrb[0].mxu0
  %v9344 = vadd.f32 %v9119, %v9343
  %v9345 = vpop.f32.mrb[0].mxu0
  %v9346 = vpop.f32.mrb[0].mxu0
  %v9347 = vadd.f32 %v9122, %v9346
  %v9348 = vpop.f32.mrb[0].mxu0
  %9349 = vmatprep.mubr.bf16.mxu0 %v8068
  %9350 = vmatmul.mubr.bf16.gmra.mrb[0].mxu0 %v8067
  %v9351 = vpop.f32.mrb[0].mxu0
  %v9352 = vadd.f32 %v9127, %v9351
  %v9353 = vpop.f32.mrb[0].mxu0
  %v9354 = vpop.f32.mrb[0].mxu0
  %v9355 = vadd.f32 %v9130, %v9354
  %v9356 = vpop.f32.mrb[0].mxu0
  %9357 = vmatprep.mubr.bf16.mxu0 %v8086
  %9358 = vmatmul.mubr.bf16.gmra.mrb[0].mxu0 %v8085
  %v9359 = vpop.f32.mrb[0].mxu0
  %v9360 = vadd.f32 %v9135, %v9359
  %v9361 = vpop.f32.mrb[0].mxu0
  %v9362 = vpop.f32.mrb[0].mxu0
  %v9363 = vadd.f32 %v9138, %v9362
  %v9364 = vpop.f32.mrb[0].mxu0
  %9365 = vmatprep.mubr.bf16.mxu0 %v8104
  %9366 = vmatmul.mubr.bf16.gmra.mrb[0].mxu0 %v8103
  %v9367 = vpop.f32.mrb[0].mxu0
  %v9368 = vadd.f32 %v9143, %v9367
  %v9369 = vpop.f32.mrb[0].mxu0
  %v9370 = vpop.f32.mrb[0].mxu0
  %v9371 = vadd.f32 %v9146, %v9370
  %v9372 = vpop.f32.mrb[0].mxu0
  %9373 = vmatprep.mubr.bf16.mxu0 %v8122
  %9374 = vmatmul.mubr.bf16.gmra.mrb[0].mxu0 %v8121
  %v9375 = vpop.f32.mrb[0].mxu0
  %v9376 = vadd.f32 %v9151, %v9375
  %v9377 = vpop.f32.mrb[0].mxu0
  %v9378 = vpop.f32.mrb[0].mxu0
  %v9379 = vadd.f32 %v9154, %v9378
  %v9380 = vpop.f32.mrb[0].mxu0
  %9381 = vmatprep.mubr.bf16.mxu0 %v8140
  %9382 = vmatmul.mubr.bf16.gmra.mrb[0].mxu0 %v8139
  %v9383 = vpop.f32.mrb[0].mxu0
  %v9384 = vadd.f32 %v9159, %v9383
  %v9385 = vpop.f32.mrb[0].mxu0
  %v9386 = vpop.f32.mrb[0].mxu0
  %v9387 = vadd.f32 %v9162, %v9386
  %v9388 = vpop.f32.mrb[0].mxu0
  %9389 = vmatprep.mubr.bf16.mxu0 %v8158
  %9390 = vmatmul.mubr.bf16.gmra.mrb[0].mxu0 %v8157
  %v9391 = vpop.f32.mrb[0].mxu0
  %v9392 = vadd.f32 %v9167, %v9391
  %v9393 = vpop.f32.mrb[0].mxu0
  %v9394 = vpop.f32.mrb[0].mxu0
  %v9395 = vadd.f32 %v9170, %v9394
  %v9396 = vpop.f32.mrb[0].mxu0
  %9397 = vmatprep.mubr.bf16.mxu0 %v8176
  %9398 = vmatmul.mubr.bf16.gmra.mrb[0].mxu0 %v8175
  %v9399 = vpop.f32.mrb[0].mxu0
  %v9400 = vadd.f32 %v9175, %v9399
  %v9401 = vpop.f32.mrb[0].mxu0
  %v9402 = vpop.f32.mrb[0].mxu0
  %v9403 = vadd.f32 %v9178, %v9402
  %v9404 = vpop.f32.mrb[0].mxu0
  %9405 = vmatprep.mubr.bf16.mxu0 %v8194
  %9406 = vmatmul.mubr.bf16.gmra.mrb[0].mxu0 %v8193
  %v9407 = vpop.f32.mrb[0].mxu0
  %v9408 = vadd.f32 %v9183, %v9407
  %v9409 = vpop.f32.mrb[0].mxu0
  %v9410 = vpop.f32.mrb[0].mxu0
  %v9411 = vadd.f32 %v9186, %v9410
  %v9412 = vpop.f32.mrb[0].mxu0
  %9413 = vmatprep.mubr.bf16.mxu0 %v8212
  %9414 = vmatmul.mubr.bf16.gmra.mrb[0].mxu0 %v8211
  %v9415 = vpop.f32.mrb[0].mxu0
  %v9416 = vadd.f32 %v9191, %v9415
  %v9417 = vpop.f32.mrb[0].mxu0
  %v9418 = vpop.f32.mrb[0].mxu0
  %v9419 = vadd.f32 %v9194, %v9418
  %v9420 = vpop.f32.mrb[0].mxu0
  %9421 = vmatprep.mubr.bf16.mxu0 %v8230
  %9422 = vmatmul.mubr.bf16.gmra.mrb[0].mxu0 %v8229
  %v9423 = vpop.f32.mrb[0].mxu0
  %v9424 = vadd.f32 %v9199, %v9423
  %v9425 = vpop.f32.mrb[0].mxu0
  %v9426 = vpop.f32.mrb[0].mxu0
  %v9427 = vadd.f32 %v9202, %v9426
  %v9428 = vpop.f32.mrb[0].mxu0
  %9429 = vmatprep.mubr.bf16.mxu0 %v8248
  %9430 = vmatmul.mubr.bf16.gmra.mrb[0].mxu0 %v8247
  %v9431 = vpop.f32.mrb[0].mxu0
  %v9432 = vadd.f32 %v9207, %v9431
  %v9433 = vpop.f32.mrb[0].mxu0
  %v9434 = vpop.f32.mrb[0].mxu0
  %v9435 = vadd.f32 %v9210, %v9434
  %v9436 = vpop.f32.mrb[0].mxu0
  %9437 = vmatprep.mubr.bf16.mxu0 %v8266
  %9438 = vmatmul.mubr.bf16.gmra.mrb[0].mxu0 %v8265
  %v9439 = vpop.f32.mrb[0].mxu0
  %v9440 = vadd.f32 %v9215, %v9439
  %v9441 = vpop.f32.mrb[0].mxu0
  %v9442 = vpop.f32.mrb[0].mxu0
  %v9443 = vadd.f32 %v9218, %v9442
  %v9444 = vpop.f32.mrb[0].mxu0
  %9445 = vmatprep.mubr.bf16.mxu0 %v8284
  %9446 = vmatmul.mubr.bf16.gmra.mrb[0].mxu0 %v8283
  %v9447 = vpop.f32.mrb[0].mxu0
  %v9448 = vadd.f32 %v9223, %v9447
  %v9449 = vpop.f32.mrb[0].mxu0
  %v9450 = vpop.f32.mrb[0].mxu0
  %v9451 = vadd.f32 %v9226, %v9450
  %v9452 = vpop.f32.mrb[0].mxu0
  %9453 = vmatprep.mubr.bf16.mxu0 %v8302
  %9454 = vmatmul.mubr.bf16.gmra.mrb[0].mxu0 %v8301
  %v9455 = vpop.f32.mrb[0].mxu0
  %v9456 = vadd.f32 %v9231, %v9455
  %v9457 = vpop.f32.mrb[0].mxu0
  %v9458 = vpop.f32.mrb[0].mxu0
  %v9459 = vadd.f32 %v9234, %v9458
  %v9460 = vpop.f32.mrb[0].mxu0
  %9461 = vmatprep.mubr.bf16.mxu0 %v8320
  %9462 = vmatmul.mubr.bf16.gmra.mrb[0].mxu0 %v8319
  %v9463 = vpop.f32.mrb[0].mxu0
  %v9464 = vadd.f32 %v9239, %v9463
  %v9465 = vpop.f32.mrb[0].mxu0
  %v9466 = vpop.f32.mrb[0].mxu0
  %v9467 = vadd.f32 %v9242, %v9466
  %v9468 = vpop.f32.mrb[0].mxu0
  %9469 = vmatprep.mubr.bf16.mxu0 %v8338
  %9470 = vmatmul.mubr.bf16.gmra.mrb[0].mxu0 %v8337
  %v9471 = vpop.f32.mrb[0].mxu0
  %v9472 = vadd.f32 %v9247, %v9471
  %v9473 = vpop.f32.mrb[0].mxu0
  %v9474 = vpop.f32.mrb[0].mxu0
  %v9475 = vadd.f32 %v9250, %v9474
  %v9476 = vpop.f32.mrb[0].mxu0
  %9477 = vmatprep.mubr.bf16.mxu0 %v8356
  %9478 = vmatmul.mubr.bf16.gmra.mrb[0].mxu0 %v8355
  %v9479 = vpop.f32.mrb[0].mxu0
  %v9480 = vadd.f32 %v9255, %v9479
  %v9481 = vpop.f32.mrb[0].mxu0
  %v9482 = vpop.f32.mrb[0].mxu0
  %v9483 = vadd.f32 %v9258, %v9482
  %v9484 = vpop.f32.mrb[0].mxu0
  %9485 = vmatprep.mubr.bf16.mxu0 %v8374
  %9486 = vmatmul.mubr.bf16.gmra.mrb[0].mxu0 %v8373
  %v9487 = vpop.f32.mrb[0].mxu0
  %v9488 = vadd.f32 %v9263, %v9487
  %v9489 = vpop.f32.mrb[0].mxu0
  %v9490 = vpop.f32.mrb[0].mxu0
  %v9491 = vadd.f32 %v9266, %v9490
  %v9492 = vpop.f32.mrb[0].mxu0
  %9493 = vdwg.mxu0
  %9494 = vmatprep.subr.bf16.mxu0 0
  %9495 = vmatpush1.bf16.msra.mxu0 %v6131
  %9496 = vmatprep.subr.bf16.mxu0 0
  %9497 = vmatpush1.bf16.msra.mxu0 %v6132
  %9498 = vmatprep.subr.bf16.mxu0 0
  %9499 = vmatpush1.bf16.msra.mxu0 %v6133
  %9500 = vmatprep.subr.bf16.mxu0 0
  %9501 = vmatpush1.bf16.msra.mxu0 %v6134
  %9502 = vmatprep.subr.bf16.mxu0 0
  %9503 = vmatpush1.bf16.msra.mxu0 %v6135
  %9504 = vmatprep.subr.bf16.mxu0 0
  %9505 = vmatpush1.bf16.msra.mxu0 %v6136
  %9506 = vmatprep.subr.bf16.mxu0 0
  %9507 = vmatpush1.bf16.msra.mxu0 %v6137
  %9508 = vmatprep.subr.bf16.mxu0 0
  %9509 = vmatpush1.bf16.msra.mxu0 %v6138
  %9510 = vmatprep.subr.bf16.mxu0 0
  %9511 = vmatpush1.bf16.msra.mxu0 %v6139
  %9512 = vmatprep.subr.bf16.mxu0 0
  %9513 = vmatpush1.bf16.msra.mxu0 %v6140
  %9514 = vmatprep.subr.bf16.mxu0 0
  %9515 = vmatpush1.bf16.msra.mxu0 %v6141
  %9516 = vmatprep.subr.bf16.mxu0 0
  %9517 = vmatpush1.bf16.msra.mxu0 %v6142
  %9518 = vmatprep.subr.bf16.mxu0 0
  %9519 = vmatpush1.bf16.msra.mxu0 %v6143
  %9520 = vmatprep.subr.bf16.mxu0 0
  %9521 = vmatpush1.bf16.msra.mxu0 %v6144
  %9522 = vmatprep.subr.bf16.mxu0 0
  %9523 = vmatpush1.bf16.msra.mxu0 %v6145
  %9524 = vmatprep.subr.bf16.mxu0 0
  %9525 = vmatpush1.bf16.msra.mxu0 %v6146
  %9526 = vmatprep.mubr.bf16.mxu0 %v7962
  %9527 = vmatmul.mubr.bf16.gmra.mrb[0].mxu0 %v7961
  %v9528 = vpop.f32.mrb[0].mxu0
  %v9529 = vadd.f32 %v9304, %v9528
  %v9530 = vpop.f32.mrb[0].mxu0
  %v9531 = vpop.f32.mrb[0].mxu0
  %v9532 = vadd.f32 %v9307, %v9531
  %v9533 = vpop.f32.mrb[0].mxu0
  %9534 = vmatprep.mubr.bf16.mxu0 %v7980
  %9535 = vmatmul.mubr.bf16.gmra.mrb[0].mxu0 %v7979
  %v9536 = vpop.f32.mrb[0].mxu0
  %v9537 = vadd.f32 %v9312, %v9536
  %v9538 = vpop.f32.mrb[0].mxu0
  %v9539 = vpop.f32.mrb[0].mxu0
  %v9540 = vadd.f32 %v9315, %v9539
  %v9541 = vpop.f32.mrb[0].mxu0
  %9542 = vmatprep.mubr.bf16.mxu0 %v7998
  %9543 = vmatmul.mubr.bf16.gmra.mrb[0].mxu0 %v7997
  %v9544 = vpop.f32.mrb[0].mxu0
  %v9545 = vadd.f32 %v9320, %v9544
  %v9546 = vpop.f32.mrb[0].mxu0
  %v9547 = vpop.f32.mrb[0].mxu0
  %v9548 = vadd.f32 %v9323, %v9547
  %v9549 = vpop.f32.mrb[0].mxu0
  %9550 = vmatprep.mubr.bf16.mxu0 %v8016
  %9551 = vmatmul.mubr.bf16.gmra.mrb[0].mxu0 %v8015
  %v9552 = vpop.f32.mrb[0].mxu0
  %v9553 = vadd.f32 %v9328, %v9552
  %v9554 = vpop.f32.mrb[0].mxu0
  %v9555 = vpop.f32.mrb[0].mxu0
  %v9556 = vadd.f32 %v9331, %v9555
  %v9557 = vpop.f32.mrb[0].mxu0
  %9558 = vmatprep.mubr.bf16.mxu0 %v8034
  %9559 = vmatmul.mubr.bf16.gmra.mrb[0].mxu0 %v8033
  %v9560 = vpop.f32.mrb[0].mxu0
  %v9561 = vadd.f32 %v9336, %v9560
  %v9562 = vpop.f32.mrb[0].mxu0
  %v9563 = vpop.f32.mrb[0].mxu0
  %v9564 = vadd.f32 %v9339, %v9563
  %v9565 = vpop.f32.mrb[0].mxu0
  %9566 = vmatprep.mubr.bf16.mxu0 %v8052
  %9567 = vmatmul.mubr.bf16.gmra.mrb[0].mxu0 %v8051
  %v9568 = vpop.f32.mrb[0].mxu0
  %v9569 = vadd.f32 %v9344, %v9568
  %v9570 = vpop.f32.mrb[0].mxu0
  %v9571 = vpop.f32.mrb[0].mxu0
  %v9572 = vadd.f32 %v9347, %v9571
  %v9573 = vpop.f32.mrb[0].mxu0
  %9574 = vmatprep.mubr.bf16.mxu0 %v8070
  %9575 = vmatmul.mubr.bf16.gmra.mrb[0].mxu0 %v8069
  %v9576 = vpop.f32.mrb[0].mxu0
  %v9577 = vadd.f32 %v9352, %v9576
  %v9578 = vpop.f32.mrb[0].mxu0
  %v9579 = vpop.f32.mrb[0].mxu0
  %v9580 = vadd.f32 %v9355, %v9579
  %v9581 = vpop.f32.mrb[0].mxu0
  %9582 = vmatprep.mubr.bf16.mxu0 %v8088
  %9583 = vmatmul.mubr.bf16.gmra.mrb[0].mxu0 %v8087
  %v9584 = vpop.f32.mrb[0].mxu0
  %v9585 = vadd.f32 %v9360, %v9584
  %v9586 = vpop.f32.mrb[0].mxu0
  %v9587 = vpop.f32.mrb[0].mxu0
  %v9588 = vadd.f32 %v9363, %v9587
  %v9589 = vpop.f32.mrb[0].mxu0
  %9590 = vmatprep.mubr.bf16.mxu0 %v8106
  %9591 = vmatmul.mubr.bf16.gmra.mrb[0].mxu0 %v8105
  %v9592 = vpop.f32.mrb[0].mxu0
  %v9593 = vadd.f32 %v9368, %v9592
  %v9594 = vpop.f32.mrb[0].mxu0
  %v9595 = vpop.f32.mrb[0].mxu0
  %v9596 = vadd.f32 %v9371, %v9595
  %v9597 = vpop.f32.mrb[0].mxu0
  %9598 = vmatprep.mubr.bf16.mxu0 %v8124
  %9599 = vmatmul.mubr.bf16.gmra.mrb[0].mxu0 %v8123
  %v9600 = vpop.f32.mrb[0].mxu0
  %v9601 = vadd.f32 %v9376, %v9600
  %v9602 = vpop.f32.mrb[0].mxu0
  %v9603 = vpop.f32.mrb[0].mxu0
  %v9604 = vadd.f32 %v9379, %v9603
  %v9605 = vpop.f32.mrb[0].mxu0
  %9606 = vmatprep.mubr.bf16.mxu0 %v8142
  %9607 = vmatmul.mubr.bf16.gmra.mrb[0].mxu0 %v8141
  %v9608 = vpop.f32.mrb[0].mxu0
  %v9609 = vadd.f32 %v9384, %v9608
  %v9610 = vpop.f32.mrb[0].mxu0
  %v9611 = vpop.f32.mrb[0].mxu0
  %v9612 = vadd.f32 %v9387, %v9611
  %v9613 = vpop.f32.mrb[0].mxu0
  %9614 = vmatprep.mubr.bf16.mxu0 %v8160
  %9615 = vmatmul.mubr.bf16.gmra.mrb[0].mxu0 %v8159
  %v9616 = vpop.f32.mrb[0].mxu0
  %v9617 = vadd.f32 %v9392, %v9616
  %v9618 = vpop.f32.mrb[0].mxu0
  %v9619 = vpop.f32.mrb[0].mxu0
  %v9620 = vadd.f32 %v9395, %v9619
  %v9621 = vpop.f32.mrb[0].mxu0
  %9622 = vmatprep.mubr.bf16.mxu0 %v8178
  %9623 = vmatmul.mubr.bf16.gmra.mrb[0].mxu0 %v8177
  %v9624 = vpop.f32.mrb[0].mxu0
  %v9625 = vadd.f32 %v9400, %v9624
  %v9626 = vpop.f32.mrb[0].mxu0
  %v9627 = vpop.f32.mrb[0].mxu0
  %v9628 = vadd.f32 %v9403, %v9627
  %v9629 = vpop.f32.mrb[0].mxu0
  %9630 = vmatprep.mubr.bf16.mxu0 %v8196
  %9631 = vmatmul.mubr.bf16.gmra.mrb[0].mxu0 %v8195
  %v9632 = vpop.f32.mrb[0].mxu0
  %v9633 = vadd.f32 %v9408, %v9632
  %v9634 = vpop.f32.mrb[0].mxu0
  %v9635 = vpop.f32.mrb[0].mxu0
  %v9636 = vadd.f32 %v9411, %v9635
  %v9637 = vpop.f32.mrb[0].mxu0
  %9638 = vmatprep.mubr.bf16.mxu0 %v8214
  %9639 = vmatmul.mubr.bf16.gmra.mrb[0].mxu0 %v8213
  %v9640 = vpop.f32.mrb[0].mxu0
  %v9641 = vadd.f32 %v9416, %v9640
  %v9642 = vpop.f32.mrb[0].mxu0
  %v9643 = vpop.f32.mrb[0].mxu0
  %v9644 = vadd.f32 %v9419, %v9643
  %v9645 = vpop.f32.mrb[0].mxu0
  %9646 = vmatprep.mubr.bf16.mxu0 %v8232
  %9647 = vmatmul.mubr.bf16.gmra.mrb[0].mxu0 %v8231
  %v9648 = vpop.f32.mrb[0].mxu0
  %v9649 = vadd.f32 %v9424, %v9648
  %v9650 = vpop.f32.mrb[0].mxu0
  %v9651 = vpop.f32.mrb[0].mxu0
  %v9652 = vadd.f32 %v9427, %v9651
  %v9653 = vpop.f32.mrb[0].mxu0
  %9654 = vmatprep.mubr.bf16.mxu0 %v8250
  %9655 = vmatmul.mubr.bf16.gmra.mrb[0].mxu0 %v8249
  %v9656 = vpop.f32.mrb[0].mxu0
  %v9657 = vadd.f32 %v9432, %v9656
  %v9658 = vpop.f32.mrb[0].mxu0
  %v9659 = vpop.f32.mrb[0].mxu0
  %v9660 = vadd.f32 %v9435, %v9659
  %v9661 = vpop.f32.mrb[0].mxu0
  %9662 = vmatprep.mubr.bf16.mxu0 %v8268
  %9663 = vmatmul.mubr.bf16.gmra.mrb[0].mxu0 %v8267
  %v9664 = vpop.f32.mrb[0].mxu0
  %v9665 = vadd.f32 %v9440, %v9664
  %v9666 = vpop.f32.mrb[0].mxu0
  %v9667 = vpop.f32.mrb[0].mxu0
  %v9668 = vadd.f32 %v9443, %v9667
  %v9669 = vpop.f32.mrb[0].mxu0
  %9670 = vmatprep.mubr.bf16.mxu0 %v8286
  %9671 = vmatmul.mubr.bf16.gmra.mrb[0].mxu0 %v8285
  %v9672 = vpop.f32.mrb[0].mxu0
  %v9673 = vadd.f32 %v9448, %v9672
  %v9674 = vpop.f32.mrb[0].mxu0
  %v9675 = vpop.f32.mrb[0].mxu0
  %v9676 = vadd.f32 %v9451, %v9675
  %v9677 = vpop.f32.mrb[0].mxu0
  %9678 = vmatprep.mubr.bf16.mxu0 %v8304
  %9679 = vmatmul.mubr.bf16.gmra.mrb[0].mxu0 %v8303
  %v9680 = vpop.f32.mrb[0].mxu0
  %v9681 = vadd.f32 %v9456, %v9680
  %v9682 = vpop.f32.mrb[0].mxu0
  %v9683 = vpop.f32.mrb[0].mxu0
  %v9684 = vadd.f32 %v9459, %v9683
  %v9685 = vpop.f32.mrb[0].mxu0
  %9686 = vmatprep.mubr.bf16.mxu0 %v8322
  %9687 = vmatmul.mubr.bf16.gmra.mrb[0].mxu0 %v8321
  %v9688 = vpop.f32.mrb[0].mxu0
  %v9689 = vadd.f32 %v9464, %v9688
  %v9690 = vpop.f32.mrb[0].mxu0
  %v9691 = vpop.f32.mrb[0].mxu0
  %v9692 = vadd.f32 %v9467, %v9691
  %v9693 = vpop.f32.mrb[0].mxu0
  %9694 = vmatprep.mubr.bf16.mxu0 %v8340
  %9695 = vmatmul.mubr.bf16.gmra.mrb[0].mxu0 %v8339
  %v9696 = vpop.f32.mrb[0].mxu0
  %v9697 = vadd.f32 %v9472, %v9696
  %v9698 = vpop.f32.mrb[0].mxu0
  %v9699 = vpop.f32.mrb[0].mxu0
  %v9700 = vadd.f32 %v9475, %v9699
  %v9701 = vpop.f32.mrb[0].mxu0
  %9702 = vmatprep.mubr.bf16.mxu0 %v8358
  %9703 = vmatmul.mubr.bf16.gmra.mrb[0].mxu0 %v8357
  %v9704 = vpop.f32.mrb[0].mxu0
  %v9705 = vadd.f32 %v9480, %v9704
  %v9706 = vpop.f32.mrb[0].mxu0
  %v9707 = vpop.f32.mrb[0].mxu0
  %v9708 = vadd.f32 %v9483, %v9707
  %v9709 = vpop.f32.mrb[0].mxu0
  %9710 = vmatprep.mubr.bf16.mxu0 %v8376
  %9711 = vmatmul.mubr.bf16.gmra.mrb[0].mxu0 %v8375
  %v9712 = vpop.f32.mrb[0].mxu0
  %v9713 = vadd.f32 %v9488, %v9712
  %v9714 = vpop.f32.mrb[0].mxu0
  %v9715 = vpop.f32.mrb[0].mxu0
  %v9716 = vadd.f32 %v9491, %v9715
  %v9717 = vpop.f32.mrb[0].mxu0
  %9718 = vdwg.mxu0
  %9719 = vmatprep.subr.bf16.mxu0 0
  %9720 = vmatpush1.bf16.msra.mxu0 %v6147
  %9721 = vmatprep.subr.bf16.mxu0 0
  %9722 = vmatpush1.bf16.msra.mxu0 %v6148
  %9723 = vmatprep.subr.bf16.mxu0 0
  %9724 = vmatpush1.bf16.msra.mxu0 %v6149
  %9725 = vmatprep.subr.bf16.mxu0 0
  %9726 = vmatpush1.bf16.msra.mxu0 %v6150
  %9727 = vmatprep.subr.bf16.mxu0 0
  %9728 = vmatpush1.bf16.msra.mxu0 %v6151
  %9729 = vmatprep.subr.bf16.mxu0 0
  %9730 = vmatpush1.bf16.msra.mxu0 %v6152
  %9731 = vmatprep.subr.bf16.mxu0 0
  %9732 = vmatpush1.bf16.msra.mxu0 %v6153
  %9733 = vmatprep.subr.bf16.mxu0 0
  %9734 = vmatpush1.bf16.msra.mxu0 %v6154
  %9735 = vmatprep.subr.bf16.mxu0 0
  %9736 = vmatpush1.bf16.msra.mxu0 %v6155
  %9737 = vmatprep.subr.bf16.mxu0 0
  %9738 = vmatpush1.bf16.msra.mxu0 %v6156
  %9739 = vmatprep.subr.bf16.mxu0 0
  %9740 = vmatpush1.bf16.msra.mxu0 %v6157
  %9741 = vmatprep.subr.bf16.mxu0 0
  %9742 = vmatpush1.bf16.msra.mxu0 %v6158
  %9743 = vmatprep.subr.bf16.mxu0 0
  %9744 = vmatpush1.bf16.msra.mxu0 %v6159
  %9745 = vmatprep.subr.bf16.mxu0 0
  %9746 = vmatpush1.bf16.msra.mxu0 %v6160
  %9747 = vmatprep.subr.bf16.mxu0 0
  %9748 = vmatpush1.bf16.msra.mxu0 %v6161
  %9749 = vmatprep.subr.bf16.mxu0 0
  %9750 = vmatpush1.bf16.msra.mxu0 %v6162
  %9751 = vmatprep.mubr.bf16.mxu0 %v7964
  %9752 = vmatmul.mubr.bf16.gmra.mrb[0].mxu0 %v7963
  %v9753 = vpop.f32.mrb[0].mxu0
  %v9754 = vadd.f32 %v9529, %v9753
  %v9755 = vpop.f32.mrb[0].mxu0
  %v9756 = vpop.f32.mrb[0].mxu0
  %v9757 = vadd.f32 %v9532, %v9756
  %v9758 = vpop.f32.mrb[0].mxu0
  %9759 = vmatprep.mubr.bf16.mxu0 %v7982
  %9760 = vmatmul.mubr.bf16.gmra.mrb[0].mxu0 %v7981
  %v9761 = vpop.f32.mrb[0].mxu0
  %v9762 = vadd.f32 %v9537, %v9761
  %v9763 = vpop.f32.mrb[0].mxu0
  %v9764 = vpop.f32.mrb[0].mxu0
  %v9765 = vadd.f32 %v9540, %v9764
  %v9766 = vpop.f32.mrb[0].mxu0
  %9767 = vmatprep.mubr.bf16.mxu0 %v8000
  %9768 = vmatmul.mubr.bf16.gmra.mrb[0].mxu0 %v7999
  %v9769 = vpop.f32.mrb[0].mxu0
  %v9770 = vadd.f32 %v9545, %v9769
  %v9771 = vpop.f32.mrb[0].mxu0
  %v9772 = vpop.f32.mrb[0].mxu0
  %v9773 = vadd.f32 %v9548, %v9772
  %v9774 = vpop.f32.mrb[0].mxu0
  %9775 = vmatprep.mubr.bf16.mxu0 %v8018
  %9776 = vmatmul.mubr.bf16.gmra.mrb[0].mxu0 %v8017
  %v9777 = vpop.f32.mrb[0].mxu0
  %v9778 = vadd.f32 %v9553, %v9777
  %v9779 = vpop.f32.mrb[0].mxu0
  %v9780 = vpop.f32.mrb[0].mxu0
  %v9781 = vadd.f32 %v9556, %v9780
  %v9782 = vpop.f32.mrb[0].mxu0
  %9783 = vmatprep.mubr.bf16.mxu0 %v8036
  %9784 = vmatmul.mubr.bf16.gmra.mrb[0].mxu0 %v8035
  %v9785 = vpop.f32.mrb[0].mxu0
  %v9786 = vadd.f32 %v9561, %v9785
  %v9787 = vpop.f32.mrb[0].mxu0
  %v9788 = vpop.f32.mrb[0].mxu0
  %v9789 = vadd.f32 %v9564, %v9788
  %v9790 = vpop.f32.mrb[0].mxu0
  %9791 = vmatprep.mubr.bf16.mxu0 %v8054
  %9792 = vmatmul.mubr.bf16.gmra.mrb[0].mxu0 %v8053
  %v9793 = vpop.f32.mrb[0].mxu0
  %v9794 = vadd.f32 %v9569, %v9793
  %v9795 = vpop.f32.mrb[0].mxu0
  %v9796 = vpop.f32.mrb[0].mxu0
  %v9797 = vadd.f32 %v9572, %v9796
  %v9798 = vpop.f32.mrb[0].mxu0
  %9799 = vmatprep.mubr.bf16.mxu0 %v8072
  %9800 = vmatmul.mubr.bf16.gmra.mrb[0].mxu0 %v8071
  %v9801 = vpop.f32.mrb[0].mxu0
  %v9802 = vadd.f32 %v9577, %v9801
  %v9803 = vpop.f32.mrb[0].mxu0
  %v9804 = vpop.f32.mrb[0].mxu0
  %v9805 = vadd.f32 %v9580, %v9804
  %v9806 = vpop.f32.mrb[0].mxu0
  %9807 = vmatprep.mubr.bf16.mxu0 %v8090
  %9808 = vmatmul.mubr.bf16.gmra.mrb[0].mxu0 %v8089
  %v9809 = vpop.f32.mrb[0].mxu0
  %v9810 = vadd.f32 %v9585, %v9809
  %v9811 = vpop.f32.mrb[0].mxu0
  %v9812 = vpop.f32.mrb[0].mxu0
  %v9813 = vadd.f32 %v9588, %v9812
  %v9814 = vpop.f32.mrb[0].mxu0
  %9815 = vmatprep.mubr.bf16.mxu0 %v8108
  %9816 = vmatmul.mubr.bf16.gmra.mrb[0].mxu0 %v8107
  %v9817 = vpop.f32.mrb[0].mxu0
  %v9818 = vadd.f32 %v9593, %v9817
  %v9819 = vpop.f32.mrb[0].mxu0
  %v9820 = vpop.f32.mrb[0].mxu0
  %v9821 = vadd.f32 %v9596, %v9820
  %v9822 = vpop.f32.mrb[0].mxu0
  %9823 = vmatprep.mubr.bf16.mxu0 %v8126
  %9824 = vmatmul.mubr.bf16.gmra.mrb[0].mxu0 %v8125
  %v9825 = vpop.f32.mrb[0].mxu0
  %v9826 = vadd.f32 %v9601, %v9825
  %v9827 = vpop.f32.mrb[0].mxu0
  %v9828 = vpop.f32.mrb[0].mxu0
  %v9829 = vadd.f32 %v9604, %v9828
  %v9830 = vpop.f32.mrb[0].mxu0
  %9831 = vmatprep.mubr.bf16.mxu0 %v8144
  %9832 = vmatmul.mubr.bf16.gmra.mrb[0].mxu0 %v8143
  %v9833 = vpop.f32.mrb[0].mxu0
  %v9834 = vadd.f32 %v9609, %v9833
  %v9835 = vpop.f32.mrb[0].mxu0
  %v9836 = vpop.f32.mrb[0].mxu0
  %v9837 = vadd.f32 %v9612, %v9836
  %v9838 = vpop.f32.mrb[0].mxu0
  %9839 = vmatprep.mubr.bf16.mxu0 %v8162
  %9840 = vmatmul.mubr.bf16.gmra.mrb[0].mxu0 %v8161
  %v9841 = vpop.f32.mrb[0].mxu0
  %v9842 = vadd.f32 %v9617, %v9841
  %v9843 = vpop.f32.mrb[0].mxu0
  %v9844 = vpop.f32.mrb[0].mxu0
  %v9845 = vadd.f32 %v9620, %v9844
  %v9846 = vpop.f32.mrb[0].mxu0
  %9847 = vmatprep.mubr.bf16.mxu0 %v8180
  %9848 = vmatmul.mubr.bf16.gmra.mrb[0].mxu0 %v8179
  %v9849 = vpop.f32.mrb[0].mxu0
  %v9850 = vadd.f32 %v9625, %v9849
  %v9851 = vpop.f32.mrb[0].mxu0
  %v9852 = vpop.f32.mrb[0].mxu0
  %v9853 = vadd.f32 %v9628, %v9852
  %v9854 = vpop.f32.mrb[0].mxu0
  %9855 = vmatprep.mubr.bf16.mxu0 %v8198
  %9856 = vmatmul.mubr.bf16.gmra.mrb[0].mxu0 %v8197
  %v9857 = vpop.f32.mrb[0].mxu0
  %v9858 = vadd.f32 %v9633, %v9857
  %v9859 = vpop.f32.mrb[0].mxu0
  %v9860 = vpop.f32.mrb[0].mxu0
  %v9861 = vadd.f32 %v9636, %v9860
  %v9862 = vpop.f32.mrb[0].mxu0
  %9863 = vmatprep.mubr.bf16.mxu0 %v8216
  %9864 = vmatmul.mubr.bf16.gmra.mrb[0].mxu0 %v8215
  %v9865 = vpop.f32.mrb[0].mxu0
  %v9866 = vadd.f32 %v9641, %v9865
  %v9867 = vpop.f32.mrb[0].mxu0
  %v9868 = vpop.f32.mrb[0].mxu0
  %v9869 = vadd.f32 %v9644, %v9868
  %v9870 = vpop.f32.mrb[0].mxu0
  %9871 = vmatprep.mubr.bf16.mxu0 %v8234
  %9872 = vmatmul.mubr.bf16.gmra.mrb[0].mxu0 %v8233
  %v9873 = vpop.f32.mrb[0].mxu0
  %v9874 = vadd.f32 %v9649, %v9873
  %v9875 = vpop.f32.mrb[0].mxu0
  %v9876 = vpop.f32.mrb[0].mxu0
  %v9877 = vadd.f32 %v9652, %v9876
  %v9878 = vpop.f32.mrb[0].mxu0
  %9879 = vmatprep.mubr.bf16.mxu0 %v8252
  %9880 = vmatmul.mubr.bf16.gmra.mrb[0].mxu0 %v8251
  %v9881 = vpop.f32.mrb[0].mxu0
  %v9882 = vadd.f32 %v9657, %v9881
  %v9883 = vpop.f32.mrb[0].mxu0
  %v9884 = vpop.f32.mrb[0].mxu0
  %v9885 = vadd.f32 %v9660, %v9884
  %v9886 = vpop.f32.mrb[0].mxu0
  %9887 = vmatprep.mubr.bf16.mxu0 %v8270
  %9888 = vmatmul.mubr.bf16.gmra.mrb[0].mxu0 %v8269
  %v9889 = vpop.f32.mrb[0].mxu0
  %v9890 = vadd.f32 %v9665, %v9889
  %v9891 = vpop.f32.mrb[0].mxu0
  %v9892 = vpop.f32.mrb[0].mxu0
  %v9893 = vadd.f32 %v9668, %v9892
  %v9894 = vpop.f32.mrb[0].mxu0
  %9895 = vmatprep.mubr.bf16.mxu0 %v8288
  %9896 = vmatmul.mubr.bf16.gmra.mrb[0].mxu0 %v8287
  %v9897 = vpop.f32.mrb[0].mxu0
  %v9898 = vadd.f32 %v9673, %v9897
  %v9899 = vpop.f32.mrb[0].mxu0
  %v9900 = vpop.f32.mrb[0].mxu0
  %v9901 = vadd.f32 %v9676, %v9900
  %v9902 = vpop.f32.mrb[0].mxu0
  %9903 = vmatprep.mubr.bf16.mxu0 %v8306
  %9904 = vmatmul.mubr.bf16.gmra.mrb[0].mxu0 %v8305
  %v9905 = vpop.f32.mrb[0].mxu0
  %v9906 = vadd.f32 %v9681, %v9905
  %v9907 = vpop.f32.mrb[0].mxu0
  %v9908 = vpop.f32.mrb[0].mxu0
  %v9909 = vadd.f32 %v9684, %v9908
  %v9910 = vpop.f32.mrb[0].mxu0
  %9911 = vmatprep.mubr.bf16.mxu0 %v8324
  %9912 = vmatmul.mubr.bf16.gmra.mrb[0].mxu0 %v8323
  %v9913 = vpop.f32.mrb[0].mxu0
  %v9914 = vadd.f32 %v9689, %v9913
  %v9915 = vpop.f32.mrb[0].mxu0
  %v9916 = vpop.f32.mrb[0].mxu0
  %v9917 = vadd.f32 %v9692, %v9916
  %v9918 = vpop.f32.mrb[0].mxu0
  %9919 = vmatprep.mubr.bf16.mxu0 %v8342
  %9920 = vmatmul.mubr.bf16.gmra.mrb[0].mxu0 %v8341
  %v9921 = vpop.f32.mrb[0].mxu0
  %v9922 = vadd.f32 %v9697, %v9921
  %v9923 = vpop.f32.mrb[0].mxu0
  %v9924 = vpop.f32.mrb[0].mxu0
  %v9925 = vadd.f32 %v9700, %v9924
  %v9926 = vpop.f32.mrb[0].mxu0
  %9927 = vmatprep.mubr.bf16.mxu0 %v8360
  %9928 = vmatmul.mubr.bf16.gmra.mrb[0].mxu0 %v8359
  %v9929 = vpop.f32.mrb[0].mxu0
  %v9930 = vadd.f32 %v9705, %v9929
  %v9931 = vpop.f32.mrb[0].mxu0
  %v9932 = vpop.f32.mrb[0].mxu0
  %v9933 = vadd.f32 %v9708, %v9932
  %v9934 = vpop.f32.mrb[0].mxu0
  %9935 = vmatprep.mubr.bf16.mxu0 %v8378
  %9936 = vmatmul.mubr.bf16.gmra.mrb[0].mxu0 %v8377
  %v9937 = vpop.f32.mrb[0].mxu0
  %v9938 = vadd.f32 %v9713, %v9937
  %v9939 = vpop.f32.mrb[0].mxu0
  %v9940 = vpop.f32.mrb[0].mxu0
  %v9941 = vadd.f32 %v9716, %v9940
  %v9942 = vpop.f32.mrb[0].mxu0
  %9943 = vdwg.mxu0
  %9944 = vmatprep.subr.bf16.mxu0 0
  %9945 = vmatpush1.bf16.msra.mxu0 %v6163
  %9946 = vmatprep.subr.bf16.mxu0 0
  %9947 = vmatpush1.bf16.msra.mxu0 %v6164
  %9948 = vmatprep.subr.bf16.mxu0 0
  %9949 = vmatpush1.bf16.msra.mxu0 %v6165
  %9950 = vmatprep.subr.bf16.mxu0 0
  %9951 = vmatpush1.bf16.msra.mxu0 %v6166
  %9952 = vmatprep.subr.bf16.mxu0 0
  %9953 = vmatpush1.bf16.msra.mxu0 %v6167
  %9954 = vmatprep.subr.bf16.mxu0 0
  %9955 = vmatpush1.bf16.msra.mxu0 %v6168
  %9956 = vmatprep.subr.bf16.mxu0 0
  %9957 = vmatpush1.bf16.msra.mxu0 %v6169
  %9958 = vmatprep.subr.bf16.mxu0 0
  %9959 = vmatpush1.bf16.msra.mxu0 %v6170
  %9960 = vmatprep.subr.bf16.mxu0 0
  %9961 = vmatpush1.bf16.msra.mxu0 %v6171
  %9962 = vmatprep.subr.bf16.mxu0 0
  %9963 = vmatpush1.bf16.msra.mxu0 %v6172
  %9964 = vmatprep.subr.bf16.mxu0 0
  %9965 = vmatpush1.bf16.msra.mxu0 %v6173
  %9966 = vmatprep.subr.bf16.mxu0 0
  %9967 = vmatpush1.bf16.msra.mxu0 %v6174
  %9968 = vmatprep.subr.bf16.mxu0 0
  %9969 = vmatpush1.bf16.msra.mxu0 %v6175
  %9970 = vmatprep.subr.bf16.mxu0 0
  %9971 = vmatpush1.bf16.msra.mxu0 %v6176
  %9972 = vmatprep.subr.bf16.mxu0 0
  %9973 = vmatpush1.bf16.msra.mxu0 %v6177
  %9974 = vmatprep.subr.bf16.mxu0 0
  %9975 = vmatpush1.bf16.msra.mxu0 %v6178
  %9976 = vmatprep.mubr.bf16.mxu0 %v7966
  %9977 = vmatmul.mubr.bf16.gmra.mrb[0].mxu0 %v7965
  %v9978 = vpop.f32.mrb[0].mxu0
  %v9979 = vadd.f32 %v9754, %v9978
  %v9980 = vpop.f32.mrb[0].mxu0
  %v9981 = vpop.f32.mrb[0].mxu0
  %v9982 = vadd.f32 %v9757, %v9981
  %v9983 = vpop.f32.mrb[0].mxu0
  %9984 = vmatprep.mubr.bf16.mxu0 %v7984
  %9985 = vmatmul.mubr.bf16.gmra.mrb[0].mxu0 %v7983
  %v9986 = vpop.f32.mrb[0].mxu0
  %v9987 = vadd.f32 %v9762, %v9986
  %v9988 = vpop.f32.mrb[0].mxu0
  %v9989 = vpop.f32.mrb[0].mxu0
  %v9990 = vadd.f32 %v9765, %v9989
  %v9991 = vpop.f32.mrb[0].mxu0
  %9992 = vmatprep.mubr.bf16.mxu0 %v8002
  %9993 = vmatmul.mubr.bf16.gmra.mrb[0].mxu0 %v8001
  %v9994 = vpop.f32.mrb[0].mxu0
  %v9995 = vadd.f32 %v9770, %v9994
  %v9996 = vpop.f32.mrb[0].mxu0
  %v9997 = vpop.f32.mrb[0].mxu0
  %v9998 = vadd.f32 %v9773, %v9997
  %v9999 = vpop.f32.mrb[0].mxu0
  %10000 = vmatprep.mubr.bf16.mxu0 %v8020
  %10001 = vmatmul.mubr.bf16.gmra.mrb[0].mxu0 %v8019
  %v10002 = vpop.f32.mrb[0].mxu0
  %v10003 = vadd.f32 %v9778, %v10002
  %v10004 = vpop.f32.mrb[0].mxu0
  %v10005 = vpop.f32.mrb[0].mxu0
  %v10006 = vadd.f32 %v9781, %v10005
  %v10007 = vpop.f32.mrb[0].mxu0
  %10008 = vmatprep.mubr.bf16.mxu0 %v8038
  %10009 = vmatmul.mubr.bf16.gmra.mrb[0].mxu0 %v8037
  %v10010 = vpop.f32.mrb[0].mxu0
  %v10011 = vadd.f32 %v9786, %v10010
  %v10012 = vpop.f32.mrb[0].mxu0
  %v10013 = vpop.f32.mrb[0].mxu0
  %v10014 = vadd.f32 %v9789, %v10013
  %v10015 = vpop.f32.mrb[0].mxu0
  %10016 = vmatprep.mubr.bf16.mxu0 %v8056
  %10017 = vmatmul.mubr.bf16.gmra.mrb[0].mxu0 %v8055
  %v10018 = vpop.f32.mrb[0].mxu0
  %v10019 = vadd.f32 %v9794, %v10018
  %v10020 = vpop.f32.mrb[0].mxu0
  %v10021 = vpop.f32.mrb[0].mxu0
  %v10022 = vadd.f32 %v9797, %v10021
  %v10023 = vpop.f32.mrb[0].mxu0
  %10024 = vmatprep.mubr.bf16.mxu0 %v8074
  %10025 = vmatmul.mubr.bf16.gmra.mrb[0].mxu0 %v8073
  %v10026 = vpop.f32.mrb[0].mxu0
  %v10027 = vadd.f32 %v9802, %v10026
  %v10028 = vpop.f32.mrb[0].mxu0
  %v10029 = vpop.f32.mrb[0].mxu0
  %v10030 = vadd.f32 %v9805, %v10029
  %v10031 = vpop.f32.mrb[0].mxu0
  %10032 = vmatprep.mubr.bf16.mxu0 %v8092
  %10033 = vmatmul.mubr.bf16.gmra.mrb[0].mxu0 %v8091
  %v10034 = vpop.f32.mrb[0].mxu0
  %v10035 = vadd.f32 %v9810, %v10034
  %v10036 = vpop.f32.mrb[0].mxu0
  %v10037 = vpop.f32.mrb[0].mxu0
  %v10038 = vadd.f32 %v9813, %v10037
  %v10039 = vpop.f32.mrb[0].mxu0
  %10040 = vmatprep.mubr.bf16.mxu0 %v8110
  %10041 = vmatmul.mubr.bf16.gmra.mrb[0].mxu0 %v8109
  %v10042 = vpop.f32.mrb[0].mxu0
  %v10043 = vadd.f32 %v9818, %v10042
  %v10044 = vpop.f32.mrb[0].mxu0
  %v10045 = vpop.f32.mrb[0].mxu0
  %v10046 = vadd.f32 %v9821, %v10045
  %v10047 = vpop.f32.mrb[0].mxu0
  %10048 = vmatprep.mubr.bf16.mxu0 %v8128
  %10049 = vmatmul.mubr.bf16.gmra.mrb[0].mxu0 %v8127
  %v10050 = vpop.f32.mrb[0].mxu0
  %v10051 = vadd.f32 %v9826, %v10050
  %v10052 = vpop.f32.mrb[0].mxu0
  %v10053 = vpop.f32.mrb[0].mxu0
  %v10054 = vadd.f32 %v9829, %v10053
  %v10055 = vpop.f32.mrb[0].mxu0
  %10056 = vmatprep.mubr.bf16.mxu0 %v8146
  %10057 = vmatmul.mubr.bf16.gmra.mrb[0].mxu0 %v8145
  %v10058 = vpop.f32.mrb[0].mxu0
  %v10059 = vadd.f32 %v9834, %v10058
  %v10060 = vpop.f32.mrb[0].mxu0
  %v10061 = vpop.f32.mrb[0].mxu0
  %v10062 = vadd.f32 %v9837, %v10061
  %v10063 = vpop.f32.mrb[0].mxu0
  %10064 = vmatprep.mubr.bf16.mxu0 %v8164
  %10065 = vmatmul.mubr.bf16.gmra.mrb[0].mxu0 %v8163
  %v10066 = vpop.f32.mrb[0].mxu0
  %v10067 = vadd.f32 %v9842, %v10066
  %v10068 = vpop.f32.mrb[0].mxu0
  %v10069 = vpop.f32.mrb[0].mxu0
  %v10070 = vadd.f32 %v9845, %v10069
  %v10071 = vpop.f32.mrb[0].mxu0
  %10072 = vmatprep.mubr.bf16.mxu0 %v8182
  %10073 = vmatmul.mubr.bf16.gmra.mrb[0].mxu0 %v8181
  %v10074 = vpop.f32.mrb[0].mxu0
  %v10075 = vadd.f32 %v9850, %v10074
  %v10076 = vpop.f32.mrb[0].mxu0
  %v10077 = vpop.f32.mrb[0].mxu0
  %v10078 = vadd.f32 %v9853, %v10077
  %v10079 = vpop.f32.mrb[0].mxu0
  %10080 = vmatprep.mubr.bf16.mxu0 %v8200
  %10081 = vmatmul.mubr.bf16.gmra.mrb[0].mxu0 %v8199
  %v10082 = vpop.f32.mrb[0].mxu0
  %v10083 = vadd.f32 %v9858, %v10082
  %v10084 = vpop.f32.mrb[0].mxu0
  %v10085 = vpop.f32.mrb[0].mxu0
  %v10086 = vadd.f32 %v9861, %v10085
  %v10087 = vpop.f32.mrb[0].mxu0
  %10088 = vmatprep.mubr.bf16.mxu0 %v8218
  %10089 = vmatmul.mubr.bf16.gmra.mrb[0].mxu0 %v8217
  %v10090 = vpop.f32.mrb[0].mxu0
  %v10091 = vadd.f32 %v9866, %v10090
  %v10092 = vpop.f32.mrb[0].mxu0
  %v10093 = vpop.f32.mrb[0].mxu0
  %v10094 = vadd.f32 %v9869, %v10093
  %v10095 = vpop.f32.mrb[0].mxu0
  %10096 = vmatprep.mubr.bf16.mxu0 %v8236
  %10097 = vmatmul.mubr.bf16.gmra.mrb[0].mxu0 %v8235
  %v10098 = vpop.f32.mrb[0].mxu0
  %v10099 = vadd.f32 %v9874, %v10098
  %v10100 = vpop.f32.mrb[0].mxu0
  %v10101 = vpop.f32.mrb[0].mxu0
  %v10102 = vadd.f32 %v9877, %v10101
  %v10103 = vpop.f32.mrb[0].mxu0
  %10104 = vmatprep.mubr.bf16.mxu0 %v8254
  %10105 = vmatmul.mubr.bf16.gmra.mrb[0].mxu0 %v8253
  %v10106 = vpop.f32.mrb[0].mxu0
  %v10107 = vadd.f32 %v9882, %v10106
  %v10108 = vpop.f32.mrb[0].mxu0
  %v10109 = vpop.f32.mrb[0].mxu0
  %v10110 = vadd.f32 %v9885, %v10109
  %v10111 = vpop.f32.mrb[0].mxu0
  %10112 = vmatprep.mubr.bf16.mxu0 %v8272
  %10113 = vmatmul.mubr.bf16.gmra.mrb[0].mxu0 %v8271
  %v10114 = vpop.f32.mrb[0].mxu0
  %v10115 = vadd.f32 %v9890, %v10114
  %v10116 = vpop.f32.mrb[0].mxu0
  %v10117 = vpop.f32.mrb[0].mxu0
  %v10118 = vadd.f32 %v9893, %v10117
  %v10119 = vpop.f32.mrb[0].mxu0
  %10120 = vmatprep.mubr.bf16.mxu0 %v8290
  %10121 = vmatmul.mubr.bf16.gmra.mrb[0].mxu0 %v8289
  %v10122 = vpop.f32.mrb[0].mxu0
  %v10123 = vadd.f32 %v9898, %v10122
  %v10124 = vpop.f32.mrb[0].mxu0
  %v10125 = vpop.f32.mrb[0].mxu0
  %v10126 = vadd.f32 %v9901, %v10125
  %v10127 = vpop.f32.mrb[0].mxu0
  %10128 = vmatprep.mubr.bf16.mxu0 %v8308
  %10129 = vmatmul.mubr.bf16.gmra.mrb[0].mxu0 %v8307
  %v10130 = vpop.f32.mrb[0].mxu0
  %v10131 = vadd.f32 %v9906, %v10130
  %v10132 = vpop.f32.mrb[0].mxu0
  %v10133 = vpop.f32.mrb[0].mxu0
  %v10134 = vadd.f32 %v9909, %v10133
  %v10135 = vpop.f32.mrb[0].mxu0
  %10136 = vmatprep.mubr.bf16.mxu0 %v8326
  %10137 = vmatmul.mubr.bf16.gmra.mrb[0].mxu0 %v8325
  %v10138 = vpop.f32.mrb[0].mxu0
  %v10139 = vadd.f32 %v9914, %v10138
  %v10140 = vpop.f32.mrb[0].mxu0
  %v10141 = vpop.f32.mrb[0].mxu0
  %v10142 = vadd.f32 %v9917, %v10141
  %v10143 = vpop.f32.mrb[0].mxu0
  %10144 = vmatprep.mubr.bf16.mxu0 %v8344
  %10145 = vmatmul.mubr.bf16.gmra.mrb[0].mxu0 %v8343
  %v10146 = vpop.f32.mrb[0].mxu0
  %v10147 = vadd.f32 %v9922, %v10146
  %v10148 = vpop.f32.mrb[0].mxu0
  %v10149 = vpop.f32.mrb[0].mxu0
  %v10150 = vadd.f32 %v9925, %v10149
  %v10151 = vpop.f32.mrb[0].mxu0
  %10152 = vmatprep.mubr.bf16.mxu0 %v8362
  %10153 = vmatmul.mubr.bf16.gmra.mrb[0].mxu0 %v8361
  %v10154 = vpop.f32.mrb[0].mxu0
  %v10155 = vadd.f32 %v9930, %v10154
  %v10156 = vpop.f32.mrb[0].mxu0
  %v10157 = vpop.f32.mrb[0].mxu0
  %v10158 = vadd.f32 %v9933, %v10157
  %v10159 = vpop.f32.mrb[0].mxu0
  %10160 = vmatprep.mubr.bf16.mxu0 %v8380
  %10161 = vmatmul.mubr.bf16.gmra.mrb[0].mxu0 %v8379
  %v10162 = vpop.f32.mrb[0].mxu0
  %v10163 = vadd.f32 %v9938, %v10162
  %v10164 = vpop.f32.mrb[0].mxu0
  %v10165 = vpop.f32.mrb[0].mxu0
  %v10166 = vadd.f32 %v9941, %v10165
  %v10167 = vpop.f32.mrb[0].mxu0
  %10168 = vdwg.mxu0
  %10169 = vmatprep.subr.bf16.mxu0 0
  %10170 = vmatpush1.bf16.msra.mxu0 %v6179
  %10171 = vmatprep.subr.bf16.mxu0 0
  %10172 = vmatpush1.bf16.msra.mxu0 %v6180
  %10173 = vmatprep.subr.bf16.mxu0 0
  %10174 = vmatpush1.bf16.msra.mxu0 %v6181
  %10175 = vmatprep.subr.bf16.mxu0 0
  %10176 = vmatpush1.bf16.msra.mxu0 %v6182
  %10177 = vmatprep.subr.bf16.mxu0 0
  %10178 = vmatpush1.bf16.msra.mxu0 %v6183
  %10179 = vmatprep.subr.bf16.mxu0 0
  %10180 = vmatpush1.bf16.msra.mxu0 %v6184
  %10181 = vmatprep.subr.bf16.mxu0 0
  %10182 = vmatpush1.bf16.msra.mxu0 %v6185
  %10183 = vmatprep.subr.bf16.mxu0 0
  %10184 = vmatpush1.bf16.msra.mxu0 %v6186
  %10185 = vmatprep.subr.bf16.mxu0 0
  %10186 = vmatpush1.bf16.msra.mxu0 %v6187
  %10187 = vmatprep.subr.bf16.mxu0 0
  %10188 = vmatpush1.bf16.msra.mxu0 %v6188
  %10189 = vmatprep.subr.bf16.mxu0 0
  %10190 = vmatpush1.bf16.msra.mxu0 %v6189
  %10191 = vmatprep.subr.bf16.mxu0 0
  %10192 = vmatpush1.bf16.msra.mxu0 %v6190
  %10193 = vmatprep.subr.bf16.mxu0 0
  %10194 = vmatpush1.bf16.msra.mxu0 %v6191
  %10195 = vmatprep.subr.bf16.mxu0 0
  %10196 = vmatpush1.bf16.msra.mxu0 %v6192
  %10197 = vmatprep.subr.bf16.mxu0 0
  %10198 = vmatpush1.bf16.msra.mxu0 %v6193
  %10199 = vmatprep.subr.bf16.mxu0 0
  %10200 = vmatpush1.bf16.msra.mxu0 %v6194
  %10201 = vmatprep.mubr.bf16.mxu0 %v7968
  %10202 = vmatmul.mubr.bf16.gmra.mrb[0].mxu0 %v7967
  %v10203 = vpop.f32.mrb[0].mxu0
  %v10204 = vadd.f32 %v9979, %v10203
  %v10205 = vpop.f32.mrb[0].mxu0
  %v10206 = vpop.f32.mrb[0].mxu0
  %v10207 = vadd.f32 %v9982, %v10206
  %v10208 = vpop.f32.mrb[0].mxu0
  %10209 = vmatprep.mubr.bf16.mxu0 %v7986
  %10210 = vmatmul.mubr.bf16.gmra.mrb[0].mxu0 %v7985
  %v10211 = vpop.f32.mrb[0].mxu0
  %v10212 = vadd.f32 %v9987, %v10211
  %v10213 = vpop.f32.mrb[0].mxu0
  %v10214 = vpop.f32.mrb[0].mxu0
  %v10215 = vadd.f32 %v9990, %v10214
  %v10216 = vpop.f32.mrb[0].mxu0
  %10217 = vmatprep.mubr.bf16.mxu0 %v8004
  %10218 = vmatmul.mubr.bf16.gmra.mrb[0].mxu0 %v8003
  %v10219 = vpop.f32.mrb[0].mxu0
  %v10220 = vadd.f32 %v9995, %v10219
  %v10221 = vpop.f32.mrb[0].mxu0
  %v10222 = vpop.f32.mrb[0].mxu0
  %v10223 = vadd.f32 %v9998, %v10222
  %v10224 = vpop.f32.mrb[0].mxu0
  %10225 = vmatprep.mubr.bf16.mxu0 %v8022
  %10226 = vmatmul.mubr.bf16.gmra.mrb[0].mxu0 %v8021
  %v10227 = vpop.f32.mrb[0].mxu0
  %v10228 = vadd.f32 %v10003, %v10227
  %v10229 = vpop.f32.mrb[0].mxu0
  %v10230 = vpop.f32.mrb[0].mxu0
  %v10231 = vadd.f32 %v10006, %v10230
  %v10232 = vpop.f32.mrb[0].mxu0
  %10233 = vmatprep.mubr.bf16.mxu0 %v8040
  %10234 = vmatmul.mubr.bf16.gmra.mrb[0].mxu0 %v8039
  %v10235 = vpop.f32.mrb[0].mxu0
  %v10236 = vadd.f32 %v10011, %v10235
  %v10237 = vpop.f32.mrb[0].mxu0
  %v10238 = vpop.f32.mrb[0].mxu0
  %v10239 = vadd.f32 %v10014, %v10238
  %v10240 = vpop.f32.mrb[0].mxu0
  %10241 = vmatprep.mubr.bf16.mxu0 %v8058
  %10242 = vmatmul.mubr.bf16.gmra.mrb[0].mxu0 %v8057
  %v10243 = vpop.f32.mrb[0].mxu0
  %v10244 = vadd.f32 %v10019, %v10243
  %v10245 = vpop.f32.mrb[0].mxu0
  %v10246 = vpop.f32.mrb[0].mxu0
  %v10247 = vadd.f32 %v10022, %v10246
  %v10248 = vpop.f32.mrb[0].mxu0
  %10249 = vmatprep.mubr.bf16.mxu0 %v8076
  %10250 = vmatmul.mubr.bf16.gmra.mrb[0].mxu0 %v8075
  %v10251 = vpop.f32.mrb[0].mxu0
  %v10252 = vadd.f32 %v10027, %v10251
  %v10253 = vpop.f32.mrb[0].mxu0
  %v10254 = vpop.f32.mrb[0].mxu0
  %v10255 = vadd.f32 %v10030, %v10254
  %v10256 = vpop.f32.mrb[0].mxu0
  %10257 = vmatprep.mubr.bf16.mxu0 %v8094
  %10258 = vmatmul.mubr.bf16.gmra.mrb[0].mxu0 %v8093
  %v10259 = vpop.f32.mrb[0].mxu0
  %v10260 = vadd.f32 %v10035, %v10259
  %v10261 = vpop.f32.mrb[0].mxu0
  %v10262 = vpop.f32.mrb[0].mxu0
  %v10263 = vadd.f32 %v10038, %v10262
  %v10264 = vpop.f32.mrb[0].mxu0
  %10265 = vmatprep.mubr.bf16.mxu0 %v8112
  %10266 = vmatmul.mubr.bf16.gmra.mrb[0].mxu0 %v8111
  %v10267 = vpop.f32.mrb[0].mxu0
  %v10268 = vadd.f32 %v10043, %v10267
  %v10269 = vpop.f32.mrb[0].mxu0
  %v10270 = vpop.f32.mrb[0].mxu0
  %v10271 = vadd.f32 %v10046, %v10270
  %v10272 = vpop.f32.mrb[0].mxu0
  %10273 = vmatprep.mubr.bf16.mxu0 %v8130
  %10274 = vmatmul.mubr.bf16.gmra.mrb[0].mxu0 %v8129
  %v10275 = vpop.f32.mrb[0].mxu0
  %v10276 = vadd.f32 %v10051, %v10275
  %v10277 = vpop.f32.mrb[0].mxu0
  %v10278 = vpop.f32.mrb[0].mxu0
  %v10279 = vadd.f32 %v10054, %v10278
  %v10280 = vpop.f32.mrb[0].mxu0
  %10281 = vmatprep.mubr.bf16.mxu0 %v8148
  %10282 = vmatmul.mubr.bf16.gmra.mrb[0].mxu0 %v8147
  %v10283 = vpop.f32.mrb[0].mxu0
  %v10284 = vadd.f32 %v10059, %v10283
  %v10285 = vpop.f32.mrb[0].mxu0
  %v10286 = vpop.f32.mrb[0].mxu0
  %v10287 = vadd.f32 %v10062, %v10286
  %v10288 = vpop.f32.mrb[0].mxu0
  %10289 = vmatprep.mubr.bf16.mxu0 %v8166
  %10290 = vmatmul.mubr.bf16.gmra.mrb[0].mxu0 %v8165
  %v10291 = vpop.f32.mrb[0].mxu0
  %v10292 = vadd.f32 %v10067, %v10291
  %v10293 = vpop.f32.mrb[0].mxu0
  %v10294 = vpop.f32.mrb[0].mxu0
  %v10295 = vadd.f32 %v10070, %v10294
  %v10296 = vpop.f32.mrb[0].mxu0
  %10297 = vmatprep.mubr.bf16.mxu0 %v8184
  %10298 = vmatmul.mubr.bf16.gmra.mrb[0].mxu0 %v8183
  %v10299 = vpop.f32.mrb[0].mxu0
  %v10300 = vadd.f32 %v10075, %v10299
  %v10301 = vpop.f32.mrb[0].mxu0
  %v10302 = vpop.f32.mrb[0].mxu0
  %v10303 = vadd.f32 %v10078, %v10302
  %v10304 = vpop.f32.mrb[0].mxu0
  %10305 = vmatprep.mubr.bf16.mxu0 %v8202
  %10306 = vmatmul.mubr.bf16.gmra.mrb[0].mxu0 %v8201
  %v10307 = vpop.f32.mrb[0].mxu0
  %v10308 = vadd.f32 %v10083, %v10307
  %v10309 = vpop.f32.mrb[0].mxu0
  %v10310 = vpop.f32.mrb[0].mxu0
  %v10311 = vadd.f32 %v10086, %v10310
  %v10312 = vpop.f32.mrb[0].mxu0
  %10313 = vmatprep.mubr.bf16.mxu0 %v8220
  %10314 = vmatmul.mubr.bf16.gmra.mrb[0].mxu0 %v8219
  %v10315 = vpop.f32.mrb[0].mxu0
  %v10316 = vadd.f32 %v10091, %v10315
  %v10317 = vpop.f32.mrb[0].mxu0
  %v10318 = vpop.f32.mrb[0].mxu0
  %v10319 = vadd.f32 %v10094, %v10318
  %v10320 = vpop.f32.mrb[0].mxu0
  %10321 = vmatprep.mubr.bf16.mxu0 %v8238
  %10322 = vmatmul.mubr.bf16.gmra.mrb[0].mxu0 %v8237
  %v10323 = vpop.f32.mrb[0].mxu0
  %v10324 = vadd.f32 %v10099, %v10323
  %v10325 = vpop.f32.mrb[0].mxu0
  %v10326 = vpop.f32.mrb[0].mxu0
  %v10327 = vadd.f32 %v10102, %v10326
  %v10328 = vpop.f32.mrb[0].mxu0
  %10329 = vmatprep.mubr.bf16.mxu0 %v8256
  %10330 = vmatmul.mubr.bf16.gmra.mrb[0].mxu0 %v8255
  %v10331 = vpop.f32.mrb[0].mxu0
  %v10332 = vadd.f32 %v10107, %v10331
  %v10333 = vpop.f32.mrb[0].mxu0
  %v10334 = vpop.f32.mrb[0].mxu0
  %v10335 = vadd.f32 %v10110, %v10334
  %v10336 = vpop.f32.mrb[0].mxu0
  %10337 = vmatprep.mubr.bf16.mxu0 %v8274
  %10338 = vmatmul.mubr.bf16.gmra.mrb[0].mxu0 %v8273
  %v10339 = vpop.f32.mrb[0].mxu0
  %v10340 = vadd.f32 %v10115, %v10339
  %v10341 = vpop.f32.mrb[0].mxu0
  %v10342 = vpop.f32.mrb[0].mxu0
  %v10343 = vadd.f32 %v10118, %v10342
  %v10344 = vpop.f32.mrb[0].mxu0
  %10345 = vmatprep.mubr.bf16.mxu0 %v8292
  %10346 = vmatmul.mubr.bf16.gmra.mrb[0].mxu0 %v8291
  %v10347 = vpop.f32.mrb[0].mxu0
  %v10348 = vadd.f32 %v10123, %v10347
  %v10349 = vpop.f32.mrb[0].mxu0
  %v10350 = vpop.f32.mrb[0].mxu0
  %v10351 = vadd.f32 %v10126, %v10350
  %v10352 = vpop.f32.mrb[0].mxu0
  %10353 = vmatprep.mubr.bf16.mxu0 %v8310
  %10354 = vmatmul.mubr.bf16.gmra.mrb[0].mxu0 %v8309
  %v10355 = vpop.f32.mrb[0].mxu0
  %v10356 = vadd.f32 %v10131, %v10355
  %v10357 = vpop.f32.mrb[0].mxu0
  %v10358 = vpop.f32.mrb[0].mxu0
  %v10359 = vadd.f32 %v10134, %v10358
  %v10360 = vpop.f32.mrb[0].mxu0
  %10361 = vmatprep.mubr.bf16.mxu0 %v8328
  %10362 = vmatmul.mubr.bf16.gmra.mrb[0].mxu0 %v8327
  %v10363 = vpop.f32.mrb[0].mxu0
  %v10364 = vadd.f32 %v10139, %v10363
  %v10365 = vpop.f32.mrb[0].mxu0
  %v10366 = vpop.f32.mrb[0].mxu0
  %v10367 = vadd.f32 %v10142, %v10366
  %v10368 = vpop.f32.mrb[0].mxu0
  %10369 = vmatprep.mubr.bf16.mxu0 %v8346
  %10370 = vmatmul.mubr.bf16.gmra.mrb[0].mxu0 %v8345
  %v10371 = vpop.f32.mrb[0].mxu0
  %v10372 = vadd.f32 %v10147, %v10371
  %v10373 = vpop.f32.mrb[0].mxu0
  %v10374 = vpop.f32.mrb[0].mxu0
  %v10375 = vadd.f32 %v10150, %v10374
  %v10376 = vpop.f32.mrb[0].mxu0
  %10377 = vmatprep.mubr.bf16.mxu0 %v8364
  %10378 = vmatmul.mubr.bf16.gmra.mrb[0].mxu0 %v8363
  %v10379 = vpop.f32.mrb[0].mxu0
  %v10380 = vadd.f32 %v10155, %v10379
  %v10381 = vpop.f32.mrb[0].mxu0
  %v10382 = vpop.f32.mrb[0].mxu0
  %v10383 = vadd.f32 %v10158, %v10382
  %v10384 = vpop.f32.mrb[0].mxu0
  %10385 = vmatprep.mubr.bf16.mxu0 %v8382
  %10386 = vmatmul.mubr.bf16.gmra.mrb[0].mxu0 %v8381
  %v10387 = vpop.f32.mrb[0].mxu0
  %v10388 = vadd.f32 %v10163, %v10387
  %v10389 = vpop.f32.mrb[0].mxu0
  %v10390 = vpop.f32.mrb[0].mxu0
  %v10391 = vadd.f32 %v10166, %v10390
  %v10392 = vpop.f32.mrb[0].mxu0
  %10393 = vdwg.mxu0
  %10394 = vmatprep.subr.bf16.mxu0 0
  %10395 = vmatpush1.bf16.msra.mxu0 %v6195
  %10396 = vmatprep.subr.bf16.mxu0 0
  %10397 = vmatpush1.bf16.msra.mxu0 %v6196
  %10398 = vmatprep.subr.bf16.mxu0 0
  %10399 = vmatpush1.bf16.msra.mxu0 %v6197
  %10400 = vmatprep.subr.bf16.mxu0 0
  %10401 = vmatpush1.bf16.msra.mxu0 %v6198
  %10402 = vmatprep.subr.bf16.mxu0 0
  %10403 = vmatpush1.bf16.msra.mxu0 %v6199
  %10404 = vmatprep.subr.bf16.mxu0 0
  %10405 = vmatpush1.bf16.msra.mxu0 %v6200
  %10406 = vmatprep.subr.bf16.mxu0 0
  %10407 = vmatpush1.bf16.msra.mxu0 %v6201
  %10408 = vmatprep.subr.bf16.mxu0 0
  %10409 = vmatpush1.bf16.msra.mxu0 %v6202
  %10410 = vmatprep.subr.bf16.mxu0 0
  %10411 = vmatpush1.bf16.msra.mxu0 %v6203
  %10412 = vmatprep.subr.bf16.mxu0 0
  %10413 = vmatpush1.bf16.msra.mxu0 %v6204
  %10414 = vmatprep.subr.bf16.mxu0 0
  %10415 = vmatpush1.bf16.msra.mxu0 %v6205
  %10416 = vmatprep.subr.bf16.mxu0 0
  %10417 = vmatpush1.bf16.msra.mxu0 %v6206
  %10418 = vmatprep.subr.bf16.mxu0 0
  %10419 = vmatpush1.bf16.msra.mxu0 %v6207
  %10420 = vmatprep.subr.bf16.mxu0 0
  %10421 = vmatpush1.bf16.msra.mxu0 %v6208
  %10422 = vmatprep.subr.bf16.mxu0 0
  %10423 = vmatpush1.bf16.msra.mxu0 %v6209
  %10424 = vmatprep.subr.bf16.mxu0 0
  %10425 = vmatpush1.bf16.msra.mxu0 %v6210
  %10426 = vmatprep.mubr.bf16.mxu0 %v7970
  %10427 = vmatmul.mubr.bf16.gmra.mrb[0].mxu0 %v7969
  %v10428 = vpop.f32.mrb[0].mxu0
  %v10429 = vadd.f32 %v10204, %v10428
  %v10430 = vpop.f32.mrb[0].mxu0
  %v10431 = vpop.f32.mrb[0].mxu0
  %v10432 = vadd.f32 %v10207, %v10431
  %v10433 = vpop.f32.mrb[0].mxu0
  %10434 = vmatprep.mubr.bf16.mxu0 %v7988
  %10435 = vmatmul.mubr.bf16.gmra.mrb[0].mxu0 %v7987
  %v10436 = vpop.f32.mrb[0].mxu0
  %v10437 = vadd.f32 %v10212, %v10436
  %v10438 = vpop.f32.mrb[0].mxu0
  %v10439 = vpop.f32.mrb[0].mxu0
  %v10440 = vadd.f32 %v10215, %v10439
  %v10441 = vpop.f32.mrb[0].mxu0
  %10442 = vmatprep.mubr.bf16.mxu0 %v8006
  %10443 = vmatmul.mubr.bf16.gmra.mrb[0].mxu0 %v8005
  %v10444 = vpop.f32.mrb[0].mxu0
  %v10445 = vadd.f32 %v10220, %v10444
  %v10446 = vpop.f32.mrb[0].mxu0
  %v10447 = vpop.f32.mrb[0].mxu0
  %v10448 = vadd.f32 %v10223, %v10447
  %v10449 = vpop.f32.mrb[0].mxu0
  %10450 = vmatprep.mubr.bf16.mxu0 %v8024
  %10451 = vmatmul.mubr.bf16.gmra.mrb[0].mxu0 %v8023
  %v10452 = vpop.f32.mrb[0].mxu0
  %v10453 = vadd.f32 %v10228, %v10452
  %v10454 = vpop.f32.mrb[0].mxu0
  %v10455 = vpop.f32.mrb[0].mxu0
  %v10456 = vadd.f32 %v10231, %v10455
  %v10457 = vpop.f32.mrb[0].mxu0
  %10458 = vmatprep.mubr.bf16.mxu0 %v8042
  %10459 = vmatmul.mubr.bf16.gmra.mrb[0].mxu0 %v8041
  %v10460 = vpop.f32.mrb[0].mxu0
  %v10461 = vadd.f32 %v10236, %v10460
  %v10462 = vpop.f32.mrb[0].mxu0
  %v10463 = vpop.f32.mrb[0].mxu0
  %v10464 = vadd.f32 %v10239, %v10463
  %v10465 = vpop.f32.mrb[0].mxu0
  %10466 = vmatprep.mubr.bf16.mxu0 %v8060
  %10467 = vmatmul.mubr.bf16.gmra.mrb[0].mxu0 %v8059
  %v10468 = vpop.f32.mrb[0].mxu0
  %v10469 = vadd.f32 %v10244, %v10468
  %v10470 = vpop.f32.mrb[0].mxu0
  %v10471 = vpop.f32.mrb[0].mxu0
  %v10472 = vadd.f32 %v10247, %v10471
  %v10473 = vpop.f32.mrb[0].mxu0
  %10474 = vmatprep.mubr.bf16.mxu0 %v8078
  %10475 = vmatmul.mubr.bf16.gmra.mrb[0].mxu0 %v8077
  %v10476 = vpop.f32.mrb[0].mxu0
  %v10477 = vadd.f32 %v10252, %v10476
  %v10478 = vpop.f32.mrb[0].mxu0
  %v10479 = vpop.f32.mrb[0].mxu0
  %v10480 = vadd.f32 %v10255, %v10479
  %v10481 = vpop.f32.mrb[0].mxu0
  %10482 = vmatprep.mubr.bf16.mxu0 %v8096
  %10483 = vmatmul.mubr.bf16.gmra.mrb[0].mxu0 %v8095
  %v10484 = vpop.f32.mrb[0].mxu0
  %v10485 = vadd.f32 %v10260, %v10484
  %v10486 = vpop.f32.mrb[0].mxu0
  %v10487 = vpop.f32.mrb[0].mxu0
  %v10488 = vadd.f32 %v10263, %v10487
  %v10489 = vpop.f32.mrb[0].mxu0
  %10490 = vmatprep.mubr.bf16.mxu0 %v8114
  %10491 = vmatmul.mubr.bf16.gmra.mrb[0].mxu0 %v8113
  %v10492 = vpop.f32.mrb[0].mxu0
  %v10493 = vadd.f32 %v10268, %v10492
  %v10494 = vpop.f32.mrb[0].mxu0
  %v10495 = vpop.f32.mrb[0].mxu0
  %v10496 = vadd.f32 %v10271, %v10495
  %v10497 = vpop.f32.mrb[0].mxu0
  %10498 = vmatprep.mubr.bf16.mxu0 %v8132
  %10499 = vmatmul.mubr.bf16.gmra.mrb[0].mxu0 %v8131
  %v10500 = vpop.f32.mrb[0].mxu0
  %v10501 = vadd.f32 %v10276, %v10500
  %v10502 = vpop.f32.mrb[0].mxu0
  %v10503 = vpop.f32.mrb[0].mxu0
  %v10504 = vadd.f32 %v10279, %v10503
  %v10505 = vpop.f32.mrb[0].mxu0
  %10506 = vmatprep.mubr.bf16.mxu0 %v8150
  %10507 = vmatmul.mubr.bf16.gmra.mrb[0].mxu0 %v8149
  %v10508 = vpop.f32.mrb[0].mxu0
  %v10509 = vadd.f32 %v10284, %v10508
  %v10510 = vpop.f32.mrb[0].mxu0
  %v10511 = vpop.f32.mrb[0].mxu0
  %v10512 = vadd.f32 %v10287, %v10511
  %v10513 = vpop.f32.mrb[0].mxu0
  %10514 = vmatprep.mubr.bf16.mxu0 %v8168
  %10515 = vmatmul.mubr.bf16.gmra.mrb[0].mxu0 %v8167
  %v10516 = vpop.f32.mrb[0].mxu0
  %v10517 = vadd.f32 %v10292, %v10516
  %v10518 = vpop.f32.mrb[0].mxu0
  %v10519 = vpop.f32.mrb[0].mxu0
  %v10520 = vadd.f32 %v10295, %v10519
  %v10521 = vpop.f32.mrb[0].mxu0
  %10522 = vmatprep.mubr.bf16.mxu0 %v8186
  %10523 = vmatmul.mubr.bf16.gmra.mrb[0].mxu0 %v8185
  %v10524 = vpop.f32.mrb[0].mxu0
  %v10525 = vadd.f32 %v10300, %v10524
  %v10526 = vpop.f32.mrb[0].mxu0
  %v10527 = vpop.f32.mrb[0].mxu0
  %v10528 = vadd.f32 %v10303, %v10527
  %v10529 = vpop.f32.mrb[0].mxu0
  %10530 = vmatprep.mubr.bf16.mxu0 %v8204
  %10531 = vmatmul.mubr.bf16.gmra.mrb[0].mxu0 %v8203
  %v10532 = vpop.f32.mrb[0].mxu0
  %v10533 = vadd.f32 %v10308, %v10532
  %v10534 = vpop.f32.mrb[0].mxu0
  %v10535 = vpop.f32.mrb[0].mxu0
  %v10536 = vadd.f32 %v10311, %v10535
  %v10537 = vpop.f32.mrb[0].mxu0
  %10538 = vmatprep.mubr.bf16.mxu0 %v8222
  %10539 = vmatmul.mubr.bf16.gmra.mrb[0].mxu0 %v8221
  %v10540 = vpop.f32.mrb[0].mxu0
  %v10541 = vadd.f32 %v10316, %v10540
  %v10542 = vpop.f32.mrb[0].mxu0
  %v10543 = vpop.f32.mrb[0].mxu0
  %v10544 = vadd.f32 %v10319, %v10543
  %v10545 = vpop.f32.mrb[0].mxu0
  %10546 = vmatprep.mubr.bf16.mxu0 %v8240
  %10547 = vmatmul.mubr.bf16.gmra.mrb[0].mxu0 %v8239
  %v10548 = vpop.f32.mrb[0].mxu0
  %v10549 = vadd.f32 %v10324, %v10548
  %v10550 = vpop.f32.mrb[0].mxu0
  %v10551 = vpop.f32.mrb[0].mxu0
  %v10552 = vadd.f32 %v10327, %v10551
  %v10553 = vpop.f32.mrb[0].mxu0
  %10554 = vmatprep.mubr.bf16.mxu0 %v8258
  %10555 = vmatmul.mubr.bf16.gmra.mrb[0].mxu0 %v8257
  %v10556 = vpop.f32.mrb[0].mxu0
  %v10557 = vadd.f32 %v10332, %v10556
  %v10558 = vpop.f32.mrb[0].mxu0
  %v10559 = vpop.f32.mrb[0].mxu0
  %v10560 = vadd.f32 %v10335, %v10559
  %v10561 = vpop.f32.mrb[0].mxu0
  %10562 = vmatprep.mubr.bf16.mxu0 %v8276
  %10563 = vmatmul.mubr.bf16.gmra.mrb[0].mxu0 %v8275
  %v10564 = vpop.f32.mrb[0].mxu0
  %v10565 = vadd.f32 %v10340, %v10564
  %v10566 = vpop.f32.mrb[0].mxu0
  %v10567 = vpop.f32.mrb[0].mxu0
  %v10568 = vadd.f32 %v10343, %v10567
  %v10569 = vpop.f32.mrb[0].mxu0
  %10570 = vmatprep.mubr.bf16.mxu0 %v8294
  %10571 = vmatmul.mubr.bf16.gmra.mrb[0].mxu0 %v8293
  %v10572 = vpop.f32.mrb[0].mxu0
  %v10573 = vadd.f32 %v10348, %v10572
  %v10574 = vpop.f32.mrb[0].mxu0
  %v10575 = vpop.f32.mrb[0].mxu0
  %v10576 = vadd.f32 %v10351, %v10575
  %v10577 = vpop.f32.mrb[0].mxu0
  %10578 = vmatprep.mubr.bf16.mxu0 %v8312
  %10579 = vmatmul.mubr.bf16.gmra.mrb[0].mxu0 %v8311
  %v10580 = vpop.f32.mrb[0].mxu0
  %v10581 = vadd.f32 %v10356, %v10580
  %v10582 = vpop.f32.mrb[0].mxu0
  %v10583 = vpop.f32.mrb[0].mxu0
  %v10584 = vadd.f32 %v10359, %v10583
  %v10585 = vpop.f32.mrb[0].mxu0
  %10586 = vmatprep.mubr.bf16.mxu0 %v8330
  %10587 = vmatmul.mubr.bf16.gmra.mrb[0].mxu0 %v8329
  %v10588 = vpop.f32.mrb[0].mxu0
  %v10589 = vadd.f32 %v10364, %v10588
  %v10590 = vpop.f32.mrb[0].mxu0
  %v10591 = vpop.f32.mrb[0].mxu0
  %v10592 = vadd.f32 %v10367, %v10591
  %v10593 = vpop.f32.mrb[0].mxu0
  %10594 = vmatprep.mubr.bf16.mxu0 %v8348
  %10595 = vmatmul.mubr.bf16.gmra.mrb[0].mxu0 %v8347
  %v10596 = vpop.f32.mrb[0].mxu0
  %v10597 = vadd.f32 %v10372, %v10596
  %v10598 = vpop.f32.mrb[0].mxu0
  %v10599 = vpop.f32.mrb[0].mxu0
  %v10600 = vadd.f32 %v10375, %v10599
  %v10601 = vpop.f32.mrb[0].mxu0
  %10602 = vmatprep.mubr.bf16.mxu0 %v8366
  %10603 = vmatmul.mubr.bf16.gmra.mrb[0].mxu0 %v8365
  %v10604 = vpop.f32.mrb[0].mxu0
  %v10605 = vadd.f32 %v10380, %v10604
  %v10606 = vpop.f32.mrb[0].mxu0
  %v10607 = vpop.f32.mrb[0].mxu0
  %v10608 = vadd.f32 %v10383, %v10607
  %v10609 = vpop.f32.mrb[0].mxu0
  %10610 = vmatprep.mubr.bf16.mxu0 %v8384
  %10611 = vmatmul.mubr.bf16.gmra.mrb[0].mxu0 %v8383
  %v10612 = vpop.f32.mrb[0].mxu0
  %v10613 = vadd.f32 %v10388, %v10612
  %v10614 = vpop.f32.mrb[0].mxu0
  %v10615 = vpop.f32.mrb[0].mxu0
  %v10616 = vadd.f32 %v10391, %v10615
  %v10617 = vpop.f32.mrb[0].mxu0
  %10618 = vdwg.mxu0
  %10619 = vmatprep.subr.bf16.mxu0 0
  %10620 = vmatpush1.bf16.msra.mxu0 %v6211
  %10621 = vmatprep.subr.bf16.mxu0 0
  %10622 = vmatpush1.bf16.msra.mxu0 %v6212
  %10623 = vmatprep.subr.bf16.mxu0 0
  %10624 = vmatpush1.bf16.msra.mxu0 %v6213
  %10625 = vmatprep.subr.bf16.mxu0 0
  %10626 = vmatpush1.bf16.msra.mxu0 %v6214
  %10627 = vmatprep.subr.bf16.mxu0 0
  %10628 = vmatpush1.bf16.msra.mxu0 %v6215
  %10629 = vmatprep.subr.bf16.mxu0 0
  %10630 = vmatpush1.bf16.msra.mxu0 %v6216
  %10631 = vmatprep.subr.bf16.mxu0 0
  %10632 = vmatpush1.bf16.msra.mxu0 %v6217
  %10633 = vmatprep.subr.bf16.mxu0 0
  %10634 = vmatpush1.bf16.msra.mxu0 %v6218
  %10635 = vmatprep.subr.bf16.mxu0 0
  %10636 = vmatpush1.bf16.msra.mxu0 %v6219
  %10637 = vmatprep.subr.bf16.mxu0 0
  %10638 = vmatpush1.bf16.msra.mxu0 %v6220
  %10639 = vmatprep.subr.bf16.mxu0 0
  %10640 = vmatpush1.bf16.msra.mxu0 %v6221
  %10641 = vmatprep.subr.bf16.mxu0 0
  %10642 = vmatpush1.bf16.msra.mxu0 %v6222
  %10643 = vmatprep.subr.bf16.mxu0 0
  %10644 = vmatpush1.bf16.msra.mxu0 %v6223
  %10645 = vmatprep.subr.bf16.mxu0 0
  %10646 = vmatpush1.bf16.msra.mxu0 %v6224
  %10647 = vmatprep.subr.bf16.mxu0 0
  %10648 = vmatpush1.bf16.msra.mxu0 %v6225
  %10649 = vmatprep.subr.bf16.mxu0 0
  %10650 = vmatpush1.bf16.msra.mxu0 %v6226
  %10651 = vmatprep.mubr.bf16.mxu0 %v7972
  %10652 = vmatmul.mubr.bf16.gmra.mrb[0].mxu0 %v7971
  %v10653 = vpop.f32.mrb[0].mxu0
  %v10654 = vadd.f32 %v10429, %v10653
  %v10655 = vpop.f32.mrb[0].mxu0
  %v10656 = vpop.f32.mrb[0].mxu0
  %v10657 = vadd.f32 %v10432, %v10656
  %v10658 = vpop.f32.mrb[0].mxu0
  %10659 = vmatprep.mubr.bf16.mxu0 %v7990
  %10660 = vmatmul.mubr.bf16.gmra.mrb[0].mxu0 %v7989
  %v10661 = vpop.f32.mrb[0].mxu0
  %v10662 = vadd.f32 %v10437, %v10661
  %v10663 = vpop.f32.mrb[0].mxu0
  %v10664 = vpop.f32.mrb[0].mxu0
  %v10665 = vadd.f32 %v10440, %v10664
  %v10666 = vpop.f32.mrb[0].mxu0
  %10667 = vmatprep.mubr.bf16.mxu0 %v8008
  %10668 = vmatmul.mubr.bf16.gmra.mrb[0].mxu0 %v8007
  %v10669 = vpop.f32.mrb[0].mxu0
  %v10670 = vadd.f32 %v10445, %v10669
  %v10671 = vpop.f32.mrb[0].mxu0
  %v10672 = vpop.f32.mrb[0].mxu0
  %v10673 = vadd.f32 %v10448, %v10672
  %v10674 = vpop.f32.mrb[0].mxu0
  %10675 = vmatprep.mubr.bf16.mxu0 %v8026
  %10676 = vmatmul.mubr.bf16.gmra.mrb[0].mxu0 %v8025
  %v10677 = vpop.f32.mrb[0].mxu0
  %v10678 = vadd.f32 %v10453, %v10677
  %v10679 = vpop.f32.mrb[0].mxu0
  %v10680 = vpop.f32.mrb[0].mxu0
  %v10681 = vadd.f32 %v10456, %v10680
  %v10682 = vpop.f32.mrb[0].mxu0
  %10683 = vmatprep.mubr.bf16.mxu0 %v8044
  %10684 = vmatmul.mubr.bf16.gmra.mrb[0].mxu0 %v8043
  %v10685 = vpop.f32.mrb[0].mxu0
  %v10686 = vadd.f32 %v10461, %v10685
  %v10687 = vpop.f32.mrb[0].mxu0
  %v10688 = vpop.f32.mrb[0].mxu0
  %v10689 = vadd.f32 %v10464, %v10688
  %v10690 = vpop.f32.mrb[0].mxu0
  %10691 = vmatprep.mubr.bf16.mxu0 %v8062
  %10692 = vmatmul.mubr.bf16.gmra.mrb[0].mxu0 %v8061
  %v10693 = vpop.f32.mrb[0].mxu0
  %v10694 = vadd.f32 %v10469, %v10693
  %v10695 = vpop.f32.mrb[0].mxu0
  %v10696 = vpop.f32.mrb[0].mxu0
  %v10697 = vadd.f32 %v10472, %v10696
  %v10698 = vpop.f32.mrb[0].mxu0
  %10699 = vmatprep.mubr.bf16.mxu0 %v8080
  %10700 = vmatmul.mubr.bf16.gmra.mrb[0].mxu0 %v8079
  %v10701 = vpop.f32.mrb[0].mxu0
  %v10702 = vadd.f32 %v10477, %v10701
  %v10703 = vpop.f32.mrb[0].mxu0
  %v10704 = vpop.f32.mrb[0].mxu0
  %v10705 = vadd.f32 %v10480, %v10704
  %v10706 = vpop.f32.mrb[0].mxu0
  %10707 = vmatprep.mubr.bf16.mxu0 %v8098
  %10708 = vmatmul.mubr.bf16.gmra.mrb[0].mxu0 %v8097
  %v10709 = vpop.f32.mrb[0].mxu0
  %v10710 = vadd.f32 %v10485, %v10709
  %v10711 = vpop.f32.mrb[0].mxu0
  %v10712 = vpop.f32.mrb[0].mxu0
  %v10713 = vadd.f32 %v10488, %v10712
  %v10714 = vpop.f32.mrb[0].mxu0
  %10715 = vmatprep.mubr.bf16.mxu0 %v8116
  %10716 = vmatmul.mubr.bf16.gmra.mrb[0].mxu0 %v8115
  %v10717 = vpop.f32.mrb[0].mxu0
  %v10718 = vadd.f32 %v10493, %v10717
  %v10719 = vpop.f32.mrb[0].mxu0
  %v10720 = vpop.f32.mrb[0].mxu0
  %v10721 = vadd.f32 %v10496, %v10720
  %v10722 = vpop.f32.mrb[0].mxu0
  %10723 = vmatprep.mubr.bf16.mxu0 %v8134
  %10724 = vmatmul.mubr.bf16.gmra.mrb[0].mxu0 %v8133
  %v10725 = vpop.f32.mrb[0].mxu0
  %v10726 = vadd.f32 %v10501, %v10725
  %v10727 = vpop.f32.mrb[0].mxu0
  %v10728 = vpop.f32.mrb[0].mxu0
  %v10729 = vadd.f32 %v10504, %v10728
  %v10730 = vpop.f32.mrb[0].mxu0
  %10731 = vmatprep.mubr.bf16.mxu0 %v8152
  %10732 = vmatmul.mubr.bf16.gmra.mrb[0].mxu0 %v8151
  %v10733 = vpop.f32.mrb[0].mxu0
  %v10734 = vadd.f32 %v10509, %v10733
  %v10735 = vpop.f32.mrb[0].mxu0
  %v10736 = vpop.f32.mrb[0].mxu0
  %v10737 = vadd.f32 %v10512, %v10736
  %v10738 = vpop.f32.mrb[0].mxu0
  %10739 = vmatprep.mubr.bf16.mxu0 %v8170
  %10740 = vmatmul.mubr.bf16.gmra.mrb[0].mxu0 %v8169
  %v10741 = vpop.f32.mrb[0].mxu0
  %v10742 = vadd.f32 %v10517, %v10741
  %v10743 = vpop.f32.mrb[0].mxu0
  %v10744 = vpop.f32.mrb[0].mxu0
  %v10745 = vadd.f32 %v10520, %v10744
  %v10746 = vpop.f32.mrb[0].mxu0
  %10747 = vmatprep.mubr.bf16.mxu0 %v8188
  %10748 = vmatmul.mubr.bf16.gmra.mrb[0].mxu0 %v8187
  %v10749 = vpop.f32.mrb[0].mxu0
  %v10750 = vadd.f32 %v10525, %v10749
  %v10751 = vpop.f32.mrb[0].mxu0
  %v10752 = vpop.f32.mrb[0].mxu0
  %v10753 = vadd.f32 %v10528, %v10752
  %v10754 = vpop.f32.mrb[0].mxu0
  %10755 = vmatprep.mubr.bf16.mxu0 %v8206
  %10756 = vmatmul.mubr.bf16.gmra.mrb[0].mxu0 %v8205
  %v10757 = vpop.f32.mrb[0].mxu0
  %v10758 = vadd.f32 %v10533, %v10757
  %v10759 = vpop.f32.mrb[0].mxu0
  %v10760 = vpop.f32.mrb[0].mxu0
  %v10761 = vadd.f32 %v10536, %v10760
  %v10762 = vpop.f32.mrb[0].mxu0
  %10763 = vmatprep.mubr.bf16.mxu0 %v8224
  %10764 = vmatmul.mubr.bf16.gmra.mrb[0].mxu0 %v8223
  %v10765 = vpop.f32.mrb[0].mxu0
  %v10766 = vadd.f32 %v10541, %v10765
  %v10767 = vpop.f32.mrb[0].mxu0
  %v10768 = vpop.f32.mrb[0].mxu0
  %v10769 = vadd.f32 %v10544, %v10768
  %v10770 = vpop.f32.mrb[0].mxu0
  %10771 = vmatprep.mubr.bf16.mxu0 %v8242
  %10772 = vmatmul.mubr.bf16.gmra.mrb[0].mxu0 %v8241
  %v10773 = vpop.f32.mrb[0].mxu0
  %v10774 = vadd.f32 %v10549, %v10773
  %v10775 = vpop.f32.mrb[0].mxu0
  %v10776 = vpop.f32.mrb[0].mxu0
  %v10777 = vadd.f32 %v10552, %v10776
  %v10778 = vpop.f32.mrb[0].mxu0
  %10779 = vmatprep.mubr.bf16.mxu0 %v8260
  %10780 = vmatmul.mubr.bf16.gmra.mrb[0].mxu0 %v8259
  %v10781 = vpop.f32.mrb[0].mxu0
  %v10782 = vadd.f32 %v10557, %v10781
  %v10783 = vpop.f32.mrb[0].mxu0
  %v10784 = vpop.f32.mrb[0].mxu0
  %v10785 = vadd.f32 %v10560, %v10784
  %v10786 = vpop.f32.mrb[0].mxu0
  %10787 = vmatprep.mubr.bf16.mxu0 %v8278
  %10788 = vmatmul.mubr.bf16.gmra.mrb[0].mxu0 %v8277
  %v10789 = vpop.f32.mrb[0].mxu0
  %v10790 = vadd.f32 %v10565, %v10789
  %v10791 = vpop.f32.mrb[0].mxu0
  %v10792 = vpop.f32.mrb[0].mxu0
  %v10793 = vadd.f32 %v10568, %v10792
  %v10794 = vpop.f32.mrb[0].mxu0
  %10795 = vmatprep.mubr.bf16.mxu0 %v8296
  %10796 = vmatmul.mubr.bf16.gmra.mrb[0].mxu0 %v8295
  %v10797 = vpop.f32.mrb[0].mxu0
  %v10798 = vadd.f32 %v10573, %v10797
  %v10799 = vpop.f32.mrb[0].mxu0
  %v10800 = vpop.f32.mrb[0].mxu0
  %v10801 = vadd.f32 %v10576, %v10800
  %v10802 = vpop.f32.mrb[0].mxu0
  %10803 = vmatprep.mubr.bf16.mxu0 %v8314
  %10804 = vmatmul.mubr.bf16.gmra.mrb[0].mxu0 %v8313
  %v10805 = vpop.f32.mrb[0].mxu0
  %v10806 = vadd.f32 %v10581, %v10805
  %v10807 = vpop.f32.mrb[0].mxu0
  %v10808 = vpop.f32.mrb[0].mxu0
  %v10809 = vadd.f32 %v10584, %v10808
  %v10810 = vpop.f32.mrb[0].mxu0
  %10811 = vmatprep.mubr.bf16.mxu0 %v8332
  %10812 = vmatmul.mubr.bf16.gmra.mrb[0].mxu0 %v8331
  %v10813 = vpop.f32.mrb[0].mxu0
  %v10814 = vadd.f32 %v10589, %v10813
  %v10815 = vpop.f32.mrb[0].mxu0
  %v10816 = vpop.f32.mrb[0].mxu0
  %v10817 = vadd.f32 %v10592, %v10816
  %v10818 = vpop.f32.mrb[0].mxu0
  %10819 = vmatprep.mubr.bf16.mxu0 %v8350
  %10820 = vmatmul.mubr.bf16.gmra.mrb[0].mxu0 %v8349
  %v10821 = vpop.f32.mrb[0].mxu0
  %v10822 = vadd.f32 %v10597, %v10821
  %v10823 = vpop.f32.mrb[0].mxu0
  %v10824 = vpop.f32.mrb[0].mxu0
  %v10825 = vadd.f32 %v10600, %v10824
  %v10826 = vpop.f32.mrb[0].mxu0
  %10827 = vmatprep.mubr.bf16.mxu0 %v8368
  %10828 = vmatmul.mubr.bf16.gmra.mrb[0].mxu0 %v8367
  %v10829 = vpop.f32.mrb[0].mxu0
  %v10830 = vadd.f32 %v10605, %v10829
  %v10831 = vpop.f32.mrb[0].mxu0
  %v10832 = vpop.f32.mrb[0].mxu0
  %v10833 = vadd.f32 %v10608, %v10832
  %v10834 = vpop.f32.mrb[0].mxu0
  %10835 = vmatprep.mubr.bf16.mxu0 %v8386
  %10836 = vmatmul.mubr.bf16.gmra.mrb[0].mxu0 %v8385
  %v10837 = vpop.f32.mrb[0].mxu0
  %v10838 = vadd.f32 %v10613, %v10837
  %v10839 = vpop.f32.mrb[0].mxu0
  %v10840 = vpop.f32.mrb[0].mxu0
  %v10841 = vadd.f32 %v10616, %v10840
  %v10842 = vpop.f32.mrb[0].mxu0
  %10843 = vdwg.mxu0
  %vm10844 = vcmask 400384
  %v10845 = vsel %vm10844, %v10654, 0.0
  %10846 = vadd.xlane.f32.xlu0 %v10845
  %v10847 = vpop.xlane.xlu0 %10846
  %v10848 = vsel %vm10844, %v10657, 0.0
  %10849 = vadd.xlane.f32.xlu0 %v10848
  %v10850 = vpop.xlane.xlu0 %10849
  %v10851 = vsel %vm10844, %v10662, 0.0
  %10852 = vadd.xlane.f32.xlu0 %v10851
  %v10853 = vpop.xlane.xlu0 %10852
  %v10854 = vsel %vm10844, %v10665, 0.0
  %10855 = vadd.xlane.f32.xlu0 %v10854
  %v10856 = vpop.xlane.xlu0 %10855
  %v10857 = vsel %vm10844, %v10670, 0.0
  %10858 = vadd.xlane.f32.xlu0 %v10857
  %v10859 = vpop.xlane.xlu0 %10858
  %v10860 = vsel %vm10844, %v10673, 0.0
  %10861 = vadd.xlane.f32.xlu0 %v10860
  %v10862 = vpop.xlane.xlu0 %10861
  %v10863 = vsel %vm10844, %v10678, 0.0
  %10864 = vadd.xlane.f32.xlu0 %v10863
  %v10865 = vpop.xlane.xlu0 %10864
  %v10866 = vsel %vm10844, %v10681, 0.0
  %10867 = vadd.xlane.f32.xlu0 %v10866
  %v10868 = vpop.xlane.xlu0 %10867
  %v10869 = vsel %vm10844, %v10686, 0.0
  %10870 = vadd.xlane.f32.xlu0 %v10869
  %v10871 = vpop.xlane.xlu0 %10870
  %v10872 = vsel %vm10844, %v10689, 0.0
  %10873 = vadd.xlane.f32.xlu0 %v10872
  %v10874 = vpop.xlane.xlu0 %10873
  %v10875 = vsel %vm10844, %v10694, 0.0
  %10876 = vadd.xlane.f32.xlu0 %v10875
  %v10877 = vpop.xlane.xlu0 %10876
  %v10878 = vsel %vm10844, %v10697, 0.0
  %10879 = vadd.xlane.f32.xlu0 %v10878
  %v10880 = vpop.xlane.xlu0 %10879
  %v10881 = vsel %vm10844, %v10702, 0.0
  %10882 = vadd.xlane.f32.xlu0 %v10881
  %v10883 = vpop.xlane.xlu0 %10882
  %v10884 = vsel %vm10844, %v10705, 0.0
  %10885 = vadd.xlane.f32.xlu0 %v10884
  %v10886 = vpop.xlane.xlu0 %10885
  %v10887 = vsel %vm10844, %v10710, 0.0
  %10888 = vadd.xlane.f32.xlu0 %v10887
  %v10889 = vpop.xlane.xlu0 %10888
  %v10890 = vsel %vm10844, %v10713, 0.0
  %10891 = vadd.xlane.f32.xlu0 %v10890
  %v10892 = vpop.xlane.xlu0 %10891
  %v10893 = vsel %vm10844, %v10718, 0.0
  %10894 = vadd.xlane.f32.xlu0 %v10893
  %v10895 = vpop.xlane.xlu0 %10894
  %v10896 = vsel %vm10844, %v10721, 0.0
  %10897 = vadd.xlane.f32.xlu0 %v10896
  %v10898 = vpop.xlane.xlu0 %10897
  %v10899 = vsel %vm10844, %v10726, 0.0
  %10900 = vadd.xlane.f32.xlu0 %v10899
  %v10901 = vpop.xlane.xlu0 %10900
  %v10902 = vsel %vm10844, %v10729, 0.0
  %10903 = vadd.xlane.f32.xlu0 %v10902
  %v10904 = vpop.xlane.xlu0 %10903
  %v10905 = vsel %vm10844, %v10734, 0.0
  %10906 = vadd.xlane.f32.xlu0 %v10905
  %v10907 = vpop.xlane.xlu0 %10906
  %v10908 = vsel %vm10844, %v10737, 0.0
  %10909 = vadd.xlane.f32.xlu0 %v10908
  %v10910 = vpop.xlane.xlu0 %10909
  %v10911 = vsel %vm10844, %v10742, 0.0
  %10912 = vadd.xlane.f32.xlu0 %v10911
  %v10913 = vpop.xlane.xlu0 %10912
  %v10914 = vsel %vm10844, %v10745, 0.0
  %10915 = vadd.xlane.f32.xlu0 %v10914
  %v10916 = vpop.xlane.xlu0 %10915
  %v10917 = vsel %vm10844, %v10750, 0.0
  %10918 = vadd.xlane.f32.xlu0 %v10917
  %v10919 = vpop.xlane.xlu0 %10918
  %v10920 = vsel %vm10844, %v10753, 0.0
  %10921 = vadd.xlane.f32.xlu0 %v10920
  %v10922 = vpop.xlane.xlu0 %10921
  %v10923 = vsel %vm10844, %v10758, 0.0
  %10924 = vadd.xlane.f32.xlu0 %v10923
  %v10925 = vpop.xlane.xlu0 %10924
  %v10926 = vsel %vm10844, %v10761, 0.0
  %10927 = vadd.xlane.f32.xlu0 %v10926
  %v10928 = vpop.xlane.xlu0 %10927
  %v10929 = vsel %vm10844, %v10766, 0.0
  %10930 = vadd.xlane.f32.xlu0 %v10929
  %v10931 = vpop.xlane.xlu0 %10930
  %v10932 = vsel %vm10844, %v10769, 0.0
  %10933 = vadd.xlane.f32.xlu0 %v10932
  %v10934 = vpop.xlane.xlu0 %10933
  %v10935 = vsel %vm10844, %v10774, 0.0
  %10936 = vadd.xlane.f32.xlu0 %v10935
  %v10937 = vpop.xlane.xlu0 %10936
  %v10938 = vsel %vm10844, %v10777, 0.0
  %10939 = vadd.xlane.f32.xlu0 %v10938
  %v10940 = vpop.xlane.xlu0 %10939
  %v10941 = vsel %vm10844, %v10782, 0.0
  %10942 = vadd.xlane.f32.xlu0 %v10941
  %v10943 = vpop.xlane.xlu0 %10942
  %v10944 = vsel %vm10844, %v10785, 0.0
  %10945 = vadd.xlane.f32.xlu0 %v10944
  %v10946 = vpop.xlane.xlu0 %10945
  %v10947 = vsel %vm10844, %v10790, 0.0
  %10948 = vadd.xlane.f32.xlu0 %v10947
  %v10949 = vpop.xlane.xlu0 %10948
  %v10950 = vsel %vm10844, %v10793, 0.0
  %10951 = vadd.xlane.f32.xlu0 %v10950
  %v10952 = vpop.xlane.xlu0 %10951
  %v10953 = vsel %vm10844, %v10798, 0.0
  %10954 = vadd.xlane.f32.xlu0 %v10953
  %v10955 = vpop.xlane.xlu0 %10954
  %v10956 = vsel %vm10844, %v10801, 0.0
  %10957 = vadd.xlane.f32.xlu0 %v10956
  %v10958 = vpop.xlane.xlu0 %10957
  %v10959 = vsel %vm10844, %v10806, 0.0
  %10960 = vadd.xlane.f32.xlu0 %v10959
  %v10961 = vpop.xlane.xlu0 %10960
  %v10962 = vsel %vm10844, %v10809, 0.0
  %10963 = vadd.xlane.f32.xlu0 %v10962
  %v10964 = vpop.xlane.xlu0 %10963
  %v10965 = vsel %vm10844, %v10814, 0.0
  %10966 = vadd.xlane.f32.xlu0 %v10965
  %v10967 = vpop.xlane.xlu0 %10966
  %v10968 = vsel %vm10844, %v10817, 0.0
  %10969 = vadd.xlane.f32.xlu0 %v10968
  %v10970 = vpop.xlane.xlu0 %10969
  %v10971 = vsel %vm10844, %v10822, 0.0
  %10972 = vadd.xlane.f32.xlu0 %v10971
  %v10973 = vpop.xlane.xlu0 %10972
  %v10974 = vsel %vm10844, %v10825, 0.0
  %10975 = vadd.xlane.f32.xlu0 %v10974
  %v10976 = vpop.xlane.xlu0 %10975
  %v10977 = vsel %vm10844, %v10830, 0.0
  %10978 = vadd.xlane.f32.xlu0 %v10977
  %v10979 = vpop.xlane.xlu0 %10978
  %v10980 = vsel %vm10844, %v10833, 0.0
  %10981 = vadd.xlane.f32.xlu0 %v10980
  %v10982 = vpop.xlane.xlu0 %10981
  %v10983 = vsel %vm10844, %v10838, 0.0
  %10984 = vadd.xlane.f32.xlu0 %v10983
  %v10985 = vpop.xlane.xlu0 %10984
  %v10986 = vsel %vm10844, %v10841, 0.0
  %10987 = vadd.xlane.f32.xlu0 %v10986
  %v10988 = vpop.xlane.xlu0 %10987
  %v10989 = vrcp.pop 49.0
  %v10990 = vmul.f32 %v10847, %v10989
  %v10991 = vmul.f32 %v10850, %v10989
  %v10992 = vmul.f32 %v10853, %v10989
  %v10993 = vmul.f32 %v10856, %v10989
  %v10994 = vmul.f32 %v10859, %v10989
  %v10995 = vmul.f32 %v10862, %v10989
  %v10996 = vmul.f32 %v10865, %v10989
  %v10997 = vmul.f32 %v10868, %v10989
  %v10998 = vmul.f32 %v10871, %v10989
  %v10999 = vmul.f32 %v10874, %v10989
  %v11000 = vmul.f32 %v10877, %v10989
  %v11001 = vmul.f32 %v10880, %v10989
  %v11002 = vmul.f32 %v10883, %v10989
  %v11003 = vmul.f32 %v10886, %v10989
  %v11004 = vmul.f32 %v10889, %v10989
  %v11005 = vmul.f32 %v10892, %v10989
  %v11006 = vmul.f32 %v10895, %v10989
  %v11007 = vmul.f32 %v10898, %v10989
  %v11008 = vmul.f32 %v10901, %v10989
  %v11009 = vmul.f32 %v10904, %v10989
  %v11010 = vmul.f32 %v10907, %v10989
  %v11011 = vmul.f32 %v10910, %v10989
  %v11012 = vmul.f32 %v10913, %v10989
  %v11013 = vmul.f32 %v10916, %v10989
  %v11014 = vmul.f32 %v10919, %v10989
  %v11015 = vmul.f32 %v10922, %v10989
  %v11016 = vmul.f32 %v10925, %v10989
  %v11017 = vmul.f32 %v10928, %v10989
  %v11018 = vmul.f32 %v10931, %v10989
  %v11019 = vmul.f32 %v10934, %v10989
  %v11020 = vmul.f32 %v10937, %v10989
  %v11021 = vmul.f32 %v10940, %v10989
  %v11022 = vmul.f32 %v10943, %v10989
  %v11023 = vmul.f32 %v10946, %v10989
  %v11024 = vmul.f32 %v10949, %v10989
  %v11025 = vmul.f32 %v10952, %v10989
  %v11026 = vmul.f32 %v10955, %v10989
  %v11027 = vmul.f32 %v10958, %v10989
  %v11028 = vmul.f32 %v10961, %v10989
  %v11029 = vmul.f32 %v10964, %v10989
  %v11030 = vmul.f32 %v10967, %v10989
  %v11031 = vmul.f32 %v10970, %v10989
  %v11032 = vmul.f32 %v10973, %v10989
  %v11033 = vmul.f32 %v10976, %v10989
  %v11034 = vmul.f32 %v10979, %v10989
  %v11035 = vmul.f32 %v10982, %v10989
  %v11036 = vmul.f32 %v10985, %v10989
  %v11037 = vmul.f32 %v10988, %v10989
  %v11038 = vsub.f32 %v10654, %v10990
  %v11039 = vsub.f32 %v10657, %v10991
  %v11040 = vsub.f32 %v10662, %v10992
  %v11041 = vsub.f32 %v10665, %v10993
  %v11042 = vsub.f32 %v10670, %v10994
  %v11043 = vsub.f32 %v10673, %v10995
  %v11044 = vsub.f32 %v10678, %v10996
  %v11045 = vsub.f32 %v10681, %v10997
  %v11046 = vsub.f32 %v10686, %v10998
  %v11047 = vsub.f32 %v10689, %v10999
  %v11048 = vsub.f32 %v10694, %v11000
  %v11049 = vsub.f32 %v10697, %v11001
  %v11050 = vsub.f32 %v10702, %v11002
  %v11051 = vsub.f32 %v10705, %v11003
  %v11052 = vsub.f32 %v10710, %v11004
  %v11053 = vsub.f32 %v10713, %v11005
  %v11054 = vsub.f32 %v10718, %v11006
  %v11055 = vsub.f32 %v10721, %v11007
  %v11056 = vsub.f32 %v10726, %v11008
  %v11057 = vsub.f32 %v10729, %v11009
  %v11058 = vsub.f32 %v10734, %v11010
  %v11059 = vsub.f32 %v10737, %v11011
  %v11060 = vsub.f32 %v10742, %v11012
  %v11061 = vsub.f32 %v10745, %v11013
  %v11062 = vsub.f32 %v10750, %v11014
  %v11063 = vsub.f32 %v10753, %v11015
  %v11064 = vsub.f32 %v10758, %v11016
  %v11065 = vsub.f32 %v10761, %v11017
  %v11066 = vsub.f32 %v10766, %v11018
  %v11067 = vsub.f32 %v10769, %v11019
  %v11068 = vsub.f32 %v10774, %v11020
  %v11069 = vsub.f32 %v10777, %v11021
  %v11070 = vsub.f32 %v10782, %v11022
  %v11071 = vsub.f32 %v10785, %v11023
  %v11072 = vsub.f32 %v10790, %v11024
  %v11073 = vsub.f32 %v10793, %v11025
  %v11074 = vsub.f32 %v10798, %v11026
  %v11075 = vsub.f32 %v10801, %v11027
  %v11076 = vsub.f32 %v10806, %v11028
  %v11077 = vsub.f32 %v10809, %v11029
  %v11078 = vsub.f32 %v10814, %v11030
  %v11079 = vsub.f32 %v10817, %v11031
  %v11080 = vsub.f32 %v10822, %v11032
  %v11081 = vsub.f32 %v10825, %v11033
  %v11082 = vsub.f32 %v10830, %v11034
  %v11083 = vsub.f32 %v10833, %v11035
  %v11084 = vsub.f32 %v10838, %v11036
  %v11085 = vsub.f32 %v10841, %v11037
  %v11086 = vmul.f32 %v11038, %v11038
  %v11087 = vmul.f32 %v11039, %v11039
  %v11088 = vmul.f32 %v11040, %v11040
  %v11089 = vmul.f32 %v11041, %v11041
  %v11090 = vmul.f32 %v11042, %v11042
  %v11091 = vmul.f32 %v11043, %v11043
  %v11092 = vmul.f32 %v11044, %v11044
  %v11093 = vmul.f32 %v11045, %v11045
  %v11094 = vmul.f32 %v11046, %v11046
  %v11095 = vmul.f32 %v11047, %v11047
  %v11096 = vmul.f32 %v11048, %v11048
  %v11097 = vmul.f32 %v11049, %v11049
  %v11098 = vmul.f32 %v11050, %v11050
  %v11099 = vmul.f32 %v11051, %v11051
  %v11100 = vmul.f32 %v11052, %v11052
  %v11101 = vmul.f32 %v11053, %v11053
  %v11102 = vmul.f32 %v11054, %v11054
  %v11103 = vmul.f32 %v11055, %v11055
  %v11104 = vmul.f32 %v11056, %v11056
  %v11105 = vmul.f32 %v11057, %v11057
  %v11106 = vmul.f32 %v11058, %v11058
  %v11107 = vmul.f32 %v11059, %v11059
  %v11108 = vmul.f32 %v11060, %v11060
  %v11109 = vmul.f32 %v11061, %v11061
  %v11110 = vmul.f32 %v11062, %v11062
  %v11111 = vmul.f32 %v11063, %v11063
  %v11112 = vmul.f32 %v11064, %v11064
  %v11113 = vmul.f32 %v11065, %v11065
  %v11114 = vmul.f32 %v11066, %v11066
  %v11115 = vmul.f32 %v11067, %v11067
  %v11116 = vmul.f32 %v11068, %v11068
  %v11117 = vmul.f32 %v11069, %v11069
  %v11118 = vmul.f32 %v11070, %v11070
  %v11119 = vmul.f32 %v11071, %v11071
  %v11120 = vmul.f32 %v11072, %v11072
  %v11121 = vmul.f32 %v11073, %v11073
  %v11122 = vmul.f32 %v11074, %v11074
  %v11123 = vmul.f32 %v11075, %v11075
  %v11124 = vmul.f32 %v11076, %v11076
  %v11125 = vmul.f32 %v11077, %v11077
  %v11126 = vmul.f32 %v11078, %v11078
  %v11127 = vmul.f32 %v11079, %v11079
  %v11128 = vmul.f32 %v11080, %v11080
  %v11129 = vmul.f32 %v11081, %v11081
  %v11130 = vmul.f32 %v11082, %v11082
  %v11131 = vmul.f32 %v11083, %v11083
  %v11132 = vmul.f32 %v11084, %v11084
  %v11133 = vmul.f32 %v11085, %v11085
  %v11134 = vsel %vm10844, %v11086, 0.0
  %11135 = vadd.xlane.f32.xlu0 %v11134
  %v11136 = vpop.xlane.xlu0 %11135
  %v11137 = vsel %vm10844, %v11087, 0.0
  %11138 = vadd.xlane.f32.xlu0 %v11137
  %v11139 = vpop.xlane.xlu0 %11138
  %v11140 = vsel %vm10844, %v11088, 0.0
  %11141 = vadd.xlane.f32.xlu0 %v11140
  %v11142 = vpop.xlane.xlu0 %11141
  %v11143 = vsel %vm10844, %v11089, 0.0
  %11144 = vadd.xlane.f32.xlu0 %v11143
  %v11145 = vpop.xlane.xlu0 %11144
  %v11146 = vsel %vm10844, %v11090, 0.0
  %11147 = vadd.xlane.f32.xlu0 %v11146
  %v11148 = vpop.xlane.xlu0 %11147
  %v11149 = vsel %vm10844, %v11091, 0.0
  %11150 = vadd.xlane.f32.xlu0 %v11149
  %v11151 = vpop.xlane.xlu0 %11150
  %v11152 = vsel %vm10844, %v11092, 0.0
  %11153 = vadd.xlane.f32.xlu0 %v11152
  %v11154 = vpop.xlane.xlu0 %11153
  %v11155 = vsel %vm10844, %v11093, 0.0
  %11156 = vadd.xlane.f32.xlu0 %v11155
  %v11157 = vpop.xlane.xlu0 %11156
  %v11158 = vsel %vm10844, %v11094, 0.0
  %11159 = vadd.xlane.f32.xlu0 %v11158
  %v11160 = vpop.xlane.xlu0 %11159
  %v11161 = vsel %vm10844, %v11095, 0.0
  %11162 = vadd.xlane.f32.xlu0 %v11161
  %v11163 = vpop.xlane.xlu0 %11162
  %v11164 = vsel %vm10844, %v11096, 0.0
  %11165 = vadd.xlane.f32.xlu0 %v11164
  %v11166 = vpop.xlane.xlu0 %11165
  %v11167 = vsel %vm10844, %v11097, 0.0
  %11168 = vadd.xlane.f32.xlu0 %v11167
  %v11169 = vpop.xlane.xlu0 %11168
  %v11170 = vsel %vm10844, %v11098, 0.0
  %11171 = vadd.xlane.f32.xlu0 %v11170
  %v11172 = vpop.xlane.xlu0 %11171
  %v11173 = vsel %vm10844, %v11099, 0.0
  %11174 = vadd.xlane.f32.xlu0 %v11173
  %v11175 = vpop.xlane.xlu0 %11174
  %v11176 = vsel %vm10844, %v11100, 0.0
  %11177 = vadd.xlane.f32.xlu0 %v11176
  %v11178 = vpop.xlane.xlu0 %11177
  %v11179 = vsel %vm10844, %v11101, 0.0
  %11180 = vadd.xlane.f32.xlu0 %v11179
  %v11181 = vpop.xlane.xlu0 %11180
  %v11182 = vsel %vm10844, %v11102, 0.0
  %11183 = vadd.xlane.f32.xlu0 %v11182
  %v11184 = vpop.xlane.xlu0 %11183
  %v11185 = vsel %vm10844, %v11103, 0.0
  %11186 = vadd.xlane.f32.xlu0 %v11185
  %v11187 = vpop.xlane.xlu0 %11186
  %v11188 = vsel %vm10844, %v11104, 0.0
  %11189 = vadd.xlane.f32.xlu0 %v11188
  %v11190 = vpop.xlane.xlu0 %11189
  %v11191 = vsel %vm10844, %v11105, 0.0
  %11192 = vadd.xlane.f32.xlu0 %v11191
  %v11193 = vpop.xlane.xlu0 %11192
  %v11194 = vsel %vm10844, %v11106, 0.0
  %11195 = vadd.xlane.f32.xlu0 %v11194
  %v11196 = vpop.xlane.xlu0 %11195
  %v11197 = vsel %vm10844, %v11107, 0.0
  %11198 = vadd.xlane.f32.xlu0 %v11197
  %v11199 = vpop.xlane.xlu0 %11198
  %v11200 = vsel %vm10844, %v11108, 0.0
  %11201 = vadd.xlane.f32.xlu0 %v11200
  %v11202 = vpop.xlane.xlu0 %11201
  %v11203 = vsel %vm10844, %v11109, 0.0
  %11204 = vadd.xlane.f32.xlu0 %v11203
  %v11205 = vpop.xlane.xlu0 %11204
  %v11206 = vsel %vm10844, %v11110, 0.0
  %11207 = vadd.xlane.f32.xlu0 %v11206
  %v11208 = vpop.xlane.xlu0 %11207
  %v11209 = vsel %vm10844, %v11111, 0.0
  %11210 = vadd.xlane.f32.xlu0 %v11209
  %v11211 = vpop.xlane.xlu0 %11210
  %v11212 = vsel %vm10844, %v11112, 0.0
  %11213 = vadd.xlane.f32.xlu0 %v11212
  %v11214 = vpop.xlane.xlu0 %11213
  %v11215 = vsel %vm10844, %v11113, 0.0
  %11216 = vadd.xlane.f32.xlu0 %v11215
  %v11217 = vpop.xlane.xlu0 %11216
  %v11218 = vsel %vm10844, %v11114, 0.0
  %11219 = vadd.xlane.f32.xlu0 %v11218
  %v11220 = vpop.xlane.xlu0 %11219
  %v11221 = vsel %vm10844, %v11115, 0.0
  %11222 = vadd.xlane.f32.xlu0 %v11221
  %v11223 = vpop.xlane.xlu0 %11222
  %v11224 = vsel %vm10844, %v11116, 0.0
  %11225 = vadd.xlane.f32.xlu0 %v11224
  %v11226 = vpop.xlane.xlu0 %11225
  %v11227 = vsel %vm10844, %v11117, 0.0
  %11228 = vadd.xlane.f32.xlu0 %v11227
  %v11229 = vpop.xlane.xlu0 %11228
  %v11230 = vsel %vm10844, %v11118, 0.0
  %11231 = vadd.xlane.f32.xlu0 %v11230
  %v11232 = vpop.xlane.xlu0 %11231
  %v11233 = vsel %vm10844, %v11119, 0.0
  %11234 = vadd.xlane.f32.xlu0 %v11233
  %v11235 = vpop.xlane.xlu0 %11234
  %v11236 = vsel %vm10844, %v11120, 0.0
  %11237 = vadd.xlane.f32.xlu0 %v11236
  %v11238 = vpop.xlane.xlu0 %11237
  %v11239 = vsel %vm10844, %v11121, 0.0
  %11240 = vadd.xlane.f32.xlu0 %v11239
  %v11241 = vpop.xlane.xlu0 %11240
  %v11242 = vsel %vm10844, %v11122, 0.0
  %11243 = vadd.xlane.f32.xlu0 %v11242
  %v11244 = vpop.xlane.xlu0 %11243
  %v11245 = vsel %vm10844, %v11123, 0.0
  %11246 = vadd.xlane.f32.xlu0 %v11245
  %v11247 = vpop.xlane.xlu0 %11246
  %v11248 = vsel %vm10844, %v11124, 0.0
  %11249 = vadd.xlane.f32.xlu0 %v11248
  %v11250 = vpop.xlane.xlu0 %11249
  %v11251 = vsel %vm10844, %v11125, 0.0
  %11252 = vadd.xlane.f32.xlu0 %v11251
  %v11253 = vpop.xlane.xlu0 %11252
  %v11254 = vsel %vm10844, %v11126, 0.0
  %11255 = vadd.xlane.f32.xlu0 %v11254
  %v11256 = vpop.xlane.xlu0 %11255
  %v11257 = vsel %vm10844, %v11127, 0.0
  %11258 = vadd.xlane.f32.xlu0 %v11257
  %v11259 = vpop.xlane.xlu0 %11258
  %v11260 = vsel %vm10844, %v11128, 0.0
  %11261 = vadd.xlane.f32.xlu0 %v11260
  %v11262 = vpop.xlane.xlu0 %11261
  %v11263 = vsel %vm10844, %v11129, 0.0
  %11264 = vadd.xlane.f32.xlu0 %v11263
  %v11265 = vpop.xlane.xlu0 %11264
  %v11266 = vsel %vm10844, %v11130, 0.0
  %11267 = vadd.xlane.f32.xlu0 %v11266
  %v11268 = vpop.xlane.xlu0 %11267
  %v11269 = vsel %vm10844, %v11131, 0.0
  %11270 = vadd.xlane.f32.xlu0 %v11269
  %v11271 = vpop.xlane.xlu0 %11270
  %v11272 = vsel %vm10844, %v11132, 0.0
  %11273 = vadd.xlane.f32.xlu0 %v11272
  %v11274 = vpop.xlane.xlu0 %11273
  %v11275 = vsel %vm10844, %v11133, 0.0
  %11276 = vadd.xlane.f32.xlu0 %v11275
  %v11277 = vpop.xlane.xlu0 %11276
  %v11278 = vmul.f32 %v11136, %v10989
  %v11279 = vmul.f32 %v11139, %v10989
  %v11280 = vmul.f32 %v11142, %v10989
  %v11281 = vmul.f32 %v11145, %v10989
  %v11282 = vmul.f32 %v11148, %v10989
  %v11283 = vmul.f32 %v11151, %v10989
  %v11284 = vmul.f32 %v11154, %v10989
  %v11285 = vmul.f32 %v11157, %v10989
  %v11286 = vmul.f32 %v11160, %v10989
  %v11287 = vmul.f32 %v11163, %v10989
  %v11288 = vmul.f32 %v11166, %v10989
  %v11289 = vmul.f32 %v11169, %v10989
  %v11290 = vmul.f32 %v11172, %v10989
  %v11291 = vmul.f32 %v11175, %v10989
  %v11292 = vmul.f32 %v11178, %v10989
  %v11293 = vmul.f32 %v11181, %v10989
  %v11294 = vmul.f32 %v11184, %v10989
  %v11295 = vmul.f32 %v11187, %v10989
  %v11296 = vmul.f32 %v11190, %v10989
  %v11297 = vmul.f32 %v11193, %v10989
  %v11298 = vmul.f32 %v11196, %v10989
  %v11299 = vmul.f32 %v11199, %v10989
  %v11300 = vmul.f32 %v11202, %v10989
  %v11301 = vmul.f32 %v11205, %v10989
  %v11302 = vmul.f32 %v11208, %v10989
  %v11303 = vmul.f32 %v11211, %v10989
  %v11304 = vmul.f32 %v11214, %v10989
  %v11305 = vmul.f32 %v11217, %v10989
  %v11306 = vmul.f32 %v11220, %v10989
  %v11307 = vmul.f32 %v11223, %v10989
  %v11308 = vmul.f32 %v11226, %v10989
  %v11309 = vmul.f32 %v11229, %v10989
  %v11310 = vmul.f32 %v11232, %v10989
  %v11311 = vmul.f32 %v11235, %v10989
  %v11312 = vmul.f32 %v11238, %v10989
  %v11313 = vmul.f32 %v11241, %v10989
  %v11314 = vmul.f32 %v11244, %v10989
  %v11315 = vmul.f32 %v11247, %v10989
  %v11316 = vmul.f32 %v11250, %v10989
  %v11317 = vmul.f32 %v11253, %v10989
  %v11318 = vmul.f32 %v11256, %v10989
  %v11319 = vmul.f32 %v11259, %v10989
  %v11320 = vmul.f32 %v11262, %v10989
  %v11321 = vmul.f32 %v11265, %v10989
  %v11322 = vmul.f32 %v11268, %v10989
  %v11323 = vmul.f32 %v11271, %v10989
  %v11324 = vmul.f32 %v11274, %v10989
  %v11325 = vmul.f32 %v11277, %v10989
  %v11326 = vadd.f32 %v11278, 0.001
  %v11327 = vadd.f32 %v11279, 0.001
  %v11328 = vadd.f32 %v11280, 0.001
  %v11329 = vadd.f32 %v11281, 0.001
  %v11330 = vadd.f32 %v11282, 0.001
  %v11331 = vadd.f32 %v11283, 0.001
  %v11332 = vadd.f32 %v11284, 0.001
  %v11333 = vadd.f32 %v11285, 0.001
  %v11334 = vadd.f32 %v11286, 0.001
  %v11335 = vadd.f32 %v11287, 0.001
  %v11336 = vadd.f32 %v11288, 0.001
  %v11337 = vadd.f32 %v11289, 0.001
  %v11338 = vadd.f32 %v11290, 0.001
  %v11339 = vadd.f32 %v11291, 0.001
  %v11340 = vadd.f32 %v11292, 0.001
  %v11341 = vadd.f32 %v11293, 0.001
  %v11342 = vadd.f32 %v11294, 0.001
  %v11343 = vadd.f32 %v11295, 0.001
  %v11344 = vadd.f32 %v11296, 0.001
  %v11345 = vadd.f32 %v11297, 0.001
  %v11346 = vadd.f32 %v11298, 0.001
  %v11347 = vadd.f32 %v11299, 0.001
  %v11348 = vadd.f32 %v11300, 0.001
  %v11349 = vadd.f32 %v11301, 0.001
  %v11350 = vadd.f32 %v11302, 0.001
  %v11351 = vadd.f32 %v11303, 0.001
  %v11352 = vadd.f32 %v11304, 0.001
  %v11353 = vadd.f32 %v11305, 0.001
  %v11354 = vadd.f32 %v11306, 0.001
  %v11355 = vadd.f32 %v11307, 0.001
  %v11356 = vadd.f32 %v11308, 0.001
  %v11357 = vadd.f32 %v11309, 0.001
  %v11358 = vadd.f32 %v11310, 0.001
  %v11359 = vadd.f32 %v11311, 0.001
  %v11360 = vadd.f32 %v11312, 0.001
  %v11361 = vadd.f32 %v11313, 0.001
  %v11362 = vadd.f32 %v11314, 0.001
  %v11363 = vadd.f32 %v11315, 0.001
  %v11364 = vadd.f32 %v11316, 0.001
  %v11365 = vadd.f32 %v11317, 0.001
  %v11366 = vadd.f32 %v11318, 0.001
  %v11367 = vadd.f32 %v11319, 0.001
  %v11368 = vadd.f32 %v11320, 0.001
  %v11369 = vadd.f32 %v11321, 0.001
  %v11370 = vadd.f32 %v11322, 0.001
  %v11371 = vadd.f32 %v11323, 0.001
  %v11372 = vadd.f32 %v11324, 0.001
  %v11373 = vadd.f32 %v11325, 0.001
  %v11374 = vrsqrt.pop %v11326
  %v11375 = vrsqrt.pop %v11327
  %v11376 = vrsqrt.pop %v11328
  %v11377 = vrsqrt.pop %v11329
  %v11378 = vrsqrt.pop %v11330
  %v11379 = vrsqrt.pop %v11331
  %v11380 = vrsqrt.pop %v11332
  %v11381 = vrsqrt.pop %v11333
  %v11382 = vrsqrt.pop %v11334
  %v11383 = vrsqrt.pop %v11335
  %v11384 = vrsqrt.pop %v11336
  %v11385 = vrsqrt.pop %v11337
  %v11386 = vrsqrt.pop %v11338
  %v11387 = vrsqrt.pop %v11339
  %v11388 = vrsqrt.pop %v11340
  %v11389 = vrsqrt.pop %v11341
  %v11390 = vrsqrt.pop %v11342
  %v11391 = vrsqrt.pop %v11343
  %v11392 = vrsqrt.pop %v11344
  %v11393 = vrsqrt.pop %v11345
  %v11394 = vrsqrt.pop %v11346
  %v11395 = vrsqrt.pop %v11347
  %v11396 = vrsqrt.pop %v11348
  %v11397 = vrsqrt.pop %v11349
  %v11398 = vrsqrt.pop %v11350
  %v11399 = vrsqrt.pop %v11351
  %v11400 = vrsqrt.pop %v11352
  %v11401 = vrsqrt.pop %v11353
  %v11402 = vrsqrt.pop %v11354
  %v11403 = vrsqrt.pop %v11355
  %v11404 = vrsqrt.pop %v11356
  %v11405 = vrsqrt.pop %v11357
  %v11406 = vrsqrt.pop %v11358
  %v11407 = vrsqrt.pop %v11359
  %v11408 = vrsqrt.pop %v11360
  %v11409 = vrsqrt.pop %v11361
  %v11410 = vrsqrt.pop %v11362
  %v11411 = vrsqrt.pop %v11363
  %v11412 = vrsqrt.pop %v11364
  %v11413 = vrsqrt.pop %v11365
  %v11414 = vrsqrt.pop %v11366
  %v11415 = vrsqrt.pop %v11367
  %v11416 = vrsqrt.pop %v11368
  %v11417 = vrsqrt.pop %v11369
  %v11418 = vrsqrt.pop %v11370
  %v11419 = vrsqrt.pop %v11371
  %v11420 = vrsqrt.pop %v11372
  %v11421 = vrsqrt.pop %v11373
  %v11422 = vmul.f32 %v11038, %v11374
  %v11423 = vmul.f32 %v11039, %v11375
  %v11424 = vmul.f32 %v11040, %v11376
  %v11425 = vmul.f32 %v11041, %v11377
  %v11426 = vmul.f32 %v11042, %v11378
  %v11427 = vmul.f32 %v11043, %v11379
  %v11428 = vmul.f32 %v11044, %v11380
  %v11429 = vmul.f32 %v11045, %v11381
  %v11430 = vmul.f32 %v11046, %v11382
  %v11431 = vmul.f32 %v11047, %v11383
  %v11432 = vmul.f32 %v11048, %v11384
  %v11433 = vmul.f32 %v11049, %v11385
  %v11434 = vmul.f32 %v11050, %v11386
  %v11435 = vmul.f32 %v11051, %v11387
  %v11436 = vmul.f32 %v11052, %v11388
  %v11437 = vmul.f32 %v11053, %v11389
  %v11438 = vmul.f32 %v11054, %v11390
  %v11439 = vmul.f32 %v11055, %v11391
  %v11440 = vmul.f32 %v11056, %v11392
  %v11441 = vmul.f32 %v11057, %v11393
  %v11442 = vmul.f32 %v11058, %v11394
  %v11443 = vmul.f32 %v11059, %v11395
  %v11444 = vmul.f32 %v11060, %v11396
  %v11445 = vmul.f32 %v11061, %v11397
  %v11446 = vmul.f32 %v11062, %v11398
  %v11447 = vmul.f32 %v11063, %v11399
  %v11448 = vmul.f32 %v11064, %v11400
  %v11449 = vmul.f32 %v11065, %v11401
  %v11450 = vmul.f32 %v11066, %v11402
  %v11451 = vmul.f32 %v11067, %v11403
  %v11452 = vmul.f32 %v11068, %v11404
  %v11453 = vmul.f32 %v11069, %v11405
  %v11454 = vmul.f32 %v11070, %v11406
  %v11455 = vmul.f32 %v11071, %v11407
  %v11456 = vmul.f32 %v11072, %v11408
  %v11457 = vmul.f32 %v11073, %v11409
  %v11458 = vmul.f32 %v11074, %v11410
  %v11459 = vmul.f32 %v11075, %v11411
  %v11460 = vmul.f32 %v11076, %v11412
  %v11461 = vmul.f32 %v11077, %v11413
  %v11462 = vmul.f32 %v11078, %v11414
  %v11463 = vmul.f32 %v11079, %v11415
  %v11464 = vmul.f32 %v11080, %v11416
  %v11465 = vmul.f32 %v11081, %v11417
  %v11466 = vmul.f32 %v11082, %v11418
  %v11467 = vmul.f32 %v11083, %v11419
  %v11468 = vmul.f32 %v11084, %v11420
  %v11469 = vmul.f32 %v11085, %v11421
  %v11470 = vld [vmem:[%s5] sm:$0xff]
  %v11471 = vld [vmem:[%s5 + $0x8] sm:$0xff]
  %v11472 = vld [vmem:[%s5 + $0x10] sm:$0xff]
  %v11473 = vld [vmem:[%s5 + $0x18] sm:$0xff]
  %v11474 = vld [vmem:[%s5 + $0x20] sm:$0xff]
  %v11475 = vld [vmem:[%s5 + $0x28] sm:$0xff]
  %v11476 = vld [vmem:[%s5 + $0x30] sm:$0xff]
  %v11477 = vld [vmem:[%s5 + $0x38] sm:$0xff]
  %v11478 = vld [vmem:[%s5 + $0x40] sm:$0xff]
  %v11479 = vld [vmem:[%s5 + $0x48] sm:$0xff]
  %v11480 = vld [vmem:[%s5 + $0x50] sm:$0xff]
  %v11481 = vld [vmem:[%s5 + $0x58] sm:$0xff]
  %v11482 = vld [vmem:[%s5 + $0x60] sm:$0xff]
  %v11483 = vld [vmem:[%s5 + $0x68] sm:$0xff]
  %v11484 = vld [vmem:[%s5 + $0x70] sm:$0xff]
  %v11485 = vld [vmem:[%s5 + $0x78] sm:$0xff]
  %v11486 = vld [vmem:[%s5 + $0x80] sm:$0xff]
  %v11487 = vld [vmem:[%s5 + $0x88] sm:$0xff]
  %v11488 = vld [vmem:[%s5 + $0x90] sm:$0xff]
  %v11489 = vld [vmem:[%s5 + $0x98] sm:$0xff]
  %v11490 = vld [vmem:[%s5 + $0xa0] sm:$0xff]
  %v11491 = vld [vmem:[%s5 + $0xa8] sm:$0xff]
  %v11492 = vld [vmem:[%s5 + $0xb0] sm:$0xff]
  %v11493 = vld [vmem:[%s5 + $0xb8] sm:$0xff]
  %v11494 = vld [vmem:[%s5 + $0xc0] sm:$0xff]
  %v11495 = vld [vmem:[%s5 + $0xc8] sm:$0xff]
  %v11496 = vld [vmem:[%s5 + $0xd0] sm:$0xff]
  %v11497 = vld [vmem:[%s5 + $0xd8] sm:$0xff]
  %v11498 = vld [vmem:[%s5 + $0xe0] sm:$0xff]
  %v11499 = vld [vmem:[%s5 + $0xe8] sm:$0xff]
  %v11500 = vld [vmem:[%s5 + $0xf0] sm:$0xff]
  %v11501 = vld [vmem:[%s5 + $0xf8] sm:$0xff]
  %v11502 = vld [vmem:[%s5 + $0x100] sm:$0xff]
  %v11503 = vld [vmem:[%s5 + $0x108] sm:$0xff]
  %v11504 = vld [vmem:[%s5 + $0x110] sm:$0xff]
  %v11505 = vld [vmem:[%s5 + $0x118] sm:$0xff]
  %v11506 = vld [vmem:[%s5 + $0x120] sm:$0xff]
  %v11507 = vld [vmem:[%s5 + $0x128] sm:$0xff]
  %v11508 = vld [vmem:[%s5 + $0x130] sm:$0xff]
  %v11509 = vld [vmem:[%s5 + $0x138] sm:$0xff]
  %v11510 = vld [vmem:[%s5 + $0x140] sm:$0xff]
  %v11511 = vld [vmem:[%s5 + $0x148] sm:$0xff]
  %v11512 = vld [vmem:[%s5 + $0x150] sm:$0xff]
  %v11513 = vld [vmem:[%s5 + $0x158] sm:$0xff]
  %v11514 = vld [vmem:[%s5 + $0x160] sm:$0xff]
  %v11515 = vld [vmem:[%s5 + $0x168] sm:$0xff]
  %v11516 = vld [vmem:[%s5 + $0x170] sm:$0xff]
  %v11517 = vld [vmem:[%s5 + $0x178] sm:$0xff]
  %11519 = vset.pattern.permute.xlu0 0
  %11520 = vperm.xlu0 %11519, %v11470
  %v11521 = vpop.permute.xlu0 %11520
  %11524 = vset.pattern.permute.xlu0 0
  %11525 = vperm.xlu0 %11524, %v11471
  %v11526 = vpop.permute.xlu0 %11525
  %11529 = vset.pattern.permute.xlu0 0
  %11530 = vperm.xlu0 %11529, %v11472
  %v11531 = vpop.permute.xlu0 %11530
  %11534 = vset.pattern.permute.xlu0 0
  %11535 = vperm.xlu0 %11534, %v11473
  %v11536 = vpop.permute.xlu0 %11535
  %11539 = vset.pattern.permute.xlu0 0
  %11540 = vperm.xlu0 %11539, %v11474
  %v11541 = vpop.permute.xlu0 %11540
  %11544 = vset.pattern.permute.xlu0 0
  %11545 = vperm.xlu0 %11544, %v11475
  %v11546 = vpop.permute.xlu0 %11545
  %11549 = vset.pattern.permute.xlu0 0
  %11550 = vperm.xlu0 %11549, %v11476
  %v11551 = vpop.permute.xlu0 %11550
  %11554 = vset.pattern.permute.xlu0 0
  %11555 = vperm.xlu0 %11554, %v11477
  %v11556 = vpop.permute.xlu0 %11555
  %11559 = vset.pattern.permute.xlu0 0
  %11560 = vperm.xlu0 %11559, %v11478
  %v11561 = vpop.permute.xlu0 %11560
  %11564 = vset.pattern.permute.xlu0 0
  %11565 = vperm.xlu0 %11564, %v11479
  %v11566 = vpop.permute.xlu0 %11565
  %11569 = vset.pattern.permute.xlu0 0
  %11570 = vperm.xlu0 %11569, %v11480
  %v11571 = vpop.permute.xlu0 %11570
  %11574 = vset.pattern.permute.xlu0 0
  %11575 = vperm.xlu0 %11574, %v11481
  %v11576 = vpop.permute.xlu0 %11575
  %11579 = vset.pattern.permute.xlu0 0
  %11580 = vperm.xlu0 %11579, %v11482
  %v11581 = vpop.permute.xlu0 %11580
  %11584 = vset.pattern.permute.xlu0 0
  %11585 = vperm.xlu0 %11584, %v11483
  %v11586 = vpop.permute.xlu0 %11585
  %11589 = vset.pattern.permute.xlu0 0
  %11590 = vperm.xlu0 %11589, %v11484
  %v11591 = vpop.permute.xlu0 %11590
  %11594 = vset.pattern.permute.xlu0 0
  %11595 = vperm.xlu0 %11594, %v11485
  %v11596 = vpop.permute.xlu0 %11595
  %11599 = vset.pattern.permute.xlu0 0
  %11600 = vperm.xlu0 %11599, %v11486
  %v11601 = vpop.permute.xlu0 %11600
  %11604 = vset.pattern.permute.xlu0 0
  %11605 = vperm.xlu0 %11604, %v11487
  %v11606 = vpop.permute.xlu0 %11605
  %11609 = vset.pattern.permute.xlu0 0
  %11610 = vperm.xlu0 %11609, %v11488
  %v11611 = vpop.permute.xlu0 %11610
  %11614 = vset.pattern.permute.xlu0 0
  %11615 = vperm.xlu0 %11614, %v11489
  %v11616 = vpop.permute.xlu0 %11615
  %11619 = vset.pattern.permute.xlu0 0
  %11620 = vperm.xlu0 %11619, %v11490
  %v11621 = vpop.permute.xlu0 %11620
  %11624 = vset.pattern.permute.xlu0 0
  %11625 = vperm.xlu0 %11624, %v11491
  %v11626 = vpop.permute.xlu0 %11625
  %11629 = vset.pattern.permute.xlu0 0
  %11630 = vperm.xlu0 %11629, %v11492
  %v11631 = vpop.permute.xlu0 %11630
  %11634 = vset.pattern.permute.xlu0 0
  %11635 = vperm.xlu0 %11634, %v11493
  %v11636 = vpop.permute.xlu0 %11635
  %11639 = vset.pattern.permute.xlu0 0
  %11640 = vperm.xlu0 %11639, %v11494
  %v11641 = vpop.permute.xlu0 %11640
  %11644 = vset.pattern.permute.xlu0 0
  %11645 = vperm.xlu0 %11644, %v11495
  %v11646 = vpop.permute.xlu0 %11645
  %11649 = vset.pattern.permute.xlu0 0
  %11650 = vperm.xlu0 %11649, %v11496
  %v11651 = vpop.permute.xlu0 %11650
  %11654 = vset.pattern.permute.xlu0 0
  %11655 = vperm.xlu0 %11654, %v11497
  %v11656 = vpop.permute.xlu0 %11655
  %11659 = vset.pattern.permute.xlu0 0
  %11660 = vperm.xlu0 %11659, %v11498
  %v11661 = vpop.permute.xlu0 %11660
  %11664 = vset.pattern.permute.xlu0 0
  %11665 = vperm.xlu0 %11664, %v11499
  %v11666 = vpop.permute.xlu0 %11665
  %11669 = vset.pattern.permute.xlu0 0
  %11670 = vperm.xlu0 %11669, %v11500
  %v11671 = vpop.permute.xlu0 %11670
  %11674 = vset.pattern.permute.xlu0 0
  %11675 = vperm.xlu0 %11674, %v11501
  %v11676 = vpop.permute.xlu0 %11675
  %11679 = vset.pattern.permute.xlu0 0
  %11680 = vperm.xlu0 %11679, %v11502
  %v11681 = vpop.permute.xlu0 %11680
  %11684 = vset.pattern.permute.xlu0 0
  %11685 = vperm.xlu0 %11684, %v11503
  %v11686 = vpop.permute.xlu0 %11685
  %11689 = vset.pattern.permute.xlu0 0
  %11690 = vperm.xlu0 %11689, %v11504
  %v11691 = vpop.permute.xlu0 %11690
  %11694 = vset.pattern.permute.xlu0 0
  %11695 = vperm.xlu0 %11694, %v11505
  %v11696 = vpop.permute.xlu0 %11695
  %11699 = vset.pattern.permute.xlu0 0
  %11700 = vperm.xlu0 %11699, %v11506
  %v11701 = vpop.permute.xlu0 %11700
  %11704 = vset.pattern.permute.xlu0 0
  %11705 = vperm.xlu0 %11704, %v11507
  %v11706 = vpop.permute.xlu0 %11705
  %11709 = vset.pattern.permute.xlu0 0
  %11710 = vperm.xlu0 %11709, %v11508
  %v11711 = vpop.permute.xlu0 %11710
  %11714 = vset.pattern.permute.xlu0 0
  %11715 = vperm.xlu0 %11714, %v11509
  %v11716 = vpop.permute.xlu0 %11715
  %11719 = vset.pattern.permute.xlu0 0
  %11720 = vperm.xlu0 %11719, %v11510
  %v11721 = vpop.permute.xlu0 %11720
  %11724 = vset.pattern.permute.xlu0 0
  %11725 = vperm.xlu0 %11724, %v11511
  %v11726 = vpop.permute.xlu0 %11725
  %11729 = vset.pattern.permute.xlu0 0
  %11730 = vperm.xlu0 %11729, %v11512
  %v11731 = vpop.permute.xlu0 %11730
  %11734 = vset.pattern.permute.xlu0 0
  %11735 = vperm.xlu0 %11734, %v11513
  %v11736 = vpop.permute.xlu0 %11735
  %11739 = vset.pattern.permute.xlu0 0
  %11740 = vperm.xlu0 %11739, %v11514
  %v11741 = vpop.permute.xlu0 %11740
  %11744 = vset.pattern.permute.xlu0 0
  %11745 = vperm.xlu0 %11744, %v11515
  %v11746 = vpop.permute.xlu0 %11745
  %11749 = vset.pattern.permute.xlu0 0
  %11750 = vperm.xlu0 %11749, %v11516
  %v11751 = vpop.permute.xlu0 %11750
  %11754 = vset.pattern.permute.xlu0 0
  %11755 = vperm.xlu0 %11754, %v11517
  %v11756 = vpop.permute.xlu0 %11755
  %v11758 = vmul.f32 %v11521, %v11422
  %v11759 = vmul.f32 %v11526, %v11423
  %v11760 = vmul.f32 %v11531, %v11424
  %v11761 = vmul.f32 %v11536, %v11425
  %v11762 = vmul.f32 %v11541, %v11426
  %v11763 = vmul.f32 %v11546, %v11427
  %v11764 = vmul.f32 %v11551, %v11428
  %v11765 = vmul.f32 %v11556, %v11429
  %v11766 = vmul.f32 %v11561, %v11430
  %v11767 = vmul.f32 %v11566, %v11431
  %v11768 = vmul.f32 %v11571, %v11432
  %v11769 = vmul.f32 %v11576, %v11433
  %v11770 = vmul.f32 %v11581, %v11434
  %v11771 = vmul.f32 %v11586, %v11435
  %v11772 = vmul.f32 %v11591, %v11436
  %v11773 = vmul.f32 %v11596, %v11437
  %v11774 = vmul.f32 %v11601, %v11438
  %v11775 = vmul.f32 %v11606, %v11439
  %v11776 = vmul.f32 %v11611, %v11440
  %v11777 = vmul.f32 %v11616, %v11441
  %v11778 = vmul.f32 %v11621, %v11442
  %v11779 = vmul.f32 %v11626, %v11443
  %v11780 = vmul.f32 %v11631, %v11444
  %v11781 = vmul.f32 %v11636, %v11445
  %v11782 = vmul.f32 %v11641, %v11446
  %v11783 = vmul.f32 %v11646, %v11447
  %v11784 = vmul.f32 %v11651, %v11448
  %v11785 = vmul.f32 %v11656, %v11449
  %v11786 = vmul.f32 %v11661, %v11450
  %v11787 = vmul.f32 %v11666, %v11451
  %v11788 = vmul.f32 %v11671, %v11452
  %v11789 = vmul.f32 %v11676, %v11453
  %v11790 = vmul.f32 %v11681, %v11454
  %v11791 = vmul.f32 %v11686, %v11455
  %v11792 = vmul.f32 %v11691, %v11456
  %v11793 = vmul.f32 %v11696, %v11457
  %v11794 = vmul.f32 %v11701, %v11458
  %v11795 = vmul.f32 %v11706, %v11459
  %v11796 = vmul.f32 %v11711, %v11460
  %v11797 = vmul.f32 %v11716, %v11461
  %v11798 = vmul.f32 %v11721, %v11462
  %v11799 = vmul.f32 %v11726, %v11463
  %v11800 = vmul.f32 %v11731, %v11464
  %v11801 = vmul.f32 %v11736, %v11465
  %v11802 = vmul.f32 %v11741, %v11466
  %v11803 = vmul.f32 %v11746, %v11467
  %v11804 = vmul.f32 %v11751, %v11468
  %v11805 = vmul.f32 %v11756, %v11469
  %v11806 = vld [vmem:[%s6] sm:$0xff]
  %v11807 = vld [vmem:[%s6 + $0x8] sm:$0xff]
  %v11808 = vld [vmem:[%s6 + $0x10] sm:$0xff]
  %v11809 = vld [vmem:[%s6 + $0x18] sm:$0xff]
  %v11810 = vld [vmem:[%s6 + $0x20] sm:$0xff]
  %v11811 = vld [vmem:[%s6 + $0x28] sm:$0xff]
  %v11812 = vld [vmem:[%s6 + $0x30] sm:$0xff]
  %v11813 = vld [vmem:[%s6 + $0x38] sm:$0xff]
  %v11814 = vld [vmem:[%s6 + $0x40] sm:$0xff]
  %v11815 = vld [vmem:[%s6 + $0x48] sm:$0xff]
  %v11816 = vld [vmem:[%s6 + $0x50] sm:$0xff]
  %v11817 = vld [vmem:[%s6 + $0x58] sm:$0xff]
  %v11818 = vld [vmem:[%s6 + $0x60] sm:$0xff]
  %v11819 = vld [vmem:[%s6 + $0x68] sm:$0xff]
  %v11820 = vld [vmem:[%s6 + $0x70] sm:$0xff]
  %v11821 = vld [vmem:[%s6 + $0x78] sm:$0xff]
  %v11822 = vld [vmem:[%s6 + $0x80] sm:$0xff]
  %v11823 = vld [vmem:[%s6 + $0x88] sm:$0xff]
  %v11824 = vld [vmem:[%s6 + $0x90] sm:$0xff]
  %v11825 = vld [vmem:[%s6 + $0x98] sm:$0xff]
  %v11826 = vld [vmem:[%s6 + $0xa0] sm:$0xff]
  %v11827 = vld [vmem:[%s6 + $0xa8] sm:$0xff]
  %v11828 = vld [vmem:[%s6 + $0xb0] sm:$0xff]
  %v11829 = vld [vmem:[%s6 + $0xb8] sm:$0xff]
  %v11830 = vld [vmem:[%s6 + $0xc0] sm:$0xff]
  %v11831 = vld [vmem:[%s6 + $0xc8] sm:$0xff]
  %v11832 = vld [vmem:[%s6 + $0xd0] sm:$0xff]
  %v11833 = vld [vmem:[%s6 + $0xd8] sm:$0xff]
  %v11834 = vld [vmem:[%s6 + $0xe0] sm:$0xff]
  %v11835 = vld [vmem:[%s6 + $0xe8] sm:$0xff]
  %v11836 = vld [vmem:[%s6 + $0xf0] sm:$0xff]
  %v11837 = vld [vmem:[%s6 + $0xf8] sm:$0xff]
  %v11838 = vld [vmem:[%s6 + $0x100] sm:$0xff]
  %v11839 = vld [vmem:[%s6 + $0x108] sm:$0xff]
  %v11840 = vld [vmem:[%s6 + $0x110] sm:$0xff]
  %v11841 = vld [vmem:[%s6 + $0x118] sm:$0xff]
  %v11842 = vld [vmem:[%s6 + $0x120] sm:$0xff]
  %v11843 = vld [vmem:[%s6 + $0x128] sm:$0xff]
  %v11844 = vld [vmem:[%s6 + $0x130] sm:$0xff]
  %v11845 = vld [vmem:[%s6 + $0x138] sm:$0xff]
  %v11846 = vld [vmem:[%s6 + $0x140] sm:$0xff]
  %v11847 = vld [vmem:[%s6 + $0x148] sm:$0xff]
  %v11848 = vld [vmem:[%s6 + $0x150] sm:$0xff]
  %v11849 = vld [vmem:[%s6 + $0x158] sm:$0xff]
  %v11850 = vld [vmem:[%s6 + $0x160] sm:$0xff]
  %v11851 = vld [vmem:[%s6 + $0x168] sm:$0xff]
  %v11852 = vld [vmem:[%s6 + $0x170] sm:$0xff]
  %v11853 = vld [vmem:[%s6 + $0x178] sm:$0xff]
  %11855 = vset.pattern.permute.xlu0 0
  %11856 = vperm.xlu0 %11855, %v11806
  %v11857 = vpop.permute.xlu0 %11856
  %11860 = vset.pattern.permute.xlu0 0
  %11861 = vperm.xlu0 %11860, %v11807
  %v11862 = vpop.permute.xlu0 %11861
  %11865 = vset.pattern.permute.xlu0 0
  %11866 = vperm.xlu0 %11865, %v11808
  %v11867 = vpop.permute.xlu0 %11866
  %11870 = vset.pattern.permute.xlu0 0
  %11871 = vperm.xlu0 %11870, %v11809
  %v11872 = vpop.permute.xlu0 %11871
  %11875 = vset.pattern.permute.xlu0 0
  %11876 = vperm.xlu0 %11875, %v11810
  %v11877 = vpop.permute.xlu0 %11876
  %11880 = vset.pattern.permute.xlu0 0
  %11881 = vperm.xlu0 %11880, %v11811
  %v11882 = vpop.permute.xlu0 %11881
  %11885 = vset.pattern.permute.xlu0 0
  %11886 = vperm.xlu0 %11885, %v11812
  %v11887 = vpop.permute.xlu0 %11886
  %11890 = vset.pattern.permute.xlu0 0
  %11891 = vperm.xlu0 %11890, %v11813
  %v11892 = vpop.permute.xlu0 %11891
  %11895 = vset.pattern.permute.xlu0 0
  %11896 = vperm.xlu0 %11895, %v11814
  %v11897 = vpop.permute.xlu0 %11896
  %11900 = vset.pattern.permute.xlu0 0
  %11901 = vperm.xlu0 %11900, %v11815
  %v11902 = vpop.permute.xlu0 %11901
  %11905 = vset.pattern.permute.xlu0 0
  %11906 = vperm.xlu0 %11905, %v11816
  %v11907 = vpop.permute.xlu0 %11906
  %11910 = vset.pattern.permute.xlu0 0
  %11911 = vperm.xlu0 %11910, %v11817
  %v11912 = vpop.permute.xlu0 %11911
  %11915 = vset.pattern.permute.xlu0 0
  %11916 = vperm.xlu0 %11915, %v11818
  %v11917 = vpop.permute.xlu0 %11916
  %11920 = vset.pattern.permute.xlu0 0
  %11921 = vperm.xlu0 %11920, %v11819
  %v11922 = vpop.permute.xlu0 %11921
  %11925 = vset.pattern.permute.xlu0 0
  %11926 = vperm.xlu0 %11925, %v11820
  %v11927 = vpop.permute.xlu0 %11926
  %11930 = vset.pattern.permute.xlu0 0
  %11931 = vperm.xlu0 %11930, %v11821
  %v11932 = vpop.permute.xlu0 %11931
  %11935 = vset.pattern.permute.xlu0 0
  %11936 = vperm.xlu0 %11935, %v11822
  %v11937 = vpop.permute.xlu0 %11936
  %11940 = vset.pattern.permute.xlu0 0
  %11941 = vperm.xlu0 %11940, %v11823
  %v11942 = vpop.permute.xlu0 %11941
  %11945 = vset.pattern.permute.xlu0 0
  %11946 = vperm.xlu0 %11945, %v11824
  %v11947 = vpop.permute.xlu0 %11946
  %11950 = vset.pattern.permute.xlu0 0
  %11951 = vperm.xlu0 %11950, %v11825
  %v11952 = vpop.permute.xlu0 %11951
  %11955 = vset.pattern.permute.xlu0 0
  %11956 = vperm.xlu0 %11955, %v11826
  %v11957 = vpop.permute.xlu0 %11956
  %11960 = vset.pattern.permute.xlu0 0
  %11961 = vperm.xlu0 %11960, %v11827
  %v11962 = vpop.permute.xlu0 %11961
  %11965 = vset.pattern.permute.xlu0 0
  %11966 = vperm.xlu0 %11965, %v11828
  %v11967 = vpop.permute.xlu0 %11966
  %11970 = vset.pattern.permute.xlu0 0
  %11971 = vperm.xlu0 %11970, %v11829
  %v11972 = vpop.permute.xlu0 %11971
  %11975 = vset.pattern.permute.xlu0 0
  %11976 = vperm.xlu0 %11975, %v11830
  %v11977 = vpop.permute.xlu0 %11976
  %11980 = vset.pattern.permute.xlu0 0
  %11981 = vperm.xlu0 %11980, %v11831
  %v11982 = vpop.permute.xlu0 %11981
  %11985 = vset.pattern.permute.xlu0 0
  %11986 = vperm.xlu0 %11985, %v11832
  %v11987 = vpop.permute.xlu0 %11986
  %11990 = vset.pattern.permute.xlu0 0
  %11991 = vperm.xlu0 %11990, %v11833
  %v11992 = vpop.permute.xlu0 %11991
  %11995 = vset.pattern.permute.xlu0 0
  %11996 = vperm.xlu0 %11995, %v11834
  %v11997 = vpop.permute.xlu0 %11996
  %12000 = vset.pattern.permute.xlu0 0
  %12001 = vperm.xlu0 %12000, %v11835
  %v12002 = vpop.permute.xlu0 %12001
  %12005 = vset.pattern.permute.xlu0 0
  %12006 = vperm.xlu0 %12005, %v11836
  %v12007 = vpop.permute.xlu0 %12006
  %12010 = vset.pattern.permute.xlu0 0
  %12011 = vperm.xlu0 %12010, %v11837
  %v12012 = vpop.permute.xlu0 %12011
  %12015 = vset.pattern.permute.xlu0 0
  %12016 = vperm.xlu0 %12015, %v11838
  %v12017 = vpop.permute.xlu0 %12016
  %12020 = vset.pattern.permute.xlu0 0
  %12021 = vperm.xlu0 %12020, %v11839
  %v12022 = vpop.permute.xlu0 %12021
  %12025 = vset.pattern.permute.xlu0 0
  %12026 = vperm.xlu0 %12025, %v11840
  %v12027 = vpop.permute.xlu0 %12026
  %12030 = vset.pattern.permute.xlu0 0
  %12031 = vperm.xlu0 %12030, %v11841
  %v12032 = vpop.permute.xlu0 %12031
  %12035 = vset.pattern.permute.xlu0 0
  %12036 = vperm.xlu0 %12035, %v11842
  %v12037 = vpop.permute.xlu0 %12036
  %12040 = vset.pattern.permute.xlu0 0
  %12041 = vperm.xlu0 %12040, %v11843
  %v12042 = vpop.permute.xlu0 %12041
  %12045 = vset.pattern.permute.xlu0 0
  %12046 = vperm.xlu0 %12045, %v11844
  %v12047 = vpop.permute.xlu0 %12046
  %12050 = vset.pattern.permute.xlu0 0
  %12051 = vperm.xlu0 %12050, %v11845
  %v12052 = vpop.permute.xlu0 %12051
  %12055 = vset.pattern.permute.xlu0 0
  %12056 = vperm.xlu0 %12055, %v11846
  %v12057 = vpop.permute.xlu0 %12056
  %12060 = vset.pattern.permute.xlu0 0
  %12061 = vperm.xlu0 %12060, %v11847
  %v12062 = vpop.permute.xlu0 %12061
  %12065 = vset.pattern.permute.xlu0 0
  %12066 = vperm.xlu0 %12065, %v11848
  %v12067 = vpop.permute.xlu0 %12066
  %12070 = vset.pattern.permute.xlu0 0
  %12071 = vperm.xlu0 %12070, %v11849
  %v12072 = vpop.permute.xlu0 %12071
  %12075 = vset.pattern.permute.xlu0 0
  %12076 = vperm.xlu0 %12075, %v11850
  %v12077 = vpop.permute.xlu0 %12076
  %12080 = vset.pattern.permute.xlu0 0
  %12081 = vperm.xlu0 %12080, %v11851
  %v12082 = vpop.permute.xlu0 %12081
  %12085 = vset.pattern.permute.xlu0 0
  %12086 = vperm.xlu0 %12085, %v11852
  %v12087 = vpop.permute.xlu0 %12086
  %12090 = vset.pattern.permute.xlu0 0
  %12091 = vperm.xlu0 %12090, %v11853
  %v12092 = vpop.permute.xlu0 %12091
  %v12094 = vadd.f32 %v11758, %v11857
  %v12095 = vadd.f32 %v11759, %v11862
  %v12096 = vadd.f32 %v11760, %v11867
  %v12097 = vadd.f32 %v11761, %v11872
  %v12098 = vadd.f32 %v11762, %v11877
  %v12099 = vadd.f32 %v11763, %v11882
  %v12100 = vadd.f32 %v11764, %v11887
  %v12101 = vadd.f32 %v11765, %v11892
  %v12102 = vadd.f32 %v11766, %v11897
  %v12103 = vadd.f32 %v11767, %v11902
  %v12104 = vadd.f32 %v11768, %v11907
  %v12105 = vadd.f32 %v11769, %v11912
  %v12106 = vadd.f32 %v11770, %v11917
  %v12107 = vadd.f32 %v11771, %v11922
  %v12108 = vadd.f32 %v11772, %v11927
  %v12109 = vadd.f32 %v11773, %v11932
  %v12110 = vadd.f32 %v11774, %v11937
  %v12111 = vadd.f32 %v11775, %v11942
  %v12112 = vadd.f32 %v11776, %v11947
  %v12113 = vadd.f32 %v11777, %v11952
  %v12114 = vadd.f32 %v11778, %v11957
  %v12115 = vadd.f32 %v11779, %v11962
  %v12116 = vadd.f32 %v11780, %v11967
  %v12117 = vadd.f32 %v11781, %v11972
  %v12118 = vadd.f32 %v11782, %v11977
  %v12119 = vadd.f32 %v11783, %v11982
  %v12120 = vadd.f32 %v11784, %v11987
  %v12121 = vadd.f32 %v11785, %v11992
  %v12122 = vadd.f32 %v11786, %v11997
  %v12123 = vadd.f32 %v11787, %v12002
  %v12124 = vadd.f32 %v11788, %v12007
  %v12125 = vadd.f32 %v11789, %v12012
  %v12126 = vadd.f32 %v11790, %v12017
  %v12127 = vadd.f32 %v11791, %v12022
  %v12128 = vadd.f32 %v11792, %v12027
  %v12129 = vadd.f32 %v11793, %v12032
  %v12130 = vadd.f32 %v11794, %v12037
  %v12131 = vadd.f32 %v11795, %v12042
  %v12132 = vadd.f32 %v11796, %v12047
  %v12133 = vadd.f32 %v11797, %v12052
  %v12134 = vadd.f32 %v11798, %v12057
  %v12135 = vadd.f32 %v11799, %v12062
  %v12136 = vadd.f32 %v11800, %v12067
  %v12137 = vadd.f32 %v11801, %v12072
  %v12138 = vadd.f32 %v11802, %v12077
  %v12139 = vadd.f32 %v11803, %v12082
  %v12140 = vadd.f32 %v11804, %v12087
  %v12141 = vadd.f32 %v11805, %v12092
  %12142 = vst.msk [vmem:[%s7] sm:$0xff] %vm10844, %v12094
  %12143 = vst.msk [vmem:[%s7 + $0x8] sm:$0xff] %vm10844, %v12095
  %12144 = vst.msk [vmem:[%s7 + $0x10] sm:$0xff] %vm10844, %v12096
  %12145 = vst.msk [vmem:[%s7 + $0x18] sm:$0xff] %vm10844, %v12097
  %12146 = vst.msk [vmem:[%s7 + $0x20] sm:$0xff] %vm10844, %v12098
  %12147 = vst.msk [vmem:[%s7 + $0x28] sm:$0xff] %vm10844, %v12099
  %12148 = vst.msk [vmem:[%s7 + $0x30] sm:$0xff] %vm10844, %v12100
  %12149 = vst.msk [vmem:[%s7 + $0x38] sm:$0xff] %vm10844, %v12101
  %12150 = vst.msk [vmem:[%s7 + $0x40] sm:$0xff] %vm10844, %v12102
  %12151 = vst.msk [vmem:[%s7 + $0x48] sm:$0xff] %vm10844, %v12103
  %12152 = vst.msk [vmem:[%s7 + $0x50] sm:$0xff] %vm10844, %v12104
  %12153 = vst.msk [vmem:[%s7 + $0x58] sm:$0xff] %vm10844, %v12105
  %12154 = vst.msk [vmem:[%s7 + $0x60] sm:$0xff] %vm10844, %v12106
  %12155 = vst.msk [vmem:[%s7 + $0x68] sm:$0xff] %vm10844, %v12107
  %12156 = vst.msk [vmem:[%s7 + $0x70] sm:$0xff] %vm10844, %v12108
  %12157 = vst.msk [vmem:[%s7 + $0x78] sm:$0xff] %vm10844, %v12109
  %12158 = vst.msk [vmem:[%s7 + $0x80] sm:$0xff] %vm10844, %v12110
  %12159 = vst.msk [vmem:[%s7 + $0x88] sm:$0xff] %vm10844, %v12111
  %12160 = vst.msk [vmem:[%s7 + $0x90] sm:$0xff] %vm10844, %v12112
  %12161 = vst.msk [vmem:[%s7 + $0x98] sm:$0xff] %vm10844, %v12113
  %12162 = vst.msk [vmem:[%s7 + $0xa0] sm:$0xff] %vm10844, %v12114
  %12163 = vst.msk [vmem:[%s7 + $0xa8] sm:$0xff] %vm10844, %v12115
  %12164 = vst.msk [vmem:[%s7 + $0xb0] sm:$0xff] %vm10844, %v12116
  %12165 = vst.msk [vmem:[%s7 + $0xb8] sm:$0xff] %vm10844, %v12117
  %12166 = vst.msk [vmem:[%s7 + $0xc0] sm:$0xff] %vm10844, %v12118
  %12167 = vst.msk [vmem:[%s7 + $0xc8] sm:$0xff] %vm10844, %v12119
  %12168 = vst.msk [vmem:[%s7 + $0xd0] sm:$0xff] %vm10844, %v12120
  %12169 = vst.msk [vmem:[%s7 + $0xd8] sm:$0xff] %vm10844, %v12121
  %12170 = vst.msk [vmem:[%s7 + $0xe0] sm:$0xff] %vm10844, %v12122
  %12171 = vst.msk [vmem:[%s7 + $0xe8] sm:$0xff] %vm10844, %v12123
  %12172 = vst.msk [vmem:[%s7 + $0xf0] sm:$0xff] %vm10844, %v12124
  %12173 = vst.msk [vmem:[%s7 + $0xf8] sm:$0xff] %vm10844, %v12125
  %12174 = vst.msk [vmem:[%s7 + $0x100] sm:$0xff] %vm10844, %v12126
  %12175 = vst.msk [vmem:[%s7 + $0x108] sm:$0xff] %vm10844, %v12127
  %12176 = vst.msk [vmem:[%s7 + $0x110] sm:$0xff] %vm10844, %v12128
  %12177 = vst.msk [vmem:[%s7 + $0x118] sm:$0xff] %vm10844, %v12129
  %12178 = vst.msk [vmem:[%s7 + $0x120] sm:$0xff] %vm10844, %v12130
  %12179 = vst.msk [vmem:[%s7 + $0x128] sm:$0xff] %vm10844, %v12131
  %12180 = vst.msk [vmem:[%s7 + $0x130] sm:$0xff] %vm10844, %v12132
  %12181 = vst.msk [vmem:[%s7 + $0x138] sm:$0xff] %vm10844, %v12133
  %12182 = vst.msk [vmem:[%s7 + $0x140] sm:$0xff] %vm10844, %v12134
  %12183 = vst.msk [vmem:[%s7 + $0x148] sm:$0xff] %vm10844, %v12135
  %12184 = vst.msk [vmem:[%s7 + $0x150] sm:$0xff] %vm10844, %v12136
  %12185 = vst.msk [vmem:[%s7 + $0x158] sm:$0xff] %vm10844, %v12137
  %12186 = vst.msk [vmem:[%s7 + $0x160] sm:$0xff] %vm10844, %v12138
  %12187 = vst.msk [vmem:[%s7 + $0x168] sm:$0xff] %vm10844, %v12139
  %12188 = vst.msk [vmem:[%s7 + $0x170] sm:$0xff] %vm10844, %v12140
  %12189 = vst.msk [vmem:[%s7 + $0x178] sm:$0xff] %vm10844, %v12141
  // Predicated region
  $region30: #{tpu_custom_call.1} parent=0 // pred_check
    _
  $region31: #{tpu_custom_call.1} parent=0 // pred_check_branch
    %12191 = sbr.rel (0) target = $region33
  $region32: #{tpu_custom_call.1} parent=0 // pred_region
    _
  $region33: #{tpu_custom_call.1} parent=0 // pred_fallthru
    _
  // Predicated region
  $region34: #{tpu_custom_call.1} parent=0 // pred_check
    _
  $region35: #{tpu_custom_call.1} parent=0 // pred_check_branch
    %12193 = sbr.rel (0) target = $region37
  $region36: #{tpu_custom_call.1} parent=0 // pred_region
    _
  $region37: #{tpu_custom_call.1} parent=0 // pred_fallthru
    _

</llo_original>
